<compile_context>
chip_gen: v5e
topology: v5e:2x2
jax: 0.10.0
libtpu: 0.0.40
codegen_flags: <defaults>
</compile_context>

<pallas_src>
import jax
import jax.numpy as jnp
import numpy as np
from jax import lax
from jax.experimental import pallas as pl
from jax.experimental.pallas import tpu as pltpu

EPS_IN = 1e-3   # InstanceNorm3d eps inside CBRR
GROUPS = 4      # CBRR conv groups


# --------------------------- layout-constant masks ---------------------------
def _build_masks(Dd, Hd, Wd):
    """(33, 1, P) float32 layout constants over the flat pooled volume.

    Rows 0..26 : conv-tap validity for tap = dz*9 + dy*3 + dx (zero padding).
    Rows 27..32: upsample edge indicators  x==0, x==Wd-1, y==0, y==Hd-1,
                 z==0, z==Dd-1 (1.0 at the clamped edge, else 0.0).
    """
    P = Dd * Hd * Wd
    f = np.arange(P)
    x = f % Wd
    y = (f // Wd) % Hd
    z = f // (Hd * Wd)
    vx = [x >= 1, np.ones(P, bool), x <= Wd - 2]
    vy = [y >= 1, np.ones(P, bool), y <= Hd - 2]
    vz = [z >= 1, np.ones(P, bool), z <= Dd - 2]
    rows = [(vz[dz] & vy[dy] & vx[dx]).astype(np.float32)
            for dz in range(3) for dy in range(3) for dx in range(3)]
    rows += [(x == 0).astype(np.float32), (x == Wd - 1).astype(np.float32),
             (y == 0).astype(np.float32), (y == Hd - 1).astype(np.float32),
             (z == 0).astype(np.float32), (z == Dd - 1).astype(np.float32)]
    return jnp.asarray(np.stack(rows)[:, None, :])                 # (33, 1, P)


def _block_diag_weights(w, C_in, C_out, groups, KKp):
    """(C_out, KKp) block-diagonal weight matrix, column = tap*C_in + ci."""
    cin_g, cout_g = C_in // groups, C_out // groups
    w3 = jnp.asarray(w, jnp.float32).reshape(C_out, cin_g, 27)
    wbd = jnp.zeros((C_out, 27, C_in), jnp.float32)
    for g in range(groups):
        blk = jnp.transpose(w3[g * cout_g:(g + 1) * cout_g], (0, 2, 1))   # (cout_g, 27, cin_g)
        wbd = wbd.at[g * cout_g:(g + 1) * cout_g, :, g * cin_g:(g + 1) * cin_g].set(blk)
    wbd = wbd.reshape(C_out, 27 * C_in)
    if KKp > 27 * C_in:
        wbd = jnp.pad(wbd, ((0, 0), (0, KKp - 27 * C_in)))
    return wbd


# --------------------------------- kernel ------------------------------------
def _make_mta_kernel(C_in, C_out, Dd, Hd, Wd, KKp):
    HW = Hd * Wd
    P = Dd * HW
    KK = 27 * C_in
    inv_npix = 1.0 / float(P)

    def rollf(v, s, axis):
        # result[..., i, ...] = v[..., (i + s) mod n, ...]   (read neighbour at +s)
        n = v.shape[axis]
        k = (-s) % n
        if k == 0:
            return v
        return pltpu.roll(v, k, axis=axis)

    def kernel(w_ref, aux_ref, x_ref, o_ref, t_ref):
        f32 = jnp.float32

        # ---- fused 2x2x2 average pool: mean of the 8 parity slabs ------------
        pooled = x_ref[0, 0].astype(f32)
        for q in range(1, 8):
            pooled = pooled + x_ref[0, q].astype(f32)
        pooled = pooled * 0.125                                     # (C_in, P)

        # ---- im2col: 27 shifted+masked tap slabs -> VMEM scratch -------------
        # Masks are read from aux_ref (VMEM) at point of use, not hoisted.
        for dz in range(3):
            for dy in range(3):
                for dx in range(3):
                    tap = dz * 9 + dy * 3 + dx
                    s = (dz - 1) * HW + (dy - 1) * Wd + (dx - 1)
                    if s == 0:
                        t = pooled                                  # centre tap: mask == 1
                    else:
                        t = rollf(pooled, s, 1) * aux_ref[tap]      # zero padding via mask
                    t_ref[pl.ds(tap * C_in, C_in), :] = t
        if KKp > KK:                                                # zero MXU padding rows
            t_ref[pl.ds(KK, KKp - KK), :] = jnp.zeros((KKp - KK, P), f32)

        # ---- grouped conv == ONE block-diagonal matmul on the MXU ------------
        y = jnp.dot(w_ref[...], t_ref[...],
                    preferred_element_type=f32,
                    precision=lax.Precision.HIGHEST)                # (C_out, P)

        # ---- InstanceNorm (two-pass stats) + ReLU ----------------------------
        mean = jnp.sum(y, axis=1, keepdims=True) * inv_npix
        cen = y - mean
        var = jnp.sum(cen * cen, axis=1, keepdims=True) * inv_npix
        v = jnp.maximum(cen * lax.rsqrt(var + EPS_IN), 0.0)         # (C_out, P)

        # ---- fused 2x trilinear upsample (align_corners=False) ---------------
        # even output = 0.75*v + 0.25*prev, odd = 0.75*v + 0.25*next, edge-clamped.
        def clamp_shift(a, edge_row, s):
            e = aux_ref[27 + edge_row]                              # (1, P), point of use
            return rollf(a, s, 1) * (1.0 - e) + a * e               # edge -> clamp to a

        ax = (0.75 * v + 0.25 * clamp_shift(v, 0, -1),              # px = 0 (prev x)
              0.75 * v + 0.25 * clamp_shift(v, 1, +1))              # px = 1 (next x)
        for px in range(2):
            a = ax[px]
            by = (0.75 * a + 0.25 * clamp_shift(a, 2, -Wd),         # py = 0
                  0.75 * a + 0.25 * clamp_shift(a, 3, +Wd))         # py = 1
            for py in range(2):
                b = by[py]
                o_ref[0, 0 * 4 + py * 2 + px] = (
                    0.75 * b + 0.25 * clamp_shift(b, 4, -HW)).astype(o_ref.dtype)
                o_ref[0, 1 * 4 + py * 2 + px] = (
                    0.75 * b + 0.25 * clamp_shift(b, 5, +HW)).astype(o_ref.dtype)

    return kernel


# -------------------------------- wrapper ------------------------------------
def mta_forward(x, w, groups=GROUPS, io_dtype=jnp.float32):
    N, C_in, D, H, W = x.shape
    C_out = w.shape[0]
    assert w.shape == (C_out, C_in // groups, 3, 3, 3)
    assert C_in % groups == 0 and C_out % groups == 0
    assert D % 2 == 0 and H % 2 == 0 and W % 2 == 0
    Dd, Hd, Wd = D // 2, H // 2, W // 2
    P = Dd * Hd * Wd
    assert P % 128 == 0, "need (D/2)*(H/2)*(W/2) % 128 == 0 for lane-dense slabs"
    KK = 27 * C_in
    KKp = ((KK + 127) // 128) * 128          # pad the contraction dim for the MXU

    # layout plumbing: parity-major 2x2x2 split, pooled voxels flat on the lane axis
    xr = x.reshape(N, C_in, Dd, 2, Hd, 2, Wd, 2)
    xr = xr.transpose(0, 3, 5, 7, 1, 2, 4, 6).reshape(N, 8, C_in, P).astype(io_dtype)

    aux = _build_masks(Dd, Hd, Wd)                                  # (33, 1, P)
    wbd = _block_diag_weights(w, C_in, C_out, groups, KKp)          # (C_out, KKp)
    kernel = _make_mta_kernel(C_in, C_out, Dd, Hd, Wd, KKp)

    itm = jnp.dtype(io_dtype).itemsize
    blk_in, blk_out = 8 * C_in * P * itm, 8 * C_out * P * itm
    vmem_bytes = (2 * (blk_in + blk_out)                 # double-buffered x / out blocks
                  + 2 * (aux.size + C_out * KKp) * 4     # resident constants
                  + KKp * P * 4                          # im2col tap scratch
                  + (4 << 20))                           # headroom for temporaries
    vmem_bytes = int(min(max(vmem_bytes, 16 << 20), 48 << 20))

    cost = pl.CostEstimate(
        flops=int(N * (8 * C_in * P + 2 * C_out * KKp * P + 46 * C_out * P)),
        transcendentals=int(N * C_out),
        bytes_accessed=int((x.size + N * 8 * C_out * P) * itm + (aux.size + C_out * KKp) * 4),
    )

    o = pl.pallas_call(
        kernel,
        out_shape=jax.ShapeDtypeStruct((N, 8, C_out, P), io_dtype),
        grid=(N,),
        in_specs=[
            pl.BlockSpec((C_out, KKp), lambda n: (0, 0)),           # block-diag weights (VMEM)
            pl.BlockSpec((33, 1, P), lambda n: (0, 0, 0)),          # resident layout masks
            pl.BlockSpec((1, 8, C_in, P), lambda n: (n, 0, 0, 0)),  # one batch element
        ],
        out_specs=pl.BlockSpec((1, 8, C_out, P), lambda n: (n, 0, 0, 0)),
        scratch_shapes=[pltpu.VMEM((KKp, P), jnp.float32)],         # im2col tap slabs
        compiler_params=pltpu.CompilerParams(
            dimension_semantics=("parallel",),                      # batch feeds both v7x TCs
            vmem_limit_bytes=vmem_bytes),
        cost_estimate=cost,
    )(wbd, aux, xr)

    # layout plumbing back: parity-major flat output -> (N, C_out, D, H, W)
    o = o.reshape(N, 2, 2, 2, C_out, Dd, Hd, Wd)
    o = o.transpose(0, 4, 5, 1, 6, 2, 7, 3).reshape(N, C_out, D, H, W)
    return o.astype(x.dtype)


# ------------------- pure-JAX reference (correctness check) -------------------
def _upsample2x_axis(v, axis):
    n = v.shape[axis]
    prev = jnp.take(v, jnp.maximum(jnp.arange(n) - 1, 0), axis=axis)
    nxt = jnp.take(v, jnp.minimum(jnp.arange(n) + 1, n - 1), axis=axis)
    even = 0.75 * v + 0.25 * prev
    odd = 0.75 * v + 0.25 * nxt
    out = jnp.stack([even, odd], axis=axis + 1)
    shape = list(v.shape)
    shape[axis] = 2 * n
    return out.reshape(shape)


def mta_reference(x, w, groups=GROUPS):
    N, C, D, H, W = x.shape
    Dd, Hd, Wd = D // 2, H // 2, W // 2
    xp = x.reshape(N, C, Dd, 2, Hd, 2, Wd, 2).mean(axis=(3, 5, 7))   # adaptive avg pool (2x)
    y = lax.conv_general_dilated(
        xp, w, window_strides=(1, 1, 1), padding=[(1, 1)] * 3,
        dimension_numbers=("NCDHW", "OIDHW", "NCDHW"),
        feature_group_count=groups,
        precision=lax.Precision.HIGHEST)
    m = jnp.mean(y, axis=(2, 3, 4), keepdims=True)
    v = jnp.mean((y - m) ** 2, axis=(2, 3, 4), keepdims=True)
    y = jax.nn.relu((y - m) / jnp.sqrt(v + EPS_IN))
    for ax in (2, 3, 4):                                             # trilinear 2x upsample
        y = _upsample2x_axis(y, ax)
    return y


if __name__ == "__main__":
    key = jax.random.PRNGKey(0)
    kx, kw = jax.random.split(key)
    N, C_in, C_out = 2, 8, 8
    D, H, W = 16, 16, 32          # pooled volume (downSize=0.5): 8*8*16 = 1024 lane-dense voxels
    x = jax.random.normal(kx, (N, C_in, D, H, W), jnp.float32)
    w = jax.random.normal(kw, (C_out, C_in // GROUPS, 3, 3, 3), jnp.float32) * 0.2

    out = jax.block_until_ready(mta_forward(x, w))
    ref = jax.block_until_ready(mta_reference(x, w))
    assert out.shape == (N, C_out, D, H, W)
    np.testing.assert_allclose(np.asarray(out), np.asarray(ref), rtol=2e-3, atol=2e-3)
    print("KERNEL_OK")
</pallas_src>

<mosaic_0001>
module attributes {stable_mosaic.version = 11 : i64} {
  func.func @kernel(%arg0: i32, %arg1: memref<8x256xf32, #tpu.memory_space<vmem>>, %arg2: memref<33x1x1024xf32, #tpu.memory_space<vmem>>, %arg3: memref<1x8x8x1024xf32, #tpu.memory_space<vmem>>, %arg4: memref<1x8x8x1024xf32, #tpu.memory_space<vmem>>, %arg5: memref<256x1024xf32, #tpu.memory_space<vmem>>) attributes {dimension_semantics = [#tpu.dimension_semantics<parallel>], iteration_bounds = array<i64: 2>, scalar_prefetch = 0 : i64, scratch_operands = 1 : i64, tpu.core_type = #tpu.core_type<tc>, window_params = [{pipeline_mode = #tpu.pipeline_mode<synchronous>, transform_indices = @transform_0, window_bounds = array<i64: 8, 256>}, {pipeline_mode = #tpu.pipeline_mode<synchronous>, transform_indices = @transform_1, window_bounds = array<i64: 33, 1, 1024>}, {transform_indices = @transform_2, window_bounds = array<i64: 1, 8, 8, 1024>}, {transform_indices = @transform_3, window_bounds = array<i64: 1, 8, 8, 1024>}]} {
    %c0 = arith.constant 0 : index
    %c0_0 = arith.constant 0 : index
    %c0_1 = arith.constant 0 : index
    %c0_2 = arith.constant 0 : index
    %0 = vector.load %arg3[%c0, %c0_0, %c0_1, %c0_2] : memref<1x8x8x1024xf32, #tpu.memory_space<vmem>>, vector<1x1x8x1024xf32>
    %1 = vector.shape_cast %0 : vector<1x1x8x1024xf32> to vector<8x1024xf32>
    %c0_3 = arith.constant 0 : index
    %c1 = arith.constant 1 : index
    %c0_4 = arith.constant 0 : index
    %c0_5 = arith.constant 0 : index
    %2 = vector.load %arg3[%c0_3, %c1, %c0_4, %c0_5] : memref<1x8x8x1024xf32, #tpu.memory_space<vmem>>, vector<1x1x8x1024xf32>
    %3 = vector.shape_cast %2 : vector<1x1x8x1024xf32> to vector<8x1024xf32>
    %4 = arith.addf %1, %3 : vector<8x1024xf32>
    %c0_6 = arith.constant 0 : index
    %c2 = arith.constant 2 : index
    %c0_7 = arith.constant 0 : index
    %c0_8 = arith.constant 0 : index
    %5 = vector.load %arg3[%c0_6, %c2, %c0_7, %c0_8] : memref<1x8x8x1024xf32, #tpu.memory_space<vmem>>, vector<1x1x8x1024xf32>
    %6 = vector.shape_cast %5 : vector<1x1x8x1024xf32> to vector<8x1024xf32>
    %7 = arith.addf %4, %6 : vector<8x1024xf32>
    %c0_9 = arith.constant 0 : index
    %c3 = arith.constant 3 : index
    %c0_10 = arith.constant 0 : index
    %c0_11 = arith.constant 0 : index
    %8 = vector.load %arg3[%c0_9, %c3, %c0_10, %c0_11] : memref<1x8x8x1024xf32, #tpu.memory_space<vmem>>, vector<1x1x8x1024xf32>
    %9 = vector.shape_cast %8 : vector<1x1x8x1024xf32> to vector<8x1024xf32>
    %10 = arith.addf %7, %9 : vector<8x1024xf32>
    %c0_12 = arith.constant 0 : index
    %c4 = arith.constant 4 : index
    %c0_13 = arith.constant 0 : index
    %c0_14 = arith.constant 0 : index
    %11 = vector.load %arg3[%c0_12, %c4, %c0_13, %c0_14] : memref<1x8x8x1024xf32, #tpu.memory_space<vmem>>, vector<1x1x8x1024xf32>
    %12 = vector.shape_cast %11 : vector<1x1x8x1024xf32> to vector<8x1024xf32>
    %13 = arith.addf %10, %12 : vector<8x1024xf32>
    %c0_15 = arith.constant 0 : index
    %c5 = arith.constant 5 : index
    %c0_16 = arith.constant 0 : index
    %c0_17 = arith.constant 0 : index
    %14 = vector.load %arg3[%c0_15, %c5, %c0_16, %c0_17] : memref<1x8x8x1024xf32, #tpu.memory_space<vmem>>, vector<1x1x8x1024xf32>
    %15 = vector.shape_cast %14 : vector<1x1x8x1024xf32> to vector<8x1024xf32>
    %16 = arith.addf %13, %15 : vector<8x1024xf32>
    %c0_18 = arith.constant 0 : index
    %c6 = arith.constant 6 : index
    %c0_19 = arith.constant 0 : index
    %c0_20 = arith.constant 0 : index
    %17 = vector.load %arg3[%c0_18, %c6, %c0_19, %c0_20] : memref<1x8x8x1024xf32, #tpu.memory_space<vmem>>, vector<1x1x8x1024xf32>
    %18 = vector.shape_cast %17 : vector<1x1x8x1024xf32> to vector<8x1024xf32>
    %19 = arith.addf %16, %18 : vector<8x1024xf32>
    %c0_21 = arith.constant 0 : index
    %c7 = arith.constant 7 : index
    %c0_22 = arith.constant 0 : index
    %c0_23 = arith.constant 0 : index
    %20 = vector.load %arg3[%c0_21, %c7, %c0_22, %c0_23] : memref<1x8x8x1024xf32, #tpu.memory_space<vmem>>, vector<1x1x8x1024xf32>
    %21 = vector.shape_cast %20 : vector<1x1x8x1024xf32> to vector<8x1024xf32>
    %22 = arith.addf %19, %21 : vector<8x1024xf32>
    %cst = arith.constant 1.250000e-01 : f32
    %23 = vector.broadcast %cst : f32 to vector<8x1024xf32>
    %24 = arith.mulf %22, %23 : vector<8x1024xf32>
    %c145_i32 = arith.constant 145 : i32
    %25 = tpu.dynamic_rotate %24 by %c145_i32 dim 1 : vector<8x1024xf32>, i32 -> vector<8x1024xf32>
    %c0_24 = arith.constant 0 : index
    %c0_25 = arith.constant 0 : index
    %c0_26 = arith.constant 0 : index
    %26 = vector.load %arg2[%c0_24, %c0_25, %c0_26] : memref<33x1x1024xf32, #tpu.memory_space<vmem>>, vector<1x1x1024xf32>
    %27 = vector.shape_cast %26 : vector<1x1x1024xf32> to vector<1x1024xf32>
    %28 = vector.broadcast %27 : vector<1x1024xf32> to vector<8x1024xf32>
    %29 = arith.mulf %25, %28 : vector<8x1024xf32>
    %c0_27 = arith.constant 0 : index
    %c0_28 = arith.constant 0 : index
    %30 = vector.load %arg5[%c0_27, %c0_28] : memref<256x1024xf32, #tpu.memory_space<vmem>>, vector<8x1024xf32>
    tpu.vector_store %arg5[%c0_27, %c0_28], %29 {strides = array<i32>} : memref<256x1024xf32, #tpu.memory_space<vmem>>, vector<8x1024xf32>,
    %c144_i32 = arith.constant 144 : i32
    %31 = tpu.dynamic_rotate %24 by %c144_i32 dim 1 : vector<8x1024xf32>, i32 -> vector<8x1024xf32>
    %c1_29 = arith.constant 1 : index
    %c0_30 = arith.constant 0 : index
    %c0_31 = arith.constant 0 : index
    %32 = vector.load %arg2[%c1_29, %c0_30, %c0_31] : memref<33x1x1024xf32, #tpu.memory_space<vmem>>, vector<1x1x1024xf32>
    %33 = vector.shape_cast %32 : vector<1x1x1024xf32> to vector<1x1024xf32>
    %34 = vector.broadcast %33 : vector<1x1024xf32> to vector<8x1024xf32>
    %35 = arith.mulf %31, %34 : vector<8x1024xf32>
    %c8 = arith.constant 8 : index
    %c0_32 = arith.constant 0 : index
    %36 = vector.load %arg5[%c8, %c0_32] : memref<256x1024xf32, #tpu.memory_space<vmem>>, vector<8x1024xf32>
    tpu.vector_store %arg5[%c8, %c0_32], %35 {strides = array<i32>} : memref<256x1024xf32, #tpu.memory_space<vmem>>, vector<8x1024xf32>,
    %c143_i32 = arith.constant 143 : i32
    %37 = tpu.dynamic_rotate %24 by %c143_i32 dim 1 : vector<8x1024xf32>, i32 -> vector<8x1024xf32>
    %c2_33 = arith.constant 2 : index
    %c0_34 = arith.constant 0 : index
    %c0_35 = arith.constant 0 : index
    %38 = vector.load %arg2[%c2_33, %c0_34, %c0_35] : memref<33x1x1024xf32, #tpu.memory_space<vmem>>, vector<1x1x1024xf32>
    %39 = vector.shape_cast %38 : vector<1x1x1024xf32> to vector<1x1024xf32>
    %40 = vector.broadcast %39 : vector<1x1024xf32> to vector<8x1024xf32>
    %41 = arith.mulf %37, %40 : vector<8x1024xf32>
    %c16 = arith.constant 16 : index
    %c0_36 = arith.constant 0 : index
    %42 = vector.load %arg5[%c16, %c0_36] : memref<256x1024xf32, #tpu.memory_space<vmem>>, vector<8x1024xf32>
    tpu.vector_store %arg5[%c16, %c0_36], %41 {strides = array<i32>} : memref<256x1024xf32, #tpu.memory_space<vmem>>, vector<8x1024xf32>,
    %c129_i32 = arith.constant 129 : i32
    %43 = tpu.dynamic_rotate %24 by %c129_i32 dim 1 : vector<8x1024xf32>, i32 -> vector<8x1024xf32>
    %c3_37 = arith.constant 3 : index
    %c0_38 = arith.constant 0 : index
    %c0_39 = arith.constant 0 : index
    %44 = vector.load %arg2[%c3_37, %c0_38, %c0_39] : memref<33x1x1024xf32, #tpu.memory_space<vmem>>, vector<1x1x1024xf32>
    %45 = vector.shape_cast %44 : vector<1x1x1024xf32> to vector<1x1024xf32>
    %46 = vector.broadcast %45 : vector<1x1024xf32> to vector<8x1024xf32>
    %47 = arith.mulf %43, %46 : vector<8x1024xf32>
    %c24 = arith.constant 24 : index
    %c0_40 = arith.constant 0 : index
    %48 = vector.load %arg5[%c24, %c0_40] : memref<256x1024xf32, #tpu.memory_space<vmem>>, vector<8x1024xf32>
    tpu.vector_store %arg5[%c24, %c0_40], %47 {strides = array<i32>} : memref<256x1024xf32, #tpu.memory_space<vmem>>, vector<8x1024xf32>,
    %c128_i32 = arith.constant 128 : i32
    %49 = tpu.dynamic_rotate %24 by %c128_i32 dim 1 : vector<8x1024xf32>, i32 -> vector<8x1024xf32>
    %c4_41 = arith.constant 4 : index
    %c0_42 = arith.constant 0 : index
    %c0_43 = arith.constant 0 : index
    %50 = vector.load %arg2[%c4_41, %c0_42, %c0_43] : memref<33x1x1024xf32, #tpu.memory_space<vmem>>, vector<1x1x1024xf32>
    %51 = vector.shape_cast %50 : vector<1x1x1024xf32> to vector<1x1024xf32>
    %52 = vector.broadcast %51 : vector<1x1024xf32> to vector<8x1024xf32>
    %53 = arith.mulf %49, %52 : vector<8x1024xf32>
    %c32 = arith.constant 32 : index
    %c0_44 = arith.constant 0 : index
    %54 = vector.load %arg5[%c32, %c0_44] : memref<256x1024xf32, #tpu.memory_space<vmem>>, vector<8x1024xf32>
    tpu.vector_store %arg5[%c32, %c0_44], %53 {strides = array<i32>} : memref<256x1024xf32, #tpu.memory_space<vmem>>, vector<8x1024xf32>,
    %c127_i32 = arith.constant 127 : i32
    %55 = tpu.dynamic_rotate %24 by %c127_i32 dim 1 : vector<8x1024xf32>, i32 -> vector<8x1024xf32>
    %c5_45 = arith.constant 5 : index
    %c0_46 = arith.constant 0 : index
    %c0_47 = arith.constant 0 : index
    %56 = vector.load %arg2[%c5_45, %c0_46, %c0_47] : memref<33x1x1024xf32, #tpu.memory_space<vmem>>, vector<1x1x1024xf32>
    %57 = vector.shape_cast %56 : vector<1x1x1024xf32> to vector<1x1024xf32>
    %58 = vector.broadcast %57 : vector<1x1024xf32> to vector<8x1024xf32>
    %59 = arith.mulf %55, %58 : vector<8x1024xf32>
    %c40 = arith.constant 40 : index
    %c0_48 = arith.constant 0 : index
    %60 = vector.load %arg5[%c40, %c0_48] : memref<256x1024xf32, #tpu.memory_space<vmem>>, vector<8x1024xf32>
    tpu.vector_store %arg5[%c40, %c0_48], %59 {strides = array<i32>} : memref<256x1024xf32, #tpu.memory_space<vmem>>, vector<8x1024xf32>,
    %c113_i32 = arith.constant 113 : i32
    %61 = tpu.dynamic_rotate %24 by %c113_i32 dim 1 : vector<8x1024xf32>, i32 -> vector<8x1024xf32>
    %c6_49 = arith.constant 6 : index
    %c0_50 = arith.constant 0 : index
    %c0_51 = arith.constant 0 : index
    %62 = vector.load %arg2[%c6_49, %c0_50, %c0_51] : memref<33x1x1024xf32, #tpu.memory_space<vmem>>, vector<1x1x1024xf32>
    %63 = vector.shape_cast %62 : vector<1x1x1024xf32> to vector<1x1024xf32>
    %64 = vector.broadcast %63 : vector<1x1024xf32> to vector<8x1024xf32>
    %65 = arith.mulf %61, %64 : vector<8x1024xf32>
    %c48 = arith.constant 48 : index
    %c0_52 = arith.constant 0 : index
    %66 = vector.load %arg5[%c48, %c0_52] : memref<256x1024xf32, #tpu.memory_space<vmem>>, vector<8x1024xf32>
    tpu.vector_store %arg5[%c48, %c0_52], %65 {strides = array<i32>} : memref<256x1024xf32, #tpu.memory_space<vmem>>, vector<8x1024xf32>,
    %c112_i32 = arith.constant 112 : i32
    %67 = tpu.dynamic_rotate %24 by %c112_i32 dim 1 : vector<8x1024xf32>, i32 -> vector<8x1024xf32>
    %c7_53 = arith.constant 7 : index
    %c0_54 = arith.constant 0 : index
    %c0_55 = arith.constant 0 : index
    %68 = vector.load %arg2[%c7_53, %c0_54, %c0_55] : memref<33x1x1024xf32, #tpu.memory_space<vmem>>, vector<1x1x1024xf32>
    %69 = vector.shape_cast %68 : vector<1x1x1024xf32> to vector<1x1024xf32>
    %70 = vector.broadcast %69 : vector<1x1024xf32> to vector<8x1024xf32>
    %71 = arith.mulf %67, %70 : vector<8x1024xf32>
    %c56 = arith.constant 56 : index
    %c0_56 = arith.constant 0 : index
    %72 = vector.load %arg5[%c56, %c0_56] : memref<256x1024xf32, #tpu.memory_space<vmem>>, vector<8x1024xf32>
    tpu.vector_store %arg5[%c56, %c0_56], %71 {strides = array<i32>} : memref<256x1024xf32, #tpu.memory_space<vmem>>, vector<8x1024xf32>,
    %c111_i32 = arith.constant 111 : i32
    %73 = tpu.dynamic_rotate %24 by %c111_i32 dim 1 : vector<8x1024xf32>, i32 -> vector<8x1024xf32>
    %c8_57 = arith.constant 8 : index
    %c0_58 = arith.constant 0 : index
    %c0_59 = arith.constant 0 : index
    %74 = vector.load %arg2[%c8_57, %c0_58, %c0_59] : memref<33x1x1024xf32, #tpu.memory_space<vmem>>, vector<1x1x1024xf32>
    %75 = vector.shape_cast %74 : vector<1x1x1024xf32> to vector<1x1024xf32>
    %76 = vector.broadcast %75 : vector<1x1024xf32> to vector<8x1024xf32>
    %77 = arith.mulf %73, %76 : vector<8x1024xf32>
    %c64 = arith.constant 64 : index
    %c0_60 = arith.constant 0 : index
    %78 = vector.load %arg5[%c64, %c0_60] : memref<256x1024xf32, #tpu.memory_space<vmem>>, vector<8x1024xf32>
    tpu.vector_store %arg5[%c64, %c0_60], %77 {strides = array<i32>} : memref<256x1024xf32, #tpu.memory_space<vmem>>, vector<8x1024xf32>,
    %c17_i32 = arith.constant 17 : i32
    %79 = tpu.dynamic_rotate %24 by %c17_i32 dim 1 : vector<8x1024xf32>, i32 -> vector<8x1024xf32>
    %c9 = arith.constant 9 : index
    %c0_61 = arith.constant 0 : index
    %c0_62 = arith.constant 0 : index
    %80 = vector.load %arg2[%c9, %c0_61, %c0_62] : memref<33x1x1024xf32, #tpu.memory_space<vmem>>, vector<1x1x1024xf32>
    %81 = vector.shape_cast %80 : vector<1x1x1024xf32> to vector<1x1024xf32>
    %82 = vector.broadcast %81 : vector<1x1024xf32> to vector<8x1024xf32>
    %83 = arith.mulf %79, %82 : vector<8x1024xf32>
    %c72 = arith.constant 72 : index
    %c0_63 = arith.constant 0 : index
    %84 = vector.load %arg5[%c72, %c0_63] : memref<256x1024xf32, #tpu.memory_space<vmem>>, vector<8x1024xf32>
    tpu.vector_store %arg5[%c72, %c0_63], %83 {strides = array<i32>} : memref<256x1024xf32, #tpu.memory_space<vmem>>, vector<8x1024xf32>,
    %c16_i32 = arith.constant 16 : i32
    %85 = tpu.dynamic_rotate %24 by %c16_i32 dim 1 : vector<8x1024xf32>, i32 -> vector<8x1024xf32>
    %c10 = arith.constant 10 : index
    %c0_64 = arith.constant 0 : index
    %c0_65 = arith.constant 0 : index
    %86 = vector.load %arg2[%c10, %c0_64, %c0_65] : memref<33x1x1024xf32, #tpu.memory_space<vmem>>, vector<1x1x1024xf32>
    %87 = vector.shape_cast %86 : vector<1x1x1024xf32> to vector<1x1024xf32>
    %88 = vector.broadcast %87 : vector<1x1024xf32> to vector<8x1024xf32>
    %89 = arith.mulf %85, %88 : vector<8x1024xf32>
    %c80 = arith.constant 80 : index
    %c0_66 = arith.constant 0 : index
    %90 = vector.load %arg5[%c80, %c0_66] : memref<256x1024xf32, #tpu.memory_space<vmem>>, vector<8x1024xf32>
    tpu.vector_store %arg5[%c80, %c0_66], %89 {strides = array<i32>} : memref<256x1024xf32, #tpu.memory_space<vmem>>, vector<8x1024xf32>,
    %c15_i32 = arith.constant 15 : i32
    %91 = tpu.dynamic_rotate %24 by %c15_i32 dim 1 : vector<8x1024xf32>, i32 -> vector<8x1024xf32>
    %c11 = arith.constant 11 : index
    %c0_67 = arith.constant 0 : index
    %c0_68 = arith.constant 0 : index
    %92 = vector.load %arg2[%c11, %c0_67, %c0_68] : memref<33x1x1024xf32, #tpu.memory_space<vmem>>, vector<1x1x1024xf32>
    %93 = vector.shape_cast %92 : vector<1x1x1024xf32> to vector<1x1024xf32>
    %94 = vector.broadcast %93 : vector<1x1024xf32> to vector<8x1024xf32>
    %95 = arith.mulf %91, %94 : vector<8x1024xf32>
    %c88 = arith.constant 88 : index
    %c0_69 = arith.constant 0 : index
    %96 = vector.load %arg5[%c88, %c0_69] : memref<256x1024xf32, #tpu.memory_space<vmem>>, vector<8x1024xf32>
    tpu.vector_store %arg5[%c88, %c0_69], %95 {strides = array<i32>} : memref<256x1024xf32, #tpu.memory_space<vmem>>, vector<8x1024xf32>,
    %c1_i32 = arith.constant 1 : i32
    %97 = tpu.dynamic_rotate %24 by %c1_i32 dim 1 : vector<8x1024xf32>, i32 -> vector<8x1024xf32>
    %c12 = arith.constant 12 : index
    %c0_70 = arith.constant 0 : index
    %c0_71 = arith.constant 0 : index
    %98 = vector.load %arg2[%c12, %c0_70, %c0_71] : memref<33x1x1024xf32, #tpu.memory_space<vmem>>, vector<1x1x1024xf32>
    %99 = vector.shape_cast %98 : vector<1x1x1024xf32> to vector<1x1024xf32>
    %100 = vector.broadcast %99 : vector<1x1024xf32> to vector<8x1024xf32>
    %101 = arith.mulf %97, %100 : vector<8x1024xf32>
    %c96 = arith.constant 96 : index
    %c0_72 = arith.constant 0 : index
    %102 = vector.load %arg5[%c96, %c0_72] : memref<256x1024xf32, #tpu.memory_space<vmem>>, vector<8x1024xf32>
    tpu.vector_store %arg5[%c96, %c0_72], %101 {strides = array<i32>} : memref<256x1024xf32, #tpu.memory_space<vmem>>, vector<8x1024xf32>,
    %c104 = arith.constant 104 : index
    %c0_73 = arith.constant 0 : index
    %103 = vector.load %arg5[%c104, %c0_73] : memref<256x1024xf32, #tpu.memory_space<vmem>>, vector<8x1024xf32>
    tpu.vector_store %arg5[%c104, %c0_73], %24 {strides = array<i32>} : memref<256x1024xf32, #tpu.memory_space<vmem>>, vector<8x1024xf32>,
    %c1023_i32 = arith.constant 1023 : i32
    %104 = tpu.dynamic_rotate %24 by %c1023_i32 dim 1 : vector<8x1024xf32>, i32 -> vector<8x1024xf32>
    %c14 = arith.constant 14 : index
    %c0_74 = arith.constant 0 : index
    %c0_75 = arith.constant 0 : index
    %105 = vector.load %arg2[%c14, %c0_74, %c0_75] : memref<33x1x1024xf32, #tpu.memory_space<vmem>>, vector<1x1x1024xf32>
    %106 = vector.shape_cast %105 : vector<1x1x1024xf32> to vector<1x1024xf32>
    %107 = vector.broadcast %106 : vector<1x1024xf32> to vector<8x1024xf32>
    %108 = arith.mulf %104, %107 : vector<8x1024xf32>
    %c112 = arith.constant 112 : index
    %c0_76 = arith.constant 0 : index
    %109 = vector.load %arg5[%c112, %c0_76] : memref<256x1024xf32, #tpu.memory_space<vmem>>, vector<8x1024xf32>
    tpu.vector_store %arg5[%c112, %c0_76], %108 {strides = array<i32>} : memref<256x1024xf32, #tpu.memory_space<vmem>>, vector<8x1024xf32>,
    %c1009_i32 = arith.constant 1009 : i32
    %110 = tpu.dynamic_rotate %24 by %c1009_i32 dim 1 : vector<8x1024xf32>, i32 -> vector<8x1024xf32>
    %c15 = arith.constant 15 : index
    %c0_77 = arith.constant 0 : index
    %c0_78 = arith.constant 0 : index
    %111 = vector.load %arg2[%c15, %c0_77, %c0_78] : memref<33x1x1024xf32, #tpu.memory_space<vmem>>, vector<1x1x1024xf32>
    %112 = vector.shape_cast %111 : vector<1x1x1024xf32> to vector<1x1024xf32>
    %113 = vector.broadcast %112 : vector<1x1024xf32> to vector<8x1024xf32>
    %114 = arith.mulf %110, %113 : vector<8x1024xf32>
    %c120 = arith.constant 120 : index
    %c0_79 = arith.constant 0 : index
    %115 = vector.load %arg5[%c120, %c0_79] : memref<256x1024xf32, #tpu.memory_space<vmem>>, vector<8x1024xf32>
    tpu.vector_store %arg5[%c120, %c0_79], %114 {strides = array<i32>} : memref<256x1024xf32, #tpu.memory_space<vmem>>, vector<8x1024xf32>,
    %c1008_i32 = arith.constant 1008 : i32
    %116 = tpu.dynamic_rotate %24 by %c1008_i32 dim 1 : vector<8x1024xf32>, i32 -> vector<8x1024xf32>
    %c16_80 = arith.constant 16 : index
    %c0_81 = arith.constant 0 : index
    %c0_82 = arith.constant 0 : index
    %117 = vector.load %arg2[%c16_80, %c0_81, %c0_82] : memref<33x1x1024xf32, #tpu.memory_space<vmem>>, vector<1x1x1024xf32>
    %118 = vector.shape_cast %117 : vector<1x1x1024xf32> to vector<1x1024xf32>
    %119 = vector.broadcast %118 : vector<1x1024xf32> to vector<8x1024xf32>
    %120 = arith.mulf %116, %119 : vector<8x1024xf32>
    %c128 = arith.constant 128 : index
    %c0_83 = arith.constant 0 : index
    %121 = vector.load %arg5[%c128, %c0_83] : memref<256x1024xf32, #tpu.memory_space<vmem>>, vector<8x1024xf32>
    tpu.vector_store %arg5[%c128, %c0_83], %120 {strides = array<i32>} : memref<256x1024xf32, #tpu.memory_space<vmem>>, vector<8x1024xf32>,
    %c1007_i32 = arith.constant 1007 : i32
    %122 = tpu.dynamic_rotate %24 by %c1007_i32 dim 1 : vector<8x1024xf32>, i32 -> vector<8x1024xf32>
    %c17 = arith.constant 17 : index
    %c0_84 = arith.constant 0 : index
    %c0_85 = arith.constant 0 : index
    %123 = vector.load %arg2[%c17, %c0_84, %c0_85] : memref<33x1x1024xf32, #tpu.memory_space<vmem>>, vector<1x1x1024xf32>
    %124 = vector.shape_cast %123 : vector<1x1x1024xf32> to vector<1x1024xf32>
    %125 = vector.broadcast %124 : vector<1x1024xf32> to vector<8x1024xf32>
    %126 = arith.mulf %122, %125 : vector<8x1024xf32>
    %c136 = arith.constant 136 : index
    %c0_86 = arith.constant 0 : index
    %127 = vector.load %arg5[%c136, %c0_86] : memref<256x1024xf32, #tpu.memory_space<vmem>>, vector<8x1024xf32>
    tpu.vector_store %arg5[%c136, %c0_86], %126 {strides = array<i32>} : memref<256x1024xf32, #tpu.memory_space<vmem>>, vector<8x1024xf32>,
    %c913_i32 = arith.constant 913 : i32
    %128 = tpu.dynamic_rotate %24 by %c913_i32 dim 1 : vector<8x1024xf32>, i32 -> vector<8x1024xf32>
    %c18 = arith.constant 18 : index
    %c0_87 = arith.constant 0 : index
    %c0_88 = arith.constant 0 : index
    %129 = vector.load %arg2[%c18, %c0_87, %c0_88] : memref<33x1x1024xf32, #tpu.memory_space<vmem>>, vector<1x1x1024xf32>
    %130 = vector.shape_cast %129 : vector<1x1x1024xf32> to vector<1x1024xf32>
    %131 = vector.broadcast %130 : vector<1x1024xf32> to vector<8x1024xf32>
    %132 = arith.mulf %128, %131 : vector<8x1024xf32>
    %c144 = arith.constant 144 : index
    %c0_89 = arith.constant 0 : index
    %133 = vector.load %arg5[%c144, %c0_89] : memref<256x1024xf32, #tpu.memory_space<vmem>>, vector<8x1024xf32>
    tpu.vector_store %arg5[%c144, %c0_89], %132 {strides = array<i32>} : memref<256x1024xf32, #tpu.memory_space<vmem>>, vector<8x1024xf32>,
    %c912_i32 = arith.constant 912 : i32
    %134 = tpu.dynamic_rotate %24 by %c912_i32 dim 1 : vector<8x1024xf32>, i32 -> vector<8x1024xf32>
    %c19 = arith.constant 19 : index
    %c0_90 = arith.constant 0 : index
    %c0_91 = arith.constant 0 : index
    %135 = vector.load %arg2[%c19, %c0_90, %c0_91] : memref<33x1x1024xf32, #tpu.memory_space<vmem>>, vector<1x1x1024xf32>
    %136 = vector.shape_cast %135 : vector<1x1x1024xf32> to vector<1x1024xf32>
    %137 = vector.broadcast %136 : vector<1x1024xf32> to vector<8x1024xf32>
    %138 = arith.mulf %134, %137 : vector<8x1024xf32>
    %c152 = arith.constant 152 : index
    %c0_92 = arith.constant 0 : index
    %139 = vector.load %arg5[%c152, %c0_92] : memref<256x1024xf32, #tpu.memory_space<vmem>>, vector<8x1024xf32>
    tpu.vector_store %arg5[%c152, %c0_92], %138 {strides = array<i32>} : memref<256x1024xf32, #tpu.memory_space<vmem>>, vector<8x1024xf32>,
    %c911_i32 = arith.constant 911 : i32
    %140 = tpu.dynamic_rotate %24 by %c911_i32 dim 1 : vector<8x1024xf32>, i32 -> vector<8x1024xf32>
    %c20 = arith.constant 20 : index
    %c0_93 = arith.constant 0 : index
    %c0_94 = arith.constant 0 : index
    %141 = vector.load %arg2[%c20, %c0_93, %c0_94] : memref<33x1x1024xf32, #tpu.memory_space<vmem>>, vector<1x1x1024xf32>
    %142 = vector.shape_cast %141 : vector<1x1x1024xf32> to vector<1x1024xf32>
    %143 = vector.broadcast %142 : vector<1x1024xf32> to vector<8x1024xf32>
    %144 = arith.mulf %140, %143 : vector<8x1024xf32>
    %c160 = arith.constant 160 : index
    %c0_95 = arith.constant 0 : index
    %145 = vector.load %arg5[%c160, %c0_95] : memref<256x1024xf32, #tpu.memory_space<vmem>>, vector<8x1024xf32>
    tpu.vector_store %arg5[%c160, %c0_95], %144 {strides = array<i32>} : memref<256x1024xf32, #tpu.memory_space<vmem>>, vector<8x1024xf32>,
    %c897_i32 = arith.constant 897 : i32
    %146 = tpu.dynamic_rotate %24 by %c897_i32 dim 1 : vector<8x1024xf32>, i32 -> vector<8x1024xf32>
    %c21 = arith.constant 21 : index
    %c0_96 = arith.constant 0 : index
    %c0_97 = arith.constant 0 : index
    %147 = vector.load %arg2[%c21, %c0_96, %c0_97] : memref<33x1x1024xf32, #tpu.memory_space<vmem>>, vector<1x1x1024xf32>
    %148 = vector.shape_cast %147 : vector<1x1x1024xf32> to vector<1x1024xf32>
    %149 = vector.broadcast %148 : vector<1x1024xf32> to vector<8x1024xf32>
    %150 = arith.mulf %146, %149 : vector<8x1024xf32>
    %c168 = arith.constant 168 : index
    %c0_98 = arith.constant 0 : index
    %151 = vector.load %arg5[%c168, %c0_98] : memref<256x1024xf32, #tpu.memory_space<vmem>>, vector<8x1024xf32>
    tpu.vector_store %arg5[%c168, %c0_98], %150 {strides = array<i32>} : memref<256x1024xf32, #tpu.memory_space<vmem>>, vector<8x1024xf32>,
    %c896_i32 = arith.constant 896 : i32
    %152 = tpu.dynamic_rotate %24 by %c896_i32 dim 1 : vector<8x1024xf32>, i32 -> vector<8x1024xf32>
    %c22 = arith.constant 22 : index
    %c0_99 = arith.constant 0 : index
    %c0_100 = arith.constant 0 : index
    %153 = vector.load %arg2[%c22, %c0_99, %c0_100] : memref<33x1x1024xf32, #tpu.memory_space<vmem>>, vector<1x1x1024xf32>
    %154 = vector.shape_cast %153 : vector<1x1x1024xf32> to vector<1x1024xf32>
    %155 = vector.broadcast %154 : vector<1x1024xf32> to vector<8x1024xf32>
    %156 = arith.mulf %152, %155 : vector<8x1024xf32>
    %c176 = arith.constant 176 : index
    %c0_101 = arith.constant 0 : index
    %157 = vector.load %arg5[%c176, %c0_101] : memref<256x1024xf32, #tpu.memory_space<vmem>>, vector<8x1024xf32>
    tpu.vector_store %arg5[%c176, %c0_101], %156 {strides = array<i32>} : memref<256x1024xf32, #tpu.memory_space<vmem>>, vector<8x1024xf32>,
    %c895_i32 = arith.constant 895 : i32
    %158 = tpu.dynamic_rotate %24 by %c895_i32 dim 1 : vector<8x1024xf32>, i32 -> vector<8x1024xf32>
    %c23 = arith.constant 23 : index
    %c0_102 = arith.constant 0 : index
    %c0_103 = arith.constant 0 : index
    %159 = vector.load %arg2[%c23, %c0_102, %c0_103] : memref<33x1x1024xf32, #tpu.memory_space<vmem>>, vector<1x1x1024xf32>
    %160 = vector.shape_cast %159 : vector<1x1x1024xf32> to vector<1x1024xf32>
    %161 = vector.broadcast %160 : vector<1x1024xf32> to vector<8x1024xf32>
    %162 = arith.mulf %158, %161 : vector<8x1024xf32>
    %c184 = arith.constant 184 : index
    %c0_104 = arith.constant 0 : index
    %163 = vector.load %arg5[%c184, %c0_104] : memref<256x1024xf32, #tpu.memory_space<vmem>>, vector<8x1024xf32>
    tpu.vector_store %arg5[%c184, %c0_104], %162 {strides = array<i32>} : memref<256x1024xf32, #tpu.memory_space<vmem>>, vector<8x1024xf32>,
    %c881_i32 = arith.constant 881 : i32
    %164 = tpu.dynamic_rotate %24 by %c881_i32 dim 1 : vector<8x1024xf32>, i32 -> vector<8x1024xf32>
    %c24_105 = arith.constant 24 : index
    %c0_106 = arith.constant 0 : index
    %c0_107 = arith.constant 0 : index
    %165 = vector.load %arg2[%c24_105, %c0_106, %c0_107] : memref<33x1x1024xf32, #tpu.memory_space<vmem>>, vector<1x1x1024xf32>
    %166 = vector.shape_cast %165 : vector<1x1x1024xf32> to vector<1x1024xf32>
    %167 = vector.broadcast %166 : vector<1x1024xf32> to vector<8x1024xf32>
    %168 = arith.mulf %164, %167 : vector<8x1024xf32>
    %c192 = arith.constant 192 : index
    %c0_108 = arith.constant 0 : index
    %169 = vector.load %arg5[%c192, %c0_108] : memref<256x1024xf32, #tpu.memory_space<vmem>>, vector<8x1024xf32>
    tpu.vector_store %arg5[%c192, %c0_108], %168 {strides = array<i32>} : memref<256x1024xf32, #tpu.memory_space<vmem>>, vector<8x1024xf32>,
    %c880_i32 = arith.constant 880 : i32
    %170 = tpu.dynamic_rotate %24 by %c880_i32 dim 1 : vector<8x1024xf32>, i32 -> vector<8x1024xf32>
    %c25 = arith.constant 25 : index
    %c0_109 = arith.constant 0 : index
    %c0_110 = arith.constant 0 : index
    %171 = vector.load %arg2[%c25, %c0_109, %c0_110] : memref<33x1x1024xf32, #tpu.memory_space<vmem>>, vector<1x1x1024xf32>
    %172 = vector.shape_cast %171 : vector<1x1x1024xf32> to vector<1x1024xf32>
    %173 = vector.broadcast %172 : vector<1x1024xf32> to vector<8x1024xf32>
    %174 = arith.mulf %170, %173 : vector<8x1024xf32>
    %c200 = arith.constant 200 : index
    %c0_111 = arith.constant 0 : index
    %175 = vector.load %arg5[%c200, %c0_111] : memref<256x1024xf32, #tpu.memory_space<vmem>>, vector<8x1024xf32>
    tpu.vector_store %arg5[%c200, %c0_111], %174 {strides = array<i32>} : memref<256x1024xf32, #tpu.memory_space<vmem>>, vector<8x1024xf32>,
    %c879_i32 = arith.constant 879 : i32
    %176 = tpu.dynamic_rotate %24 by %c879_i32 dim 1 : vector<8x1024xf32>, i32 -> vector<8x1024xf32>
    %c26 = arith.constant 26 : index
    %c0_112 = arith.constant 0 : index
    %c0_113 = arith.constant 0 : index
    %177 = vector.load %arg2[%c26, %c0_112, %c0_113] : memref<33x1x1024xf32, #tpu.memory_space<vmem>>, vector<1x1x1024xf32>
    %178 = vector.shape_cast %177 : vector<1x1x1024xf32> to vector<1x1024xf32>
    %179 = vector.broadcast %178 : vector<1x1024xf32> to vector<8x1024xf32>
    %180 = arith.mulf %176, %179 : vector<8x1024xf32>
    %c208 = arith.constant 208 : index
    %c0_114 = arith.constant 0 : index
    %181 = vector.load %arg5[%c208, %c0_114] : memref<256x1024xf32, #tpu.memory_space<vmem>>, vector<8x1024xf32>
    tpu.vector_store %arg5[%c208, %c0_114], %180 {strides = array<i32>} : memref<256x1024xf32, #tpu.memory_space<vmem>>, vector<8x1024xf32>,
    %cst_115 = arith.constant 0.000000e+00 : f32
    %182 = vector.broadcast %cst_115 : f32 to vector<40x1024xf32>
    %c216 = arith.constant 216 : index
    %c0_116 = arith.constant 0 : index
    %183 = vector.load %arg5[%c216, %c0_116] : memref<256x1024xf32, #tpu.memory_space<vmem>>, vector<40x1024xf32>
    tpu.vector_store %arg5[%c216, %c0_116], %182 {strides = array<i32>} : memref<256x1024xf32, #tpu.memory_space<vmem>>, vector<40x1024xf32>,
    %c0_117 = arith.constant 0 : index
    %c0_118 = arith.constant 0 : index
    %184 = vector.load %arg1[%c0_117, %c0_118] : memref<8x256xf32, #tpu.memory_space<vmem>>, vector<8x256xf32>
    %c0_119 = arith.constant 0 : index
    %c0_120 = arith.constant 0 : index
    %185 = vector.load %arg5[%c0_119, %c0_120] : memref<256x1024xf32, #tpu.memory_space<vmem>>, vector<256x1024xf32>
    %cst_121 = arith.constant dense<0.000000e+00> : vector<8x1024xf32>
    %186 = tpu.matmul %184, %185, %cst_121 {dimension_numbers = #tpu.dot_dimension_numbers<[1], [0], [0], [1], [0, 0, 1, 1], [], []>, precision = #tpu.contract_precision<fp32>} : vector<8x256xf32>, vector<256x1024xf32>, vector<8x1024xf32> -> vector<8x1024xf32>
    %cst_122 = arith.constant dense<0.000000e+00> : vector<8xf32>
    %187 = vector.multi_reduction <add>, %186, %cst_122 [1] : vector<8x1024xf32> to vector<8xf32>
    %188 = vector.shape_cast %187 : vector<8xf32> to vector<8x1xf32>
    %cst_123 = arith.constant 9.765625E-4 : f32
    %189 = vector.broadcast %cst_123 : f32 to vector<8x1xf32>
    %190 = arith.mulf %188, %189 : vector<8x1xf32>
    %191 = vector.broadcast %190 : vector<8x1xf32> to vector<8x1024xf32>
    %192 = arith.subf %186, %191 : vector<8x1024xf32>
    %193 = arith.mulf %192, %192 : vector<8x1024xf32>
    %cst_124 = arith.constant dense<0.000000e+00> : vector<8xf32>
    %194 = vector.multi_reduction <add>, %193, %cst_124 [1] : vector<8x1024xf32> to vector<8xf32>
    %195 = vector.shape_cast %194 : vector<8xf32> to vector<8x1xf32>
    %cst_125 = arith.constant 9.765625E-4 : f32
    %196 = vector.broadcast %cst_125 : f32 to vector<8x1xf32>
    %197 = arith.mulf %195, %196 : vector<8x1xf32>
    %cst_126 = arith.constant 1.000000e-03 : f32
    %198 = vector.broadcast %cst_126 : f32 to vector<8x1xf32>
    %199 = arith.addf %197, %198 : vector<8x1xf32>
    %200 = math.rsqrt %199 : vector<8x1xf32>
    %201 = vector.broadcast %200 : vector<8x1xf32> to vector<8x1024xf32>
    %202 = arith.mulf %192, %201 : vector<8x1024xf32>
    %cst_127 = arith.constant 0.000000e+00 : f32
    %203 = vector.broadcast %cst_127 : f32 to vector<8x1024xf32>
    %204 = arith.maximumf %202, %203 : vector<8x1024xf32>
    %cst_128 = arith.constant 7.500000e-01 : f32
    %205 = vector.broadcast %cst_128 : f32 to vector<8x1024xf32>
    %206 = arith.mulf %205, %204 : vector<8x1024xf32>
    %c27 = arith.constant 27 : index
    %c0_129 = arith.constant 0 : index
    %c0_130 = arith.constant 0 : index
    %207 = vector.load %arg2[%c27, %c0_129, %c0_130] : memref<33x1x1024xf32, #tpu.memory_space<vmem>>, vector<1x1x1024xf32>
    %208 = vector.shape_cast %207 : vector<1x1x1024xf32> to vector<1x1024xf32>
    %c1_i32_131 = arith.constant 1 : i32
    %209 = tpu.dynamic_rotate %204 by %c1_i32_131 dim 1 : vector<8x1024xf32>, i32 -> vector<8x1024xf32>
    %cst_132 = arith.constant 1.000000e+00 : f32
    %210 = vector.broadcast %cst_132 : f32 to vector<1x1024xf32>
    %211 = arith.subf %210, %208 : vector<1x1024xf32>
    %212 = vector.broadcast %211 : vector<1x1024xf32> to vector<8x1024xf32>
    %213 = arith.mulf %209, %212 : vector<8x1024xf32>
    %214 = vector.broadcast %208 : vector<1x1024xf32> to vector<8x1024xf32>
    %215 = arith.mulf %204, %214 : vector<8x1024xf32>
    %216 = arith.addf %213, %215 : vector<8x1024xf32>
    %cst_133 = arith.constant 2.500000e-01 : f32
    %217 = vector.broadcast %cst_133 : f32 to vector<8x1024xf32>
    %218 = arith.mulf %217, %216 : vector<8x1024xf32>
    %219 = arith.addf %206, %218 : vector<8x1024xf32>
    %cst_134 = arith.constant 7.500000e-01 : f32
    %220 = vector.broadcast %cst_134 : f32 to vector<8x1024xf32>
    %221 = arith.mulf %220, %204 : vector<8x1024xf32>
    %c28 = arith.constant 28 : index
    %c0_135 = arith.constant 0 : index
    %c0_136 = arith.constant 0 : index
    %222 = vector.load %arg2[%c28, %c0_135, %c0_136] : memref<33x1x1024xf32, #tpu.memory_space<vmem>>, vector<1x1x1024xf32>
    %223 = vector.shape_cast %222 : vector<1x1x1024xf32> to vector<1x1024xf32>
    %c1023_i32_137 = arith.constant 1023 : i32
    %224 = tpu.dynamic_rotate %204 by %c1023_i32_137 dim 1 : vector<8x1024xf32>, i32 -> vector<8x1024xf32>
    %cst_138 = arith.constant 1.000000e+00 : f32
    %225 = vector.broadcast %cst_138 : f32 to vector<1x1024xf32>
    %226 = arith.subf %225, %223 : vector<1x1024xf32>
    %227 = vector.broadcast %226 : vector<1x1024xf32> to vector<8x1024xf32>
    %228 = arith.mulf %224, %227 : vector<8x1024xf32>
    %229 = vector.broadcast %223 : vector<1x1024xf32> to vector<8x1024xf32>
    %230 = arith.mulf %204, %229 : vector<8x1024xf32>
    %231 = arith.addf %228, %230 : vector<8x1024xf32>
    %cst_139 = arith.constant 2.500000e-01 : f32
    %232 = vector.broadcast %cst_139 : f32 to vector<8x1024xf32>
    %233 = arith.mulf %232, %231 : vector<8x1024xf32>
    %234 = arith.addf %221, %233 : vector<8x1024xf32>
    %cst_140 = arith.constant 7.500000e-01 : f32
    %235 = vector.broadcast %cst_140 : f32 to vector<8x1024xf32>
    %236 = arith.mulf %235, %219 : vector<8x1024xf32>
    %c29 = arith.constant 29 : index
    %c0_141 = arith.constant 0 : index
    %c0_142 = arith.constant 0 : index
    %237 = vector.load %arg2[%c29, %c0_141, %c0_142] : memref<33x1x1024xf32, #tpu.memory_space<vmem>>, vector<1x1x1024xf32>
    %238 = vector.shape_cast %237 : vector<1x1x1024xf32> to vector<1x1024xf32>
    %c16_i32_143 = arith.constant 16 : i32
    %239 = tpu.dynamic_rotate %219 by %c16_i32_143 dim 1 : vector<8x1024xf32>, i32 -> vector<8x1024xf32>
    %cst_144 = arith.constant 1.000000e+00 : f32
    %240 = vector.broadcast %cst_144 : f32 to vector<1x1024xf32>
    %241 = arith.subf %240, %238 : vector<1x1024xf32>
    %242 = vector.broadcast %241 : vector<1x1024xf32> to vector<8x1024xf32>
    %243 = arith.mulf %239, %242 : vector<8x1024xf32>
    %244 = vector.broadcast %238 : vector<1x1024xf32> to vector<8x1024xf32>
    %245 = arith.mulf %219, %244 : vector<8x1024xf32>
    %246 = arith.addf %243, %245 : vector<8x1024xf32>
    %cst_145 = arith.constant 2.500000e-01 : f32
    %247 = vector.broadcast %cst_145 : f32 to vector<8x1024xf32>
    %248 = arith.mulf %247, %246 : vector<8x1024xf32>
    %249 = arith.addf %236, %248 : vector<8x1024xf32>
    %cst_146 = arith.constant 7.500000e-01 : f32
    %250 = vector.broadcast %cst_146 : f32 to vector<8x1024xf32>
    %251 = arith.mulf %250, %219 : vector<8x1024xf32>
    %c30 = arith.constant 30 : index
    %c0_147 = arith.constant 0 : index
    %c0_148 = arith.constant 0 : index
    %252 = vector.load %arg2[%c30, %c0_147, %c0_148] : memref<33x1x1024xf32, #tpu.memory_space<vmem>>, vector<1x1x1024xf32>
    %253 = vector.shape_cast %252 : vector<1x1x1024xf32> to vector<1x1024xf32>
    %c1008_i32_149 = arith.constant 1008 : i32
    %254 = tpu.dynamic_rotate %219 by %c1008_i32_149 dim 1 : vector<8x1024xf32>, i32 -> vector<8x1024xf32>
    %cst_150 = arith.constant 1.000000e+00 : f32
    %255 = vector.broadcast %cst_150 : f32 to vector<1x1024xf32>
    %256 = arith.subf %255, %253 : vector<1x1024xf32>
    %257 = vector.broadcast %256 : vector<1x1024xf32> to vector<8x1024xf32>
    %258 = arith.mulf %254, %257 : vector<8x1024xf32>
    %259 = vector.broadcast %253 : vector<1x1024xf32> to vector<8x1024xf32>
    %260 = arith.mulf %219, %259 : vector<8x1024xf32>
    %261 = arith.addf %258, %260 : vector<8x1024xf32>
    %cst_151 = arith.constant 2.500000e-01 : f32
    %262 = vector.broadcast %cst_151 : f32 to vector<8x1024xf32>
    %263 = arith.mulf %262, %261 : vector<8x1024xf32>
    %264 = arith.addf %251, %263 : vector<8x1024xf32>
    %cst_152 = arith.constant 7.500000e-01 : f32
    %265 = vector.broadcast %cst_152 : f32 to vector<8x1024xf32>
    %266 = arith.mulf %265, %249 : vector<8x1024xf32>
    %c31 = arith.constant 31 : index
    %c0_153 = arith.constant 0 : index
    %c0_154 = arith.constant 0 : index
    %267 = vector.load %arg2[%c31, %c0_153, %c0_154] : memref<33x1x1024xf32, #tpu.memory_space<vmem>>, vector<1x1x1024xf32>
    %268 = vector.shape_cast %267 : vector<1x1x1024xf32> to vector<1x1024xf32>
    %c128_i32_155 = arith.constant 128 : i32
    %269 = tpu.dynamic_rotate %249 by %c128_i32_155 dim 1 : vector<8x1024xf32>, i32 -> vector<8x1024xf32>
    %cst_156 = arith.constant 1.000000e+00 : f32
    %270 = vector.broadcast %cst_156 : f32 to vector<1x1024xf32>
    %271 = arith.subf %270, %268 : vector<1x1024xf32>
    %272 = vector.broadcast %271 : vector<1x1024xf32> to vector<8x1024xf32>
    %273 = arith.mulf %269, %272 : vector<8x1024xf32>
    %274 = vector.broadcast %268 : vector<1x1024xf32> to vector<8x1024xf32>
    %275 = arith.mulf %249, %274 : vector<8x1024xf32>
    %276 = arith.addf %273, %275 : vector<8x1024xf32>
    %cst_157 = arith.constant 2.500000e-01 : f32
    %277 = vector.broadcast %cst_157 : f32 to vector<8x1024xf32>
    %278 = arith.mulf %277, %276 : vector<8x1024xf32>
    %279 = arith.addf %266, %278 : vector<8x1024xf32>
    %c0_158 = arith.constant 0 : index
    %c0_159 = arith.constant 0 : index
    %c0_160 = arith.constant 0 : index
    %c0_161 = arith.constant 0 : index
    %280 = vector.load %arg4[%c0_158, %c0_159, %c0_160, %c0_161] : memref<1x8x8x1024xf32, #tpu.memory_space<vmem>>, vector<1x1x8x1024xf32>
    %281 = vector.shape_cast %280 : vector<1x1x8x1024xf32> to vector<8x1024xf32>
    %282 = vector.shape_cast %279 : vector<8x1024xf32> to vector<1x1x8x1024xf32>
    tpu.vector_store %arg4[%c0_158, %c0_159, %c0_160, %c0_161], %282 {strides = array<i32>} : memref<1x8x8x1024xf32, #tpu.memory_space<vmem>>, vector<1x1x8x1024xf32>,
    %cst_162 = arith.constant 7.500000e-01 : f32
    %283 = vector.broadcast %cst_162 : f32 to vector<8x1024xf32>
    %284 = arith.mulf %283, %249 : vector<8x1024xf32>
    %c32_163 = arith.constant 32 : index
    %c0_164 = arith.constant 0 : index
    %c0_165 = arith.constant 0 : index
    %285 = vector.load %arg2[%c32_163, %c0_164, %c0_165] : memref<33x1x1024xf32, #tpu.memory_space<vmem>>, vector<1x1x1024xf32>
    %286 = vector.shape_cast %285 : vector<1x1x1024xf32> to vector<1x1024xf32>
    %c896_i32_166 = arith.constant 896 : i32
    %287 = tpu.dynamic_rotate %249 by %c896_i32_166 dim 1 : vector<8x1024xf32>, i32 -> vector<8x1024xf32>
    %cst_167 = arith.constant 1.000000e+00 : f32
    %288 = vector.broadcast %cst_167 : f32 to vector<1x1024xf32>
    %289 = arith.subf %288, %286 : vector<1x1024xf32>
    %290 = vector.broadcast %289 : vector<1x1024xf32> to vector<8x1024xf32>
    %291 = arith.mulf %287, %290 : vector<8x1024xf32>
    %292 = vector.broadcast %286 : vector<1x1024xf32> to vector<8x1024xf32>
    %293 = arith.mulf %249, %292 : vector<8x1024xf32>
    %294 = arith.addf %291, %293 : vector<8x1024xf32>
    %cst_168 = arith.constant 2.500000e-01 : f32
    %295 = vector.broadcast %cst_168 : f32 to vector<8x1024xf32>
    %296 = arith.mulf %295, %294 : vector<8x1024xf32>
    %297 = arith.addf %284, %296 : vector<8x1024xf32>
    %c0_169 = arith.constant 0 : index
    %c4_170 = arith.constant 4 : index
    %c0_171 = arith.constant 0 : index
    %c0_172 = arith.constant 0 : index
    %298 = vector.load %arg4[%c0_169, %c4_170, %c0_171, %c0_172] : memref<1x8x8x1024xf32, #tpu.memory_space<vmem>>, vector<1x1x8x1024xf32>
    %299 = vector.shape_cast %298 : vector<1x1x8x1024xf32> to vector<8x1024xf32>
    %300 = vector.shape_cast %297 : vector<8x1024xf32> to vector<1x1x8x1024xf32>
    tpu.vector_store %arg4[%c0_169, %c4_170, %c0_171, %c0_172], %300 {strides = array<i32>} : memref<1x8x8x1024xf32, #tpu.memory_space<vmem>>, vector<1x1x8x1024xf32>,
    %cst_173 = arith.constant 7.500000e-01 : f32
    %301 = vector.broadcast %cst_173 : f32 to vector<8x1024xf32>
    %302 = arith.mulf %301, %264 : vector<8x1024xf32>
    %c31_174 = arith.constant 31 : index
    %c0_175 = arith.constant 0 : index
    %c0_176 = arith.constant 0 : index
    %303 = vector.load %arg2[%c31_174, %c0_175, %c0_176] : memref<33x1x1024xf32, #tpu.memory_space<vmem>>, vector<1x1x1024xf32>
    %304 = vector.shape_cast %303 : vector<1x1x1024xf32> to vector<1x1024xf32>
    %c128_i32_177 = arith.constant 128 : i32
    %305 = tpu.dynamic_rotate %264 by %c128_i32_177 dim 1 : vector<8x1024xf32>, i32 -> vector<8x1024xf32>
    %cst_178 = arith.constant 1.000000e+00 : f32
    %306 = vector.broadcast %cst_178 : f32 to vector<1x1024xf32>
    %307 = arith.subf %306, %304 : vector<1x1024xf32>
    %308 = vector.broadcast %307 : vector<1x1024xf32> to vector<8x1024xf32>
    %309 = arith.mulf %305, %308 : vector<8x1024xf32>
    %310 = vector.broadcast %304 : vector<1x1024xf32> to vector<8x1024xf32>
    %311 = arith.mulf %264, %310 : vector<8x1024xf32>
    %312 = arith.addf %309, %311 : vector<8x1024xf32>
    %cst_179 = arith.constant 2.500000e-01 : f32
    %313 = vector.broadcast %cst_179 : f32 to vector<8x1024xf32>
    %314 = arith.mulf %313, %312 : vector<8x1024xf32>
    %315 = arith.addf %302, %314 : vector<8x1024xf32>
    %c0_180 = arith.constant 0 : index
    %c2_181 = arith.constant 2 : index
    %c0_182 = arith.constant 0 : index
    %c0_183 = arith.constant 0 : index
    %316 = vector.load %arg4[%c0_180, %c2_181, %c0_182, %c0_183] : memref<1x8x8x1024xf32, #tpu.memory_space<vmem>>, vector<1x1x8x1024xf32>
    %317 = vector.shape_cast %316 : vector<1x1x8x1024xf32> to vector<8x1024xf32>
    %318 = vector.shape_cast %315 : vector<8x1024xf32> to vector<1x1x8x1024xf32>
    tpu.vector_store %arg4[%c0_180, %c2_181, %c0_182, %c0_183], %318 {strides = array<i32>} : memref<1x8x8x1024xf32, #tpu.memory_space<vmem>>, vector<1x1x8x1024xf32>,
    %cst_184 = arith.constant 7.500000e-01 : f32
    %319 = vector.broadcast %cst_184 : f32 to vector<8x1024xf32>
    %320 = arith.mulf %319, %264 : vector<8x1024xf32>
    %c32_185 = arith.constant 32 : index
    %c0_186 = arith.constant 0 : index
    %c0_187 = arith.constant 0 : index
    %321 = vector.load %arg2[%c32_185, %c0_186, %c0_187] : memref<33x1x1024xf32, #tpu.memory_space<vmem>>, vector<1x1x1024xf32>
    %322 = vector.shape_cast %321 : vector<1x1x1024xf32> to vector<1x1024xf32>
    %c896_i32_188 = arith.constant 896 : i32
    %323 = tpu.dynamic_rotate %264 by %c896_i32_188 dim 1 : vector<8x1024xf32>, i32 -> vector<8x1024xf32>
    %cst_189 = arith.constant 1.000000e+00 : f32
    %324 = vector.broadcast %cst_189 : f32 to vector<1x1024xf32>
    %325 = arith.subf %324, %322 : vector<1x1024xf32>
    %326 = vector.broadcast %325 : vector<1x1024xf32> to vector<8x1024xf32>
    %327 = arith.mulf %323, %326 : vector<8x1024xf32>
    %328 = vector.broadcast %322 : vector<1x1024xf32> to vector<8x1024xf32>
    %329 = arith.mulf %264, %328 : vector<8x1024xf32>
    %330 = arith.addf %327, %329 : vector<8x1024xf32>
    %cst_190 = arith.constant 2.500000e-01 : f32
    %331 = vector.broadcast %cst_190 : f32 to vector<8x1024xf32>
    %332 = arith.mulf %331, %330 : vector<8x1024xf32>
    %333 = arith.addf %320, %332 : vector<8x1024xf32>
    %c0_191 = arith.constant 0 : index
    %c6_192 = arith.constant 6 : index
    %c0_193 = arith.constant 0 : index
    %c0_194 = arith.constant 0 : index
    %334 = vector.load %arg4[%c0_191, %c6_192, %c0_193, %c0_194] : memref<1x8x8x1024xf32, #tpu.memory_space<vmem>>, vector<1x1x8x1024xf32>
    %335 = vector.shape_cast %334 : vector<1x1x8x1024xf32> to vector<8x1024xf32>
    %336 = vector.shape_cast %333 : vector<8x1024xf32> to vector<1x1x8x1024xf32>
    tpu.vector_store %arg4[%c0_191, %c6_192, %c0_193, %c0_194], %336 {strides = array<i32>} : memref<1x8x8x1024xf32, #tpu.memory_space<vmem>>, vector<1x1x8x1024xf32>,
    %cst_195 = arith.constant 7.500000e-01 : f32
    %337 = vector.broadcast %cst_195 : f32 to vector<8x1024xf32>
    %338 = arith.mulf %337, %234 : vector<8x1024xf32>
    %c29_196 = arith.constant 29 : index
    %c0_197 = arith.constant 0 : index
    %c0_198 = arith.constant 0 : index
    %339 = vector.load %arg2[%c29_196, %c0_197, %c0_198] : memref<33x1x1024xf32, #tpu.memory_space<vmem>>, vector<1x1x1024xf32>
    %340 = vector.shape_cast %339 : vector<1x1x1024xf32> to vector<1x1024xf32>
    %c16_i32_199 = arith.constant 16 : i32
    %341 = tpu.dynamic_rotate %234 by %c16_i32_199 dim 1 : vector<8x1024xf32>, i32 -> vector<8x1024xf32>
    %cst_200 = arith.constant 1.000000e+00 : f32
    %342 = vector.broadcast %cst_200 : f32 to vector<1x1024xf32>
    %343 = arith.subf %342, %340 : vector<1x1024xf32>
    %344 = vector.broadcast %343 : vector<1x1024xf32> to vector<8x1024xf32>
    %345 = arith.mulf %341, %344 : vector<8x1024xf32>
    %346 = vector.broadcast %340 : vector<1x1024xf32> to vector<8x1024xf32>
    %347 = arith.mulf %234, %346 : vector<8x1024xf32>
    %348 = arith.addf %345, %347 : vector<8x1024xf32>
    %cst_201 = arith.constant 2.500000e-01 : f32
    %349 = vector.broadcast %cst_201 : f32 to vector<8x1024xf32>
    %350 = arith.mulf %349, %348 : vector<8x1024xf32>
    %351 = arith.addf %338, %350 : vector<8x1024xf32>
    %cst_202 = arith.constant 7.500000e-01 : f32
    %352 = vector.broadcast %cst_202 : f32 to vector<8x1024xf32>
    %353 = arith.mulf %352, %234 : vector<8x1024xf32>
    %c30_203 = arith.constant 30 : index
    %c0_204 = arith.constant 0 : index
    %c0_205 = arith.constant 0 : index
    %354 = vector.load %arg2[%c30_203, %c0_204, %c0_205] : memref<33x1x1024xf32, #tpu.memory_space<vmem>>, vector<1x1x1024xf32>
    %355 = vector.shape_cast %354 : vector<1x1x1024xf32> to vector<1x1024xf32>
    %c1008_i32_206 = arith.constant 1008 : i32
    %356 = tpu.dynamic_rotate %234 by %c1008_i32_206 dim 1 : vector<8x1024xf32>, i32 -> vector<8x1024xf32>
    %cst_207 = arith.constant 1.000000e+00 : f32
    %357 = vector.broadcast %cst_207 : f32 to vector<1x1024xf32>
    %358 = arith.subf %357, %355 : vector<1x1024xf32>
    %359 = vector.broadcast %358 : vector<1x1024xf32> to vector<8x1024xf32>
    %360 = arith.mulf %356, %359 : vector<8x1024xf32>
    %361 = vector.broadcast %355 : vector<1x1024xf32> to vector<8x1024xf32>
    %362 = arith.mulf %234, %361 : vector<8x1024xf32>
    %363 = arith.addf %360, %362 : vector<8x1024xf32>
    %cst_208 = arith.constant 2.500000e-01 : f32
    %364 = vector.broadcast %cst_208 : f32 to vector<8x1024xf32>
    %365 = arith.mulf %364, %363 : vector<8x1024xf32>
    %366 = arith.addf %353, %365 : vector<8x1024xf32>
    %cst_209 = arith.constant 7.500000e-01 : f32
    %367 = vector.broadcast %cst_209 : f32 to vector<8x1024xf32>
    %368 = arith.mulf %367, %351 : vector<8x1024xf32>
    %c31_210 = arith.constant 31 : index
    %c0_211 = arith.constant 0 : index
    %c0_212 = arith.constant 0 : index
    %369 = vector.load %arg2[%c31_210, %c0_211, %c0_212] : memref<33x1x1024xf32, #tpu.memory_space<vmem>>, vector<1x1x1024xf32>
    %370 = vector.shape_cast %369 : vector<1x1x1024xf32> to vector<1x1024xf32>
    %c128_i32_213 = arith.constant 128 : i32
    %371 = tpu.dynamic_rotate %351 by %c128_i32_213 dim 1 : vector<8x1024xf32>, i32 -> vector<8x1024xf32>
    %cst_214 = arith.constant 1.000000e+00 : f32
    %372 = vector.broadcast %cst_214 : f32 to vector<1x1024xf32>
    %373 = arith.subf %372, %370 : vector<1x1024xf32>
    %374 = vector.broadcast %373 : vector<1x1024xf32> to vector<8x1024xf32>
    %375 = arith.mulf %371, %374 : vector<8x1024xf32>
    %376 = vector.broadcast %370 : vector<1x1024xf32> to vector<8x1024xf32>
    %377 = arith.mulf %351, %376 : vector<8x1024xf32>
    %378 = arith.addf %375, %377 : vector<8x1024xf32>
    %cst_215 = arith.constant 2.500000e-01 : f32
    %379 = vector.broadcast %cst_215 : f32 to vector<8x1024xf32>
    %380 = arith.mulf %379, %378 : vector<8x1024xf32>
    %381 = arith.addf %368, %380 : vector<8x1024xf32>
    %c0_216 = arith.constant 0 : index
    %c1_217 = arith.constant 1 : index
    %c0_218 = arith.constant 0 : index
    %c0_219 = arith.constant 0 : index
    %382 = vector.load %arg4[%c0_216, %c1_217, %c0_218, %c0_219] : memref<1x8x8x1024xf32, #tpu.memory_space<vmem>>, vector<1x1x8x1024xf32>
    %383 = vector.shape_cast %382 : vector<1x1x8x1024xf32> to vector<8x1024xf32>
    %384 = vector.shape_cast %381 : vector<8x1024xf32> to vector<1x1x8x1024xf32>
    tpu.vector_store %arg4[%c0_216, %c1_217, %c0_218, %c0_219], %384 {strides = array<i32>} : memref<1x8x8x1024xf32, #tpu.memory_space<vmem>>, vector<1x1x8x1024xf32>,
    %cst_220 = arith.constant 7.500000e-01 : f32
    %385 = vector.broadcast %cst_220 : f32 to vector<8x1024xf32>
    %386 = arith.mulf %385, %351 : vector<8x1024xf32>
    %c32_221 = arith.constant 32 : index
    %c0_222 = arith.constant 0 : index
    %c0_223 = arith.constant 0 : index
    %387 = vector.load %arg2[%c32_221, %c0_222, %c0_223] : memref<33x1x1024xf32, #tpu.memory_space<vmem>>, vector<1x1x1024xf32>
    %388 = vector.shape_cast %387 : vector<1x1x1024xf32> to vector<1x1024xf32>
    %c896_i32_224 = arith.constant 896 : i32
    %389 = tpu.dynamic_rotate %351 by %c896_i32_224 dim 1 : vector<8x1024xf32>, i32 -> vector<8x1024xf32>
    %cst_225 = arith.constant 1.000000e+00 : f32
    %390 = vector.broadcast %cst_225 : f32 to vector<1x1024xf32>
    %391 = arith.subf %390, %388 : vector<1x1024xf32>
    %392 = vector.broadcast %391 : vector<1x1024xf32> to vector<8x1024xf32>
    %393 = arith.mulf %389, %392 : vector<8x1024xf32>
    %394 = vector.broadcast %388 : vector<1x1024xf32> to vector<8x1024xf32>
    %395 = arith.mulf %351, %394 : vector<8x1024xf32>
    %396 = arith.addf %393, %395 : vector<8x1024xf32>
    %cst_226 = arith.constant 2.500000e-01 : f32
    %397 = vector.broadcast %cst_226 : f32 to vector<8x1024xf32>
    %398 = arith.mulf %397, %396 : vector<8x1024xf32>
    %399 = arith.addf %386, %398 : vector<8x1024xf32>
    %c0_227 = arith.constant 0 : index
    %c5_228 = arith.constant 5 : index
    %c0_229 = arith.constant 0 : index
    %c0_230 = arith.constant 0 : index
    %400 = vector.load %arg4[%c0_227, %c5_228, %c0_229, %c0_230] : memref<1x8x8x1024xf32, #tpu.memory_space<vmem>>, vector<1x1x8x1024xf32>
    %401 = vector.shape_cast %400 : vector<1x1x8x1024xf32> to vector<8x1024xf32>
    %402 = vector.shape_cast %399 : vector<8x1024xf32> to vector<1x1x8x1024xf32>
    tpu.vector_store %arg4[%c0_227, %c5_228, %c0_229, %c0_230], %402 {strides = array<i32>} : memref<1x8x8x1024xf32, #tpu.memory_space<vmem>>, vector<1x1x8x1024xf32>,
    %cst_231 = arith.constant 7.500000e-01 : f32
    %403 = vector.broadcast %cst_231 : f32 to vector<8x1024xf32>
    %404 = arith.mulf %403, %366 : vector<8x1024xf32>
    %c31_232 = arith.constant 31 : index
    %c0_233 = arith.constant 0 : index
    %c0_234 = arith.constant 0 : index
    %405 = vector.load %arg2[%c31_232, %c0_233, %c0_234] : memref<33x1x1024xf32, #tpu.memory_space<vmem>>, vector<1x1x1024xf32>
    %406 = vector.shape_cast %405 : vector<1x1x1024xf32> to vector<1x1024xf32>
    %c128_i32_235 = arith.constant 128 : i32
    %407 = tpu.dynamic_rotate %366 by %c128_i32_235 dim 1 : vector<8x1024xf32>, i32 -> vector<8x1024xf32>
    %cst_236 = arith.constant 1.000000e+00 : f32
    %408 = vector.broadcast %cst_236 : f32 to vector<1x1024xf32>
    %409 = arith.subf %408, %406 : vector<1x1024xf32>
    %410 = vector.broadcast %409 : vector<1x1024xf32> to vector<8x1024xf32>
    %411 = arith.mulf %407, %410 : vector<8x1024xf32>
    %412 = vector.broadcast %406 : vector<1x1024xf32> to vector<8x1024xf32>
    %413 = arith.mulf %366, %412 : vector<8x1024xf32>
    %414 = arith.addf %411, %413 : vector<8x1024xf32>
    %cst_237 = arith.constant 2.500000e-01 : f32
    %415 = vector.broadcast %cst_237 : f32 to vector<8x1024xf32>
    %416 = arith.mulf %415, %414 : vector<8x1024xf32>
    %417 = arith.addf %404, %416 : vector<8x1024xf32>
    %c0_238 = arith.constant 0 : index
    %c3_239 = arith.constant 3 : index
    %c0_240 = arith.constant 0 : index
    %c0_241 = arith.constant 0 : index
    %418 = vector.load %arg4[%c0_238, %c3_239, %c0_240, %c0_241] : memref<1x8x8x1024xf32, #tpu.memory_space<vmem>>, vector<1x1x8x1024xf32>
    %419 = vector.shape_cast %418 : vector<1x1x8x1024xf32> to vector<8x1024xf32>
    %420 = vector.shape_cast %417 : vector<8x1024xf32> to vector<1x1x8x1024xf32>
    tpu.vector_store %arg4[%c0_238, %c3_239, %c0_240, %c0_241], %420 {strides = array<i32>} : memref<1x8x8x1024xf32, #tpu.memory_space<vmem>>, vector<1x1x8x1024xf32>,
    %cst_242 = arith.constant 7.500000e-01 : f32
    %421 = vector.broadcast %cst_242 : f32 to vector<8x1024xf32>
    %422 = arith.mulf %421, %366 : vector<8x1024xf32>
    %c32_243 = arith.constant 32 : index
    %c0_244 = arith.constant 0 : index
    %c0_245 = arith.constant 0 : index
    %423 = vector.load %arg2[%c32_243, %c0_244, %c0_245] : memref<33x1x1024xf32, #tpu.memory_space<vmem>>, vector<1x1x1024xf32>
    %424 = vector.shape_cast %423 : vector<1x1x1024xf32> to vector<1x1024xf32>
    %c896_i32_246 = arith.constant 896 : i32
    %425 = tpu.dynamic_rotate %366 by %c896_i32_246 dim 1 : vector<8x1024xf32>, i32 -> vector<8x1024xf32>
    %cst_247 = arith.constant 1.000000e+00 : f32
    %426 = vector.broadcast %cst_247 : f32 to vector<1x1024xf32>
    %427 = arith.subf %426, %424 : vector<1x1024xf32>
    %428 = vector.broadcast %427 : vector<1x1024xf32> to vector<8x1024xf32>
    %429 = arith.mulf %425, %428 : vector<8x1024xf32>
    %430 = vector.broadcast %424 : vector<1x1024xf32> to vector<8x1024xf32>
    %431 = arith.mulf %366, %430 : vector<8x1024xf32>
    %432 = arith.addf %429, %431 : vector<8x1024xf32>
    %cst_248 = arith.constant 2.500000e-01 : f32
    %433 = vector.broadcast %cst_248 : f32 to vector<8x1024xf32>
    %434 = arith.mulf %433, %432 : vector<8x1024xf32>
    %435 = arith.addf %422, %434 : vector<8x1024xf32>
    %c0_249 = arith.constant 0 : index
    %c7_250 = arith.constant 7 : index
    %c0_251 = arith.constant 0 : index
    %c0_252 = arith.constant 0 : index
    %436 = vector.load %arg4[%c0_249, %c7_250, %c0_251, %c0_252] : memref<1x8x8x1024xf32, #tpu.memory_space<vmem>>, vector<1x1x8x1024xf32>
    %437 = vector.shape_cast %436 : vector<1x1x8x1024xf32> to vector<8x1024xf32>
    %438 = vector.shape_cast %435 : vector<8x1024xf32> to vector<1x1x8x1024xf32>
    tpu.vector_store %arg4[%c0_249, %c7_250, %c0_251, %c0_252], %438 {strides = array<i32>} : memref<1x8x8x1024xf32, #tpu.memory_space<vmem>>, vector<1x1x8x1024xf32>,
    return
  }
  func.func @transform_0(%arg0: i32) -> (i32, i32) {
    %c0_i32 = arith.constant 0 : i32
    %c0_i32_0 = arith.constant 0 : i32
    %c0_i32_1 = arith.constant 0 : i32
    return %c0_i32, %c0_i32_0 : i32, i32
  }
  func.func @transform_1(%arg0: i32) -> (i32, i32, i32) {
    %c0_i32 = arith.constant 0 : i32
    %c0_i32_0 = arith.constant 0 : i32
    %c0_i32_1 = arith.constant 0 : i32
    %c0_i32_2 = arith.constant 0 : i32
    return %c0_i32, %c0_i32_0, %c0_i32_1 : i32, i32, i32
  }
  func.func @transform_2(%arg0: i32) -> (i32, i32, i32, i32) {
    %c0_i32 = arith.constant 0 : i32
    %c0_i32_0 = arith.constant 0 : i32
    %c0_i32_1 = arith.constant 0 : i32
    %c0_i32_2 = arith.constant 0 : i32
    return %arg0, %c0_i32, %c0_i32_0, %c0_i32_1 : i32, i32, i32, i32
  }
  func.func @transform_3(%arg0: i32) -> (i32, i32, i32, i32) {
    %c0_i32 = arith.constant 0 : i32
    %c0_i32_0 = arith.constant 0 : i32
    %c0_i32_1 = arith.constant 0 : i32
    %c0_i32_2 = arith.constant 0 : i32
    return %arg0, %c0_i32, %c0_i32_0, %c0_i32_1 : i32, i32, i32, i32
  }
}

</mosaic_0001>

<llo_original>
// kernel: tpu_custom_call.1
$region0: #{tpu_custom_call.1}
  #allocation0 [shape = 'u32[]', space=smem, size = 0x4, offset = 0x4, fixed_abs, tag = 'smem constant byte address 0x4 - core index']
  #allocation1 [shape = 'u32[72,128]{1,0:T(1,128)}', space=vmem, size = 0x9000, scoped, tag = 'internal scratch']
  #allocation2 [shape = 'f32[256,1024]{1,0:T(8,128)}', space=vmem, size = 0x100000, scoped, tag = 'scratch operand']
  %s0 = inlined_call_operand.hbm [shape: f32[8,256], index: 0, kind: input, shape index: {}]
  %s1 = inlined_call_operand.hbm [shape: f32[33,1,1024], index: 1, kind: input, shape index: {}]
  %s2 = inlined_call_operand.hbm [shape: f32[2,8,8,1024], index: 2, kind: input, shape index: {}]
  %s3 = inlined_call_operand.hbm [shape: f32[2,8,8,1024], index: 3, kind: output, shape index: {}]
  %s4 = sld [smem:[#allocation0]]
  $region57: #{tpu_custom_call.1} parent=0
    _
  %s6 = ssub.s32 1, %s4
  %s7 = scalar_select 0, %s6, %s4
  $region1: #{tpu_custom_call.1} parent=0
    #allocation3 [shape = 'u8[8192]{0}', space=vmem, size = 0x2000, scoped, tag = 'input window, operand 0, single buffered']
    #allocation4 [shape = 's32[2]{0}', space=sflag, size = 0x8, scoped, tag = 'scoped memory for tpu_custom_call.1']
    #allocation5 [shape = 's32[2]{0}', space=sflag, size = 0x8, scoped, tag = 'scoped memory for tpu_custom_call.1']
    #allocation6 [shape = 'u8[135168]{0}', space=vmem, size = 0x21000, scoped, tag = 'input window, operand 1, single buffered']
    #allocation7 [shape = 's32[1]{0}', space=sflag, size = 0x4, scoped, tag = 'scoped memory for tpu_custom_call.1']
    #allocation8 [shape = 'u8[524288]{0}', space=vmem, size = 0x80000, scoped, tag = 'input window, operand 2']
    #allocation9 [shape = 'u8[524288]{0}', space=vmem, size = 0x80000, scoped, tag = 'output window, operand 0']
    %8 = vsyncpa [#allocation4], 0
    %9 = vsyncpa [#allocation7], 0
    %10 = vsyncpa [#allocation5], 0
    %s11 = scalar_lea.sflag [#allocation5], 1
    %12 = vsyncpa %s11, 0
    loop: start=0, step=1, limit=4
    $region2: #{tpu_custom_call.1} parent=1 // loop_pre_header
      _
    $region3: #{tpu_custom_call.1} parent=1 // loop_header
      %s14 = sphi 0, %s18
      %p15 = scmp.ge.s32.totalorder %s14, 4
      %s22 = sphi 0, %s22
      %s24 = sphi 0, %s22
      %s25 = sphi 0, %s24
      %s39 = sphi 0, %s25
      %s43 = sphi 0, %s43
      %s45 = sphi 0, %s43
      %s46 = sphi 0, %s45
      %s60 = sphi 0, %s46
      %s66 = sphi 0, %s68
      %s69 = sphi 0, %s66
      %s70 = sphi 0, %s69
      %s86 = sphi 0, %s70
      %s92 = sphi 0, %s94
      %s95 = sphi 0, %s92
      %s96 = sphi 0, %s95
      %s112 = sphi 0, %s96
    $region4: #{tpu_custom_call.1} parent=1 // loop_header_branch
      %17 = sbr.rel (%p15) target = $region8
    $region5: #{tpu_custom_call.1} parent=1 // loop_body
      %s19 = ssub.s32 %s14, 1
      %s20 = ssub.s32 %s14, 2
      %s21 = sadd.s32 %s14, 1
      %s23 = sadd.s32 %s22, 1
      %p26 = scmp.eq.s32.totalorder %s14, 1
      %p27 = scmp.ne.s32.totalorder %s22, %s24
      %p28 = scmp.eq.s32.totalorder %s14, 0
      %p29 = por %p27, %p28
      %p30 = scmp.ne.s32.totalorder %s22, %s24
      %p31 = scmp.eq.s32.totalorder %s19, 1
      %p32 = por %p30, %p31
      %p33 = scmp.ne.s32.totalorder %s24, %s25
      %p34 = scmp.eq.s32.totalorder %s19, 0
      %p35 = por %p33, %p34
      %p36 = scmp.ne.s32.totalorder %s24, %s25
      %p37 = scmp.eq.s32.totalorder %s20, 1
      %p38 = por %p36, %p37
      %p40 = scmp.ne.s32.totalorder %s25, %s39
      %p41 = scmp.eq.s32.totalorder %s20, 0
      %p42 = por %p40, %p41
      %s44 = sadd.s32 %s43, 1
      %p47 = scmp.eq.s32.totalorder %s14, 1
      %p48 = scmp.ne.s32.totalorder %s43, %s45
      %p49 = scmp.eq.s32.totalorder %s14, 0
      %p50 = por %p48, %p49
      %p51 = scmp.ne.s32.totalorder %s43, %s45
      %p52 = scmp.eq.s32.totalorder %s19, 1
      %p53 = por %p51, %p52
      %p54 = scmp.ne.s32.totalorder %s45, %s46
      %p55 = scmp.eq.s32.totalorder %s19, 0
      %p56 = por %p54, %p55
      %p57 = scmp.ne.s32.totalorder %s45, %s46
      %p58 = scmp.eq.s32.totalorder %s20, 1
      %p59 = por %p57, %p58
      %p61 = scmp.ne.s32.totalorder %s46, %s60
      %p62 = scmp.eq.s32.totalorder %s20, 0
      %p63 = por %p61, %p62
      %s64 = ssub.s32 %s14, %s21
      %p65 = scmp.eq.s32.totalorder %s64, 0
      %s67 = sadd.s32 %s66, 1
      %s68 = scalar_select %p65, %s66, %s67
      %p71 = pneg %p65
      %p72 = scmp.eq.s32.totalorder %s14, 1
      %p73 = por %p71, %p72
      %p74 = scmp.ne.s32.totalorder %s66, %s69
      %p75 = scmp.eq.s32.totalorder %s14, 0
      %p76 = por %p74, %p75
      %p77 = scmp.ne.s32.totalorder %s66, %s69
      %p78 = scmp.eq.s32.totalorder %s19, 1
      %p79 = por %p77, %p78
      %p80 = scmp.ne.s32.totalorder %s69, %s70
      %p81 = scmp.eq.s32.totalorder %s19, 0
      %p82 = por %p80, %p81
      %p83 = scmp.ne.s32.totalorder %s69, %s70
      %p84 = scmp.eq.s32.totalorder %s20, 1
      %p85 = por %p83, %p84
      %p87 = scmp.ne.s32.totalorder %s70, %s86
      %p88 = scmp.eq.s32.totalorder %s20, 0
      %p89 = por %p87, %p88
      %s90 = ssub.s32 %s14, %s21
      %p91 = scmp.eq.s32.totalorder %s90, 0
      %s93 = sadd.s32 %s92, 1
      %s94 = scalar_select %p91, %s92, %s93
      %p97 = pneg %p91
      %p98 = scmp.eq.s32.totalorder %s14, 1
      %p99 = por %p97, %p98
      %p100 = scmp.ne.s32.totalorder %s92, %s95
      %p101 = scmp.eq.s32.totalorder %s14, 0
      %p102 = por %p100, %p101
      %p103 = scmp.ne.s32.totalorder %s92, %s95
      %p104 = scmp.eq.s32.totalorder %s19, 1
      %p105 = por %p103, %p104
      %p106 = scmp.ne.s32.totalorder %s95, %s96
      %p107 = scmp.eq.s32.totalorder %s19, 0
      %p108 = por %p106, %p107
      %p109 = scmp.ne.s32.totalorder %s95, %s96
      %p110 = scmp.eq.s32.totalorder %s20, 1
      %p111 = por %p109, %p110
      %p113 = scmp.ne.s32.totalorder %s96, %s112
      %p114 = scmp.eq.s32.totalorder %s20, 0
      %p115 = por %p113, %p114
      %p116 = scmp.le.s32.totalorder 1, %s14
      %p117 = scmp.lt.s32.totalorder %s14, 3
      %p118 = pnand %p116, %p117
      %p119 = pneg %p118
      // Predicated region
      $region9: #{tpu_custom_call.1} parent=5 // pred_check
        _
      $region10: #{tpu_custom_call.1} parent=5 // pred_check_branch
        %121 = sbr.rel (%p118) target = $region12
      $region11: #{tpu_custom_call.1} parent=5 // pred_region
        %s122 = ssub.s32 %s14, 1
        // Predicated region
        $region13: #{tpu_custom_call.1} parent=11 // pred_check
          %p123 = pneg %p35
        $region14: #{tpu_custom_call.1} parent=11 // pred_check_branch
          %125 = sbr.rel (%p123) target = $region16
        $region15: #{tpu_custom_call.1} parent=11 // pred_region
          %127 = vsyncadd [#allocation4], 0
          %s129 = sshll.u32 %s0, 4
          %s130 = int_to_ptr.hbm [resolvable:$true] %s129
          %s131 = sshll.u32 [#allocation3], 4
          %s132 = int_to_ptr.vmem [resolvable:$true] %s131
          %134 = dma.hbm_to_vmem [thread:$0]  %s130, 256, %s132, [#allocation4]
        $region16: #{tpu_custom_call.1} parent=11 // pred_fallthru
          _
        // Predicated region
        $region17: #{tpu_custom_call.1} parent=11 // pred_check
          %p135 = pneg %p56
        $region18: #{tpu_custom_call.1} parent=11 // pred_check_branch
          %137 = sbr.rel (%p135) target = $region20
        $region19: #{tpu_custom_call.1} parent=11 // pred_region
          %139 = vsyncadd [#allocation7], 0
          %s140 = sshll.u32 %s1, 4
          %s141 = int_to_ptr.hbm [resolvable:$true] %s140
          %s142 = sshll.u32 [#allocation6], 4
          %s143 = int_to_ptr.vmem [resolvable:$true] %s142
          %148 = dma.hbm_to_vmem [thread:$0]  %s141, 4224, %s143, [#allocation7], 128, 128, 8
        $region20: #{tpu_custom_call.1} parent=11 // pred_fallthru
          _
      $region12: #{tpu_custom_call.1} parent=5 // pred_fallthru
        _
      %p149 = scmp.lt.s32.totalorder %s14, 2
      // Predicated region
      $region21: #{tpu_custom_call.1} parent=5 // pred_check
        %p150 = pneg %p149
      $region22: #{tpu_custom_call.1} parent=5 // pred_check_branch
        %152 = sbr.rel (%p150) target = $region24
      $region23: #{tpu_custom_call.1} parent=5 // pred_region
        // Predicated region
        $region25: #{tpu_custom_call.1} parent=23 // pred_check
          %p153 = pneg %p76
        $region26: #{tpu_custom_call.1} parent=23 // pred_check_branch
          %155 = sbr.rel (%p153) target = $region28
        $region27: #{tpu_custom_call.1} parent=23 // pred_region
          %s156 = sand.u32 %s14, 1
          %s157 = scalar_lea.sflag [#allocation4], %s156
          %s158 = sand.u32 %s66, 1
          %s159 = smul.addr %s158, 512
          %s160 = scalar_lea.vmem [#allocation8], %s159
          %162 = vsyncadd %s157, 0
          %s163 = smul.addr %s14, 64
          %s164 = smul.addr %s163, 8
          %s165 = scalar_lea.hbm %s2, %s164
          %s166 = sshll.u32 %s165, 4
          %s167 = int_to_ptr.hbm [resolvable:$true] %s166
          %s168 = sshll.u32 %s160, 4
          %s169 = int_to_ptr.vmem [resolvable:$true] %s168
          %174 = dma.hbm_to_vmem [thread:$0]  %s167, 8192, %s169, %s157, 1024, 1024, 64
        $region28: #{tpu_custom_call.1} parent=23 // pred_fallthru
          _
      $region24: #{tpu_custom_call.1} parent=5 // pred_fallthru
        _
      %p175 = scmp.le.s32.totalorder 1, %s14
      %p176 = scmp.lt.s32.totalorder %s14, 3
      %p177 = pnand %p175, %p176
      %p178 = pneg %p177
      // Predicated region
      $region29: #{tpu_custom_call.1} parent=5 // pred_check
        _
      $region30: #{tpu_custom_call.1} parent=5 // pred_check_branch
        %180 = sbr.rel (%p177) target = $region32
      $region31: #{tpu_custom_call.1} parent=5 // pred_region
        %s181 = ssub.s32 %s14, 1
        // Predicated region
        $region33: #{tpu_custom_call.1} parent=31 // pred_check
          %p182 = pneg %p35
        $region34: #{tpu_custom_call.1} parent=31 // pred_check_branch
          %184 = sbr.rel (%p182) target = $region36
        $region35: #{tpu_custom_call.1} parent=31 // pred_region
          %186 = dma.done [#allocation4], 256
        $region36: #{tpu_custom_call.1} parent=31 // pred_fallthru
          _
        // Predicated region
        $region37: #{tpu_custom_call.1} parent=31 // pred_check
          %p187 = pneg %p56
        $region38: #{tpu_custom_call.1} parent=31 // pred_check_branch
          %189 = sbr.rel (%p187) target = $region40
        $region39: #{tpu_custom_call.1} parent=31 // pred_region
          %191 = dma.done [#allocation7], 4224
        $region40: #{tpu_custom_call.1} parent=31 // pred_fallthru
          _
        %s192 = sand.u32 %s19, 1
        %s193 = scalar_lea.sflag [#allocation4], %s192
        %s194 = sand.u32 %s69, 1
        %s195 = smul.addr %s194, 512
        %s196 = scalar_lea.vmem [#allocation8], %s195
        // Predicated region
        $region41: #{tpu_custom_call.1} parent=31 // pred_check
          %p197 = pneg %p82
        $region42: #{tpu_custom_call.1} parent=31 // pred_check_branch
          %199 = sbr.rel (%p197) target = $region44
        $region43: #{tpu_custom_call.1} parent=31 // pred_region
          %201 = dma.done %s193, 8192
        $region44: #{tpu_custom_call.1} parent=31 // pred_fallthru
          _
        %p202 = pneg %p35
        %p203 = pneg %p32
        %p204 = pneg %p56
        %p205 = pneg %p53
        %s206 = sand.u32 %s19, 1
        %s207 = scalar_lea.sflag [#allocation4], %s206
        %s208 = sand.u32 %s69, 1
        %s209 = smul.addr %s208, 512
        %s210 = scalar_lea.vmem [#allocation8], %s209
        %p211 = pneg %p82
        %p212 = pneg %p79
        %p213 = pneg %p108
        %p214 = pneg %p105
        %s215 = sand.u32 %s95, 1
        %s216 = scalar_lea.sflag [#allocation5], %s215
        %s217 = sand.u32 %s95, 1
        %s218 = smul.addr %s217, 512
        %s219 = scalar_lea.vmem [#allocation9], %s218
        %v220 = vld [vmem:[%s196] sm:$0xff]
        %v221 = vld [vmem:[%s196 + $0x8] sm:$0xff]
        %v222 = vld [vmem:[%s196 + $0x10] sm:$0xff]
        %v223 = vld [vmem:[%s196 + $0x18] sm:$0xff]
        %v224 = vld [vmem:[%s196 + $0x20] sm:$0xff]
        %v225 = vld [vmem:[%s196 + $0x28] sm:$0xff]
        %v226 = vld [vmem:[%s196 + $0x30] sm:$0xff]
        %v227 = vld [vmem:[%s196 + $0x38] sm:$0xff]
        %s228 = scalar_lea.vmem %s196, 64 [#allocation8]
        %v229 = vld [vmem:[%s228] sm:$0xff]
        %v230 = vld [vmem:[%s228 + $0x8] sm:$0xff]
        %v231 = vld [vmem:[%s228 + $0x10] sm:$0xff]
        %v232 = vld [vmem:[%s228 + $0x18] sm:$0xff]
        %v233 = vld [vmem:[%s228 + $0x20] sm:$0xff]
        %v234 = vld [vmem:[%s228 + $0x28] sm:$0xff]
        %v235 = vld [vmem:[%s228 + $0x30] sm:$0xff]
        %v236 = vld [vmem:[%s228 + $0x38] sm:$0xff]
        %v237 = vadd.f32 %v220, %v229
        %v238 = vadd.f32 %v221, %v230
        %v239 = vadd.f32 %v222, %v231
        %v240 = vadd.f32 %v223, %v232
        %v241 = vadd.f32 %v224, %v233
        %v242 = vadd.f32 %v225, %v234
        %v243 = vadd.f32 %v226, %v235
        %v244 = vadd.f32 %v227, %v236
        %s245 = scalar_lea.vmem %s196, 128 [#allocation8]
        %v246 = vld [vmem:[%s245] sm:$0xff]
        %v247 = vld [vmem:[%s245 + $0x8] sm:$0xff]
        %v248 = vld [vmem:[%s245 + $0x10] sm:$0xff]
        %v249 = vld [vmem:[%s245 + $0x18] sm:$0xff]
        %v250 = vld [vmem:[%s245 + $0x20] sm:$0xff]
        %v251 = vld [vmem:[%s245 + $0x28] sm:$0xff]
        %v252 = vld [vmem:[%s245 + $0x30] sm:$0xff]
        %v253 = vld [vmem:[%s245 + $0x38] sm:$0xff]
        %v254 = vadd.f32 %v237, %v246
        %v255 = vadd.f32 %v238, %v247
        %v256 = vadd.f32 %v239, %v248
        %v257 = vadd.f32 %v240, %v249
        %v258 = vadd.f32 %v241, %v250
        %v259 = vadd.f32 %v242, %v251
        %v260 = vadd.f32 %v243, %v252
        %v261 = vadd.f32 %v244, %v253
        %s262 = scalar_lea.vmem %s196, 192 [#allocation8]
        %v263 = vld [vmem:[%s262] sm:$0xff]
        %v264 = vld [vmem:[%s262 + $0x8] sm:$0xff]
        %v265 = vld [vmem:[%s262 + $0x10] sm:$0xff]
        %v266 = vld [vmem:[%s262 + $0x18] sm:$0xff]
        %v267 = vld [vmem:[%s262 + $0x20] sm:$0xff]
        %v268 = vld [vmem:[%s262 + $0x28] sm:$0xff]
        %v269 = vld [vmem:[%s262 + $0x30] sm:$0xff]
        %v270 = vld [vmem:[%s262 + $0x38] sm:$0xff]
        %v271 = vadd.f32 %v254, %v263
        %v272 = vadd.f32 %v255, %v264
        %v273 = vadd.f32 %v256, %v265
        %v274 = vadd.f32 %v257, %v266
        %v275 = vadd.f32 %v258, %v267
        %v276 = vadd.f32 %v259, %v268
        %v277 = vadd.f32 %v260, %v269
        %v278 = vadd.f32 %v261, %v270
        %s279 = scalar_lea.vmem %s196, 256 [#allocation8]
        %v280 = vld [vmem:[%s279] sm:$0xff]
        %v281 = vld [vmem:[%s279 + $0x8] sm:$0xff]
        %v282 = vld [vmem:[%s279 + $0x10] sm:$0xff]
        %v283 = vld [vmem:[%s279 + $0x18] sm:$0xff]
        %v284 = vld [vmem:[%s279 + $0x20] sm:$0xff]
        %v285 = vld [vmem:[%s279 + $0x28] sm:$0xff]
        %v286 = vld [vmem:[%s279 + $0x30] sm:$0xff]
        %v287 = vld [vmem:[%s279 + $0x38] sm:$0xff]
        %v288 = vadd.f32 %v271, %v280
        %v289 = vadd.f32 %v272, %v281
        %v290 = vadd.f32 %v273, %v282
        %v291 = vadd.f32 %v274, %v283
        %v292 = vadd.f32 %v275, %v284
        %v293 = vadd.f32 %v276, %v285
        %v294 = vadd.f32 %v277, %v286
        %v295 = vadd.f32 %v278, %v287
        %s296 = scalar_lea.vmem %s196, 320 [#allocation8]
        %v297 = vld [vmem:[%s296] sm:$0xff]
        %v298 = vld [vmem:[%s296 + $0x8] sm:$0xff]
        %v299 = vld [vmem:[%s296 + $0x10] sm:$0xff]
        %v300 = vld [vmem:[%s296 + $0x18] sm:$0xff]
        %v301 = vld [vmem:[%s296 + $0x20] sm:$0xff]
        %v302 = vld [vmem:[%s296 + $0x28] sm:$0xff]
        %v303 = vld [vmem:[%s296 + $0x30] sm:$0xff]
        %v304 = vld [vmem:[%s296 + $0x38] sm:$0xff]
        %v305 = vadd.f32 %v288, %v297
        %v306 = vadd.f32 %v289, %v298
        %v307 = vadd.f32 %v290, %v299
        %v308 = vadd.f32 %v291, %v300
        %v309 = vadd.f32 %v292, %v301
        %v310 = vadd.f32 %v293, %v302
        %v311 = vadd.f32 %v294, %v303
        %v312 = vadd.f32 %v295, %v304
        %s313 = scalar_lea.vmem %s196, 384 [#allocation8]
        %v314 = vld [vmem:[%s313] sm:$0xff]
        %v315 = vld [vmem:[%s313 + $0x8] sm:$0xff]
        %v316 = vld [vmem:[%s313 + $0x10] sm:$0xff]
        %v317 = vld [vmem:[%s313 + $0x18] sm:$0xff]
        %v318 = vld [vmem:[%s313 + $0x20] sm:$0xff]
        %v319 = vld [vmem:[%s313 + $0x28] sm:$0xff]
        %v320 = vld [vmem:[%s313 + $0x30] sm:$0xff]
        %v321 = vld [vmem:[%s313 + $0x38] sm:$0xff]
        %v322 = vadd.f32 %v305, %v314
        %v323 = vadd.f32 %v306, %v315
        %v324 = vadd.f32 %v307, %v316
        %v325 = vadd.f32 %v308, %v317
        %v326 = vadd.f32 %v309, %v318
        %v327 = vadd.f32 %v310, %v319
        %v328 = vadd.f32 %v311, %v320
        %v329 = vadd.f32 %v312, %v321
        %s330 = scalar_lea.vmem %s196, 448 [#allocation8]
        %v331 = vld [vmem:[%s330] sm:$0xff]
        %v332 = vld [vmem:[%s330 + $0x8] sm:$0xff]
        %v333 = vld [vmem:[%s330 + $0x10] sm:$0xff]
        %v334 = vld [vmem:[%s330 + $0x18] sm:$0xff]
        %v335 = vld [vmem:[%s330 + $0x20] sm:$0xff]
        %v336 = vld [vmem:[%s330 + $0x28] sm:$0xff]
        %v337 = vld [vmem:[%s330 + $0x30] sm:$0xff]
        %v338 = vld [vmem:[%s330 + $0x38] sm:$0xff]
        %v339 = vadd.f32 %v322, %v331
        %v340 = vadd.f32 %v323, %v332
        %v341 = vadd.f32 %v324, %v333
        %v342 = vadd.f32 %v325, %v334
        %v343 = vadd.f32 %v326, %v335
        %v344 = vadd.f32 %v327, %v336
        %v345 = vadd.f32 %v328, %v337
        %v346 = vadd.f32 %v329, %v338
        %v347 = vmul.f32 %v339, 0.125
        %v348 = vmul.f32 %v340, 0.125
        %v349 = vmul.f32 %v341, 0.125
        %v350 = vmul.f32 %v342, 0.125
        %v351 = vmul.f32 %v343, 0.125
        %v352 = vmul.f32 %v344, 0.125
        %v353 = vmul.f32 %v345, 0.125
        %v354 = vmul.f32 %v346, 0.125
        %355 = vrot.lane.b32.xlu0 %v347, 17
        %v356 = vpop.permute.xlu0 %355
        %357 = vrot.lane.b32.xlu0 %v348, 17
        %v358 = vpop.permute.xlu0 %357
        %359 = vrot.lane.b32.xlu0 %v349, 17
        %v360 = vpop.permute.xlu0 %359
        %361 = vrot.lane.b32.xlu0 %v350, 17
        %v362 = vpop.permute.xlu0 %361
        %363 = vrot.lane.b32.xlu0 %v351, 17
        %v364 = vpop.permute.xlu0 %363
        %365 = vrot.lane.b32.xlu0 %v352, 17
        %v366 = vpop.permute.xlu0 %365
        %367 = vrot.lane.b32.xlu0 %v353, 17
        %v368 = vpop.permute.xlu0 %367
        %369 = vrot.lane.b32.xlu0 %v354, 17
        %v370 = vpop.permute.xlu0 %369
        %v371 = vlaneseq
        %v372 = vand.u32 %v371, 127
        %vm373 = vcmp.lt.s32.totalorder %v372, 17
        %v374 = vsel %vm373, %v368, %v370
        %v375 = vsel %vm373, %v366, %v368
        %v376 = vsel %vm373, %v364, %v366
        %v377 = vsel %vm373, %v362, %v364
        %v378 = vsel %vm373, %v360, %v362
        %v379 = vsel %vm373, %v358, %v360
        %v380 = vsel %vm373, %v356, %v358
        %v381 = vsel %vm373, %v370, %v356
        %v382 = vld [vmem:[#allocation6] sm:$0xff]
        %v384 = vperm.slane %v382, 0
        %v385 = vperm.slane %v382, 1
        %v386 = vperm.slane %v382, 2
        %v387 = vperm.slane %v382, 3
        %v388 = vperm.slane %v382, 4
        %v389 = vperm.slane %v382, 5
        %v390 = vperm.slane %v382, 6
        %v391 = vperm.slane %v382, 7
        %v400 = vmul.f32 %v374, %v384
        %v401 = vmul.f32 %v381, %v385
        %v402 = vmul.f32 %v380, %v386
        %v403 = vmul.f32 %v379, %v387
        %v404 = vmul.f32 %v378, %v388
        %v405 = vmul.f32 %v377, %v389
        %v406 = vmul.f32 %v376, %v390
        %v407 = vmul.f32 %v375, %v391
        %408 = vst [vmem:[#allocation2] sm:$0xff] %v400
        %409 = vst [vmem:[#allocation2 + $0x8] sm:$0xff] %v401
        %410 = vst [vmem:[#allocation2 + $0x10] sm:$0xff] %v402
        %411 = vst [vmem:[#allocation2 + $0x18] sm:$0xff] %v403
        %412 = vst [vmem:[#allocation2 + $0x20] sm:$0xff] %v404
        %413 = vst [vmem:[#allocation2 + $0x28] sm:$0xff] %v405
        %414 = vst [vmem:[#allocation2 + $0x30] sm:$0xff] %v406
        %415 = vst [vmem:[#allocation2 + $0x38] sm:$0xff] %v407
        %416 = vrot.lane.b32.xlu0 %v347, 16
        %v417 = vpop.permute.xlu0 %416
        %418 = vrot.lane.b32.xlu0 %v348, 16
        %v419 = vpop.permute.xlu0 %418
        %420 = vrot.lane.b32.xlu0 %v349, 16
        %v421 = vpop.permute.xlu0 %420
        %422 = vrot.lane.b32.xlu0 %v350, 16
        %v423 = vpop.permute.xlu0 %422
        %424 = vrot.lane.b32.xlu0 %v351, 16
        %v425 = vpop.permute.xlu0 %424
        %426 = vrot.lane.b32.xlu0 %v352, 16
        %v427 = vpop.permute.xlu0 %426
        %428 = vrot.lane.b32.xlu0 %v353, 16
        %v429 = vpop.permute.xlu0 %428
        %430 = vrot.lane.b32.xlu0 %v354, 16
        %v431 = vpop.permute.xlu0 %430
        %vm432 = vcmp.lt.s32.totalorder %v372, 16
        %v433 = vsel %vm432, %v429, %v431
        %v434 = vsel %vm432, %v427, %v429
        %v435 = vsel %vm432, %v425, %v427
        %v436 = vsel %vm432, %v423, %v425
        %v437 = vsel %vm432, %v421, %v423
        %v438 = vsel %vm432, %v419, %v421
        %v439 = vsel %vm432, %v417, %v419
        %v440 = vsel %vm432, %v431, %v417
        %s441 = scalar_lea.vmem [#allocation6], 8
        %v442 = vld [vmem:[%s441] sm:$0xff]
        %v444 = vperm.slane %v442, 0
        %v445 = vperm.slane %v442, 1
        %v446 = vperm.slane %v442, 2
        %v447 = vperm.slane %v442, 3
        %v448 = vperm.slane %v442, 4
        %v449 = vperm.slane %v442, 5
        %v450 = vperm.slane %v442, 6
        %v451 = vperm.slane %v442, 7
        %v460 = vmul.f32 %v433, %v444
        %v461 = vmul.f32 %v440, %v445
        %v462 = vmul.f32 %v439, %v446
        %v463 = vmul.f32 %v438, %v447
        %v464 = vmul.f32 %v437, %v448
        %v465 = vmul.f32 %v436, %v449
        %v466 = vmul.f32 %v435, %v450
        %v467 = vmul.f32 %v434, %v451
        %468 = vst [vmem:[#allocation2 + $0x40] sm:$0xff] %v460
        %469 = vst [vmem:[#allocation2 + $0x48] sm:$0xff] %v461
        %470 = vst [vmem:[#allocation2 + $0x50] sm:$0xff] %v462
        %471 = vst [vmem:[#allocation2 + $0x58] sm:$0xff] %v463
        %472 = vst [vmem:[#allocation2 + $0x60] sm:$0xff] %v464
        %473 = vst [vmem:[#allocation2 + $0x68] sm:$0xff] %v465
        %474 = vst [vmem:[#allocation2 + $0x70] sm:$0xff] %v466
        %475 = vst [vmem:[#allocation2 + $0x78] sm:$0xff] %v467
        %476 = vrot.lane.b32.xlu0 %v347, 15
        %v477 = vpop.permute.xlu0 %476
        %478 = vrot.lane.b32.xlu0 %v348, 15
        %v479 = vpop.permute.xlu0 %478
        %480 = vrot.lane.b32.xlu0 %v349, 15
        %v481 = vpop.permute.xlu0 %480
        %482 = vrot.lane.b32.xlu0 %v350, 15
        %v483 = vpop.permute.xlu0 %482
        %484 = vrot.lane.b32.xlu0 %v351, 15
        %v485 = vpop.permute.xlu0 %484
        %486 = vrot.lane.b32.xlu0 %v352, 15
        %v487 = vpop.permute.xlu0 %486
        %488 = vrot.lane.b32.xlu0 %v353, 15
        %v489 = vpop.permute.xlu0 %488
        %490 = vrot.lane.b32.xlu0 %v354, 15
        %v491 = vpop.permute.xlu0 %490
        %vm492 = vcmp.lt.s32.totalorder %v372, 15
        %v493 = vsel %vm492, %v489, %v491
        %v494 = vsel %vm492, %v487, %v489
        %v495 = vsel %vm492, %v485, %v487
        %v496 = vsel %vm492, %v483, %v485
        %v497 = vsel %vm492, %v481, %v483
        %v498 = vsel %vm492, %v479, %v481
        %v499 = vsel %vm492, %v477, %v479
        %v500 = vsel %vm492, %v491, %v477
        %s501 = scalar_lea.vmem [#allocation6], 16
        %v502 = vld [vmem:[%s501] sm:$0xff]
        %v504 = vperm.slane %v502, 0
        %v505 = vperm.slane %v502, 1
        %v506 = vperm.slane %v502, 2
        %v507 = vperm.slane %v502, 3
        %v508 = vperm.slane %v502, 4
        %v509 = vperm.slane %v502, 5
        %v510 = vperm.slane %v502, 6
        %v511 = vperm.slane %v502, 7
        %v520 = vmul.f32 %v493, %v504
        %v521 = vmul.f32 %v500, %v505
        %v522 = vmul.f32 %v499, %v506
        %v523 = vmul.f32 %v498, %v507
        %v524 = vmul.f32 %v497, %v508
        %v525 = vmul.f32 %v496, %v509
        %v526 = vmul.f32 %v495, %v510
        %v527 = vmul.f32 %v494, %v511
        %528 = vst [vmem:[#allocation2 + $0x80] sm:$0xff] %v520
        %529 = vst [vmem:[#allocation2 + $0x88] sm:$0xff] %v521
        %530 = vst [vmem:[#allocation2 + $0x90] sm:$0xff] %v522
        %531 = vst [vmem:[#allocation2 + $0x98] sm:$0xff] %v523
        %532 = vst [vmem:[#allocation2 + $0xa0] sm:$0xff] %v524
        %533 = vst [vmem:[#allocation2 + $0xa8] sm:$0xff] %v525
        %534 = vst [vmem:[#allocation2 + $0xb0] sm:$0xff] %v526
        %535 = vst [vmem:[#allocation2 + $0xb8] sm:$0xff] %v527
        %536 = vrot.lane.b32.xlu0 %v347, 1
        %v537 = vpop.permute.xlu0 %536
        %538 = vrot.lane.b32.xlu0 %v348, 1
        %v539 = vpop.permute.xlu0 %538
        %540 = vrot.lane.b32.xlu0 %v349, 1
        %v541 = vpop.permute.xlu0 %540
        %542 = vrot.lane.b32.xlu0 %v350, 1
        %v543 = vpop.permute.xlu0 %542
        %544 = vrot.lane.b32.xlu0 %v351, 1
        %v545 = vpop.permute.xlu0 %544
        %546 = vrot.lane.b32.xlu0 %v352, 1
        %v547 = vpop.permute.xlu0 %546
        %548 = vrot.lane.b32.xlu0 %v353, 1
        %v549 = vpop.permute.xlu0 %548
        %550 = vrot.lane.b32.xlu0 %v354, 1
        %v551 = vpop.permute.xlu0 %550
        %vm552 = vcmp.lt.s32.totalorder %v372, 1
        %v553 = vsel %vm552, %v549, %v551
        %v554 = vsel %vm552, %v547, %v549
        %v555 = vsel %vm552, %v545, %v547
        %v556 = vsel %vm552, %v543, %v545
        %v557 = vsel %vm552, %v541, %v543
        %v558 = vsel %vm552, %v539, %v541
        %v559 = vsel %vm552, %v537, %v539
        %v560 = vsel %vm552, %v551, %v537
        %s561 = scalar_lea.vmem [#allocation6], 24
        %v562 = vld [vmem:[%s561] sm:$0xff]
        %v564 = vperm.slane %v562, 0
        %v565 = vperm.slane %v562, 1
        %v566 = vperm.slane %v562, 2
        %v567 = vperm.slane %v562, 3
        %v568 = vperm.slane %v562, 4
        %v569 = vperm.slane %v562, 5
        %v570 = vperm.slane %v562, 6
        %v571 = vperm.slane %v562, 7
        %v580 = vmul.f32 %v553, %v564
        %v581 = vmul.f32 %v560, %v565
        %v582 = vmul.f32 %v559, %v566
        %v583 = vmul.f32 %v558, %v567
        %v584 = vmul.f32 %v557, %v568
        %v585 = vmul.f32 %v556, %v569
        %v586 = vmul.f32 %v555, %v570
        %v587 = vmul.f32 %v554, %v571
        %588 = vst [vmem:[#allocation2 + $0xc0] sm:$0xff] %v580
        %589 = vst [vmem:[#allocation2 + $0xc8] sm:$0xff] %v581
        %590 = vst [vmem:[#allocation2 + $0xd0] sm:$0xff] %v582
        %591 = vst [vmem:[#allocation2 + $0xd8] sm:$0xff] %v583
        %592 = vst [vmem:[#allocation2 + $0xe0] sm:$0xff] %v584
        %593 = vst [vmem:[#allocation2 + $0xe8] sm:$0xff] %v585
        %594 = vst [vmem:[#allocation2 + $0xf0] sm:$0xff] %v586
        %595 = vst [vmem:[#allocation2 + $0xf8] sm:$0xff] %v587
        %s596 = scalar_lea.vmem [#allocation6], 32
        %v597 = vld [vmem:[%s596] sm:$0xff]
        %v599 = vperm.slane %v597, 0
        %v600 = vperm.slane %v597, 1
        %v601 = vperm.slane %v597, 2
        %v602 = vperm.slane %v597, 3
        %v603 = vperm.slane %v597, 4
        %v604 = vperm.slane %v597, 5
        %v605 = vperm.slane %v597, 6
        %v606 = vperm.slane %v597, 7
        %v615 = vmul.f32 %v354, %v599
        %v616 = vmul.f32 %v347, %v600
        %v617 = vmul.f32 %v348, %v601
        %v618 = vmul.f32 %v349, %v602
        %v619 = vmul.f32 %v350, %v603
        %v620 = vmul.f32 %v351, %v604
        %v621 = vmul.f32 %v352, %v605
        %v622 = vmul.f32 %v353, %v606
        %623 = vst [vmem:[#allocation2 + $0x100] sm:$0xff] %v615
        %624 = vst [vmem:[#allocation2 + $0x108] sm:$0xff] %v616
        %625 = vst [vmem:[#allocation2 + $0x110] sm:$0xff] %v617
        %626 = vst [vmem:[#allocation2 + $0x118] sm:$0xff] %v618
        %627 = vst [vmem:[#allocation2 + $0x120] sm:$0xff] %v619
        %628 = vst [vmem:[#allocation2 + $0x128] sm:$0xff] %v620
        %629 = vst [vmem:[#allocation2 + $0x130] sm:$0xff] %v621
        %630 = vst [vmem:[#allocation2 + $0x138] sm:$0xff] %v622
        %631 = vrot.lane.b32.xlu0 %v347, 127
        %v632 = vpop.permute.xlu0 %631
        %633 = vrot.lane.b32.xlu0 %v348, 127
        %v634 = vpop.permute.xlu0 %633
        %635 = vrot.lane.b32.xlu0 %v349, 127
        %v636 = vpop.permute.xlu0 %635
        %637 = vrot.lane.b32.xlu0 %v350, 127
        %v638 = vpop.permute.xlu0 %637
        %639 = vrot.lane.b32.xlu0 %v351, 127
        %v640 = vpop.permute.xlu0 %639
        %641 = vrot.lane.b32.xlu0 %v352, 127
        %v642 = vpop.permute.xlu0 %641
        %643 = vrot.lane.b32.xlu0 %v353, 127
        %v644 = vpop.permute.xlu0 %643
        %645 = vrot.lane.b32.xlu0 %v354, 127
        %v646 = vpop.permute.xlu0 %645
        %vm647 = vcmp.lt.s32.totalorder %v372, 127
        %v648 = vsel %vm647, %v644, %v646
        %v649 = vsel %vm647, %v642, %v644
        %v650 = vsel %vm647, %v640, %v642
        %v651 = vsel %vm647, %v638, %v640
        %v652 = vsel %vm647, %v636, %v638
        %v653 = vsel %vm647, %v634, %v636
        %v654 = vsel %vm647, %v632, %v634
        %v655 = vsel %vm647, %v646, %v632
        %s656 = scalar_lea.vmem [#allocation6], 40
        %v657 = vld [vmem:[%s656] sm:$0xff]
        %v659 = vperm.slane %v657, 0
        %v660 = vperm.slane %v657, 1
        %v661 = vperm.slane %v657, 2
        %v662 = vperm.slane %v657, 3
        %v663 = vperm.slane %v657, 4
        %v664 = vperm.slane %v657, 5
        %v665 = vperm.slane %v657, 6
        %v666 = vperm.slane %v657, 7
        %v675 = vmul.f32 %v655, %v659
        %v676 = vmul.f32 %v654, %v660
        %v677 = vmul.f32 %v653, %v661
        %v678 = vmul.f32 %v652, %v662
        %v679 = vmul.f32 %v651, %v663
        %v680 = vmul.f32 %v650, %v664
        %v681 = vmul.f32 %v649, %v665
        %v682 = vmul.f32 %v648, %v666
        %683 = vst [vmem:[#allocation2 + $0x140] sm:$0xff] %v675
        %684 = vst [vmem:[#allocation2 + $0x148] sm:$0xff] %v676
        %685 = vst [vmem:[#allocation2 + $0x150] sm:$0xff] %v677
        %686 = vst [vmem:[#allocation2 + $0x158] sm:$0xff] %v678
        %687 = vst [vmem:[#allocation2 + $0x160] sm:$0xff] %v679
        %688 = vst [vmem:[#allocation2 + $0x168] sm:$0xff] %v680
        %689 = vst [vmem:[#allocation2 + $0x170] sm:$0xff] %v681
        %690 = vst [vmem:[#allocation2 + $0x178] sm:$0xff] %v682
        %691 = vrot.lane.b32.xlu0 %v347, 113
        %v692 = vpop.permute.xlu0 %691
        %693 = vrot.lane.b32.xlu0 %v348, 113
        %v694 = vpop.permute.xlu0 %693
        %695 = vrot.lane.b32.xlu0 %v349, 113
        %v696 = vpop.permute.xlu0 %695
        %697 = vrot.lane.b32.xlu0 %v350, 113
        %v698 = vpop.permute.xlu0 %697
        %699 = vrot.lane.b32.xlu0 %v351, 113
        %v700 = vpop.permute.xlu0 %699
        %701 = vrot.lane.b32.xlu0 %v352, 113
        %v702 = vpop.permute.xlu0 %701
        %703 = vrot.lane.b32.xlu0 %v353, 113
        %v704 = vpop.permute.xlu0 %703
        %705 = vrot.lane.b32.xlu0 %v354, 113
        %v706 = vpop.permute.xlu0 %705
        %vm707 = vcmp.lt.s32.totalorder %v372, 113
        %v708 = vsel %vm707, %v704, %v706
        %v709 = vsel %vm707, %v702, %v704
        %v710 = vsel %vm707, %v700, %v702
        %v711 = vsel %vm707, %v698, %v700
        %v712 = vsel %vm707, %v696, %v698
        %v713 = vsel %vm707, %v694, %v696
        %v714 = vsel %vm707, %v692, %v694
        %v715 = vsel %vm707, %v706, %v692
        %s716 = scalar_lea.vmem [#allocation6], 48
        %v717 = vld [vmem:[%s716] sm:$0xff]
        %v719 = vperm.slane %v717, 0
        %v720 = vperm.slane %v717, 1
        %v721 = vperm.slane %v717, 2
        %v722 = vperm.slane %v717, 3
        %v723 = vperm.slane %v717, 4
        %v724 = vperm.slane %v717, 5
        %v725 = vperm.slane %v717, 6
        %v726 = vperm.slane %v717, 7
        %v735 = vmul.f32 %v715, %v719
        %v736 = vmul.f32 %v714, %v720
        %v737 = vmul.f32 %v713, %v721
        %v738 = vmul.f32 %v712, %v722
        %v739 = vmul.f32 %v711, %v723
        %v740 = vmul.f32 %v710, %v724
        %v741 = vmul.f32 %v709, %v725
        %v742 = vmul.f32 %v708, %v726
        %743 = vst [vmem:[#allocation2 + $0x180] sm:$0xff] %v735
        %744 = vst [vmem:[#allocation2 + $0x188] sm:$0xff] %v736
        %745 = vst [vmem:[#allocation2 + $0x190] sm:$0xff] %v737
        %746 = vst [vmem:[#allocation2 + $0x198] sm:$0xff] %v738
        %747 = vst [vmem:[#allocation2 + $0x1a0] sm:$0xff] %v739
        %748 = vst [vmem:[#allocation2 + $0x1a8] sm:$0xff] %v740
        %749 = vst [vmem:[#allocation2 + $0x1b0] sm:$0xff] %v741
        %750 = vst [vmem:[#allocation2 + $0x1b8] sm:$0xff] %v742
        %751 = vrot.lane.b32.xlu0 %v347, 112
        %v752 = vpop.permute.xlu0 %751
        %753 = vrot.lane.b32.xlu0 %v348, 112
        %v754 = vpop.permute.xlu0 %753
        %755 = vrot.lane.b32.xlu0 %v349, 112
        %v756 = vpop.permute.xlu0 %755
        %757 = vrot.lane.b32.xlu0 %v350, 112
        %v758 = vpop.permute.xlu0 %757
        %759 = vrot.lane.b32.xlu0 %v351, 112
        %v760 = vpop.permute.xlu0 %759
        %761 = vrot.lane.b32.xlu0 %v352, 112
        %v762 = vpop.permute.xlu0 %761
        %763 = vrot.lane.b32.xlu0 %v353, 112
        %v764 = vpop.permute.xlu0 %763
        %765 = vrot.lane.b32.xlu0 %v354, 112
        %v766 = vpop.permute.xlu0 %765
        %vm767 = vcmp.lt.s32.totalorder %v372, 112
        %v768 = vsel %vm767, %v764, %v766
        %v769 = vsel %vm767, %v762, %v764
        %v770 = vsel %vm767, %v760, %v762
        %v771 = vsel %vm767, %v758, %v760
        %v772 = vsel %vm767, %v756, %v758
        %v773 = vsel %vm767, %v754, %v756
        %v774 = vsel %vm767, %v752, %v754
        %v775 = vsel %vm767, %v766, %v752
        %s776 = scalar_lea.vmem [#allocation6], 56
        %v777 = vld [vmem:[%s776] sm:$0xff]
        %v779 = vperm.slane %v777, 0
        %v780 = vperm.slane %v777, 1
        %v781 = vperm.slane %v777, 2
        %v782 = vperm.slane %v777, 3
        %v783 = vperm.slane %v777, 4
        %v784 = vperm.slane %v777, 5
        %v785 = vperm.slane %v777, 6
        %v786 = vperm.slane %v777, 7
        %v795 = vmul.f32 %v775, %v779
        %v796 = vmul.f32 %v774, %v780
        %v797 = vmul.f32 %v773, %v781
        %v798 = vmul.f32 %v772, %v782
        %v799 = vmul.f32 %v771, %v783
        %v800 = vmul.f32 %v770, %v784
        %v801 = vmul.f32 %v769, %v785
        %v802 = vmul.f32 %v768, %v786
        %803 = vst [vmem:[#allocation2 + $0x1c0] sm:$0xff] %v795
        %804 = vst [vmem:[#allocation2 + $0x1c8] sm:$0xff] %v796
        %805 = vst [vmem:[#allocation2 + $0x1d0] sm:$0xff] %v797
        %806 = vst [vmem:[#allocation2 + $0x1d8] sm:$0xff] %v798
        %807 = vst [vmem:[#allocation2 + $0x1e0] sm:$0xff] %v799
        %808 = vst [vmem:[#allocation2 + $0x1e8] sm:$0xff] %v800
        %809 = vst [vmem:[#allocation2 + $0x1f0] sm:$0xff] %v801
        %810 = vst [vmem:[#allocation2 + $0x1f8] sm:$0xff] %v802
        %811 = vrot.lane.b32.xlu0 %v347, 111
        %v812 = vpop.permute.xlu0 %811
        %813 = vrot.lane.b32.xlu0 %v348, 111
        %v814 = vpop.permute.xlu0 %813
        %815 = vrot.lane.b32.xlu0 %v349, 111
        %v816 = vpop.permute.xlu0 %815
        %817 = vrot.lane.b32.xlu0 %v350, 111
        %v818 = vpop.permute.xlu0 %817
        %819 = vrot.lane.b32.xlu0 %v351, 111
        %v820 = vpop.permute.xlu0 %819
        %821 = vrot.lane.b32.xlu0 %v352, 111
        %v822 = vpop.permute.xlu0 %821
        %823 = vrot.lane.b32.xlu0 %v353, 111
        %v824 = vpop.permute.xlu0 %823
        %825 = vrot.lane.b32.xlu0 %v354, 111
        %v826 = vpop.permute.xlu0 %825
        %vm827 = vcmp.lt.s32.totalorder %v372, 111
        %v828 = vsel %vm827, %v824, %v826
        %v829 = vsel %vm827, %v822, %v824
        %v830 = vsel %vm827, %v820, %v822
        %v831 = vsel %vm827, %v818, %v820
        %v832 = vsel %vm827, %v816, %v818
        %v833 = vsel %vm827, %v814, %v816
        %v834 = vsel %vm827, %v812, %v814
        %v835 = vsel %vm827, %v826, %v812
        %s836 = scalar_lea.vmem [#allocation6], 64
        %v837 = vld [vmem:[%s836] sm:$0xff]
        %v839 = vperm.slane %v837, 0
        %v840 = vperm.slane %v837, 1
        %v841 = vperm.slane %v837, 2
        %v842 = vperm.slane %v837, 3
        %v843 = vperm.slane %v837, 4
        %v844 = vperm.slane %v837, 5
        %v845 = vperm.slane %v837, 6
        %v846 = vperm.slane %v837, 7
        %v855 = vmul.f32 %v835, %v839
        %v856 = vmul.f32 %v834, %v840
        %v857 = vmul.f32 %v833, %v841
        %v858 = vmul.f32 %v832, %v842
        %v859 = vmul.f32 %v831, %v843
        %v860 = vmul.f32 %v830, %v844
        %v861 = vmul.f32 %v829, %v845
        %v862 = vmul.f32 %v828, %v846
        %863 = vst [vmem:[#allocation2 + $0x200] sm:$0xff] %v855
        %864 = vst [vmem:[#allocation2 + $0x208] sm:$0xff] %v856
        %865 = vst [vmem:[#allocation2 + $0x210] sm:$0xff] %v857
        %866 = vst [vmem:[#allocation2 + $0x218] sm:$0xff] %v858
        %867 = vst [vmem:[#allocation2 + $0x220] sm:$0xff] %v859
        %868 = vst [vmem:[#allocation2 + $0x228] sm:$0xff] %v860
        %869 = vst [vmem:[#allocation2 + $0x230] sm:$0xff] %v861
        %870 = vst [vmem:[#allocation2 + $0x238] sm:$0xff] %v862
        %s871 = scalar_lea.vmem [#allocation6], 72
        %v872 = vld [vmem:[%s871] sm:$0xff]
        %v874 = vperm.slane %v872, 0
        %v875 = vperm.slane %v872, 1
        %v876 = vperm.slane %v872, 2
        %v877 = vperm.slane %v872, 3
        %v878 = vperm.slane %v872, 4
        %v879 = vperm.slane %v872, 5
        %v880 = vperm.slane %v872, 6
        %v881 = vperm.slane %v872, 7
        %v890 = vmul.f32 %v381, %v874
        %v891 = vmul.f32 %v380, %v875
        %v892 = vmul.f32 %v379, %v876
        %v893 = vmul.f32 %v378, %v877
        %v894 = vmul.f32 %v377, %v878
        %v895 = vmul.f32 %v376, %v879
        %v896 = vmul.f32 %v375, %v880
        %v897 = vmul.f32 %v374, %v881
        %898 = vst [vmem:[#allocation2 + $0x240] sm:$0xff] %v890
        %899 = vst [vmem:[#allocation2 + $0x248] sm:$0xff] %v891
        %900 = vst [vmem:[#allocation2 + $0x250] sm:$0xff] %v892
        %901 = vst [vmem:[#allocation2 + $0x258] sm:$0xff] %v893
        %902 = vst [vmem:[#allocation2 + $0x260] sm:$0xff] %v894
        %903 = vst [vmem:[#allocation2 + $0x268] sm:$0xff] %v895
        %904 = vst [vmem:[#allocation2 + $0x270] sm:$0xff] %v896
        %905 = vst [vmem:[#allocation2 + $0x278] sm:$0xff] %v897
        %s906 = scalar_lea.vmem [#allocation6], 80
        %v907 = vld [vmem:[%s906] sm:$0xff]
        %v909 = vperm.slane %v907, 0
        %v910 = vperm.slane %v907, 1
        %v911 = vperm.slane %v907, 2
        %v912 = vperm.slane %v907, 3
        %v913 = vperm.slane %v907, 4
        %v914 = vperm.slane %v907, 5
        %v915 = vperm.slane %v907, 6
        %v916 = vperm.slane %v907, 7
        %v925 = vmul.f32 %v440, %v909
        %v926 = vmul.f32 %v439, %v910
        %v927 = vmul.f32 %v438, %v911
        %v928 = vmul.f32 %v437, %v912
        %v929 = vmul.f32 %v436, %v913
        %v930 = vmul.f32 %v435, %v914
        %v931 = vmul.f32 %v434, %v915
        %v932 = vmul.f32 %v433, %v916
        %933 = vst [vmem:[#allocation2 + $0x280] sm:$0xff] %v925
        %934 = vst [vmem:[#allocation2 + $0x288] sm:$0xff] %v926
        %935 = vst [vmem:[#allocation2 + $0x290] sm:$0xff] %v927
        %936 = vst [vmem:[#allocation2 + $0x298] sm:$0xff] %v928
        %937 = vst [vmem:[#allocation2 + $0x2a0] sm:$0xff] %v929
        %938 = vst [vmem:[#allocation2 + $0x2a8] sm:$0xff] %v930
        %939 = vst [vmem:[#allocation2 + $0x2b0] sm:$0xff] %v931
        %940 = vst [vmem:[#allocation2 + $0x2b8] sm:$0xff] %v932
        %s941 = scalar_lea.vmem [#allocation6], 88
        %v942 = vld [vmem:[%s941] sm:$0xff]
        %v944 = vperm.slane %v942, 0
        %v945 = vperm.slane %v942, 1
        %v946 = vperm.slane %v942, 2
        %v947 = vperm.slane %v942, 3
        %v948 = vperm.slane %v942, 4
        %v949 = vperm.slane %v942, 5
        %v950 = vperm.slane %v942, 6
        %v951 = vperm.slane %v942, 7
        %v960 = vmul.f32 %v500, %v944
        %v961 = vmul.f32 %v499, %v945
        %v962 = vmul.f32 %v498, %v946
        %v963 = vmul.f32 %v497, %v947
        %v964 = vmul.f32 %v496, %v948
        %v965 = vmul.f32 %v495, %v949
        %v966 = vmul.f32 %v494, %v950
        %v967 = vmul.f32 %v493, %v951
        %968 = vst [vmem:[#allocation2 + $0x2c0] sm:$0xff] %v960
        %969 = vst [vmem:[#allocation2 + $0x2c8] sm:$0xff] %v961
        %970 = vst [vmem:[#allocation2 + $0x2d0] sm:$0xff] %v962
        %971 = vst [vmem:[#allocation2 + $0x2d8] sm:$0xff] %v963
        %972 = vst [vmem:[#allocation2 + $0x2e0] sm:$0xff] %v964
        %973 = vst [vmem:[#allocation2 + $0x2e8] sm:$0xff] %v965
        %974 = vst [vmem:[#allocation2 + $0x2f0] sm:$0xff] %v966
        %975 = vst [vmem:[#allocation2 + $0x2f8] sm:$0xff] %v967
        %s976 = scalar_lea.vmem [#allocation6], 96
        %v977 = vld [vmem:[%s976] sm:$0xff]
        %v979 = vperm.slane %v977, 0
        %v980 = vperm.slane %v977, 1
        %v981 = vperm.slane %v977, 2
        %v982 = vperm.slane %v977, 3
        %v983 = vperm.slane %v977, 4
        %v984 = vperm.slane %v977, 5
        %v985 = vperm.slane %v977, 6
        %v986 = vperm.slane %v977, 7
        %v995 = vmul.f32 %v560, %v979
        %v996 = vmul.f32 %v559, %v980
        %v997 = vmul.f32 %v558, %v981
        %v998 = vmul.f32 %v557, %v982
        %v999 = vmul.f32 %v556, %v983
        %v1000 = vmul.f32 %v555, %v984
        %v1001 = vmul.f32 %v554, %v985
        %v1002 = vmul.f32 %v553, %v986
        %1003 = vst [vmem:[#allocation2 + $0x300] sm:$0xff] %v995
        %1004 = vst [vmem:[#allocation2 + $0x308] sm:$0xff] %v996
        %1005 = vst [vmem:[#allocation2 + $0x310] sm:$0xff] %v997
        %1006 = vst [vmem:[#allocation2 + $0x318] sm:$0xff] %v998
        %1007 = vst [vmem:[#allocation2 + $0x320] sm:$0xff] %v999
        %1008 = vst [vmem:[#allocation2 + $0x328] sm:$0xff] %v1000
        %1009 = vst [vmem:[#allocation2 + $0x330] sm:$0xff] %v1001
        %1010 = vst [vmem:[#allocation2 + $0x338] sm:$0xff] %v1002
        %1011 = vst [vmem:[#allocation2 + $0x340] sm:$0xff] %v347
        %1012 = vst [vmem:[#allocation2 + $0x348] sm:$0xff] %v348
        %1013 = vst [vmem:[#allocation2 + $0x350] sm:$0xff] %v349
        %1014 = vst [vmem:[#allocation2 + $0x358] sm:$0xff] %v350
        %1015 = vst [vmem:[#allocation2 + $0x360] sm:$0xff] %v351
        %1016 = vst [vmem:[#allocation2 + $0x368] sm:$0xff] %v352
        %1017 = vst [vmem:[#allocation2 + $0x370] sm:$0xff] %v353
        %1018 = vst [vmem:[#allocation2 + $0x378] sm:$0xff] %v354
        %s1019 = scalar_lea.vmem [#allocation6], 112
        %v1020 = vld [vmem:[%s1019] sm:$0xff]
        %v1022 = vperm.slane %v1020, 0
        %v1023 = vperm.slane %v1020, 1
        %v1024 = vperm.slane %v1020, 2
        %v1025 = vperm.slane %v1020, 3
        %v1026 = vperm.slane %v1020, 4
        %v1027 = vperm.slane %v1020, 5
        %v1028 = vperm.slane %v1020, 6
        %v1029 = vperm.slane %v1020, 7
        %v1038 = vmul.f32 %v654, %v1022
        %v1039 = vmul.f32 %v653, %v1023
        %v1040 = vmul.f32 %v652, %v1024
        %v1041 = vmul.f32 %v651, %v1025
        %v1042 = vmul.f32 %v650, %v1026
        %v1043 = vmul.f32 %v649, %v1027
        %v1044 = vmul.f32 %v648, %v1028
        %v1045 = vmul.f32 %v655, %v1029
        %1046 = vst [vmem:[#allocation2 + $0x380] sm:$0xff] %v1038
        %1047 = vst [vmem:[#allocation2 + $0x388] sm:$0xff] %v1039
        %1048 = vst [vmem:[#allocation2 + $0x390] sm:$0xff] %v1040
        %1049 = vst [vmem:[#allocation2 + $0x398] sm:$0xff] %v1041
        %1050 = vst [vmem:[#allocation2 + $0x3a0] sm:$0xff] %v1042
        %1051 = vst [vmem:[#allocation2 + $0x3a8] sm:$0xff] %v1043
        %1052 = vst [vmem:[#allocation2 + $0x3b0] sm:$0xff] %v1044
        %1053 = vst [vmem:[#allocation2 + $0x3b8] sm:$0xff] %v1045
        %s1054 = scalar_lea.vmem [#allocation6], 120
        %v1055 = vld [vmem:[%s1054] sm:$0xff]
        %v1057 = vperm.slane %v1055, 0
        %v1058 = vperm.slane %v1055, 1
        %v1059 = vperm.slane %v1055, 2
        %v1060 = vperm.slane %v1055, 3
        %v1061 = vperm.slane %v1055, 4
        %v1062 = vperm.slane %v1055, 5
        %v1063 = vperm.slane %v1055, 6
        %v1064 = vperm.slane %v1055, 7
        %v1073 = vmul.f32 %v714, %v1057
        %v1074 = vmul.f32 %v713, %v1058
        %v1075 = vmul.f32 %v712, %v1059
        %v1076 = vmul.f32 %v711, %v1060
        %v1077 = vmul.f32 %v710, %v1061
        %v1078 = vmul.f32 %v709, %v1062
        %v1079 = vmul.f32 %v708, %v1063
        %v1080 = vmul.f32 %v715, %v1064
        %1081 = vst [vmem:[#allocation2 + $0x3c0] sm:$0xff] %v1073
        %1082 = vst [vmem:[#allocation2 + $0x3c8] sm:$0xff] %v1074
        %1083 = vst [vmem:[#allocation2 + $0x3d0] sm:$0xff] %v1075
        %1084 = vst [vmem:[#allocation2 + $0x3d8] sm:$0xff] %v1076
        %1085 = vst [vmem:[#allocation2 + $0x3e0] sm:$0xff] %v1077
        %1086 = vst [vmem:[#allocation2 + $0x3e8] sm:$0xff] %v1078
        %1087 = vst [vmem:[#allocation2 + $0x3f0] sm:$0xff] %v1079
        %1088 = vst [vmem:[#allocation2 + $0x3f8] sm:$0xff] %v1080
        %s1089 = scalar_lea.vmem [#allocation6], 128
        %v1090 = vld [vmem:[%s1089] sm:$0xff]
        %v1092 = vperm.slane %v1090, 0
        %v1093 = vperm.slane %v1090, 1
        %v1094 = vperm.slane %v1090, 2
        %v1095 = vperm.slane %v1090, 3
        %v1096 = vperm.slane %v1090, 4
        %v1097 = vperm.slane %v1090, 5
        %v1098 = vperm.slane %v1090, 6
        %v1099 = vperm.slane %v1090, 7
        %v1108 = vmul.f32 %v774, %v1092
        %v1109 = vmul.f32 %v773, %v1093
        %v1110 = vmul.f32 %v772, %v1094
        %v1111 = vmul.f32 %v771, %v1095
        %v1112 = vmul.f32 %v770, %v1096
        %v1113 = vmul.f32 %v769, %v1097
        %v1114 = vmul.f32 %v768, %v1098
        %v1115 = vmul.f32 %v775, %v1099
        %1116 = vst [vmem:[#allocation2 + $0x400] sm:$0xff] %v1108
        %1117 = vst [vmem:[#allocation2 + $0x408] sm:$0xff] %v1109
        %1118 = vst [vmem:[#allocation2 + $0x410] sm:$0xff] %v1110
        %1119 = vst [vmem:[#allocation2 + $0x418] sm:$0xff] %v1111
        %1120 = vst [vmem:[#allocation2 + $0x420] sm:$0xff] %v1112
        %1121 = vst [vmem:[#allocation2 + $0x428] sm:$0xff] %v1113
        %1122 = vst [vmem:[#allocation2 + $0x430] sm:$0xff] %v1114
        %1123 = vst [vmem:[#allocation2 + $0x438] sm:$0xff] %v1115
        %s1124 = scalar_lea.vmem [#allocation6], 136
        %v1125 = vld [vmem:[%s1124] sm:$0xff]
        %v1127 = vperm.slane %v1125, 0
        %v1128 = vperm.slane %v1125, 1
        %v1129 = vperm.slane %v1125, 2
        %v1130 = vperm.slane %v1125, 3
        %v1131 = vperm.slane %v1125, 4
        %v1132 = vperm.slane %v1125, 5
        %v1133 = vperm.slane %v1125, 6
        %v1134 = vperm.slane %v1125, 7
        %v1143 = vmul.f32 %v834, %v1127
        %v1144 = vmul.f32 %v833, %v1128
        %v1145 = vmul.f32 %v832, %v1129
        %v1146 = vmul.f32 %v831, %v1130
        %v1147 = vmul.f32 %v830, %v1131
        %v1148 = vmul.f32 %v829, %v1132
        %v1149 = vmul.f32 %v828, %v1133
        %v1150 = vmul.f32 %v835, %v1134
        %1151 = vst [vmem:[#allocation2 + $0x440] sm:$0xff] %v1143
        %1152 = vst [vmem:[#allocation2 + $0x448] sm:$0xff] %v1144
        %1153 = vst [vmem:[#allocation2 + $0x450] sm:$0xff] %v1145
        %1154 = vst [vmem:[#allocation2 + $0x458] sm:$0xff] %v1146
        %1155 = vst [vmem:[#allocation2 + $0x460] sm:$0xff] %v1147
        %1156 = vst [vmem:[#allocation2 + $0x468] sm:$0xff] %v1148
        %1157 = vst [vmem:[#allocation2 + $0x470] sm:$0xff] %v1149
        %1158 = vst [vmem:[#allocation2 + $0x478] sm:$0xff] %v1150
        %s1159 = scalar_lea.vmem [#allocation6], 144
        %v1160 = vld [vmem:[%s1159] sm:$0xff]
        %v1162 = vperm.slane %v1160, 0
        %v1163 = vperm.slane %v1160, 1
        %v1164 = vperm.slane %v1160, 2
        %v1165 = vperm.slane %v1160, 3
        %v1166 = vperm.slane %v1160, 4
        %v1167 = vperm.slane %v1160, 5
        %v1168 = vperm.slane %v1160, 6
        %v1169 = vperm.slane %v1160, 7
        %v1178 = vmul.f32 %v380, %v1162
        %v1179 = vmul.f32 %v379, %v1163
        %v1180 = vmul.f32 %v378, %v1164
        %v1181 = vmul.f32 %v377, %v1165
        %v1182 = vmul.f32 %v376, %v1166
        %v1183 = vmul.f32 %v375, %v1167
        %v1184 = vmul.f32 %v374, %v1168
        %v1185 = vmul.f32 %v381, %v1169
        %1186 = vst [vmem:[#allocation2 + $0x480] sm:$0xff] %v1178
        %1187 = vst [vmem:[#allocation2 + $0x488] sm:$0xff] %v1179
        %1188 = vst [vmem:[#allocation2 + $0x490] sm:$0xff] %v1180
        %1189 = vst [vmem:[#allocation2 + $0x498] sm:$0xff] %v1181
        %1190 = vst [vmem:[#allocation2 + $0x4a0] sm:$0xff] %v1182
        %1191 = vst [vmem:[#allocation2 + $0x4a8] sm:$0xff] %v1183
        %1192 = vst [vmem:[#allocation2 + $0x4b0] sm:$0xff] %v1184
        %1193 = vst [vmem:[#allocation2 + $0x4b8] sm:$0xff] %v1185
        %s1194 = scalar_lea.vmem [#allocation6], 152
        %v1195 = vld [vmem:[%s1194] sm:$0xff]
        %v1197 = vperm.slane %v1195, 0
        %v1198 = vperm.slane %v1195, 1
        %v1199 = vperm.slane %v1195, 2
        %v1200 = vperm.slane %v1195, 3
        %v1201 = vperm.slane %v1195, 4
        %v1202 = vperm.slane %v1195, 5
        %v1203 = vperm.slane %v1195, 6
        %v1204 = vperm.slane %v1195, 7
        %v1213 = vmul.f32 %v439, %v1197
        %v1214 = vmul.f32 %v438, %v1198
        %v1215 = vmul.f32 %v437, %v1199
        %v1216 = vmul.f32 %v436, %v1200
        %v1217 = vmul.f32 %v435, %v1201
        %v1218 = vmul.f32 %v434, %v1202
        %v1219 = vmul.f32 %v433, %v1203
        %v1220 = vmul.f32 %v440, %v1204
        %1221 = vst [vmem:[#allocation2 + $0x4c0] sm:$0xff] %v1213
        %1222 = vst [vmem:[#allocation2 + $0x4c8] sm:$0xff] %v1214
        %1223 = vst [vmem:[#allocation2 + $0x4d0] sm:$0xff] %v1215
        %1224 = vst [vmem:[#allocation2 + $0x4d8] sm:$0xff] %v1216
        %1225 = vst [vmem:[#allocation2 + $0x4e0] sm:$0xff] %v1217
        %1226 = vst [vmem:[#allocation2 + $0x4e8] sm:$0xff] %v1218
        %1227 = vst [vmem:[#allocation2 + $0x4f0] sm:$0xff] %v1219
        %1228 = vst [vmem:[#allocation2 + $0x4f8] sm:$0xff] %v1220
        %s1229 = scalar_lea.vmem [#allocation6], 160
        %v1230 = vld [vmem:[%s1229] sm:$0xff]
        %v1232 = vperm.slane %v1230, 0
        %v1233 = vperm.slane %v1230, 1
        %v1234 = vperm.slane %v1230, 2
        %v1235 = vperm.slane %v1230, 3
        %v1236 = vperm.slane %v1230, 4
        %v1237 = vperm.slane %v1230, 5
        %v1238 = vperm.slane %v1230, 6
        %v1239 = vperm.slane %v1230, 7
        %v1248 = vmul.f32 %v499, %v1232
        %v1249 = vmul.f32 %v498, %v1233
        %v1250 = vmul.f32 %v497, %v1234
        %v1251 = vmul.f32 %v496, %v1235
        %v1252 = vmul.f32 %v495, %v1236
        %v1253 = vmul.f32 %v494, %v1237
        %v1254 = vmul.f32 %v493, %v1238
        %v1255 = vmul.f32 %v500, %v1239
        %1256 = vst [vmem:[#allocation2 + $0x500] sm:$0xff] %v1248
        %1257 = vst [vmem:[#allocation2 + $0x508] sm:$0xff] %v1249
        %1258 = vst [vmem:[#allocation2 + $0x510] sm:$0xff] %v1250
        %1259 = vst [vmem:[#allocation2 + $0x518] sm:$0xff] %v1251
        %1260 = vst [vmem:[#allocation2 + $0x520] sm:$0xff] %v1252
        %1261 = vst [vmem:[#allocation2 + $0x528] sm:$0xff] %v1253
        %1262 = vst [vmem:[#allocation2 + $0x530] sm:$0xff] %v1254
        %1263 = vst [vmem:[#allocation2 + $0x538] sm:$0xff] %v1255
        %s1264 = scalar_lea.vmem [#allocation6], 168
        %v1265 = vld [vmem:[%s1264] sm:$0xff]
        %v1267 = vperm.slane %v1265, 0
        %v1268 = vperm.slane %v1265, 1
        %v1269 = vperm.slane %v1265, 2
        %v1270 = vperm.slane %v1265, 3
        %v1271 = vperm.slane %v1265, 4
        %v1272 = vperm.slane %v1265, 5
        %v1273 = vperm.slane %v1265, 6
        %v1274 = vperm.slane %v1265, 7
        %v1283 = vmul.f32 %v559, %v1267
        %v1284 = vmul.f32 %v558, %v1268
        %v1285 = vmul.f32 %v557, %v1269
        %v1286 = vmul.f32 %v556, %v1270
        %v1287 = vmul.f32 %v555, %v1271
        %v1288 = vmul.f32 %v554, %v1272
        %v1289 = vmul.f32 %v553, %v1273
        %v1290 = vmul.f32 %v560, %v1274
        %1291 = vst [vmem:[#allocation2 + $0x540] sm:$0xff] %v1283
        %1292 = vst [vmem:[#allocation2 + $0x548] sm:$0xff] %v1284
        %1293 = vst [vmem:[#allocation2 + $0x550] sm:$0xff] %v1285
        %1294 = vst [vmem:[#allocation2 + $0x558] sm:$0xff] %v1286
        %1295 = vst [vmem:[#allocation2 + $0x560] sm:$0xff] %v1287
        %1296 = vst [vmem:[#allocation2 + $0x568] sm:$0xff] %v1288
        %1297 = vst [vmem:[#allocation2 + $0x570] sm:$0xff] %v1289
        %1298 = vst [vmem:[#allocation2 + $0x578] sm:$0xff] %v1290
        %s1299 = scalar_lea.vmem [#allocation6], 176
        %v1300 = vld [vmem:[%s1299] sm:$0xff]
        %v1302 = vperm.slane %v1300, 0
        %v1303 = vperm.slane %v1300, 1
        %v1304 = vperm.slane %v1300, 2
        %v1305 = vperm.slane %v1300, 3
        %v1306 = vperm.slane %v1300, 4
        %v1307 = vperm.slane %v1300, 5
        %v1308 = vperm.slane %v1300, 6
        %v1309 = vperm.slane %v1300, 7
        %v1318 = vmul.f32 %v348, %v1302
        %v1319 = vmul.f32 %v349, %v1303
        %v1320 = vmul.f32 %v350, %v1304
        %v1321 = vmul.f32 %v351, %v1305
        %v1322 = vmul.f32 %v352, %v1306
        %v1323 = vmul.f32 %v353, %v1307
        %v1324 = vmul.f32 %v354, %v1308
        %v1325 = vmul.f32 %v347, %v1309
        %1326 = vst [vmem:[#allocation2 + $0x580] sm:$0xff] %v1318
        %1327 = vst [vmem:[#allocation2 + $0x588] sm:$0xff] %v1319
        %1328 = vst [vmem:[#allocation2 + $0x590] sm:$0xff] %v1320
        %1329 = vst [vmem:[#allocation2 + $0x598] sm:$0xff] %v1321
        %1330 = vst [vmem:[#allocation2 + $0x5a0] sm:$0xff] %v1322
        %1331 = vst [vmem:[#allocation2 + $0x5a8] sm:$0xff] %v1323
        %1332 = vst [vmem:[#allocation2 + $0x5b0] sm:$0xff] %v1324
        %1333 = vst [vmem:[#allocation2 + $0x5b8] sm:$0xff] %v1325
        %s1334 = scalar_lea.vmem [#allocation6], 184
        %v1335 = vld [vmem:[%s1334] sm:$0xff]
        %v1337 = vperm.slane %v1335, 0
        %v1338 = vperm.slane %v1335, 1
        %v1339 = vperm.slane %v1335, 2
        %v1340 = vperm.slane %v1335, 3
        %v1341 = vperm.slane %v1335, 4
        %v1342 = vperm.slane %v1335, 5
        %v1343 = vperm.slane %v1335, 6
        %v1344 = vperm.slane %v1335, 7
        %v1353 = vmul.f32 %v653, %v1337
        %v1354 = vmul.f32 %v652, %v1338
        %v1355 = vmul.f32 %v651, %v1339
        %v1356 = vmul.f32 %v650, %v1340
        %v1357 = vmul.f32 %v649, %v1341
        %v1358 = vmul.f32 %v648, %v1342
        %v1359 = vmul.f32 %v655, %v1343
        %v1360 = vmul.f32 %v654, %v1344
        %1361 = vst [vmem:[#allocation2 + $0x5c0] sm:$0xff] %v1353
        %1362 = vst [vmem:[#allocation2 + $0x5c8] sm:$0xff] %v1354
        %1363 = vst [vmem:[#allocation2 + $0x5d0] sm:$0xff] %v1355
        %1364 = vst [vmem:[#allocation2 + $0x5d8] sm:$0xff] %v1356
        %1365 = vst [vmem:[#allocation2 + $0x5e0] sm:$0xff] %v1357
        %1366 = vst [vmem:[#allocation2 + $0x5e8] sm:$0xff] %v1358
        %1367 = vst [vmem:[#allocation2 + $0x5f0] sm:$0xff] %v1359
        %1368 = vst [vmem:[#allocation2 + $0x5f8] sm:$0xff] %v1360
        %s1369 = scalar_lea.vmem [#allocation6], 192
        %v1370 = vld [vmem:[%s1369] sm:$0xff]
        %v1372 = vperm.slane %v1370, 0
        %v1373 = vperm.slane %v1370, 1
        %v1374 = vperm.slane %v1370, 2
        %v1375 = vperm.slane %v1370, 3
        %v1376 = vperm.slane %v1370, 4
        %v1377 = vperm.slane %v1370, 5
        %v1378 = vperm.slane %v1370, 6
        %v1379 = vperm.slane %v1370, 7
        %v1388 = vmul.f32 %v713, %v1372
        %v1389 = vmul.f32 %v712, %v1373
        %v1390 = vmul.f32 %v711, %v1374
        %v1391 = vmul.f32 %v710, %v1375
        %v1392 = vmul.f32 %v709, %v1376
        %v1393 = vmul.f32 %v708, %v1377
        %v1394 = vmul.f32 %v715, %v1378
        %v1395 = vmul.f32 %v714, %v1379
        %1396 = vst [vmem:[#allocation2 + $0x600] sm:$0xff] %v1388
        %1397 = vst [vmem:[#allocation2 + $0x608] sm:$0xff] %v1389
        %1398 = vst [vmem:[#allocation2 + $0x610] sm:$0xff] %v1390
        %1399 = vst [vmem:[#allocation2 + $0x618] sm:$0xff] %v1391
        %1400 = vst [vmem:[#allocation2 + $0x620] sm:$0xff] %v1392
        %1401 = vst [vmem:[#allocation2 + $0x628] sm:$0xff] %v1393
        %1402 = vst [vmem:[#allocation2 + $0x630] sm:$0xff] %v1394
        %1403 = vst [vmem:[#allocation2 + $0x638] sm:$0xff] %v1395
        %s1404 = scalar_lea.vmem [#allocation6], 200
        %v1405 = vld [vmem:[%s1404] sm:$0xff]
        %v1407 = vperm.slane %v1405, 0
        %v1408 = vperm.slane %v1405, 1
        %v1409 = vperm.slane %v1405, 2
        %v1410 = vperm.slane %v1405, 3
        %v1411 = vperm.slane %v1405, 4
        %v1412 = vperm.slane %v1405, 5
        %v1413 = vperm.slane %v1405, 6
        %v1414 = vperm.slane %v1405, 7
        %v1423 = vmul.f32 %v773, %v1407
        %v1424 = vmul.f32 %v772, %v1408
        %v1425 = vmul.f32 %v771, %v1409
        %v1426 = vmul.f32 %v770, %v1410
        %v1427 = vmul.f32 %v769, %v1411
        %v1428 = vmul.f32 %v768, %v1412
        %v1429 = vmul.f32 %v775, %v1413
        %v1430 = vmul.f32 %v774, %v1414
        %1431 = vst [vmem:[#allocation2 + $0x640] sm:$0xff] %v1423
        %1432 = vst [vmem:[#allocation2 + $0x648] sm:$0xff] %v1424
        %1433 = vst [vmem:[#allocation2 + $0x650] sm:$0xff] %v1425
        %1434 = vst [vmem:[#allocation2 + $0x658] sm:$0xff] %v1426
        %1435 = vst [vmem:[#allocation2 + $0x660] sm:$0xff] %v1427
        %1436 = vst [vmem:[#allocation2 + $0x668] sm:$0xff] %v1428
        %1437 = vst [vmem:[#allocation2 + $0x670] sm:$0xff] %v1429
        %1438 = vst [vmem:[#allocation2 + $0x678] sm:$0xff] %v1430
        %s1439 = scalar_lea.vmem [#allocation6], 208
        %v1440 = vld [vmem:[%s1439] sm:$0xff]
        %v1442 = vperm.slane %v1440, 0
        %v1443 = vperm.slane %v1440, 1
        %v1444 = vperm.slane %v1440, 2
        %v1445 = vperm.slane %v1440, 3
        %v1446 = vperm.slane %v1440, 4
        %v1447 = vperm.slane %v1440, 5
        %v1448 = vperm.slane %v1440, 6
        %v1449 = vperm.slane %v1440, 7
        %v1458 = vmul.f32 %v833, %v1442
        %v1459 = vmul.f32 %v832, %v1443
        %v1460 = vmul.f32 %v831, %v1444
        %v1461 = vmul.f32 %v830, %v1445
        %v1462 = vmul.f32 %v829, %v1446
        %v1463 = vmul.f32 %v828, %v1447
        %v1464 = vmul.f32 %v835, %v1448
        %v1465 = vmul.f32 %v834, %v1449
        %1466 = vst [vmem:[#allocation2 + $0x680] sm:$0xff] %v1458
        %1467 = vst [vmem:[#allocation2 + $0x688] sm:$0xff] %v1459
        %1468 = vst [vmem:[#allocation2 + $0x690] sm:$0xff] %v1460
        %1469 = vst [vmem:[#allocation2 + $0x698] sm:$0xff] %v1461
        %1470 = vst [vmem:[#allocation2 + $0x6a0] sm:$0xff] %v1462
        %1471 = vst [vmem:[#allocation2 + $0x6a8] sm:$0xff] %v1463
        %1472 = vst [vmem:[#allocation2 + $0x6b0] sm:$0xff] %v1464
        %1473 = vst [vmem:[#allocation2 + $0x6b8] sm:$0xff] %v1465
        %1474 = vst [vmem:[#allocation2 + $0x6c0] sm:$0xff] 0.0
        %1475 = vst [vmem:[#allocation2 + $0x6c8] sm:$0xff] 0.0
        %1476 = vst [vmem:[#allocation2 + $0x6d0] sm:$0xff] 0.0
        %1477 = vst [vmem:[#allocation2 + $0x6d8] sm:$0xff] 0.0
        %1478 = vst [vmem:[#allocation2 + $0x6e0] sm:$0xff] 0.0
        %1479 = vst [vmem:[#allocation2 + $0x6e8] sm:$0xff] 0.0
        %1480 = vst [vmem:[#allocation2 + $0x6f0] sm:$0xff] 0.0
        %1481 = vst [vmem:[#allocation2 + $0x6f8] sm:$0xff] 0.0
        %1482 = vst [vmem:[#allocation2 + $0x700] sm:$0xff] 0.0
        %1483 = vst [vmem:[#allocation2 + $0x708] sm:$0xff] 0.0
        %1484 = vst [vmem:[#allocation2 + $0x710] sm:$0xff] 0.0
        %1485 = vst [vmem:[#allocation2 + $0x718] sm:$0xff] 0.0
        %1486 = vst [vmem:[#allocation2 + $0x720] sm:$0xff] 0.0
        %1487 = vst [vmem:[#allocation2 + $0x728] sm:$0xff] 0.0
        %1488 = vst [vmem:[#allocation2 + $0x730] sm:$0xff] 0.0
        %1489 = vst [vmem:[#allocation2 + $0x738] sm:$0xff] 0.0
        %1490 = vst [vmem:[#allocation2 + $0x740] sm:$0xff] 0.0
        %1491 = vst [vmem:[#allocation2 + $0x748] sm:$0xff] 0.0
        %1492 = vst [vmem:[#allocation2 + $0x750] sm:$0xff] 0.0
        %1493 = vst [vmem:[#allocation2 + $0x758] sm:$0xff] 0.0
        %1494 = vst [vmem:[#allocation2 + $0x760] sm:$0xff] 0.0
        %1495 = vst [vmem:[#allocation2 + $0x768] sm:$0xff] 0.0
        %1496 = vst [vmem:[#allocation2 + $0x770] sm:$0xff] 0.0
        %1497 = vst [vmem:[#allocation2 + $0x778] sm:$0xff] 0.0
        %1498 = vst [vmem:[#allocation2 + $0x780] sm:$0xff] 0.0
        %1499 = vst [vmem:[#allocation2 + $0x788] sm:$0xff] 0.0
        %1500 = vst [vmem:[#allocation2 + $0x790] sm:$0xff] 0.0
        %1501 = vst [vmem:[#allocation2 + $0x798] sm:$0xff] 0.0
        %1502 = vst [vmem:[#allocation2 + $0x7a0] sm:$0xff] 0.0
        %1503 = vst [vmem:[#allocation2 + $0x7a8] sm:$0xff] 0.0
        %1504 = vst [vmem:[#allocation2 + $0x7b0] sm:$0xff] 0.0
        %1505 = vst [vmem:[#allocation2 + $0x7b8] sm:$0xff] 0.0
        %1506 = vst [vmem:[#allocation2 + $0x7c0] sm:$0xff] 0.0
        %1507 = vst [vmem:[#allocation2 + $0x7c8] sm:$0xff] 0.0
        %1508 = vst [vmem:[#allocation2 + $0x7d0] sm:$0xff] 0.0
        %1509 = vst [vmem:[#allocation2 + $0x7d8] sm:$0xff] 0.0
        %1510 = vst [vmem:[#allocation2 + $0x7e0] sm:$0xff] 0.0
        %1511 = vst [vmem:[#allocation2 + $0x7e8] sm:$0xff] 0.0
        %1512 = vst [vmem:[#allocation2 + $0x7f0] sm:$0xff] 0.0
        %1513 = vst [vmem:[#allocation2 + $0x7f8] sm:$0xff] 0.0
        %v1514 = vld [vmem:[#allocation3] sm:$0xff]
        %v1515 = vld [vmem:[#allocation3 + $0x8] sm:$0xff]
        %v1516 = vld [vmem:[#allocation2] sm:$0xff]
        %v1517 = vld [vmem:[#allocation2 + $0x8] sm:$0xff]
        %v1518 = vld [vmem:[#allocation2 + $0x10] sm:$0xff]
        %v1519 = vld [vmem:[#allocation2 + $0x18] sm:$0xff]
        %v1520 = vld [vmem:[#allocation2 + $0x20] sm:$0xff]
        %v1521 = vld [vmem:[#allocation2 + $0x28] sm:$0xff]
        %v1522 = vld [vmem:[#allocation2 + $0x30] sm:$0xff]
        %v1523 = vld [vmem:[#allocation2 + $0x38] sm:$0xff]
        %v1524 = vld [vmem:[#allocation2 + $0x40] sm:$0xff]
        %v1525 = vld [vmem:[#allocation2 + $0x48] sm:$0xff]
        %v1526 = vld [vmem:[#allocation2 + $0x50] sm:$0xff]
        %v1527 = vld [vmem:[#allocation2 + $0x58] sm:$0xff]
        %v1528 = vld [vmem:[#allocation2 + $0x60] sm:$0xff]
        %v1529 = vld [vmem:[#allocation2 + $0x68] sm:$0xff]
        %v1530 = vld [vmem:[#allocation2 + $0x70] sm:$0xff]
        %v1531 = vld [vmem:[#allocation2 + $0x78] sm:$0xff]
        %v1532 = vld [vmem:[#allocation2 + $0x80] sm:$0xff]
        %v1533 = vld [vmem:[#allocation2 + $0x88] sm:$0xff]
        %v1534 = vld [vmem:[#allocation2 + $0x90] sm:$0xff]
        %v1535 = vld [vmem:[#allocation2 + $0x98] sm:$0xff]
        %v1536 = vld [vmem:[#allocation2 + $0xa0] sm:$0xff]
        %v1537 = vld [vmem:[#allocation2 + $0xa8] sm:$0xff]
        %v1538 = vld [vmem:[#allocation2 + $0xb0] sm:$0xff]
        %v1539 = vld [vmem:[#allocation2 + $0xb8] sm:$0xff]
        %v1540 = vld [vmem:[#allocation2 + $0xc0] sm:$0xff]
        %v1541 = vld [vmem:[#allocation2 + $0xc8] sm:$0xff]
        %v1542 = vld [vmem:[#allocation2 + $0xd0] sm:$0xff]
        %v1543 = vld [vmem:[#allocation2 + $0xd8] sm:$0xff]
        %v1544 = vld [vmem:[#allocation2 + $0xe0] sm:$0xff]
        %v1545 = vld [vmem:[#allocation2 + $0xe8] sm:$0xff]
        %v1546 = vld [vmem:[#allocation2 + $0xf0] sm:$0xff]
        %v1547 = vld [vmem:[#allocation2 + $0xf8] sm:$0xff]
        %v1548 = vld [vmem:[#allocation2 + $0x100] sm:$0xff]
        %v1549 = vld [vmem:[#allocation2 + $0x108] sm:$0xff]
        %v1550 = vld [vmem:[#allocation2 + $0x110] sm:$0xff]
        %v1551 = vld [vmem:[#allocation2 + $0x118] sm:$0xff]
        %v1552 = vld [vmem:[#allocation2 + $0x120] sm:$0xff]
        %v1553 = vld [vmem:[#allocation2 + $0x128] sm:$0xff]
        %v1554 = vld [vmem:[#allocation2 + $0x130] sm:$0xff]
        %v1555 = vld [vmem:[#allocation2 + $0x138] sm:$0xff]
        %v1556 = vld [vmem:[#allocation2 + $0x140] sm:$0xff]
        %v1557 = vld [vmem:[#allocation2 + $0x148] sm:$0xff]
        %v1558 = vld [vmem:[#allocation2 + $0x150] sm:$0xff]
        %v1559 = vld [vmem:[#allocation2 + $0x158] sm:$0xff]
        %v1560 = vld [vmem:[#allocation2 + $0x160] sm:$0xff]
        %v1561 = vld [vmem:[#allocation2 + $0x168] sm:$0xff]
        %v1562 = vld [vmem:[#allocation2 + $0x170] sm:$0xff]
        %v1563 = vld [vmem:[#allocation2 + $0x178] sm:$0xff]
        %v1564 = vld [vmem:[#allocation2 + $0x180] sm:$0xff]
        %v1565 = vld [vmem:[#allocation2 + $0x188] sm:$0xff]
        %v1566 = vld [vmem:[#allocation2 + $0x190] sm:$0xff]
        %v1567 = vld [vmem:[#allocation2 + $0x198] sm:$0xff]
        %v1568 = vld [vmem:[#allocation2 + $0x1a0] sm:$0xff]
        %v1569 = vld [vmem:[#allocation2 + $0x1a8] sm:$0xff]
        %v1570 = vld [vmem:[#allocation2 + $0x1b0] sm:$0xff]
        %v1571 = vld [vmem:[#allocation2 + $0x1b8] sm:$0xff]
        %v1572 = vld [vmem:[#allocation2 + $0x1c0] sm:$0xff]
        %v1573 = vld [vmem:[#allocation2 + $0x1c8] sm:$0xff]
        %v1574 = vld [vmem:[#allocation2 + $0x1d0] sm:$0xff]
        %v1575 = vld [vmem:[#allocation2 + $0x1d8] sm:$0xff]
        %v1576 = vld [vmem:[#allocation2 + $0x1e0] sm:$0xff]
        %v1577 = vld [vmem:[#allocation2 + $0x1e8] sm:$0xff]
        %v1578 = vld [vmem:[#allocation2 + $0x1f0] sm:$0xff]
        %v1579 = vld [vmem:[#allocation2 + $0x1f8] sm:$0xff]
        %v1580 = vld [vmem:[#allocation2 + $0x200] sm:$0xff]
        %v1581 = vld [vmem:[#allocation2 + $0x208] sm:$0xff]
        %v1582 = vld [vmem:[#allocation2 + $0x210] sm:$0xff]
        %v1583 = vld [vmem:[#allocation2 + $0x218] sm:$0xff]
        %v1584 = vld [vmem:[#allocation2 + $0x220] sm:$0xff]
        %v1585 = vld [vmem:[#allocation2 + $0x228] sm:$0xff]
        %v1586 = vld [vmem:[#allocation2 + $0x230] sm:$0xff]
        %v1587 = vld [vmem:[#allocation2 + $0x238] sm:$0xff]
        %v1588 = vld [vmem:[#allocation2 + $0x240] sm:$0xff]
        %v1589 = vld [vmem:[#allocation2 + $0x248] sm:$0xff]
        %v1590 = vld [vmem:[#allocation2 + $0x250] sm:$0xff]
        %v1591 = vld [vmem:[#allocation2 + $0x258] sm:$0xff]
        %v1592 = vld [vmem:[#allocation2 + $0x260] sm:$0xff]
        %v1593 = vld [vmem:[#allocation2 + $0x268] sm:$0xff]
        %v1594 = vld [vmem:[#allocation2 + $0x270] sm:$0xff]
        %v1595 = vld [vmem:[#allocation2 + $0x278] sm:$0xff]
        %v1596 = vld [vmem:[#allocation2 + $0x280] sm:$0xff]
        %v1597 = vld [vmem:[#allocation2 + $0x288] sm:$0xff]
        %v1598 = vld [vmem:[#allocation2 + $0x290] sm:$0xff]
        %v1599 = vld [vmem:[#allocation2 + $0x298] sm:$0xff]
        %v1600 = vld [vmem:[#allocation2 + $0x2a0] sm:$0xff]
        %v1601 = vld [vmem:[#allocation2 + $0x2a8] sm:$0xff]
        %v1602 = vld [vmem:[#allocation2 + $0x2b0] sm:$0xff]
        %v1603 = vld [vmem:[#allocation2 + $0x2b8] sm:$0xff]
        %v1604 = vld [vmem:[#allocation2 + $0x2c0] sm:$0xff]
        %v1605 = vld [vmem:[#allocation2 + $0x2c8] sm:$0xff]
        %v1606 = vld [vmem:[#allocation2 + $0x2d0] sm:$0xff]
        %v1607 = vld [vmem:[#allocation2 + $0x2d8] sm:$0xff]
        %v1608 = vld [vmem:[#allocation2 + $0x2e0] sm:$0xff]
        %v1609 = vld [vmem:[#allocation2 + $0x2e8] sm:$0xff]
        %v1610 = vld [vmem:[#allocation2 + $0x2f0] sm:$0xff]
        %v1611 = vld [vmem:[#allocation2 + $0x2f8] sm:$0xff]
        %v1612 = vld [vmem:[#allocation2 + $0x300] sm:$0xff]
        %v1613 = vld [vmem:[#allocation2 + $0x308] sm:$0xff]
        %v1614 = vld [vmem:[#allocation2 + $0x310] sm:$0xff]
        %v1615 = vld [vmem:[#allocation2 + $0x318] sm:$0xff]
        %v1616 = vld [vmem:[#allocation2 + $0x320] sm:$0xff]
        %v1617 = vld [vmem:[#allocation2 + $0x328] sm:$0xff]
        %v1618 = vld [vmem:[#allocation2 + $0x330] sm:$0xff]
        %v1619 = vld [vmem:[#allocation2 + $0x338] sm:$0xff]
        %v1620 = vld [vmem:[#allocation2 + $0x340] sm:$0xff]
        %v1621 = vld [vmem:[#allocation2 + $0x348] sm:$0xff]
        %v1622 = vld [vmem:[#allocation2 + $0x350] sm:$0xff]
        %v1623 = vld [vmem:[#allocation2 + $0x358] sm:$0xff]
        %v1624 = vld [vmem:[#allocation2 + $0x360] sm:$0xff]
        %v1625 = vld [vmem:[#allocation2 + $0x368] sm:$0xff]
        %v1626 = vld [vmem:[#allocation2 + $0x370] sm:$0xff]
        %v1627 = vld [vmem:[#allocation2 + $0x378] sm:$0xff]
        %v1628 = vld [vmem:[#allocation2 + $0x380] sm:$0xff]
        %v1629 = vld [vmem:[#allocation2 + $0x388] sm:$0xff]
        %v1630 = vld [vmem:[#allocation2 + $0x390] sm:$0xff]
        %v1631 = vld [vmem:[#allocation2 + $0x398] sm:$0xff]
        %v1632 = vld [vmem:[#allocation2 + $0x3a0] sm:$0xff]
        %v1633 = vld [vmem:[#allocation2 + $0x3a8] sm:$0xff]
        %v1634 = vld [vmem:[#allocation2 + $0x3b0] sm:$0xff]
        %v1635 = vld [vmem:[#allocation2 + $0x3b8] sm:$0xff]
        %v1636 = vld [vmem:[#allocation2 + $0x3c0] sm:$0xff]
        %v1637 = vld [vmem:[#allocation2 + $0x3c8] sm:$0xff]
        %v1638 = vld [vmem:[#allocation2 + $0x3d0] sm:$0xff]
        %v1639 = vld [vmem:[#allocation2 + $0x3d8] sm:$0xff]
        %v1640 = vld [vmem:[#allocation2 + $0x3e0] sm:$0xff]
        %v1641 = vld [vmem:[#allocation2 + $0x3e8] sm:$0xff]
        %v1642 = vld [vmem:[#allocation2 + $0x3f0] sm:$0xff]
        %v1643 = vld [vmem:[#allocation2 + $0x3f8] sm:$0xff]
        %v1644 = vld [vmem:[#allocation2 + $0x400] sm:$0xff]
        %v1645 = vld [vmem:[#allocation2 + $0x408] sm:$0xff]
        %v1646 = vld [vmem:[#allocation2 + $0x410] sm:$0xff]
        %v1647 = vld [vmem:[#allocation2 + $0x418] sm:$0xff]
        %v1648 = vld [vmem:[#allocation2 + $0x420] sm:$0xff]
        %v1649 = vld [vmem:[#allocation2 + $0x428] sm:$0xff]
        %v1650 = vld [vmem:[#allocation2 + $0x430] sm:$0xff]
        %v1651 = vld [vmem:[#allocation2 + $0x438] sm:$0xff]
        %v1652 = vld [vmem:[#allocation2 + $0x440] sm:$0xff]
        %v1653 = vld [vmem:[#allocation2 + $0x448] sm:$0xff]
        %v1654 = vld [vmem:[#allocation2 + $0x450] sm:$0xff]
        %v1655 = vld [vmem:[#allocation2 + $0x458] sm:$0xff]
        %v1656 = vld [vmem:[#allocation2 + $0x460] sm:$0xff]
        %v1657 = vld [vmem:[#allocation2 + $0x468] sm:$0xff]
        %v1658 = vld [vmem:[#allocation2 + $0x470] sm:$0xff]
        %v1659 = vld [vmem:[#allocation2 + $0x478] sm:$0xff]
        %v1660 = vld [vmem:[#allocation2 + $0x480] sm:$0xff]
        %v1661 = vld [vmem:[#allocation2 + $0x488] sm:$0xff]
        %v1662 = vld [vmem:[#allocation2 + $0x490] sm:$0xff]
        %v1663 = vld [vmem:[#allocation2 + $0x498] sm:$0xff]
        %v1664 = vld [vmem:[#allocation2 + $0x4a0] sm:$0xff]
        %v1665 = vld [vmem:[#allocation2 + $0x4a8] sm:$0xff]
        %v1666 = vld [vmem:[#allocation2 + $0x4b0] sm:$0xff]
        %v1667 = vld [vmem:[#allocation2 + $0x4b8] sm:$0xff]
        %v1668 = vld [vmem:[#allocation2 + $0x4c0] sm:$0xff]
        %v1669 = vld [vmem:[#allocation2 + $0x4c8] sm:$0xff]
        %v1670 = vld [vmem:[#allocation2 + $0x4d0] sm:$0xff]
        %v1671 = vld [vmem:[#allocation2 + $0x4d8] sm:$0xff]
        %v1672 = vld [vmem:[#allocation2 + $0x4e0] sm:$0xff]
        %v1673 = vld [vmem:[#allocation2 + $0x4e8] sm:$0xff]
        %v1674 = vld [vmem:[#allocation2 + $0x4f0] sm:$0xff]
        %v1675 = vld [vmem:[#allocation2 + $0x4f8] sm:$0xff]
        %v1676 = vld [vmem:[#allocation2 + $0x500] sm:$0xff]
        %v1677 = vld [vmem:[#allocation2 + $0x508] sm:$0xff]
        %v1678 = vld [vmem:[#allocation2 + $0x510] sm:$0xff]
        %v1679 = vld [vmem:[#allocation2 + $0x518] sm:$0xff]
        %v1680 = vld [vmem:[#allocation2 + $0x520] sm:$0xff]
        %v1681 = vld [vmem:[#allocation2 + $0x528] sm:$0xff]
        %v1682 = vld [vmem:[#allocation2 + $0x530] sm:$0xff]
        %v1683 = vld [vmem:[#allocation2 + $0x538] sm:$0xff]
        %v1684 = vld [vmem:[#allocation2 + $0x540] sm:$0xff]
        %v1685 = vld [vmem:[#allocation2 + $0x548] sm:$0xff]
        %v1686 = vld [vmem:[#allocation2 + $0x550] sm:$0xff]
        %v1687 = vld [vmem:[#allocation2 + $0x558] sm:$0xff]
        %v1688 = vld [vmem:[#allocation2 + $0x560] sm:$0xff]
        %v1689 = vld [vmem:[#allocation2 + $0x568] sm:$0xff]
        %v1690 = vld [vmem:[#allocation2 + $0x570] sm:$0xff]
        %v1691 = vld [vmem:[#allocation2 + $0x578] sm:$0xff]
        %v1692 = vld [vmem:[#allocation2 + $0x580] sm:$0xff]
        %v1693 = vld [vmem:[#allocation2 + $0x588] sm:$0xff]
        %v1694 = vld [vmem:[#allocation2 + $0x590] sm:$0xff]
        %v1695 = vld [vmem:[#allocation2 + $0x598] sm:$0xff]
        %v1696 = vld [vmem:[#allocation2 + $0x5a0] sm:$0xff]
        %v1697 = vld [vmem:[#allocation2 + $0x5a8] sm:$0xff]
        %v1698 = vld [vmem:[#allocation2 + $0x5b0] sm:$0xff]
        %v1699 = vld [vmem:[#allocation2 + $0x5b8] sm:$0xff]
        %v1700 = vld [vmem:[#allocation2 + $0x5c0] sm:$0xff]
        %v1701 = vld [vmem:[#allocation2 + $0x5c8] sm:$0xff]
        %v1702 = vld [vmem:[#allocation2 + $0x5d0] sm:$0xff]
        %v1703 = vld [vmem:[#allocation2 + $0x5d8] sm:$0xff]
        %v1704 = vld [vmem:[#allocation2 + $0x5e0] sm:$0xff]
        %v1705 = vld [vmem:[#allocation2 + $0x5e8] sm:$0xff]
        %v1706 = vld [vmem:[#allocation2 + $0x5f0] sm:$0xff]
        %v1707 = vld [vmem:[#allocation2 + $0x5f8] sm:$0xff]
        %v1708 = vld [vmem:[#allocation2 + $0x600] sm:$0xff]
        %v1709 = vld [vmem:[#allocation2 + $0x608] sm:$0xff]
        %v1710 = vld [vmem:[#allocation2 + $0x610] sm:$0xff]
        %v1711 = vld [vmem:[#allocation2 + $0x618] sm:$0xff]
        %v1712 = vld [vmem:[#allocation2 + $0x620] sm:$0xff]
        %v1713 = vld [vmem:[#allocation2 + $0x628] sm:$0xff]
        %v1714 = vld [vmem:[#allocation2 + $0x630] sm:$0xff]
        %v1715 = vld [vmem:[#allocation2 + $0x638] sm:$0xff]
        %v1716 = vld [vmem:[#allocation2 + $0x640] sm:$0xff]
        %v1717 = vld [vmem:[#allocation2 + $0x648] sm:$0xff]
        %v1718 = vld [vmem:[#allocation2 + $0x650] sm:$0xff]
        %v1719 = vld [vmem:[#allocation2 + $0x658] sm:$0xff]
        %v1720 = vld [vmem:[#allocation2 + $0x660] sm:$0xff]
        %v1721 = vld [vmem:[#allocation2 + $0x668] sm:$0xff]
        %v1722 = vld [vmem:[#allocation2 + $0x670] sm:$0xff]
        %v1723 = vld [vmem:[#allocation2 + $0x678] sm:$0xff]
        %v1724 = vld [vmem:[#allocation2 + $0x680] sm:$0xff]
        %v1725 = vld [vmem:[#allocation2 + $0x688] sm:$0xff]
        %v1726 = vld [vmem:[#allocation2 + $0x690] sm:$0xff]
        %v1727 = vld [vmem:[#allocation2 + $0x698] sm:$0xff]
        %v1728 = vld [vmem:[#allocation2 + $0x6a0] sm:$0xff]
        %v1729 = vld [vmem:[#allocation2 + $0x6a8] sm:$0xff]
        %v1730 = vld [vmem:[#allocation2 + $0x6b0] sm:$0xff]
        %v1731 = vld [vmem:[#allocation2 + $0x6b8] sm:$0xff]
        %v1732 = vld [vmem:[#allocation2 + $0x6c0] sm:$0xff]
        %v1733 = vld [vmem:[#allocation2 + $0x6c8] sm:$0xff]
        %v1734 = vld [vmem:[#allocation2 + $0x6d0] sm:$0xff]
        %v1735 = vld [vmem:[#allocation2 + $0x6d8] sm:$0xff]
        %v1736 = vld [vmem:[#allocation2 + $0x6e0] sm:$0xff]
        %v1737 = vld [vmem:[#allocation2 + $0x6e8] sm:$0xff]
        %v1738 = vld [vmem:[#allocation2 + $0x6f0] sm:$0xff]
        %v1739 = vld [vmem:[#allocation2 + $0x6f8] sm:$0xff]
        %v1740 = vld [vmem:[#allocation2 + $0x700] sm:$0xff]
        %v1741 = vld [vmem:[#allocation2 + $0x708] sm:$0xff]
        %v1742 = vld [vmem:[#allocation2 + $0x710] sm:$0xff]
        %v1743 = vld [vmem:[#allocation2 + $0x718] sm:$0xff]
        %v1744 = vld [vmem:[#allocation2 + $0x720] sm:$0xff]
        %v1745 = vld [vmem:[#allocation2 + $0x728] sm:$0xff]
        %v1746 = vld [vmem:[#allocation2 + $0x730] sm:$0xff]
        %v1747 = vld [vmem:[#allocation2 + $0x738] sm:$0xff]
        %v1748 = vld [vmem:[#allocation2 + $0x740] sm:$0xff]
        %v1749 = vld [vmem:[#allocation2 + $0x748] sm:$0xff]
        %v1750 = vld [vmem:[#allocation2 + $0x750] sm:$0xff]
        %v1751 = vld [vmem:[#allocation2 + $0x758] sm:$0xff]
        %v1752 = vld [vmem:[#allocation2 + $0x760] sm:$0xff]
        %v1753 = vld [vmem:[#allocation2 + $0x768] sm:$0xff]
        %v1754 = vld [vmem:[#allocation2 + $0x770] sm:$0xff]
        %v1755 = vld [vmem:[#allocation2 + $0x778] sm:$0xff]
        %v1756 = vld [vmem:[#allocation2 + $0x780] sm:$0xff]
        %v1757 = vld [vmem:[#allocation2 + $0x788] sm:$0xff]
        %v1758 = vld [vmem:[#allocation2 + $0x790] sm:$0xff]
        %v1759 = vld [vmem:[#allocation2 + $0x798] sm:$0xff]
        %v1760 = vld [vmem:[#allocation2 + $0x7a0] sm:$0xff]
        %v1761 = vld [vmem:[#allocation2 + $0x7a8] sm:$0xff]
        %v1762 = vld [vmem:[#allocation2 + $0x7b0] sm:$0xff]
        %v1763 = vld [vmem:[#allocation2 + $0x7b8] sm:$0xff]
        %v1764 = vld [vmem:[#allocation2 + $0x7c0] sm:$0xff]
        %v1765 = vld [vmem:[#allocation2 + $0x7c8] sm:$0xff]
        %v1766 = vld [vmem:[#allocation2 + $0x7d0] sm:$0xff]
        %v1767 = vld [vmem:[#allocation2 + $0x7d8] sm:$0xff]
        %v1768 = vld [vmem:[#allocation2 + $0x7e0] sm:$0xff]
        %v1769 = vld [vmem:[#allocation2 + $0x7e8] sm:$0xff]
        %v1770 = vld [vmem:[#allocation2 + $0x7f0] sm:$0xff]
        %v1771 = vld [vmem:[#allocation2 + $0x7f8] sm:$0xff]
        %v1772 = vand.u32 %v1636, 4294901760
        %1773 = vmatpush.msra.mxu0 %v1772
        %v1774 = vand.u32 %v1628, 4294901760
        %1775 = vmatpush.msra.mxu0 %v1774
        %v1776 = vand.u32 %v1620, 4294901760
        %1777 = vmatpush.msra.mxu0 %v1776
        %v1778 = vand.u32 %v1612, 4294901760
        %1779 = vmatpush.msra.mxu0 %v1778
        %v1780 = vand.u32 %v1604, 4294901760
        %1781 = vmatpush.msra.mxu0 %v1780
        %v1782 = vand.u32 %v1596, 4294901760
        %1783 = vmatpush.msra.mxu0 %v1782
        %v1784 = vand.u32 %v1588, 4294901760
        %1785 = vmatpush.msra.mxu0 %v1784
        %v1786 = vand.u32 %v1580, 4294901760
        %1787 = vmatpush.msra.mxu0 %v1786
        %v1788 = vand.u32 %v1572, 4294901760
        %1789 = vmatpush.msra.mxu0 %v1788
        %v1790 = vand.u32 %v1564, 4294901760
        %1791 = vmatpush.msra.mxu0 %v1790
        %v1792 = vand.u32 %v1556, 4294901760
        %1793 = vmatpush.msra.mxu0 %v1792
        %v1794 = vand.u32 %v1548, 4294901760
        %1795 = vmatpush.msra.mxu0 %v1794
        %v1796 = vand.u32 %v1540, 4294901760
        %1797 = vmatpush.msra.mxu0 %v1796
        %v1798 = vand.u32 %v1532, 4294901760
        %1799 = vmatpush.msra.mxu0 %v1798
        %v1800 = vand.u32 %v1524, 4294901760
        %1801 = vmatpush.msra.mxu0 %v1800
        %v1802 = vand.u32 %v1516, 4294901760
        %1803 = vmatpush.msra.mxu0 %v1802
        %v1804 = vand.u32 %v1514, 4294901760
        %v1805 = vsub.f32 %v1514, %v1804
        %v1806 = vand.u32 %v1805, 4294901760
        %v1807 = vsub.f32 %v1805, %v1806
        %v1808 = vand.u32 %v1807, 4294901760
        %1809 = vmatmul.f32.gmra.mxu0 %v1808
        %v1810 = vpop.f32.mrf.mxu0
        %v1811 = vadd.f32 0.0, %v1810
        %1812 = vdwg.mxu0
        %v1813 = vand.u32 %v1636, 4294901760
        %v1814 = vsub.f32 %v1636, %v1813
        %v1815 = vand.u32 %v1814, 4294901760
        %v1816 = vsub.f32 %v1814, %v1815
        %v1817 = vand.u32 %v1816, 4294901760
        %1818 = vmatpush.msra.mxu0 %v1817
        %v1819 = vand.u32 %v1628, 4294901760
        %v1820 = vsub.f32 %v1628, %v1819
        %v1821 = vand.u32 %v1820, 4294901760
        %v1822 = vsub.f32 %v1820, %v1821
        %v1823 = vand.u32 %v1822, 4294901760
        %1824 = vmatpush.msra.mxu0 %v1823
        %v1825 = vand.u32 %v1620, 4294901760
        %v1826 = vsub.f32 %v1620, %v1825
        %v1827 = vand.u32 %v1826, 4294901760
        %v1828 = vsub.f32 %v1826, %v1827
        %v1829 = vand.u32 %v1828, 4294901760
        %1830 = vmatpush.msra.mxu0 %v1829
        %v1831 = vand.u32 %v1612, 4294901760
        %v1832 = vsub.f32 %v1612, %v1831
        %v1833 = vand.u32 %v1832, 4294901760
        %v1834 = vsub.f32 %v1832, %v1833
        %v1835 = vand.u32 %v1834, 4294901760
        %1836 = vmatpush.msra.mxu0 %v1835
        %v1837 = vand.u32 %v1604, 4294901760
        %v1838 = vsub.f32 %v1604, %v1837
        %v1839 = vand.u32 %v1838, 4294901760
        %v1840 = vsub.f32 %v1838, %v1839
        %v1841 = vand.u32 %v1840, 4294901760
        %1842 = vmatpush.msra.mxu0 %v1841
        %v1843 = vand.u32 %v1596, 4294901760
        %v1844 = vsub.f32 %v1596, %v1843
        %v1845 = vand.u32 %v1844, 4294901760
        %v1846 = vsub.f32 %v1844, %v1845
        %v1847 = vand.u32 %v1846, 4294901760
        %1848 = vmatpush.msra.mxu0 %v1847
        %v1849 = vand.u32 %v1588, 4294901760
        %v1850 = vsub.f32 %v1588, %v1849
        %v1851 = vand.u32 %v1850, 4294901760
        %v1852 = vsub.f32 %v1850, %v1851
        %v1853 = vand.u32 %v1852, 4294901760
        %1854 = vmatpush.msra.mxu0 %v1853
        %v1855 = vand.u32 %v1580, 4294901760
        %v1856 = vsub.f32 %v1580, %v1855
        %v1857 = vand.u32 %v1856, 4294901760
        %v1858 = vsub.f32 %v1856, %v1857
        %v1859 = vand.u32 %v1858, 4294901760
        %1860 = vmatpush.msra.mxu0 %v1859
        %v1861 = vand.u32 %v1572, 4294901760
        %v1862 = vsub.f32 %v1572, %v1861
        %v1863 = vand.u32 %v1862, 4294901760
        %v1864 = vsub.f32 %v1862, %v1863
        %v1865 = vand.u32 %v1864, 4294901760
        %1866 = vmatpush.msra.mxu0 %v1865
        %v1867 = vand.u32 %v1564, 4294901760
        %v1868 = vsub.f32 %v1564, %v1867
        %v1869 = vand.u32 %v1868, 4294901760
        %v1870 = vsub.f32 %v1868, %v1869
        %v1871 = vand.u32 %v1870, 4294901760
        %1872 = vmatpush.msra.mxu0 %v1871
        %v1873 = vand.u32 %v1556, 4294901760
        %v1874 = vsub.f32 %v1556, %v1873
        %v1875 = vand.u32 %v1874, 4294901760
        %v1876 = vsub.f32 %v1874, %v1875
        %v1877 = vand.u32 %v1876, 4294901760
        %1878 = vmatpush.msra.mxu0 %v1877
        %v1879 = vand.u32 %v1548, 4294901760
        %v1880 = vsub.f32 %v1548, %v1879
        %v1881 = vand.u32 %v1880, 4294901760
        %v1882 = vsub.f32 %v1880, %v1881
        %v1883 = vand.u32 %v1882, 4294901760
        %1884 = vmatpush.msra.mxu0 %v1883
        %v1885 = vand.u32 %v1540, 4294901760
        %v1886 = vsub.f32 %v1540, %v1885
        %v1887 = vand.u32 %v1886, 4294901760
        %v1888 = vsub.f32 %v1886, %v1887
        %v1889 = vand.u32 %v1888, 4294901760
        %1890 = vmatpush.msra.mxu0 %v1889
        %v1891 = vand.u32 %v1532, 4294901760
        %v1892 = vsub.f32 %v1532, %v1891
        %v1893 = vand.u32 %v1892, 4294901760
        %v1894 = vsub.f32 %v1892, %v1893
        %v1895 = vand.u32 %v1894, 4294901760
        %1896 = vmatpush.msra.mxu0 %v1895
        %v1897 = vand.u32 %v1524, 4294901760
        %v1898 = vsub.f32 %v1524, %v1897
        %v1899 = vand.u32 %v1898, 4294901760
        %v1900 = vsub.f32 %v1898, %v1899
        %v1901 = vand.u32 %v1900, 4294901760
        %1902 = vmatpush.msra.mxu0 %v1901
        %v1903 = vand.u32 %v1516, 4294901760
        %v1904 = vsub.f32 %v1516, %v1903
        %v1905 = vand.u32 %v1904, 4294901760
        %v1906 = vsub.f32 %v1904, %v1905
        %v1907 = vand.u32 %v1906, 4294901760
        %1908 = vmatpush.msra.mxu0 %v1907
        %v1909 = vand.u32 %v1514, 4294901760
        %1910 = vmatmul.f32.gmra.mxu0 %v1909
        %v1911 = vpop.f32.mrf.mxu0
        %v1912 = vadd.f32 %v1811, %v1911
        %1913 = vdwg.mxu0
        %v1914 = vand.u32 %v1636, 4294901760
        %v1915 = vsub.f32 %v1636, %v1914
        %1916 = vmatpush.msra.mxu0 %v1915
        %v1917 = vand.u32 %v1628, 4294901760
        %v1918 = vsub.f32 %v1628, %v1917
        %1919 = vmatpush.msra.mxu0 %v1918
        %v1920 = vand.u32 %v1620, 4294901760
        %v1921 = vsub.f32 %v1620, %v1920
        %1922 = vmatpush.msra.mxu0 %v1921
        %v1923 = vand.u32 %v1612, 4294901760
        %v1924 = vsub.f32 %v1612, %v1923
        %1925 = vmatpush.msra.mxu0 %v1924
        %v1926 = vand.u32 %v1604, 4294901760
        %v1927 = vsub.f32 %v1604, %v1926
        %1928 = vmatpush.msra.mxu0 %v1927
        %v1929 = vand.u32 %v1596, 4294901760
        %v1930 = vsub.f32 %v1596, %v1929
        %1931 = vmatpush.msra.mxu0 %v1930
        %v1932 = vand.u32 %v1588, 4294901760
        %v1933 = vsub.f32 %v1588, %v1932
        %1934 = vmatpush.msra.mxu0 %v1933
        %v1935 = vand.u32 %v1580, 4294901760
        %v1936 = vsub.f32 %v1580, %v1935
        %1937 = vmatpush.msra.mxu0 %v1936
        %v1938 = vand.u32 %v1572, 4294901760
        %v1939 = vsub.f32 %v1572, %v1938
        %1940 = vmatpush.msra.mxu0 %v1939
        %v1941 = vand.u32 %v1564, 4294901760
        %v1942 = vsub.f32 %v1564, %v1941
        %1943 = vmatpush.msra.mxu0 %v1942
        %v1944 = vand.u32 %v1556, 4294901760
        %v1945 = vsub.f32 %v1556, %v1944
        %1946 = vmatpush.msra.mxu0 %v1945
        %v1947 = vand.u32 %v1548, 4294901760
        %v1948 = vsub.f32 %v1548, %v1947
        %1949 = vmatpush.msra.mxu0 %v1948
        %v1950 = vand.u32 %v1540, 4294901760
        %v1951 = vsub.f32 %v1540, %v1950
        %1952 = vmatpush.msra.mxu0 %v1951
        %v1953 = vand.u32 %v1532, 4294901760
        %v1954 = vsub.f32 %v1532, %v1953
        %1955 = vmatpush.msra.mxu0 %v1954
        %v1956 = vand.u32 %v1524, 4294901760
        %v1957 = vsub.f32 %v1524, %v1956
        %1958 = vmatpush.msra.mxu0 %v1957
        %v1959 = vand.u32 %v1516, 4294901760
        %v1960 = vsub.f32 %v1516, %v1959
        %1961 = vmatpush.msra.mxu0 %v1960
        %v1962 = vand.u32 %v1514, 4294901760
        %v1963 = vsub.f32 %v1514, %v1962
        %1964 = vmatmul.f32.gmra.mxu0 %v1963
        %v1965 = vpop.f32.mrf.mxu0
        %v1966 = vadd.f32 %v1912, %v1965
        %1967 = vdwg.mxu0
        %v1968 = vand.u32 %v1636, 4294901760
        %1969 = vmatpush.msra.mxu0 %v1968
        %v1970 = vand.u32 %v1628, 4294901760
        %1971 = vmatpush.msra.mxu0 %v1970
        %v1972 = vand.u32 %v1620, 4294901760
        %1973 = vmatpush.msra.mxu0 %v1972
        %v1974 = vand.u32 %v1612, 4294901760
        %1975 = vmatpush.msra.mxu0 %v1974
        %v1976 = vand.u32 %v1604, 4294901760
        %1977 = vmatpush.msra.mxu0 %v1976
        %v1978 = vand.u32 %v1596, 4294901760
        %1979 = vmatpush.msra.mxu0 %v1978
        %v1980 = vand.u32 %v1588, 4294901760
        %1981 = vmatpush.msra.mxu0 %v1980
        %v1982 = vand.u32 %v1580, 4294901760
        %1983 = vmatpush.msra.mxu0 %v1982
        %v1984 = vand.u32 %v1572, 4294901760
        %1985 = vmatpush.msra.mxu0 %v1984
        %v1986 = vand.u32 %v1564, 4294901760
        %1987 = vmatpush.msra.mxu0 %v1986
        %v1988 = vand.u32 %v1556, 4294901760
        %1989 = vmatpush.msra.mxu0 %v1988
        %v1990 = vand.u32 %v1548, 4294901760
        %1991 = vmatpush.msra.mxu0 %v1990
        %v1992 = vand.u32 %v1540, 4294901760
        %1993 = vmatpush.msra.mxu0 %v1992
        %v1994 = vand.u32 %v1532, 4294901760
        %1995 = vmatpush.msra.mxu0 %v1994
        %v1996 = vand.u32 %v1524, 4294901760
        %1997 = vmatpush.msra.mxu0 %v1996
        %v1998 = vand.u32 %v1516, 4294901760
        %1999 = vmatpush.msra.mxu0 %v1998
        %v2000 = vand.u32 %v1514, 4294901760
        %v2001 = vsub.f32 %v1514, %v2000
        %v2002 = vand.u32 %v2001, 4294901760
        %2003 = vmatmul.f32.gmra.mxu0 %v2002
        %v2004 = vpop.f32.mrf.mxu0
        %v2005 = vadd.f32 %v1966, %v2004
        %2006 = vdwg.mxu0
        %v2007 = vand.u32 %v1636, 4294901760
        %v2008 = vsub.f32 %v1636, %v2007
        %v2009 = vand.u32 %v2008, 4294901760
        %2010 = vmatpush.msra.mxu0 %v2009
        %v2011 = vand.u32 %v1628, 4294901760
        %v2012 = vsub.f32 %v1628, %v2011
        %v2013 = vand.u32 %v2012, 4294901760
        %2014 = vmatpush.msra.mxu0 %v2013
        %v2015 = vand.u32 %v1620, 4294901760
        %v2016 = vsub.f32 %v1620, %v2015
        %v2017 = vand.u32 %v2016, 4294901760
        %2018 = vmatpush.msra.mxu0 %v2017
        %v2019 = vand.u32 %v1612, 4294901760
        %v2020 = vsub.f32 %v1612, %v2019
        %v2021 = vand.u32 %v2020, 4294901760
        %2022 = vmatpush.msra.mxu0 %v2021
        %v2023 = vand.u32 %v1604, 4294901760
        %v2024 = vsub.f32 %v1604, %v2023
        %v2025 = vand.u32 %v2024, 4294901760
        %2026 = vmatpush.msra.mxu0 %v2025
        %v2027 = vand.u32 %v1596, 4294901760
        %v2028 = vsub.f32 %v1596, %v2027
        %v2029 = vand.u32 %v2028, 4294901760
        %2030 = vmatpush.msra.mxu0 %v2029
        %v2031 = vand.u32 %v1588, 4294901760
        %v2032 = vsub.f32 %v1588, %v2031
        %v2033 = vand.u32 %v2032, 4294901760
        %2034 = vmatpush.msra.mxu0 %v2033
        %v2035 = vand.u32 %v1580, 4294901760
        %v2036 = vsub.f32 %v1580, %v2035
        %v2037 = vand.u32 %v2036, 4294901760
        %2038 = vmatpush.msra.mxu0 %v2037
        %v2039 = vand.u32 %v1572, 4294901760
        %v2040 = vsub.f32 %v1572, %v2039
        %v2041 = vand.u32 %v2040, 4294901760
        %2042 = vmatpush.msra.mxu0 %v2041
        %v2043 = vand.u32 %v1564, 4294901760
        %v2044 = vsub.f32 %v1564, %v2043
        %v2045 = vand.u32 %v2044, 4294901760
        %2046 = vmatpush.msra.mxu0 %v2045
        %v2047 = vand.u32 %v1556, 4294901760
        %v2048 = vsub.f32 %v1556, %v2047
        %v2049 = vand.u32 %v2048, 4294901760
        %2050 = vmatpush.msra.mxu0 %v2049
        %v2051 = vand.u32 %v1548, 4294901760
        %v2052 = vsub.f32 %v1548, %v2051
        %v2053 = vand.u32 %v2052, 4294901760
        %2054 = vmatpush.msra.mxu0 %v2053
        %v2055 = vand.u32 %v1540, 4294901760
        %v2056 = vsub.f32 %v1540, %v2055
        %v2057 = vand.u32 %v2056, 4294901760
        %2058 = vmatpush.msra.mxu0 %v2057
        %v2059 = vand.u32 %v1532, 4294901760
        %v2060 = vsub.f32 %v1532, %v2059
        %v2061 = vand.u32 %v2060, 4294901760
        %2062 = vmatpush.msra.mxu0 %v2061
        %v2063 = vand.u32 %v1524, 4294901760
        %v2064 = vsub.f32 %v1524, %v2063
        %v2065 = vand.u32 %v2064, 4294901760
        %2066 = vmatpush.msra.mxu0 %v2065
        %v2067 = vand.u32 %v1516, 4294901760
        %v2068 = vsub.f32 %v1516, %v2067
        %v2069 = vand.u32 %v2068, 4294901760
        %2070 = vmatpush.msra.mxu0 %v2069
        %v2071 = vand.u32 %v1514, 4294901760
        %2072 = vmatmul.f32.gmra.mxu0 %v2071
        %v2073 = vpop.f32.mrf.mxu0
        %v2074 = vadd.f32 %v2005, %v2073
        %2075 = vdwg.mxu0
        %v2076 = vand.u32 %v1636, 4294901760
        %2077 = vmatpush.msra.mxu0 %v2076
        %v2078 = vand.u32 %v1628, 4294901760
        %2079 = vmatpush.msra.mxu0 %v2078
        %v2080 = vand.u32 %v1620, 4294901760
        %2081 = vmatpush.msra.mxu0 %v2080
        %v2082 = vand.u32 %v1612, 4294901760
        %2083 = vmatpush.msra.mxu0 %v2082
        %v2084 = vand.u32 %v1604, 4294901760
        %2085 = vmatpush.msra.mxu0 %v2084
        %v2086 = vand.u32 %v1596, 4294901760
        %2087 = vmatpush.msra.mxu0 %v2086
        %v2088 = vand.u32 %v1588, 4294901760
        %2089 = vmatpush.msra.mxu0 %v2088
        %v2090 = vand.u32 %v1580, 4294901760
        %2091 = vmatpush.msra.mxu0 %v2090
        %v2092 = vand.u32 %v1572, 4294901760
        %2093 = vmatpush.msra.mxu0 %v2092
        %v2094 = vand.u32 %v1564, 4294901760
        %2095 = vmatpush.msra.mxu0 %v2094
        %v2096 = vand.u32 %v1556, 4294901760
        %2097 = vmatpush.msra.mxu0 %v2096
        %v2098 = vand.u32 %v1548, 4294901760
        %2099 = vmatpush.msra.mxu0 %v2098
        %v2100 = vand.u32 %v1540, 4294901760
        %2101 = vmatpush.msra.mxu0 %v2100
        %v2102 = vand.u32 %v1532, 4294901760
        %2103 = vmatpush.msra.mxu0 %v2102
        %v2104 = vand.u32 %v1524, 4294901760
        %2105 = vmatpush.msra.mxu0 %v2104
        %v2106 = vand.u32 %v1516, 4294901760
        %2107 = vmatpush.msra.mxu0 %v2106
        %v2108 = vand.u32 %v1514, 4294901760
        %2109 = vmatmul.f32.gmra.mxu0 %v2108
        %v2110 = vpop.f32.mrf.mxu0
        %v2111 = vadd.f32 %v2074, %v2110
        %2112 = vdwg.mxu0
        %v2113 = vand.u32 %v1764, 4294901760
        %2114 = vmatpush.msra.mxu0 %v2113
        %v2115 = vand.u32 %v1756, 4294901760
        %2116 = vmatpush.msra.mxu0 %v2115
        %v2117 = vand.u32 %v1748, 4294901760
        %2118 = vmatpush.msra.mxu0 %v2117
        %v2119 = vand.u32 %v1740, 4294901760
        %2120 = vmatpush.msra.mxu0 %v2119
        %v2121 = vand.u32 %v1732, 4294901760
        %2122 = vmatpush.msra.mxu0 %v2121
        %v2123 = vand.u32 %v1724, 4294901760
        %2124 = vmatpush.msra.mxu0 %v2123
        %v2125 = vand.u32 %v1716, 4294901760
        %2126 = vmatpush.msra.mxu0 %v2125
        %v2127 = vand.u32 %v1708, 4294901760
        %2128 = vmatpush.msra.mxu0 %v2127
        %v2129 = vand.u32 %v1700, 4294901760
        %2130 = vmatpush.msra.mxu0 %v2129
        %v2131 = vand.u32 %v1692, 4294901760
        %2132 = vmatpush.msra.mxu0 %v2131
        %v2133 = vand.u32 %v1684, 4294901760
        %2134 = vmatpush.msra.mxu0 %v2133
        %v2135 = vand.u32 %v1676, 4294901760
        %2136 = vmatpush.msra.mxu0 %v2135
        %v2137 = vand.u32 %v1668, 4294901760
        %2138 = vmatpush.msra.mxu0 %v2137
        %v2139 = vand.u32 %v1660, 4294901760
        %2140 = vmatpush.msra.mxu0 %v2139
        %v2141 = vand.u32 %v1652, 4294901760
        %2142 = vmatpush.msra.mxu0 %v2141
        %v2143 = vand.u32 %v1644, 4294901760
        %2144 = vmatpush.msra.mxu0 %v2143
        %v2145 = vand.u32 %v1515, 4294901760
        %v2146 = vsub.f32 %v1515, %v2145
        %v2147 = vand.u32 %v2146, 4294901760
        %v2148 = vsub.f32 %v2146, %v2147
        %v2149 = vand.u32 %v2148, 4294901760
        %2150 = vmatmul.f32.gmra.mxu0 %v2149
        %v2151 = vpop.f32.mrf.mxu0
        %v2152 = vadd.f32 %v2111, %v2151
        %2153 = vdwg.mxu0
        %v2154 = vand.u32 %v1764, 4294901760
        %v2155 = vsub.f32 %v1764, %v2154
        %v2156 = vand.u32 %v2155, 4294901760
        %v2157 = vsub.f32 %v2155, %v2156
        %v2158 = vand.u32 %v2157, 4294901760
        %2159 = vmatpush.msra.mxu0 %v2158
        %v2160 = vand.u32 %v1756, 4294901760
        %v2161 = vsub.f32 %v1756, %v2160
        %v2162 = vand.u32 %v2161, 4294901760
        %v2163 = vsub.f32 %v2161, %v2162
        %v2164 = vand.u32 %v2163, 4294901760
        %2165 = vmatpush.msra.mxu0 %v2164
        %v2166 = vand.u32 %v1748, 4294901760
        %v2167 = vsub.f32 %v1748, %v2166
        %v2168 = vand.u32 %v2167, 4294901760
        %v2169 = vsub.f32 %v2167, %v2168
        %v2170 = vand.u32 %v2169, 4294901760
        %2171 = vmatpush.msra.mxu0 %v2170
        %v2172 = vand.u32 %v1740, 4294901760
        %v2173 = vsub.f32 %v1740, %v2172
        %v2174 = vand.u32 %v2173, 4294901760
        %v2175 = vsub.f32 %v2173, %v2174
        %v2176 = vand.u32 %v2175, 4294901760
        %2177 = vmatpush.msra.mxu0 %v2176
        %v2178 = vand.u32 %v1732, 4294901760
        %v2179 = vsub.f32 %v1732, %v2178
        %v2180 = vand.u32 %v2179, 4294901760
        %v2181 = vsub.f32 %v2179, %v2180
        %v2182 = vand.u32 %v2181, 4294901760
        %2183 = vmatpush.msra.mxu0 %v2182
        %v2184 = vand.u32 %v1724, 4294901760
        %v2185 = vsub.f32 %v1724, %v2184
        %v2186 = vand.u32 %v2185, 4294901760
        %v2187 = vsub.f32 %v2185, %v2186
        %v2188 = vand.u32 %v2187, 4294901760
        %2189 = vmatpush.msra.mxu0 %v2188
        %v2190 = vand.u32 %v1716, 4294901760
        %v2191 = vsub.f32 %v1716, %v2190
        %v2192 = vand.u32 %v2191, 4294901760
        %v2193 = vsub.f32 %v2191, %v2192
        %v2194 = vand.u32 %v2193, 4294901760
        %2195 = vmatpush.msra.mxu0 %v2194
        %v2196 = vand.u32 %v1708, 4294901760
        %v2197 = vsub.f32 %v1708, %v2196
        %v2198 = vand.u32 %v2197, 4294901760
        %v2199 = vsub.f32 %v2197, %v2198
        %v2200 = vand.u32 %v2199, 4294901760
        %2201 = vmatpush.msra.mxu0 %v2200
        %v2202 = vand.u32 %v1700, 4294901760
        %v2203 = vsub.f32 %v1700, %v2202
        %v2204 = vand.u32 %v2203, 4294901760
        %v2205 = vsub.f32 %v2203, %v2204
        %v2206 = vand.u32 %v2205, 4294901760
        %2207 = vmatpush.msra.mxu0 %v2206
        %v2208 = vand.u32 %v1692, 4294901760
        %v2209 = vsub.f32 %v1692, %v2208
        %v2210 = vand.u32 %v2209, 4294901760
        %v2211 = vsub.f32 %v2209, %v2210
        %v2212 = vand.u32 %v2211, 4294901760
        %2213 = vmatpush.msra.mxu0 %v2212
        %v2214 = vand.u32 %v1684, 4294901760
        %v2215 = vsub.f32 %v1684, %v2214
        %v2216 = vand.u32 %v2215, 4294901760
        %v2217 = vsub.f32 %v2215, %v2216
        %v2218 = vand.u32 %v2217, 4294901760
        %2219 = vmatpush.msra.mxu0 %v2218
        %v2220 = vand.u32 %v1676, 4294901760
        %v2221 = vsub.f32 %v1676, %v2220
        %v2222 = vand.u32 %v2221, 4294901760
        %v2223 = vsub.f32 %v2221, %v2222
        %v2224 = vand.u32 %v2223, 4294901760
        %2225 = vmatpush.msra.mxu0 %v2224
        %v2226 = vand.u32 %v1668, 4294901760
        %v2227 = vsub.f32 %v1668, %v2226
        %v2228 = vand.u32 %v2227, 4294901760
        %v2229 = vsub.f32 %v2227, %v2228
        %v2230 = vand.u32 %v2229, 4294901760
        %2231 = vmatpush.msra.mxu0 %v2230
        %v2232 = vand.u32 %v1660, 4294901760
        %v2233 = vsub.f32 %v1660, %v2232
        %v2234 = vand.u32 %v2233, 4294901760
        %v2235 = vsub.f32 %v2233, %v2234
        %v2236 = vand.u32 %v2235, 4294901760
        %2237 = vmatpush.msra.mxu0 %v2236
        %v2238 = vand.u32 %v1652, 4294901760
        %v2239 = vsub.f32 %v1652, %v2238
        %v2240 = vand.u32 %v2239, 4294901760
        %v2241 = vsub.f32 %v2239, %v2240
        %v2242 = vand.u32 %v2241, 4294901760
        %2243 = vmatpush.msra.mxu0 %v2242
        %v2244 = vand.u32 %v1644, 4294901760
        %v2245 = vsub.f32 %v1644, %v2244
        %v2246 = vand.u32 %v2245, 4294901760
        %v2247 = vsub.f32 %v2245, %v2246
        %v2248 = vand.u32 %v2247, 4294901760
        %2249 = vmatpush.msra.mxu0 %v2248
        %v2250 = vand.u32 %v1515, 4294901760
        %2251 = vmatmul.f32.gmra.mxu0 %v2250
        %v2252 = vpop.f32.mrf.mxu0
        %v2253 = vadd.f32 %v2152, %v2252
        %2254 = vdwg.mxu0
        %v2255 = vand.u32 %v1764, 4294901760
        %v2256 = vsub.f32 %v1764, %v2255
        %2257 = vmatpush.msra.mxu0 %v2256
        %v2258 = vand.u32 %v1756, 4294901760
        %v2259 = vsub.f32 %v1756, %v2258
        %2260 = vmatpush.msra.mxu0 %v2259
        %v2261 = vand.u32 %v1748, 4294901760
        %v2262 = vsub.f32 %v1748, %v2261
        %2263 = vmatpush.msra.mxu0 %v2262
        %v2264 = vand.u32 %v1740, 4294901760
        %v2265 = vsub.f32 %v1740, %v2264
        %2266 = vmatpush.msra.mxu0 %v2265
        %v2267 = vand.u32 %v1732, 4294901760
        %v2268 = vsub.f32 %v1732, %v2267
        %2269 = vmatpush.msra.mxu0 %v2268
        %v2270 = vand.u32 %v1724, 4294901760
        %v2271 = vsub.f32 %v1724, %v2270
        %2272 = vmatpush.msra.mxu0 %v2271
        %v2273 = vand.u32 %v1716, 4294901760
        %v2274 = vsub.f32 %v1716, %v2273
        %2275 = vmatpush.msra.mxu0 %v2274
        %v2276 = vand.u32 %v1708, 4294901760
        %v2277 = vsub.f32 %v1708, %v2276
        %2278 = vmatpush.msra.mxu0 %v2277
        %v2279 = vand.u32 %v1700, 4294901760
        %v2280 = vsub.f32 %v1700, %v2279
        %2281 = vmatpush.msra.mxu0 %v2280
        %v2282 = vand.u32 %v1692, 4294901760
        %v2283 = vsub.f32 %v1692, %v2282
        %2284 = vmatpush.msra.mxu0 %v2283
        %v2285 = vand.u32 %v1684, 4294901760
        %v2286 = vsub.f32 %v1684, %v2285
        %2287 = vmatpush.msra.mxu0 %v2286
        %v2288 = vand.u32 %v1676, 4294901760
        %v2289 = vsub.f32 %v1676, %v2288
        %2290 = vmatpush.msra.mxu0 %v2289
        %v2291 = vand.u32 %v1668, 4294901760
        %v2292 = vsub.f32 %v1668, %v2291
        %2293 = vmatpush.msra.mxu0 %v2292
        %v2294 = vand.u32 %v1660, 4294901760
        %v2295 = vsub.f32 %v1660, %v2294
        %2296 = vmatpush.msra.mxu0 %v2295
        %v2297 = vand.u32 %v1652, 4294901760
        %v2298 = vsub.f32 %v1652, %v2297
        %2299 = vmatpush.msra.mxu0 %v2298
        %v2300 = vand.u32 %v1644, 4294901760
        %v2301 = vsub.f32 %v1644, %v2300
        %2302 = vmatpush.msra.mxu0 %v2301
        %v2303 = vand.u32 %v1515, 4294901760
        %v2304 = vsub.f32 %v1515, %v2303
        %2305 = vmatmul.f32.gmra.mxu0 %v2304
        %v2306 = vpop.f32.mrf.mxu0
        %v2307 = vadd.f32 %v2253, %v2306
        %2308 = vdwg.mxu0
        %v2309 = vand.u32 %v1764, 4294901760
        %2310 = vmatpush.msra.mxu0 %v2309
        %v2311 = vand.u32 %v1756, 4294901760
        %2312 = vmatpush.msra.mxu0 %v2311
        %v2313 = vand.u32 %v1748, 4294901760
        %2314 = vmatpush.msra.mxu0 %v2313
        %v2315 = vand.u32 %v1740, 4294901760
        %2316 = vmatpush.msra.mxu0 %v2315
        %v2317 = vand.u32 %v1732, 4294901760
        %2318 = vmatpush.msra.mxu0 %v2317
        %v2319 = vand.u32 %v1724, 4294901760
        %2320 = vmatpush.msra.mxu0 %v2319
        %v2321 = vand.u32 %v1716, 4294901760
        %2322 = vmatpush.msra.mxu0 %v2321
        %v2323 = vand.u32 %v1708, 4294901760
        %2324 = vmatpush.msra.mxu0 %v2323
        %v2325 = vand.u32 %v1700, 4294901760
        %2326 = vmatpush.msra.mxu0 %v2325
        %v2327 = vand.u32 %v1692, 4294901760
        %2328 = vmatpush.msra.mxu0 %v2327
        %v2329 = vand.u32 %v1684, 4294901760
        %2330 = vmatpush.msra.mxu0 %v2329
        %v2331 = vand.u32 %v1676, 4294901760
        %2332 = vmatpush.msra.mxu0 %v2331
        %v2333 = vand.u32 %v1668, 4294901760
        %2334 = vmatpush.msra.mxu0 %v2333
        %v2335 = vand.u32 %v1660, 4294901760
        %2336 = vmatpush.msra.mxu0 %v2335
        %v2337 = vand.u32 %v1652, 4294901760
        %2338 = vmatpush.msra.mxu0 %v2337
        %v2339 = vand.u32 %v1644, 4294901760
        %2340 = vmatpush.msra.mxu0 %v2339
        %v2341 = vand.u32 %v1515, 4294901760
        %v2342 = vsub.f32 %v1515, %v2341
        %v2343 = vand.u32 %v2342, 4294901760
        %2344 = vmatmul.f32.gmra.mxu0 %v2343
        %v2345 = vpop.f32.mrf.mxu0
        %v2346 = vadd.f32 %v2307, %v2345
        %2347 = vdwg.mxu0
        %v2348 = vand.u32 %v1764, 4294901760
        %v2349 = vsub.f32 %v1764, %v2348
        %v2350 = vand.u32 %v2349, 4294901760
        %2351 = vmatpush.msra.mxu0 %v2350
        %v2352 = vand.u32 %v1756, 4294901760
        %v2353 = vsub.f32 %v1756, %v2352
        %v2354 = vand.u32 %v2353, 4294901760
        %2355 = vmatpush.msra.mxu0 %v2354
        %v2356 = vand.u32 %v1748, 4294901760
        %v2357 = vsub.f32 %v1748, %v2356
        %v2358 = vand.u32 %v2357, 4294901760
        %2359 = vmatpush.msra.mxu0 %v2358
        %v2360 = vand.u32 %v1740, 4294901760
        %v2361 = vsub.f32 %v1740, %v2360
        %v2362 = vand.u32 %v2361, 4294901760
        %2363 = vmatpush.msra.mxu0 %v2362
        %v2364 = vand.u32 %v1732, 4294901760
        %v2365 = vsub.f32 %v1732, %v2364
        %v2366 = vand.u32 %v2365, 4294901760
        %2367 = vmatpush.msra.mxu0 %v2366
        %v2368 = vand.u32 %v1724, 4294901760
        %v2369 = vsub.f32 %v1724, %v2368
        %v2370 = vand.u32 %v2369, 4294901760
        %2371 = vmatpush.msra.mxu0 %v2370
        %v2372 = vand.u32 %v1716, 4294901760
        %v2373 = vsub.f32 %v1716, %v2372
        %v2374 = vand.u32 %v2373, 4294901760
        %2375 = vmatpush.msra.mxu0 %v2374
        %v2376 = vand.u32 %v1708, 4294901760
        %v2377 = vsub.f32 %v1708, %v2376
        %v2378 = vand.u32 %v2377, 4294901760
        %2379 = vmatpush.msra.mxu0 %v2378
        %v2380 = vand.u32 %v1700, 4294901760
        %v2381 = vsub.f32 %v1700, %v2380
        %v2382 = vand.u32 %v2381, 4294901760
        %2383 = vmatpush.msra.mxu0 %v2382
        %v2384 = vand.u32 %v1692, 4294901760
        %v2385 = vsub.f32 %v1692, %v2384
        %v2386 = vand.u32 %v2385, 4294901760
        %2387 = vmatpush.msra.mxu0 %v2386
        %v2388 = vand.u32 %v1684, 4294901760
        %v2389 = vsub.f32 %v1684, %v2388
        %v2390 = vand.u32 %v2389, 4294901760
        %2391 = vmatpush.msra.mxu0 %v2390
        %v2392 = vand.u32 %v1676, 4294901760
        %v2393 = vsub.f32 %v1676, %v2392
        %v2394 = vand.u32 %v2393, 4294901760
        %2395 = vmatpush.msra.mxu0 %v2394
        %v2396 = vand.u32 %v1668, 4294901760
        %v2397 = vsub.f32 %v1668, %v2396
        %v2398 = vand.u32 %v2397, 4294901760
        %2399 = vmatpush.msra.mxu0 %v2398
        %v2400 = vand.u32 %v1660, 4294901760
        %v2401 = vsub.f32 %v1660, %v2400
        %v2402 = vand.u32 %v2401, 4294901760
        %2403 = vmatpush.msra.mxu0 %v2402
        %v2404 = vand.u32 %v1652, 4294901760
        %v2405 = vsub.f32 %v1652, %v2404
        %v2406 = vand.u32 %v2405, 4294901760
        %2407 = vmatpush.msra.mxu0 %v2406
        %v2408 = vand.u32 %v1644, 4294901760
        %v2409 = vsub.f32 %v1644, %v2408
        %v2410 = vand.u32 %v2409, 4294901760
        %2411 = vmatpush.msra.mxu0 %v2410
        %v2412 = vand.u32 %v1515, 4294901760
        %2413 = vmatmul.f32.gmra.mxu0 %v2412
        %v2414 = vpop.f32.mrf.mxu0
        %v2415 = vadd.f32 %v2346, %v2414
        %2416 = vdwg.mxu0
        %v2417 = vand.u32 %v1764, 4294901760
        %2418 = vmatpush.msra.mxu0 %v2417
        %v2419 = vand.u32 %v1756, 4294901760
        %2420 = vmatpush.msra.mxu0 %v2419
        %v2421 = vand.u32 %v1748, 4294901760
        %2422 = vmatpush.msra.mxu0 %v2421
        %v2423 = vand.u32 %v1740, 4294901760
        %2424 = vmatpush.msra.mxu0 %v2423
        %v2425 = vand.u32 %v1732, 4294901760
        %2426 = vmatpush.msra.mxu0 %v2425
        %v2427 = vand.u32 %v1724, 4294901760
        %2428 = vmatpush.msra.mxu0 %v2427
        %v2429 = vand.u32 %v1716, 4294901760
        %2430 = vmatpush.msra.mxu0 %v2429
        %v2431 = vand.u32 %v1708, 4294901760
        %2432 = vmatpush.msra.mxu0 %v2431
        %v2433 = vand.u32 %v1700, 4294901760
        %2434 = vmatpush.msra.mxu0 %v2433
        %v2435 = vand.u32 %v1692, 4294901760
        %2436 = vmatpush.msra.mxu0 %v2435
        %v2437 = vand.u32 %v1684, 4294901760
        %2438 = vmatpush.msra.mxu0 %v2437
        %v2439 = vand.u32 %v1676, 4294901760
        %2440 = vmatpush.msra.mxu0 %v2439
        %v2441 = vand.u32 %v1668, 4294901760
        %2442 = vmatpush.msra.mxu0 %v2441
        %v2443 = vand.u32 %v1660, 4294901760
        %2444 = vmatpush.msra.mxu0 %v2443
        %v2445 = vand.u32 %v1652, 4294901760
        %2446 = vmatpush.msra.mxu0 %v2445
        %v2447 = vand.u32 %v1644, 4294901760
        %2448 = vmatpush.msra.mxu0 %v2447
        %v2449 = vand.u32 %v1515, 4294901760
        %2450 = vmatmul.f32.gmra.mxu0 %v2449
        %v2451 = vpop.f32.mrf.mxu0
        %v2452 = vadd.f32 %v2415, %v2451
        %2453 = vdwg.mxu0
        %v2454 = vand.u32 %v1637, 4294901760
        %2455 = vmatpush.msra.mxu0 %v2454
        %v2456 = vand.u32 %v1629, 4294901760
        %2457 = vmatpush.msra.mxu0 %v2456
        %v2458 = vand.u32 %v1621, 4294901760
        %2459 = vmatpush.msra.mxu0 %v2458
        %v2460 = vand.u32 %v1613, 4294901760
        %2461 = vmatpush.msra.mxu0 %v2460
        %v2462 = vand.u32 %v1605, 4294901760
        %2463 = vmatpush.msra.mxu0 %v2462
        %v2464 = vand.u32 %v1597, 4294901760
        %2465 = vmatpush.msra.mxu0 %v2464
        %v2466 = vand.u32 %v1589, 4294901760
        %2467 = vmatpush.msra.mxu0 %v2466
        %v2468 = vand.u32 %v1581, 4294901760
        %2469 = vmatpush.msra.mxu0 %v2468
        %v2470 = vand.u32 %v1573, 4294901760
        %2471 = vmatpush.msra.mxu0 %v2470
        %v2472 = vand.u32 %v1565, 4294901760
        %2473 = vmatpush.msra.mxu0 %v2472
        %v2474 = vand.u32 %v1557, 4294901760
        %2475 = vmatpush.msra.mxu0 %v2474
        %v2476 = vand.u32 %v1549, 4294901760
        %2477 = vmatpush.msra.mxu0 %v2476
        %v2478 = vand.u32 %v1541, 4294901760
        %2479 = vmatpush.msra.mxu0 %v2478
        %v2480 = vand.u32 %v1533, 4294901760
        %2481 = vmatpush.msra.mxu0 %v2480
        %v2482 = vand.u32 %v1525, 4294901760
        %2483 = vmatpush.msra.mxu0 %v2482
        %v2484 = vand.u32 %v1517, 4294901760
        %2485 = vmatpush.msra.mxu0 %v2484
        %v2486 = vand.u32 %v1514, 4294901760
        %v2487 = vsub.f32 %v1514, %v2486
        %v2488 = vand.u32 %v2487, 4294901760
        %v2489 = vsub.f32 %v2487, %v2488
        %v2490 = vand.u32 %v2489, 4294901760
        %2491 = vmatmul.f32.gmra.mxu0 %v2490
        %v2492 = vpop.f32.mrf.mxu0
        %v2493 = vadd.f32 0.0, %v2492
        %2494 = vdwg.mxu0
        %v2495 = vand.u32 %v1637, 4294901760
        %v2496 = vsub.f32 %v1637, %v2495
        %v2497 = vand.u32 %v2496, 4294901760
        %v2498 = vsub.f32 %v2496, %v2497
        %v2499 = vand.u32 %v2498, 4294901760
        %2500 = vmatpush.msra.mxu0 %v2499
        %v2501 = vand.u32 %v1629, 4294901760
        %v2502 = vsub.f32 %v1629, %v2501
        %v2503 = vand.u32 %v2502, 4294901760
        %v2504 = vsub.f32 %v2502, %v2503
        %v2505 = vand.u32 %v2504, 4294901760
        %2506 = vmatpush.msra.mxu0 %v2505
        %v2507 = vand.u32 %v1621, 4294901760
        %v2508 = vsub.f32 %v1621, %v2507
        %v2509 = vand.u32 %v2508, 4294901760
        %v2510 = vsub.f32 %v2508, %v2509
        %v2511 = vand.u32 %v2510, 4294901760
        %2512 = vmatpush.msra.mxu0 %v2511
        %v2513 = vand.u32 %v1613, 4294901760
        %v2514 = vsub.f32 %v1613, %v2513
        %v2515 = vand.u32 %v2514, 4294901760
        %v2516 = vsub.f32 %v2514, %v2515
        %v2517 = vand.u32 %v2516, 4294901760
        %2518 = vmatpush.msra.mxu0 %v2517
        %v2519 = vand.u32 %v1605, 4294901760
        %v2520 = vsub.f32 %v1605, %v2519
        %v2521 = vand.u32 %v2520, 4294901760
        %v2522 = vsub.f32 %v2520, %v2521
        %v2523 = vand.u32 %v2522, 4294901760
        %2524 = vmatpush.msra.mxu0 %v2523
        %v2525 = vand.u32 %v1597, 4294901760
        %v2526 = vsub.f32 %v1597, %v2525
        %v2527 = vand.u32 %v2526, 4294901760
        %v2528 = vsub.f32 %v2526, %v2527
        %v2529 = vand.u32 %v2528, 4294901760
        %2530 = vmatpush.msra.mxu0 %v2529
        %v2531 = vand.u32 %v1589, 4294901760
        %v2532 = vsub.f32 %v1589, %v2531
        %v2533 = vand.u32 %v2532, 4294901760
        %v2534 = vsub.f32 %v2532, %v2533
        %v2535 = vand.u32 %v2534, 4294901760
        %2536 = vmatpush.msra.mxu0 %v2535
        %v2537 = vand.u32 %v1581, 4294901760
        %v2538 = vsub.f32 %v1581, %v2537
        %v2539 = vand.u32 %v2538, 4294901760
        %v2540 = vsub.f32 %v2538, %v2539
        %v2541 = vand.u32 %v2540, 4294901760
        %2542 = vmatpush.msra.mxu0 %v2541
        %v2543 = vand.u32 %v1573, 4294901760
        %v2544 = vsub.f32 %v1573, %v2543
        %v2545 = vand.u32 %v2544, 4294901760
        %v2546 = vsub.f32 %v2544, %v2545
        %v2547 = vand.u32 %v2546, 4294901760
        %2548 = vmatpush.msra.mxu0 %v2547
        %v2549 = vand.u32 %v1565, 4294901760
        %v2550 = vsub.f32 %v1565, %v2549
        %v2551 = vand.u32 %v2550, 4294901760
        %v2552 = vsub.f32 %v2550, %v2551
        %v2553 = vand.u32 %v2552, 4294901760
        %2554 = vmatpush.msra.mxu0 %v2553
        %v2555 = vand.u32 %v1557, 4294901760
        %v2556 = vsub.f32 %v1557, %v2555
        %v2557 = vand.u32 %v2556, 4294901760
        %v2558 = vsub.f32 %v2556, %v2557
        %v2559 = vand.u32 %v2558, 4294901760
        %2560 = vmatpush.msra.mxu0 %v2559
        %v2561 = vand.u32 %v1549, 4294901760
        %v2562 = vsub.f32 %v1549, %v2561
        %v2563 = vand.u32 %v2562, 4294901760
        %v2564 = vsub.f32 %v2562, %v2563
        %v2565 = vand.u32 %v2564, 4294901760
        %2566 = vmatpush.msra.mxu0 %v2565
        %v2567 = vand.u32 %v1541, 4294901760
        %v2568 = vsub.f32 %v1541, %v2567
        %v2569 = vand.u32 %v2568, 4294901760
        %v2570 = vsub.f32 %v2568, %v2569
        %v2571 = vand.u32 %v2570, 4294901760
        %2572 = vmatpush.msra.mxu0 %v2571
        %v2573 = vand.u32 %v1533, 4294901760
        %v2574 = vsub.f32 %v1533, %v2573
        %v2575 = vand.u32 %v2574, 4294901760
        %v2576 = vsub.f32 %v2574, %v2575
        %v2577 = vand.u32 %v2576, 4294901760
        %2578 = vmatpush.msra.mxu0 %v2577
        %v2579 = vand.u32 %v1525, 4294901760
        %v2580 = vsub.f32 %v1525, %v2579
        %v2581 = vand.u32 %v2580, 4294901760
        %v2582 = vsub.f32 %v2580, %v2581
        %v2583 = vand.u32 %v2582, 4294901760
        %2584 = vmatpush.msra.mxu0 %v2583
        %v2585 = vand.u32 %v1517, 4294901760
        %v2586 = vsub.f32 %v1517, %v2585
        %v2587 = vand.u32 %v2586, 4294901760
        %v2588 = vsub.f32 %v2586, %v2587
        %v2589 = vand.u32 %v2588, 4294901760
        %2590 = vmatpush.msra.mxu0 %v2589
        %v2591 = vand.u32 %v1514, 4294901760
        %2592 = vmatmul.f32.gmra.mxu0 %v2591
        %v2593 = vpop.f32.mrf.mxu0
        %v2594 = vadd.f32 %v2493, %v2593
        %2595 = vdwg.mxu0
        %v2596 = vand.u32 %v1637, 4294901760
        %v2597 = vsub.f32 %v1637, %v2596
        %2598 = vmatpush.msra.mxu0 %v2597
        %v2599 = vand.u32 %v1629, 4294901760
        %v2600 = vsub.f32 %v1629, %v2599
        %2601 = vmatpush.msra.mxu0 %v2600
        %v2602 = vand.u32 %v1621, 4294901760
        %v2603 = vsub.f32 %v1621, %v2602
        %2604 = vmatpush.msra.mxu0 %v2603
        %v2605 = vand.u32 %v1613, 4294901760
        %v2606 = vsub.f32 %v1613, %v2605
        %2607 = vmatpush.msra.mxu0 %v2606
        %v2608 = vand.u32 %v1605, 4294901760
        %v2609 = vsub.f32 %v1605, %v2608
        %2610 = vmatpush.msra.mxu0 %v2609
        %v2611 = vand.u32 %v1597, 4294901760
        %v2612 = vsub.f32 %v1597, %v2611
        %2613 = vmatpush.msra.mxu0 %v2612
        %v2614 = vand.u32 %v1589, 4294901760
        %v2615 = vsub.f32 %v1589, %v2614
        %2616 = vmatpush.msra.mxu0 %v2615
        %v2617 = vand.u32 %v1581, 4294901760
        %v2618 = vsub.f32 %v1581, %v2617
        %2619 = vmatpush.msra.mxu0 %v2618
        %v2620 = vand.u32 %v1573, 4294901760
        %v2621 = vsub.f32 %v1573, %v2620
        %2622 = vmatpush.msra.mxu0 %v2621
        %v2623 = vand.u32 %v1565, 4294901760
        %v2624 = vsub.f32 %v1565, %v2623
        %2625 = vmatpush.msra.mxu0 %v2624
        %v2626 = vand.u32 %v1557, 4294901760
        %v2627 = vsub.f32 %v1557, %v2626
        %2628 = vmatpush.msra.mxu0 %v2627
        %v2629 = vand.u32 %v1549, 4294901760
        %v2630 = vsub.f32 %v1549, %v2629
        %2631 = vmatpush.msra.mxu0 %v2630
        %v2632 = vand.u32 %v1541, 4294901760
        %v2633 = vsub.f32 %v1541, %v2632
        %2634 = vmatpush.msra.mxu0 %v2633
        %v2635 = vand.u32 %v1533, 4294901760
        %v2636 = vsub.f32 %v1533, %v2635
        %2637 = vmatpush.msra.mxu0 %v2636
        %v2638 = vand.u32 %v1525, 4294901760
        %v2639 = vsub.f32 %v1525, %v2638
        %2640 = vmatpush.msra.mxu0 %v2639
        %v2641 = vand.u32 %v1517, 4294901760
        %v2642 = vsub.f32 %v1517, %v2641
        %2643 = vmatpush.msra.mxu0 %v2642
        %v2644 = vand.u32 %v1514, 4294901760
        %v2645 = vsub.f32 %v1514, %v2644
        %2646 = vmatmul.f32.gmra.mxu0 %v2645
        %v2647 = vpop.f32.mrf.mxu0
        %v2648 = vadd.f32 %v2594, %v2647
        %2649 = vdwg.mxu0
        %v2650 = vand.u32 %v1637, 4294901760
        %2651 = vmatpush.msra.mxu0 %v2650
        %v2652 = vand.u32 %v1629, 4294901760
        %2653 = vmatpush.msra.mxu0 %v2652
        %v2654 = vand.u32 %v1621, 4294901760
        %2655 = vmatpush.msra.mxu0 %v2654
        %v2656 = vand.u32 %v1613, 4294901760
        %2657 = vmatpush.msra.mxu0 %v2656
        %v2658 = vand.u32 %v1605, 4294901760
        %2659 = vmatpush.msra.mxu0 %v2658
        %v2660 = vand.u32 %v1597, 4294901760
        %2661 = vmatpush.msra.mxu0 %v2660
        %v2662 = vand.u32 %v1589, 4294901760
        %2663 = vmatpush.msra.mxu0 %v2662
        %v2664 = vand.u32 %v1581, 4294901760
        %2665 = vmatpush.msra.mxu0 %v2664
        %v2666 = vand.u32 %v1573, 4294901760
        %2667 = vmatpush.msra.mxu0 %v2666
        %v2668 = vand.u32 %v1565, 4294901760
        %2669 = vmatpush.msra.mxu0 %v2668
        %v2670 = vand.u32 %v1557, 4294901760
        %2671 = vmatpush.msra.mxu0 %v2670
        %v2672 = vand.u32 %v1549, 4294901760
        %2673 = vmatpush.msra.mxu0 %v2672
        %v2674 = vand.u32 %v1541, 4294901760
        %2675 = vmatpush.msra.mxu0 %v2674
        %v2676 = vand.u32 %v1533, 4294901760
        %2677 = vmatpush.msra.mxu0 %v2676
        %v2678 = vand.u32 %v1525, 4294901760
        %2679 = vmatpush.msra.mxu0 %v2678
        %v2680 = vand.u32 %v1517, 4294901760
        %2681 = vmatpush.msra.mxu0 %v2680
        %v2682 = vand.u32 %v1514, 4294901760
        %v2683 = vsub.f32 %v1514, %v2682
        %v2684 = vand.u32 %v2683, 4294901760
        %2685 = vmatmul.f32.gmra.mxu0 %v2684
        %v2686 = vpop.f32.mrf.mxu0
        %v2687 = vadd.f32 %v2648, %v2686
        %2688 = vdwg.mxu0
        %v2689 = vand.u32 %v1637, 4294901760
        %v2690 = vsub.f32 %v1637, %v2689
        %v2691 = vand.u32 %v2690, 4294901760
        %2692 = vmatpush.msra.mxu0 %v2691
        %v2693 = vand.u32 %v1629, 4294901760
        %v2694 = vsub.f32 %v1629, %v2693
        %v2695 = vand.u32 %v2694, 4294901760
        %2696 = vmatpush.msra.mxu0 %v2695
        %v2697 = vand.u32 %v1621, 4294901760
        %v2698 = vsub.f32 %v1621, %v2697
        %v2699 = vand.u32 %v2698, 4294901760
        %2700 = vmatpush.msra.mxu0 %v2699
        %v2701 = vand.u32 %v1613, 4294901760
        %v2702 = vsub.f32 %v1613, %v2701
        %v2703 = vand.u32 %v2702, 4294901760
        %2704 = vmatpush.msra.mxu0 %v2703
        %v2705 = vand.u32 %v1605, 4294901760
        %v2706 = vsub.f32 %v1605, %v2705
        %v2707 = vand.u32 %v2706, 4294901760
        %2708 = vmatpush.msra.mxu0 %v2707
        %v2709 = vand.u32 %v1597, 4294901760
        %v2710 = vsub.f32 %v1597, %v2709
        %v2711 = vand.u32 %v2710, 4294901760
        %2712 = vmatpush.msra.mxu0 %v2711
        %v2713 = vand.u32 %v1589, 4294901760
        %v2714 = vsub.f32 %v1589, %v2713
        %v2715 = vand.u32 %v2714, 4294901760
        %2716 = vmatpush.msra.mxu0 %v2715
        %v2717 = vand.u32 %v1581, 4294901760
        %v2718 = vsub.f32 %v1581, %v2717
        %v2719 = vand.u32 %v2718, 4294901760
        %2720 = vmatpush.msra.mxu0 %v2719
        %v2721 = vand.u32 %v1573, 4294901760
        %v2722 = vsub.f32 %v1573, %v2721
        %v2723 = vand.u32 %v2722, 4294901760
        %2724 = vmatpush.msra.mxu0 %v2723
        %v2725 = vand.u32 %v1565, 4294901760
        %v2726 = vsub.f32 %v1565, %v2725
        %v2727 = vand.u32 %v2726, 4294901760
        %2728 = vmatpush.msra.mxu0 %v2727
        %v2729 = vand.u32 %v1557, 4294901760
        %v2730 = vsub.f32 %v1557, %v2729
        %v2731 = vand.u32 %v2730, 4294901760
        %2732 = vmatpush.msra.mxu0 %v2731
        %v2733 = vand.u32 %v1549, 4294901760
        %v2734 = vsub.f32 %v1549, %v2733
        %v2735 = vand.u32 %v2734, 4294901760
        %2736 = vmatpush.msra.mxu0 %v2735
        %v2737 = vand.u32 %v1541, 4294901760
        %v2738 = vsub.f32 %v1541, %v2737
        %v2739 = vand.u32 %v2738, 4294901760
        %2740 = vmatpush.msra.mxu0 %v2739
        %v2741 = vand.u32 %v1533, 4294901760
        %v2742 = vsub.f32 %v1533, %v2741
        %v2743 = vand.u32 %v2742, 4294901760
        %2744 = vmatpush.msra.mxu0 %v2743
        %v2745 = vand.u32 %v1525, 4294901760
        %v2746 = vsub.f32 %v1525, %v2745
        %v2747 = vand.u32 %v2746, 4294901760
        %2748 = vmatpush.msra.mxu0 %v2747
        %v2749 = vand.u32 %v1517, 4294901760
        %v2750 = vsub.f32 %v1517, %v2749
        %v2751 = vand.u32 %v2750, 4294901760
        %2752 = vmatpush.msra.mxu0 %v2751
        %v2753 = vand.u32 %v1514, 4294901760
        %2754 = vmatmul.f32.gmra.mxu0 %v2753
        %v2755 = vpop.f32.mrf.mxu0
        %v2756 = vadd.f32 %v2687, %v2755
        %2757 = vdwg.mxu0
        %v2758 = vand.u32 %v1637, 4294901760
        %2759 = vmatpush.msra.mxu0 %v2758
        %v2760 = vand.u32 %v1629, 4294901760
        %2761 = vmatpush.msra.mxu0 %v2760
        %v2762 = vand.u32 %v1621, 4294901760
        %2763 = vmatpush.msra.mxu0 %v2762
        %v2764 = vand.u32 %v1613, 4294901760
        %2765 = vmatpush.msra.mxu0 %v2764
        %v2766 = vand.u32 %v1605, 4294901760
        %2767 = vmatpush.msra.mxu0 %v2766
        %v2768 = vand.u32 %v1597, 4294901760
        %2769 = vmatpush.msra.mxu0 %v2768
        %v2770 = vand.u32 %v1589, 4294901760
        %2771 = vmatpush.msra.mxu0 %v2770
        %v2772 = vand.u32 %v1581, 4294901760
        %2773 = vmatpush.msra.mxu0 %v2772
        %v2774 = vand.u32 %v1573, 4294901760
        %2775 = vmatpush.msra.mxu0 %v2774
        %v2776 = vand.u32 %v1565, 4294901760
        %2777 = vmatpush.msra.mxu0 %v2776
        %v2778 = vand.u32 %v1557, 4294901760
        %2779 = vmatpush.msra.mxu0 %v2778
        %v2780 = vand.u32 %v1549, 4294901760
        %2781 = vmatpush.msra.mxu0 %v2780
        %v2782 = vand.u32 %v1541, 4294901760
        %2783 = vmatpush.msra.mxu0 %v2782
        %v2784 = vand.u32 %v1533, 4294901760
        %2785 = vmatpush.msra.mxu0 %v2784
        %v2786 = vand.u32 %v1525, 4294901760
        %2787 = vmatpush.msra.mxu0 %v2786
        %v2788 = vand.u32 %v1517, 4294901760
        %2789 = vmatpush.msra.mxu0 %v2788
        %v2790 = vand.u32 %v1514, 4294901760
        %2791 = vmatmul.f32.gmra.mxu0 %v2790
        %v2792 = vpop.f32.mrf.mxu0
        %v2793 = vadd.f32 %v2756, %v2792
        %2794 = vdwg.mxu0
        %v2795 = vand.u32 %v1765, 4294901760
        %2796 = vmatpush.msra.mxu0 %v2795
        %v2797 = vand.u32 %v1757, 4294901760
        %2798 = vmatpush.msra.mxu0 %v2797
        %v2799 = vand.u32 %v1749, 4294901760
        %2800 = vmatpush.msra.mxu0 %v2799
        %v2801 = vand.u32 %v1741, 4294901760
        %2802 = vmatpush.msra.mxu0 %v2801
        %v2803 = vand.u32 %v1733, 4294901760
        %2804 = vmatpush.msra.mxu0 %v2803
        %v2805 = vand.u32 %v1725, 4294901760
        %2806 = vmatpush.msra.mxu0 %v2805
        %v2807 = vand.u32 %v1717, 4294901760
        %2808 = vmatpush.msra.mxu0 %v2807
        %v2809 = vand.u32 %v1709, 4294901760
        %2810 = vmatpush.msra.mxu0 %v2809
        %v2811 = vand.u32 %v1701, 4294901760
        %2812 = vmatpush.msra.mxu0 %v2811
        %v2813 = vand.u32 %v1693, 4294901760
        %2814 = vmatpush.msra.mxu0 %v2813
        %v2815 = vand.u32 %v1685, 4294901760
        %2816 = vmatpush.msra.mxu0 %v2815
        %v2817 = vand.u32 %v1677, 4294901760
        %2818 = vmatpush.msra.mxu0 %v2817
        %v2819 = vand.u32 %v1669, 4294901760
        %2820 = vmatpush.msra.mxu0 %v2819
        %v2821 = vand.u32 %v1661, 4294901760
        %2822 = vmatpush.msra.mxu0 %v2821
        %v2823 = vand.u32 %v1653, 4294901760
        %2824 = vmatpush.msra.mxu0 %v2823
        %v2825 = vand.u32 %v1645, 4294901760
        %2826 = vmatpush.msra.mxu0 %v2825
        %v2827 = vand.u32 %v1515, 4294901760
        %v2828 = vsub.f32 %v1515, %v2827
        %v2829 = vand.u32 %v2828, 4294901760
        %v2830 = vsub.f32 %v2828, %v2829
        %v2831 = vand.u32 %v2830, 4294901760
        %2832 = vmatmul.f32.gmra.mxu0 %v2831
        %v2833 = vpop.f32.mrf.mxu0
        %v2834 = vadd.f32 %v2793, %v2833
        %2835 = vdwg.mxu0
        %v2836 = vand.u32 %v1765, 4294901760
        %v2837 = vsub.f32 %v1765, %v2836
        %v2838 = vand.u32 %v2837, 4294901760
        %v2839 = vsub.f32 %v2837, %v2838
        %v2840 = vand.u32 %v2839, 4294901760
        %2841 = vmatpush.msra.mxu0 %v2840
        %v2842 = vand.u32 %v1757, 4294901760
        %v2843 = vsub.f32 %v1757, %v2842
        %v2844 = vand.u32 %v2843, 4294901760
        %v2845 = vsub.f32 %v2843, %v2844
        %v2846 = vand.u32 %v2845, 4294901760
        %2847 = vmatpush.msra.mxu0 %v2846
        %v2848 = vand.u32 %v1749, 4294901760
        %v2849 = vsub.f32 %v1749, %v2848
        %v2850 = vand.u32 %v2849, 4294901760
        %v2851 = vsub.f32 %v2849, %v2850
        %v2852 = vand.u32 %v2851, 4294901760
        %2853 = vmatpush.msra.mxu0 %v2852
        %v2854 = vand.u32 %v1741, 4294901760
        %v2855 = vsub.f32 %v1741, %v2854
        %v2856 = vand.u32 %v2855, 4294901760
        %v2857 = vsub.f32 %v2855, %v2856
        %v2858 = vand.u32 %v2857, 4294901760
        %2859 = vmatpush.msra.mxu0 %v2858
        %v2860 = vand.u32 %v1733, 4294901760
        %v2861 = vsub.f32 %v1733, %v2860
        %v2862 = vand.u32 %v2861, 4294901760
        %v2863 = vsub.f32 %v2861, %v2862
        %v2864 = vand.u32 %v2863, 4294901760
        %2865 = vmatpush.msra.mxu0 %v2864
        %v2866 = vand.u32 %v1725, 4294901760
        %v2867 = vsub.f32 %v1725, %v2866
        %v2868 = vand.u32 %v2867, 4294901760
        %v2869 = vsub.f32 %v2867, %v2868
        %v2870 = vand.u32 %v2869, 4294901760
        %2871 = vmatpush.msra.mxu0 %v2870
        %v2872 = vand.u32 %v1717, 4294901760
        %v2873 = vsub.f32 %v1717, %v2872
        %v2874 = vand.u32 %v2873, 4294901760
        %v2875 = vsub.f32 %v2873, %v2874
        %v2876 = vand.u32 %v2875, 4294901760
        %2877 = vmatpush.msra.mxu0 %v2876
        %v2878 = vand.u32 %v1709, 4294901760
        %v2879 = vsub.f32 %v1709, %v2878
        %v2880 = vand.u32 %v2879, 4294901760
        %v2881 = vsub.f32 %v2879, %v2880
        %v2882 = vand.u32 %v2881, 4294901760
        %2883 = vmatpush.msra.mxu0 %v2882
        %v2884 = vand.u32 %v1701, 4294901760
        %v2885 = vsub.f32 %v1701, %v2884
        %v2886 = vand.u32 %v2885, 4294901760
        %v2887 = vsub.f32 %v2885, %v2886
        %v2888 = vand.u32 %v2887, 4294901760
        %2889 = vmatpush.msra.mxu0 %v2888
        %v2890 = vand.u32 %v1693, 4294901760
        %v2891 = vsub.f32 %v1693, %v2890
        %v2892 = vand.u32 %v2891, 4294901760
        %v2893 = vsub.f32 %v2891, %v2892
        %v2894 = vand.u32 %v2893, 4294901760
        %2895 = vmatpush.msra.mxu0 %v2894
        %v2896 = vand.u32 %v1685, 4294901760
        %v2897 = vsub.f32 %v1685, %v2896
        %v2898 = vand.u32 %v2897, 4294901760
        %v2899 = vsub.f32 %v2897, %v2898
        %v2900 = vand.u32 %v2899, 4294901760
        %2901 = vmatpush.msra.mxu0 %v2900
        %v2902 = vand.u32 %v1677, 4294901760
        %v2903 = vsub.f32 %v1677, %v2902
        %v2904 = vand.u32 %v2903, 4294901760
        %v2905 = vsub.f32 %v2903, %v2904
        %v2906 = vand.u32 %v2905, 4294901760
        %2907 = vmatpush.msra.mxu0 %v2906
        %v2908 = vand.u32 %v1669, 4294901760
        %v2909 = vsub.f32 %v1669, %v2908
        %v2910 = vand.u32 %v2909, 4294901760
        %v2911 = vsub.f32 %v2909, %v2910
        %v2912 = vand.u32 %v2911, 4294901760
        %2913 = vmatpush.msra.mxu0 %v2912
        %v2914 = vand.u32 %v1661, 4294901760
        %v2915 = vsub.f32 %v1661, %v2914
        %v2916 = vand.u32 %v2915, 4294901760
        %v2917 = vsub.f32 %v2915, %v2916
        %v2918 = vand.u32 %v2917, 4294901760
        %2919 = vmatpush.msra.mxu0 %v2918
        %v2920 = vand.u32 %v1653, 4294901760
        %v2921 = vsub.f32 %v1653, %v2920
        %v2922 = vand.u32 %v2921, 4294901760
        %v2923 = vsub.f32 %v2921, %v2922
        %v2924 = vand.u32 %v2923, 4294901760
        %2925 = vmatpush.msra.mxu0 %v2924
        %v2926 = vand.u32 %v1645, 4294901760
        %v2927 = vsub.f32 %v1645, %v2926
        %v2928 = vand.u32 %v2927, 4294901760
        %v2929 = vsub.f32 %v2927, %v2928
        %v2930 = vand.u32 %v2929, 4294901760
        %2931 = vmatpush.msra.mxu0 %v2930
        %v2932 = vand.u32 %v1515, 4294901760
        %2933 = vmatmul.f32.gmra.mxu0 %v2932
        %v2934 = vpop.f32.mrf.mxu0
        %v2935 = vadd.f32 %v2834, %v2934
        %2936 = vdwg.mxu0
        %v2937 = vand.u32 %v1765, 4294901760
        %v2938 = vsub.f32 %v1765, %v2937
        %2939 = vmatpush.msra.mxu0 %v2938
        %v2940 = vand.u32 %v1757, 4294901760
        %v2941 = vsub.f32 %v1757, %v2940
        %2942 = vmatpush.msra.mxu0 %v2941
        %v2943 = vand.u32 %v1749, 4294901760
        %v2944 = vsub.f32 %v1749, %v2943
        %2945 = vmatpush.msra.mxu0 %v2944
        %v2946 = vand.u32 %v1741, 4294901760
        %v2947 = vsub.f32 %v1741, %v2946
        %2948 = vmatpush.msra.mxu0 %v2947
        %v2949 = vand.u32 %v1733, 4294901760
        %v2950 = vsub.f32 %v1733, %v2949
        %2951 = vmatpush.msra.mxu0 %v2950
        %v2952 = vand.u32 %v1725, 4294901760
        %v2953 = vsub.f32 %v1725, %v2952
        %2954 = vmatpush.msra.mxu0 %v2953
        %v2955 = vand.u32 %v1717, 4294901760
        %v2956 = vsub.f32 %v1717, %v2955
        %2957 = vmatpush.msra.mxu0 %v2956
        %v2958 = vand.u32 %v1709, 4294901760
        %v2959 = vsub.f32 %v1709, %v2958
        %2960 = vmatpush.msra.mxu0 %v2959
        %v2961 = vand.u32 %v1701, 4294901760
        %v2962 = vsub.f32 %v1701, %v2961
        %2963 = vmatpush.msra.mxu0 %v2962
        %v2964 = vand.u32 %v1693, 4294901760
        %v2965 = vsub.f32 %v1693, %v2964
        %2966 = vmatpush.msra.mxu0 %v2965
        %v2967 = vand.u32 %v1685, 4294901760
        %v2968 = vsub.f32 %v1685, %v2967
        %2969 = vmatpush.msra.mxu0 %v2968
        %v2970 = vand.u32 %v1677, 4294901760
        %v2971 = vsub.f32 %v1677, %v2970
        %2972 = vmatpush.msra.mxu0 %v2971
        %v2973 = vand.u32 %v1669, 4294901760
        %v2974 = vsub.f32 %v1669, %v2973
        %2975 = vmatpush.msra.mxu0 %v2974
        %v2976 = vand.u32 %v1661, 4294901760
        %v2977 = vsub.f32 %v1661, %v2976
        %2978 = vmatpush.msra.mxu0 %v2977
        %v2979 = vand.u32 %v1653, 4294901760
        %v2980 = vsub.f32 %v1653, %v2979
        %2981 = vmatpush.msra.mxu0 %v2980
        %v2982 = vand.u32 %v1645, 4294901760
        %v2983 = vsub.f32 %v1645, %v2982
        %2984 = vmatpush.msra.mxu0 %v2983
        %v2985 = vand.u32 %v1515, 4294901760
        %v2986 = vsub.f32 %v1515, %v2985
        %2987 = vmatmul.f32.gmra.mxu0 %v2986
        %v2988 = vpop.f32.mrf.mxu0
        %v2989 = vadd.f32 %v2935, %v2988
        %2990 = vdwg.mxu0
        %v2991 = vand.u32 %v1765, 4294901760
        %2992 = vmatpush.msra.mxu0 %v2991
        %v2993 = vand.u32 %v1757, 4294901760
        %2994 = vmatpush.msra.mxu0 %v2993
        %v2995 = vand.u32 %v1749, 4294901760
        %2996 = vmatpush.msra.mxu0 %v2995
        %v2997 = vand.u32 %v1741, 4294901760
        %2998 = vmatpush.msra.mxu0 %v2997
        %v2999 = vand.u32 %v1733, 4294901760
        %3000 = vmatpush.msra.mxu0 %v2999
        %v3001 = vand.u32 %v1725, 4294901760
        %3002 = vmatpush.msra.mxu0 %v3001
        %v3003 = vand.u32 %v1717, 4294901760
        %3004 = vmatpush.msra.mxu0 %v3003
        %v3005 = vand.u32 %v1709, 4294901760
        %3006 = vmatpush.msra.mxu0 %v3005
        %v3007 = vand.u32 %v1701, 4294901760
        %3008 = vmatpush.msra.mxu0 %v3007
        %v3009 = vand.u32 %v1693, 4294901760
        %3010 = vmatpush.msra.mxu0 %v3009
        %v3011 = vand.u32 %v1685, 4294901760
        %3012 = vmatpush.msra.mxu0 %v3011
        %v3013 = vand.u32 %v1677, 4294901760
        %3014 = vmatpush.msra.mxu0 %v3013
        %v3015 = vand.u32 %v1669, 4294901760
        %3016 = vmatpush.msra.mxu0 %v3015
        %v3017 = vand.u32 %v1661, 4294901760
        %3018 = vmatpush.msra.mxu0 %v3017
        %v3019 = vand.u32 %v1653, 4294901760
        %3020 = vmatpush.msra.mxu0 %v3019
        %v3021 = vand.u32 %v1645, 4294901760
        %3022 = vmatpush.msra.mxu0 %v3021
        %v3023 = vand.u32 %v1515, 4294901760
        %v3024 = vsub.f32 %v1515, %v3023
        %v3025 = vand.u32 %v3024, 4294901760
        %3026 = vmatmul.f32.gmra.mxu0 %v3025
        %v3027 = vpop.f32.mrf.mxu0
        %v3028 = vadd.f32 %v2989, %v3027
        %3029 = vdwg.mxu0
        %v3030 = vand.u32 %v1765, 4294901760
        %v3031 = vsub.f32 %v1765, %v3030
        %v3032 = vand.u32 %v3031, 4294901760
        %3033 = vmatpush.msra.mxu0 %v3032
        %v3034 = vand.u32 %v1757, 4294901760
        %v3035 = vsub.f32 %v1757, %v3034
        %v3036 = vand.u32 %v3035, 4294901760
        %3037 = vmatpush.msra.mxu0 %v3036
        %v3038 = vand.u32 %v1749, 4294901760
        %v3039 = vsub.f32 %v1749, %v3038
        %v3040 = vand.u32 %v3039, 4294901760
        %3041 = vmatpush.msra.mxu0 %v3040
        %v3042 = vand.u32 %v1741, 4294901760
        %v3043 = vsub.f32 %v1741, %v3042
        %v3044 = vand.u32 %v3043, 4294901760
        %3045 = vmatpush.msra.mxu0 %v3044
        %v3046 = vand.u32 %v1733, 4294901760
        %v3047 = vsub.f32 %v1733, %v3046
        %v3048 = vand.u32 %v3047, 4294901760
        %3049 = vmatpush.msra.mxu0 %v3048
        %v3050 = vand.u32 %v1725, 4294901760
        %v3051 = vsub.f32 %v1725, %v3050
        %v3052 = vand.u32 %v3051, 4294901760
        %3053 = vmatpush.msra.mxu0 %v3052
        %v3054 = vand.u32 %v1717, 4294901760
        %v3055 = vsub.f32 %v1717, %v3054
        %v3056 = vand.u32 %v3055, 4294901760
        %3057 = vmatpush.msra.mxu0 %v3056
        %v3058 = vand.u32 %v1709, 4294901760
        %v3059 = vsub.f32 %v1709, %v3058
        %v3060 = vand.u32 %v3059, 4294901760
        %3061 = vmatpush.msra.mxu0 %v3060
        %v3062 = vand.u32 %v1701, 4294901760
        %v3063 = vsub.f32 %v1701, %v3062
        %v3064 = vand.u32 %v3063, 4294901760
        %3065 = vmatpush.msra.mxu0 %v3064
        %v3066 = vand.u32 %v1693, 4294901760
        %v3067 = vsub.f32 %v1693, %v3066
        %v3068 = vand.u32 %v3067, 4294901760
        %3069 = vmatpush.msra.mxu0 %v3068
        %v3070 = vand.u32 %v1685, 4294901760
        %v3071 = vsub.f32 %v1685, %v3070
        %v3072 = vand.u32 %v3071, 4294901760
        %3073 = vmatpush.msra.mxu0 %v3072
        %v3074 = vand.u32 %v1677, 4294901760
        %v3075 = vsub.f32 %v1677, %v3074
        %v3076 = vand.u32 %v3075, 4294901760
        %3077 = vmatpush.msra.mxu0 %v3076
        %v3078 = vand.u32 %v1669, 4294901760
        %v3079 = vsub.f32 %v1669, %v3078
        %v3080 = vand.u32 %v3079, 4294901760
        %3081 = vmatpush.msra.mxu0 %v3080
        %v3082 = vand.u32 %v1661, 4294901760
        %v3083 = vsub.f32 %v1661, %v3082
        %v3084 = vand.u32 %v3083, 4294901760
        %3085 = vmatpush.msra.mxu0 %v3084
        %v3086 = vand.u32 %v1653, 4294901760
        %v3087 = vsub.f32 %v1653, %v3086
        %v3088 = vand.u32 %v3087, 4294901760
        %3089 = vmatpush.msra.mxu0 %v3088
        %v3090 = vand.u32 %v1645, 4294901760
        %v3091 = vsub.f32 %v1645, %v3090
        %v3092 = vand.u32 %v3091, 4294901760
        %3093 = vmatpush.msra.mxu0 %v3092
        %v3094 = vand.u32 %v1515, 4294901760
        %3095 = vmatmul.f32.gmra.mxu0 %v3094
        %v3096 = vpop.f32.mrf.mxu0
        %v3097 = vadd.f32 %v3028, %v3096
        %3098 = vdwg.mxu0
        %v3099 = vand.u32 %v1765, 4294901760
        %3100 = vmatpush.msra.mxu0 %v3099
        %v3101 = vand.u32 %v1757, 4294901760
        %3102 = vmatpush.msra.mxu0 %v3101
        %v3103 = vand.u32 %v1749, 4294901760
        %3104 = vmatpush.msra.mxu0 %v3103
        %v3105 = vand.u32 %v1741, 4294901760
        %3106 = vmatpush.msra.mxu0 %v3105
        %v3107 = vand.u32 %v1733, 4294901760
        %3108 = vmatpush.msra.mxu0 %v3107
        %v3109 = vand.u32 %v1725, 4294901760
        %3110 = vmatpush.msra.mxu0 %v3109
        %v3111 = vand.u32 %v1717, 4294901760
        %3112 = vmatpush.msra.mxu0 %v3111
        %v3113 = vand.u32 %v1709, 4294901760
        %3114 = vmatpush.msra.mxu0 %v3113
        %v3115 = vand.u32 %v1701, 4294901760
        %3116 = vmatpush.msra.mxu0 %v3115
        %v3117 = vand.u32 %v1693, 4294901760
        %3118 = vmatpush.msra.mxu0 %v3117
        %v3119 = vand.u32 %v1685, 4294901760
        %3120 = vmatpush.msra.mxu0 %v3119
        %v3121 = vand.u32 %v1677, 4294901760
        %3122 = vmatpush.msra.mxu0 %v3121
        %v3123 = vand.u32 %v1669, 4294901760
        %3124 = vmatpush.msra.mxu0 %v3123
        %v3125 = vand.u32 %v1661, 4294901760
        %3126 = vmatpush.msra.mxu0 %v3125
        %v3127 = vand.u32 %v1653, 4294901760
        %3128 = vmatpush.msra.mxu0 %v3127
        %v3129 = vand.u32 %v1645, 4294901760
        %3130 = vmatpush.msra.mxu0 %v3129
        %v3131 = vand.u32 %v1515, 4294901760
        %3132 = vmatmul.f32.gmra.mxu0 %v3131
        %v3133 = vpop.f32.mrf.mxu0
        %v3134 = vadd.f32 %v3097, %v3133
        %3135 = vdwg.mxu0
        %v3136 = vand.u32 %v1638, 4294901760
        %3137 = vmatpush.msra.mxu0 %v3136
        %v3138 = vand.u32 %v1630, 4294901760
        %3139 = vmatpush.msra.mxu0 %v3138
        %v3140 = vand.u32 %v1622, 4294901760
        %3141 = vmatpush.msra.mxu0 %v3140
        %v3142 = vand.u32 %v1614, 4294901760
        %3143 = vmatpush.msra.mxu0 %v3142
        %v3144 = vand.u32 %v1606, 4294901760
        %3145 = vmatpush.msra.mxu0 %v3144
        %v3146 = vand.u32 %v1598, 4294901760
        %3147 = vmatpush.msra.mxu0 %v3146
        %v3148 = vand.u32 %v1590, 4294901760
        %3149 = vmatpush.msra.mxu0 %v3148
        %v3150 = vand.u32 %v1582, 4294901760
        %3151 = vmatpush.msra.mxu0 %v3150
        %v3152 = vand.u32 %v1574, 4294901760
        %3153 = vmatpush.msra.mxu0 %v3152
        %v3154 = vand.u32 %v1566, 4294901760
        %3155 = vmatpush.msra.mxu0 %v3154
        %v3156 = vand.u32 %v1558, 4294901760
        %3157 = vmatpush.msra.mxu0 %v3156
        %v3158 = vand.u32 %v1550, 4294901760
        %3159 = vmatpush.msra.mxu0 %v3158
        %v3160 = vand.u32 %v1542, 4294901760
        %3161 = vmatpush.msra.mxu0 %v3160
        %v3162 = vand.u32 %v1534, 4294901760
        %3163 = vmatpush.msra.mxu0 %v3162
        %v3164 = vand.u32 %v1526, 4294901760
        %3165 = vmatpush.msra.mxu0 %v3164
        %v3166 = vand.u32 %v1518, 4294901760
        %3167 = vmatpush.msra.mxu0 %v3166
        %v3168 = vand.u32 %v1514, 4294901760
        %v3169 = vsub.f32 %v1514, %v3168
        %v3170 = vand.u32 %v3169, 4294901760
        %v3171 = vsub.f32 %v3169, %v3170
        %v3172 = vand.u32 %v3171, 4294901760
        %3173 = vmatmul.f32.gmra.mxu0 %v3172
        %v3174 = vpop.f32.mrf.mxu0
        %v3175 = vadd.f32 0.0, %v3174
        %3176 = vdwg.mxu0
        %v3177 = vand.u32 %v1638, 4294901760
        %v3178 = vsub.f32 %v1638, %v3177
        %v3179 = vand.u32 %v3178, 4294901760
        %v3180 = vsub.f32 %v3178, %v3179
        %v3181 = vand.u32 %v3180, 4294901760
        %3182 = vmatpush.msra.mxu0 %v3181
        %v3183 = vand.u32 %v1630, 4294901760
        %v3184 = vsub.f32 %v1630, %v3183
        %v3185 = vand.u32 %v3184, 4294901760
        %v3186 = vsub.f32 %v3184, %v3185
        %v3187 = vand.u32 %v3186, 4294901760
        %3188 = vmatpush.msra.mxu0 %v3187
        %v3189 = vand.u32 %v1622, 4294901760
        %v3190 = vsub.f32 %v1622, %v3189
        %v3191 = vand.u32 %v3190, 4294901760
        %v3192 = vsub.f32 %v3190, %v3191
        %v3193 = vand.u32 %v3192, 4294901760
        %3194 = vmatpush.msra.mxu0 %v3193
        %v3195 = vand.u32 %v1614, 4294901760
        %v3196 = vsub.f32 %v1614, %v3195
        %v3197 = vand.u32 %v3196, 4294901760
        %v3198 = vsub.f32 %v3196, %v3197
        %v3199 = vand.u32 %v3198, 4294901760
        %3200 = vmatpush.msra.mxu0 %v3199
        %v3201 = vand.u32 %v1606, 4294901760
        %v3202 = vsub.f32 %v1606, %v3201
        %v3203 = vand.u32 %v3202, 4294901760
        %v3204 = vsub.f32 %v3202, %v3203
        %v3205 = vand.u32 %v3204, 4294901760
        %3206 = vmatpush.msra.mxu0 %v3205
        %v3207 = vand.u32 %v1598, 4294901760
        %v3208 = vsub.f32 %v1598, %v3207
        %v3209 = vand.u32 %v3208, 4294901760
        %v3210 = vsub.f32 %v3208, %v3209
        %v3211 = vand.u32 %v3210, 4294901760
        %3212 = vmatpush.msra.mxu0 %v3211
        %v3213 = vand.u32 %v1590, 4294901760
        %v3214 = vsub.f32 %v1590, %v3213
        %v3215 = vand.u32 %v3214, 4294901760
        %v3216 = vsub.f32 %v3214, %v3215
        %v3217 = vand.u32 %v3216, 4294901760
        %3218 = vmatpush.msra.mxu0 %v3217
        %v3219 = vand.u32 %v1582, 4294901760
        %v3220 = vsub.f32 %v1582, %v3219
        %v3221 = vand.u32 %v3220, 4294901760
        %v3222 = vsub.f32 %v3220, %v3221
        %v3223 = vand.u32 %v3222, 4294901760
        %3224 = vmatpush.msra.mxu0 %v3223
        %v3225 = vand.u32 %v1574, 4294901760
        %v3226 = vsub.f32 %v1574, %v3225
        %v3227 = vand.u32 %v3226, 4294901760
        %v3228 = vsub.f32 %v3226, %v3227
        %v3229 = vand.u32 %v3228, 4294901760
        %3230 = vmatpush.msra.mxu0 %v3229
        %v3231 = vand.u32 %v1566, 4294901760
        %v3232 = vsub.f32 %v1566, %v3231
        %v3233 = vand.u32 %v3232, 4294901760
        %v3234 = vsub.f32 %v3232, %v3233
        %v3235 = vand.u32 %v3234, 4294901760
        %3236 = vmatpush.msra.mxu0 %v3235
        %v3237 = vand.u32 %v1558, 4294901760
        %v3238 = vsub.f32 %v1558, %v3237
        %v3239 = vand.u32 %v3238, 4294901760
        %v3240 = vsub.f32 %v3238, %v3239
        %v3241 = vand.u32 %v3240, 4294901760
        %3242 = vmatpush.msra.mxu0 %v3241
        %v3243 = vand.u32 %v1550, 4294901760
        %v3244 = vsub.f32 %v1550, %v3243
        %v3245 = vand.u32 %v3244, 4294901760
        %v3246 = vsub.f32 %v3244, %v3245
        %v3247 = vand.u32 %v3246, 4294901760
        %3248 = vmatpush.msra.mxu0 %v3247
        %v3249 = vand.u32 %v1542, 4294901760
        %v3250 = vsub.f32 %v1542, %v3249
        %v3251 = vand.u32 %v3250, 4294901760
        %v3252 = vsub.f32 %v3250, %v3251
        %v3253 = vand.u32 %v3252, 4294901760
        %3254 = vmatpush.msra.mxu0 %v3253
        %v3255 = vand.u32 %v1534, 4294901760
        %v3256 = vsub.f32 %v1534, %v3255
        %v3257 = vand.u32 %v3256, 4294901760
        %v3258 = vsub.f32 %v3256, %v3257
        %v3259 = vand.u32 %v3258, 4294901760
        %3260 = vmatpush.msra.mxu0 %v3259
        %v3261 = vand.u32 %v1526, 4294901760
        %v3262 = vsub.f32 %v1526, %v3261
        %v3263 = vand.u32 %v3262, 4294901760
        %v3264 = vsub.f32 %v3262, %v3263
        %v3265 = vand.u32 %v3264, 4294901760
        %3266 = vmatpush.msra.mxu0 %v3265
        %v3267 = vand.u32 %v1518, 4294901760
        %v3268 = vsub.f32 %v1518, %v3267
        %v3269 = vand.u32 %v3268, 4294901760
        %v3270 = vsub.f32 %v3268, %v3269
        %v3271 = vand.u32 %v3270, 4294901760
        %3272 = vmatpush.msra.mxu0 %v3271
        %v3273 = vand.u32 %v1514, 4294901760
        %3274 = vmatmul.f32.gmra.mxu0 %v3273
        %v3275 = vpop.f32.mrf.mxu0
        %v3276 = vadd.f32 %v3175, %v3275
        %3277 = vdwg.mxu0
        %v3278 = vand.u32 %v1638, 4294901760
        %v3279 = vsub.f32 %v1638, %v3278
        %3280 = vmatpush.msra.mxu0 %v3279
        %v3281 = vand.u32 %v1630, 4294901760
        %v3282 = vsub.f32 %v1630, %v3281
        %3283 = vmatpush.msra.mxu0 %v3282
        %v3284 = vand.u32 %v1622, 4294901760
        %v3285 = vsub.f32 %v1622, %v3284
        %3286 = vmatpush.msra.mxu0 %v3285
        %v3287 = vand.u32 %v1614, 4294901760
        %v3288 = vsub.f32 %v1614, %v3287
        %3289 = vmatpush.msra.mxu0 %v3288
        %v3290 = vand.u32 %v1606, 4294901760
        %v3291 = vsub.f32 %v1606, %v3290
        %3292 = vmatpush.msra.mxu0 %v3291
        %v3293 = vand.u32 %v1598, 4294901760
        %v3294 = vsub.f32 %v1598, %v3293
        %3295 = vmatpush.msra.mxu0 %v3294
        %v3296 = vand.u32 %v1590, 4294901760
        %v3297 = vsub.f32 %v1590, %v3296
        %3298 = vmatpush.msra.mxu0 %v3297
        %v3299 = vand.u32 %v1582, 4294901760
        %v3300 = vsub.f32 %v1582, %v3299
        %3301 = vmatpush.msra.mxu0 %v3300
        %v3302 = vand.u32 %v1574, 4294901760
        %v3303 = vsub.f32 %v1574, %v3302
        %3304 = vmatpush.msra.mxu0 %v3303
        %v3305 = vand.u32 %v1566, 4294901760
        %v3306 = vsub.f32 %v1566, %v3305
        %3307 = vmatpush.msra.mxu0 %v3306
        %v3308 = vand.u32 %v1558, 4294901760
        %v3309 = vsub.f32 %v1558, %v3308
        %3310 = vmatpush.msra.mxu0 %v3309
        %v3311 = vand.u32 %v1550, 4294901760
        %v3312 = vsub.f32 %v1550, %v3311
        %3313 = vmatpush.msra.mxu0 %v3312
        %v3314 = vand.u32 %v1542, 4294901760
        %v3315 = vsub.f32 %v1542, %v3314
        %3316 = vmatpush.msra.mxu0 %v3315
        %v3317 = vand.u32 %v1534, 4294901760
        %v3318 = vsub.f32 %v1534, %v3317
        %3319 = vmatpush.msra.mxu0 %v3318
        %v3320 = vand.u32 %v1526, 4294901760
        %v3321 = vsub.f32 %v1526, %v3320
        %3322 = vmatpush.msra.mxu0 %v3321
        %v3323 = vand.u32 %v1518, 4294901760
        %v3324 = vsub.f32 %v1518, %v3323
        %3325 = vmatpush.msra.mxu0 %v3324
        %v3326 = vand.u32 %v1514, 4294901760
        %v3327 = vsub.f32 %v1514, %v3326
        %3328 = vmatmul.f32.gmra.mxu0 %v3327
        %v3329 = vpop.f32.mrf.mxu0
        %v3330 = vadd.f32 %v3276, %v3329
        %3331 = vdwg.mxu0
        %v3332 = vand.u32 %v1638, 4294901760
        %3333 = vmatpush.msra.mxu0 %v3332
        %v3334 = vand.u32 %v1630, 4294901760
        %3335 = vmatpush.msra.mxu0 %v3334
        %v3336 = vand.u32 %v1622, 4294901760
        %3337 = vmatpush.msra.mxu0 %v3336
        %v3338 = vand.u32 %v1614, 4294901760
        %3339 = vmatpush.msra.mxu0 %v3338
        %v3340 = vand.u32 %v1606, 4294901760
        %3341 = vmatpush.msra.mxu0 %v3340
        %v3342 = vand.u32 %v1598, 4294901760
        %3343 = vmatpush.msra.mxu0 %v3342
        %v3344 = vand.u32 %v1590, 4294901760
        %3345 = vmatpush.msra.mxu0 %v3344
        %v3346 = vand.u32 %v1582, 4294901760
        %3347 = vmatpush.msra.mxu0 %v3346
        %v3348 = vand.u32 %v1574, 4294901760
        %3349 = vmatpush.msra.mxu0 %v3348
        %v3350 = vand.u32 %v1566, 4294901760
        %3351 = vmatpush.msra.mxu0 %v3350
        %v3352 = vand.u32 %v1558, 4294901760
        %3353 = vmatpush.msra.mxu0 %v3352
        %v3354 = vand.u32 %v1550, 4294901760
        %3355 = vmatpush.msra.mxu0 %v3354
        %v3356 = vand.u32 %v1542, 4294901760
        %3357 = vmatpush.msra.mxu0 %v3356
        %v3358 = vand.u32 %v1534, 4294901760
        %3359 = vmatpush.msra.mxu0 %v3358
        %v3360 = vand.u32 %v1526, 4294901760
        %3361 = vmatpush.msra.mxu0 %v3360
        %v3362 = vand.u32 %v1518, 4294901760
        %3363 = vmatpush.msra.mxu0 %v3362
        %v3364 = vand.u32 %v1514, 4294901760
        %v3365 = vsub.f32 %v1514, %v3364
        %v3366 = vand.u32 %v3365, 4294901760
        %3367 = vmatmul.f32.gmra.mxu0 %v3366
        %v3368 = vpop.f32.mrf.mxu0
        %v3369 = vadd.f32 %v3330, %v3368
        %3370 = vdwg.mxu0
        %v3371 = vand.u32 %v1638, 4294901760
        %v3372 = vsub.f32 %v1638, %v3371
        %v3373 = vand.u32 %v3372, 4294901760
        %3374 = vmatpush.msra.mxu0 %v3373
        %v3375 = vand.u32 %v1630, 4294901760
        %v3376 = vsub.f32 %v1630, %v3375
        %v3377 = vand.u32 %v3376, 4294901760
        %3378 = vmatpush.msra.mxu0 %v3377
        %v3379 = vand.u32 %v1622, 4294901760
        %v3380 = vsub.f32 %v1622, %v3379
        %v3381 = vand.u32 %v3380, 4294901760
        %3382 = vmatpush.msra.mxu0 %v3381
        %v3383 = vand.u32 %v1614, 4294901760
        %v3384 = vsub.f32 %v1614, %v3383
        %v3385 = vand.u32 %v3384, 4294901760
        %3386 = vmatpush.msra.mxu0 %v3385
        %v3387 = vand.u32 %v1606, 4294901760
        %v3388 = vsub.f32 %v1606, %v3387
        %v3389 = vand.u32 %v3388, 4294901760
        %3390 = vmatpush.msra.mxu0 %v3389
        %v3391 = vand.u32 %v1598, 4294901760
        %v3392 = vsub.f32 %v1598, %v3391
        %v3393 = vand.u32 %v3392, 4294901760
        %3394 = vmatpush.msra.mxu0 %v3393
        %v3395 = vand.u32 %v1590, 4294901760
        %v3396 = vsub.f32 %v1590, %v3395
        %v3397 = vand.u32 %v3396, 4294901760
        %3398 = vmatpush.msra.mxu0 %v3397
        %v3399 = vand.u32 %v1582, 4294901760
        %v3400 = vsub.f32 %v1582, %v3399
        %v3401 = vand.u32 %v3400, 4294901760
        %3402 = vmatpush.msra.mxu0 %v3401
        %v3403 = vand.u32 %v1574, 4294901760
        %v3404 = vsub.f32 %v1574, %v3403
        %v3405 = vand.u32 %v3404, 4294901760
        %3406 = vmatpush.msra.mxu0 %v3405
        %v3407 = vand.u32 %v1566, 4294901760
        %v3408 = vsub.f32 %v1566, %v3407
        %v3409 = vand.u32 %v3408, 4294901760
        %3410 = vmatpush.msra.mxu0 %v3409
        %v3411 = vand.u32 %v1558, 4294901760
        %v3412 = vsub.f32 %v1558, %v3411
        %v3413 = vand.u32 %v3412, 4294901760
        %3414 = vmatpush.msra.mxu0 %v3413
        %v3415 = vand.u32 %v1550, 4294901760
        %v3416 = vsub.f32 %v1550, %v3415
        %v3417 = vand.u32 %v3416, 4294901760
        %3418 = vmatpush.msra.mxu0 %v3417
        %v3419 = vand.u32 %v1542, 4294901760
        %v3420 = vsub.f32 %v1542, %v3419
        %v3421 = vand.u32 %v3420, 4294901760
        %3422 = vmatpush.msra.mxu0 %v3421
        %v3423 = vand.u32 %v1534, 4294901760
        %v3424 = vsub.f32 %v1534, %v3423
        %v3425 = vand.u32 %v3424, 4294901760
        %3426 = vmatpush.msra.mxu0 %v3425
        %v3427 = vand.u32 %v1526, 4294901760
        %v3428 = vsub.f32 %v1526, %v3427
        %v3429 = vand.u32 %v3428, 4294901760
        %3430 = vmatpush.msra.mxu0 %v3429
        %v3431 = vand.u32 %v1518, 4294901760
        %v3432 = vsub.f32 %v1518, %v3431
        %v3433 = vand.u32 %v3432, 4294901760
        %3434 = vmatpush.msra.mxu0 %v3433
        %v3435 = vand.u32 %v1514, 4294901760
        %3436 = vmatmul.f32.gmra.mxu0 %v3435
        %v3437 = vpop.f32.mrf.mxu0
        %v3438 = vadd.f32 %v3369, %v3437
        %3439 = vdwg.mxu0
        %v3440 = vand.u32 %v1638, 4294901760
        %3441 = vmatpush.msra.mxu0 %v3440
        %v3442 = vand.u32 %v1630, 4294901760
        %3443 = vmatpush.msra.mxu0 %v3442
        %v3444 = vand.u32 %v1622, 4294901760
        %3445 = vmatpush.msra.mxu0 %v3444
        %v3446 = vand.u32 %v1614, 4294901760
        %3447 = vmatpush.msra.mxu0 %v3446
        %v3448 = vand.u32 %v1606, 4294901760
        %3449 = vmatpush.msra.mxu0 %v3448
        %v3450 = vand.u32 %v1598, 4294901760
        %3451 = vmatpush.msra.mxu0 %v3450
        %v3452 = vand.u32 %v1590, 4294901760
        %3453 = vmatpush.msra.mxu0 %v3452
        %v3454 = vand.u32 %v1582, 4294901760
        %3455 = vmatpush.msra.mxu0 %v3454
        %v3456 = vand.u32 %v1574, 4294901760
        %3457 = vmatpush.msra.mxu0 %v3456
        %v3458 = vand.u32 %v1566, 4294901760
        %3459 = vmatpush.msra.mxu0 %v3458
        %v3460 = vand.u32 %v1558, 4294901760
        %3461 = vmatpush.msra.mxu0 %v3460
        %v3462 = vand.u32 %v1550, 4294901760
        %3463 = vmatpush.msra.mxu0 %v3462
        %v3464 = vand.u32 %v1542, 4294901760
        %3465 = vmatpush.msra.mxu0 %v3464
        %v3466 = vand.u32 %v1534, 4294901760
        %3467 = vmatpush.msra.mxu0 %v3466
        %v3468 = vand.u32 %v1526, 4294901760
        %3469 = vmatpush.msra.mxu0 %v3468
        %v3470 = vand.u32 %v1518, 4294901760
        %3471 = vmatpush.msra.mxu0 %v3470
        %v3472 = vand.u32 %v1514, 4294901760
        %3473 = vmatmul.f32.gmra.mxu0 %v3472
        %v3474 = vpop.f32.mrf.mxu0
        %v3475 = vadd.f32 %v3438, %v3474
        %3476 = vdwg.mxu0
        %v3477 = vand.u32 %v1766, 4294901760
        %3478 = vmatpush.msra.mxu0 %v3477
        %v3479 = vand.u32 %v1758, 4294901760
        %3480 = vmatpush.msra.mxu0 %v3479
        %v3481 = vand.u32 %v1750, 4294901760
        %3482 = vmatpush.msra.mxu0 %v3481
        %v3483 = vand.u32 %v1742, 4294901760
        %3484 = vmatpush.msra.mxu0 %v3483
        %v3485 = vand.u32 %v1734, 4294901760
        %3486 = vmatpush.msra.mxu0 %v3485
        %v3487 = vand.u32 %v1726, 4294901760
        %3488 = vmatpush.msra.mxu0 %v3487
        %v3489 = vand.u32 %v1718, 4294901760
        %3490 = vmatpush.msra.mxu0 %v3489
        %v3491 = vand.u32 %v1710, 4294901760
        %3492 = vmatpush.msra.mxu0 %v3491
        %v3493 = vand.u32 %v1702, 4294901760
        %3494 = vmatpush.msra.mxu0 %v3493
        %v3495 = vand.u32 %v1694, 4294901760
        %3496 = vmatpush.msra.mxu0 %v3495
        %v3497 = vand.u32 %v1686, 4294901760
        %3498 = vmatpush.msra.mxu0 %v3497
        %v3499 = vand.u32 %v1678, 4294901760
        %3500 = vmatpush.msra.mxu0 %v3499
        %v3501 = vand.u32 %v1670, 4294901760
        %3502 = vmatpush.msra.mxu0 %v3501
        %v3503 = vand.u32 %v1662, 4294901760
        %3504 = vmatpush.msra.mxu0 %v3503
        %v3505 = vand.u32 %v1654, 4294901760
        %3506 = vmatpush.msra.mxu0 %v3505
        %v3507 = vand.u32 %v1646, 4294901760
        %3508 = vmatpush.msra.mxu0 %v3507
        %v3509 = vand.u32 %v1515, 4294901760
        %v3510 = vsub.f32 %v1515, %v3509
        %v3511 = vand.u32 %v3510, 4294901760
        %v3512 = vsub.f32 %v3510, %v3511
        %v3513 = vand.u32 %v3512, 4294901760
        %3514 = vmatmul.f32.gmra.mxu0 %v3513
        %v3515 = vpop.f32.mrf.mxu0
        %v3516 = vadd.f32 %v3475, %v3515
        %3517 = vdwg.mxu0
        %v3518 = vand.u32 %v1766, 4294901760
        %v3519 = vsub.f32 %v1766, %v3518
        %v3520 = vand.u32 %v3519, 4294901760
        %v3521 = vsub.f32 %v3519, %v3520
        %v3522 = vand.u32 %v3521, 4294901760
        %3523 = vmatpush.msra.mxu0 %v3522
        %v3524 = vand.u32 %v1758, 4294901760
        %v3525 = vsub.f32 %v1758, %v3524
        %v3526 = vand.u32 %v3525, 4294901760
        %v3527 = vsub.f32 %v3525, %v3526
        %v3528 = vand.u32 %v3527, 4294901760
        %3529 = vmatpush.msra.mxu0 %v3528
        %v3530 = vand.u32 %v1750, 4294901760
        %v3531 = vsub.f32 %v1750, %v3530
        %v3532 = vand.u32 %v3531, 4294901760
        %v3533 = vsub.f32 %v3531, %v3532
        %v3534 = vand.u32 %v3533, 4294901760
        %3535 = vmatpush.msra.mxu0 %v3534
        %v3536 = vand.u32 %v1742, 4294901760
        %v3537 = vsub.f32 %v1742, %v3536
        %v3538 = vand.u32 %v3537, 4294901760
        %v3539 = vsub.f32 %v3537, %v3538
        %v3540 = vand.u32 %v3539, 4294901760
        %3541 = vmatpush.msra.mxu0 %v3540
        %v3542 = vand.u32 %v1734, 4294901760
        %v3543 = vsub.f32 %v1734, %v3542
        %v3544 = vand.u32 %v3543, 4294901760
        %v3545 = vsub.f32 %v3543, %v3544
        %v3546 = vand.u32 %v3545, 4294901760
        %3547 = vmatpush.msra.mxu0 %v3546
        %v3548 = vand.u32 %v1726, 4294901760
        %v3549 = vsub.f32 %v1726, %v3548
        %v3550 = vand.u32 %v3549, 4294901760
        %v3551 = vsub.f32 %v3549, %v3550
        %v3552 = vand.u32 %v3551, 4294901760
        %3553 = vmatpush.msra.mxu0 %v3552
        %v3554 = vand.u32 %v1718, 4294901760
        %v3555 = vsub.f32 %v1718, %v3554
        %v3556 = vand.u32 %v3555, 4294901760
        %v3557 = vsub.f32 %v3555, %v3556
        %v3558 = vand.u32 %v3557, 4294901760
        %3559 = vmatpush.msra.mxu0 %v3558
        %v3560 = vand.u32 %v1710, 4294901760
        %v3561 = vsub.f32 %v1710, %v3560
        %v3562 = vand.u32 %v3561, 4294901760
        %v3563 = vsub.f32 %v3561, %v3562
        %v3564 = vand.u32 %v3563, 4294901760
        %3565 = vmatpush.msra.mxu0 %v3564
        %v3566 = vand.u32 %v1702, 4294901760
        %v3567 = vsub.f32 %v1702, %v3566
        %v3568 = vand.u32 %v3567, 4294901760
        %v3569 = vsub.f32 %v3567, %v3568
        %v3570 = vand.u32 %v3569, 4294901760
        %3571 = vmatpush.msra.mxu0 %v3570
        %v3572 = vand.u32 %v1694, 4294901760
        %v3573 = vsub.f32 %v1694, %v3572
        %v3574 = vand.u32 %v3573, 4294901760
        %v3575 = vsub.f32 %v3573, %v3574
        %v3576 = vand.u32 %v3575, 4294901760
        %3577 = vmatpush.msra.mxu0 %v3576
        %v3578 = vand.u32 %v1686, 4294901760
        %v3579 = vsub.f32 %v1686, %v3578
        %v3580 = vand.u32 %v3579, 4294901760
        %v3581 = vsub.f32 %v3579, %v3580
        %v3582 = vand.u32 %v3581, 4294901760
        %3583 = vmatpush.msra.mxu0 %v3582
        %v3584 = vand.u32 %v1678, 4294901760
        %v3585 = vsub.f32 %v1678, %v3584
        %v3586 = vand.u32 %v3585, 4294901760
        %v3587 = vsub.f32 %v3585, %v3586
        %v3588 = vand.u32 %v3587, 4294901760
        %3589 = vmatpush.msra.mxu0 %v3588
        %v3590 = vand.u32 %v1670, 4294901760
        %v3591 = vsub.f32 %v1670, %v3590
        %v3592 = vand.u32 %v3591, 4294901760
        %v3593 = vsub.f32 %v3591, %v3592
        %v3594 = vand.u32 %v3593, 4294901760
        %3595 = vmatpush.msra.mxu0 %v3594
        %v3596 = vand.u32 %v1662, 4294901760
        %v3597 = vsub.f32 %v1662, %v3596
        %v3598 = vand.u32 %v3597, 4294901760
        %v3599 = vsub.f32 %v3597, %v3598
        %v3600 = vand.u32 %v3599, 4294901760
        %3601 = vmatpush.msra.mxu0 %v3600
        %v3602 = vand.u32 %v1654, 4294901760
        %v3603 = vsub.f32 %v1654, %v3602
        %v3604 = vand.u32 %v3603, 4294901760
        %v3605 = vsub.f32 %v3603, %v3604
        %v3606 = vand.u32 %v3605, 4294901760
        %3607 = vmatpush.msra.mxu0 %v3606
        %v3608 = vand.u32 %v1646, 4294901760
        %v3609 = vsub.f32 %v1646, %v3608
        %v3610 = vand.u32 %v3609, 4294901760
        %v3611 = vsub.f32 %v3609, %v3610
        %v3612 = vand.u32 %v3611, 4294901760
        %3613 = vmatpush.msra.mxu0 %v3612
        %v3614 = vand.u32 %v1515, 4294901760
        %3615 = vmatmul.f32.gmra.mxu0 %v3614
        %v3616 = vpop.f32.mrf.mxu0
        %v3617 = vadd.f32 %v3516, %v3616
        %3618 = vdwg.mxu0
        %v3619 = vand.u32 %v1766, 4294901760
        %v3620 = vsub.f32 %v1766, %v3619
        %3621 = vmatpush.msra.mxu0 %v3620
        %v3622 = vand.u32 %v1758, 4294901760
        %v3623 = vsub.f32 %v1758, %v3622
        %3624 = vmatpush.msra.mxu0 %v3623
        %v3625 = vand.u32 %v1750, 4294901760
        %v3626 = vsub.f32 %v1750, %v3625
        %3627 = vmatpush.msra.mxu0 %v3626
        %v3628 = vand.u32 %v1742, 4294901760
        %v3629 = vsub.f32 %v1742, %v3628
        %3630 = vmatpush.msra.mxu0 %v3629
        %v3631 = vand.u32 %v1734, 4294901760
        %v3632 = vsub.f32 %v1734, %v3631
        %3633 = vmatpush.msra.mxu0 %v3632
        %v3634 = vand.u32 %v1726, 4294901760
        %v3635 = vsub.f32 %v1726, %v3634
        %3636 = vmatpush.msra.mxu0 %v3635
        %v3637 = vand.u32 %v1718, 4294901760
        %v3638 = vsub.f32 %v1718, %v3637
        %3639 = vmatpush.msra.mxu0 %v3638
        %v3640 = vand.u32 %v1710, 4294901760
        %v3641 = vsub.f32 %v1710, %v3640
        %3642 = vmatpush.msra.mxu0 %v3641
        %v3643 = vand.u32 %v1702, 4294901760
        %v3644 = vsub.f32 %v1702, %v3643
        %3645 = vmatpush.msra.mxu0 %v3644
        %v3646 = vand.u32 %v1694, 4294901760
        %v3647 = vsub.f32 %v1694, %v3646
        %3648 = vmatpush.msra.mxu0 %v3647
        %v3649 = vand.u32 %v1686, 4294901760
        %v3650 = vsub.f32 %v1686, %v3649
        %3651 = vmatpush.msra.mxu0 %v3650
        %v3652 = vand.u32 %v1678, 4294901760
        %v3653 = vsub.f32 %v1678, %v3652
        %3654 = vmatpush.msra.mxu0 %v3653
        %v3655 = vand.u32 %v1670, 4294901760
        %v3656 = vsub.f32 %v1670, %v3655
        %3657 = vmatpush.msra.mxu0 %v3656
        %v3658 = vand.u32 %v1662, 4294901760
        %v3659 = vsub.f32 %v1662, %v3658
        %3660 = vmatpush.msra.mxu0 %v3659
        %v3661 = vand.u32 %v1654, 4294901760
        %v3662 = vsub.f32 %v1654, %v3661
        %3663 = vmatpush.msra.mxu0 %v3662
        %v3664 = vand.u32 %v1646, 4294901760
        %v3665 = vsub.f32 %v1646, %v3664
        %3666 = vmatpush.msra.mxu0 %v3665
        %v3667 = vand.u32 %v1515, 4294901760
        %v3668 = vsub.f32 %v1515, %v3667
        %3669 = vmatmul.f32.gmra.mxu0 %v3668
        %v3670 = vpop.f32.mrf.mxu0
        %v3671 = vadd.f32 %v3617, %v3670
        %3672 = vdwg.mxu0
        %v3673 = vand.u32 %v1766, 4294901760
        %3674 = vmatpush.msra.mxu0 %v3673
        %v3675 = vand.u32 %v1758, 4294901760
        %3676 = vmatpush.msra.mxu0 %v3675
        %v3677 = vand.u32 %v1750, 4294901760
        %3678 = vmatpush.msra.mxu0 %v3677
        %v3679 = vand.u32 %v1742, 4294901760
        %3680 = vmatpush.msra.mxu0 %v3679
        %v3681 = vand.u32 %v1734, 4294901760
        %3682 = vmatpush.msra.mxu0 %v3681
        %v3683 = vand.u32 %v1726, 4294901760
        %3684 = vmatpush.msra.mxu0 %v3683
        %v3685 = vand.u32 %v1718, 4294901760
        %3686 = vmatpush.msra.mxu0 %v3685
        %v3687 = vand.u32 %v1710, 4294901760
        %3688 = vmatpush.msra.mxu0 %v3687
        %v3689 = vand.u32 %v1702, 4294901760
        %3690 = vmatpush.msra.mxu0 %v3689
        %v3691 = vand.u32 %v1694, 4294901760
        %3692 = vmatpush.msra.mxu0 %v3691
        %v3693 = vand.u32 %v1686, 4294901760
        %3694 = vmatpush.msra.mxu0 %v3693
        %v3695 = vand.u32 %v1678, 4294901760
        %3696 = vmatpush.msra.mxu0 %v3695
        %v3697 = vand.u32 %v1670, 4294901760
        %3698 = vmatpush.msra.mxu0 %v3697
        %v3699 = vand.u32 %v1662, 4294901760
        %3700 = vmatpush.msra.mxu0 %v3699
        %v3701 = vand.u32 %v1654, 4294901760
        %3702 = vmatpush.msra.mxu0 %v3701
        %v3703 = vand.u32 %v1646, 4294901760
        %3704 = vmatpush.msra.mxu0 %v3703
        %v3705 = vand.u32 %v1515, 4294901760
        %v3706 = vsub.f32 %v1515, %v3705
        %v3707 = vand.u32 %v3706, 4294901760
        %3708 = vmatmul.f32.gmra.mxu0 %v3707
        %v3709 = vpop.f32.mrf.mxu0
        %v3710 = vadd.f32 %v3671, %v3709
        %3711 = vdwg.mxu0
        %v3712 = vand.u32 %v1766, 4294901760
        %v3713 = vsub.f32 %v1766, %v3712
        %v3714 = vand.u32 %v3713, 4294901760
        %3715 = vmatpush.msra.mxu0 %v3714
        %v3716 = vand.u32 %v1758, 4294901760
        %v3717 = vsub.f32 %v1758, %v3716
        %v3718 = vand.u32 %v3717, 4294901760
        %3719 = vmatpush.msra.mxu0 %v3718
        %v3720 = vand.u32 %v1750, 4294901760
        %v3721 = vsub.f32 %v1750, %v3720
        %v3722 = vand.u32 %v3721, 4294901760
        %3723 = vmatpush.msra.mxu0 %v3722
        %v3724 = vand.u32 %v1742, 4294901760
        %v3725 = vsub.f32 %v1742, %v3724
        %v3726 = vand.u32 %v3725, 4294901760
        %3727 = vmatpush.msra.mxu0 %v3726
        %v3728 = vand.u32 %v1734, 4294901760
        %v3729 = vsub.f32 %v1734, %v3728
        %v3730 = vand.u32 %v3729, 4294901760
        %3731 = vmatpush.msra.mxu0 %v3730
        %v3732 = vand.u32 %v1726, 4294901760
        %v3733 = vsub.f32 %v1726, %v3732
        %v3734 = vand.u32 %v3733, 4294901760
        %3735 = vmatpush.msra.mxu0 %v3734
        %v3736 = vand.u32 %v1718, 4294901760
        %v3737 = vsub.f32 %v1718, %v3736
        %v3738 = vand.u32 %v3737, 4294901760
        %3739 = vmatpush.msra.mxu0 %v3738
        %v3740 = vand.u32 %v1710, 4294901760
        %v3741 = vsub.f32 %v1710, %v3740
        %v3742 = vand.u32 %v3741, 4294901760
        %3743 = vmatpush.msra.mxu0 %v3742
        %v3744 = vand.u32 %v1702, 4294901760
        %v3745 = vsub.f32 %v1702, %v3744
        %v3746 = vand.u32 %v3745, 4294901760
        %3747 = vmatpush.msra.mxu0 %v3746
        %v3748 = vand.u32 %v1694, 4294901760
        %v3749 = vsub.f32 %v1694, %v3748
        %v3750 = vand.u32 %v3749, 4294901760
        %3751 = vmatpush.msra.mxu0 %v3750
        %v3752 = vand.u32 %v1686, 4294901760
        %v3753 = vsub.f32 %v1686, %v3752
        %v3754 = vand.u32 %v3753, 4294901760
        %3755 = vmatpush.msra.mxu0 %v3754
        %v3756 = vand.u32 %v1678, 4294901760
        %v3757 = vsub.f32 %v1678, %v3756
        %v3758 = vand.u32 %v3757, 4294901760
        %3759 = vmatpush.msra.mxu0 %v3758
        %v3760 = vand.u32 %v1670, 4294901760
        %v3761 = vsub.f32 %v1670, %v3760
        %v3762 = vand.u32 %v3761, 4294901760
        %3763 = vmatpush.msra.mxu0 %v3762
        %v3764 = vand.u32 %v1662, 4294901760
        %v3765 = vsub.f32 %v1662, %v3764
        %v3766 = vand.u32 %v3765, 4294901760
        %3767 = vmatpush.msra.mxu0 %v3766
        %v3768 = vand.u32 %v1654, 4294901760
        %v3769 = vsub.f32 %v1654, %v3768
        %v3770 = vand.u32 %v3769, 4294901760
        %3771 = vmatpush.msra.mxu0 %v3770
        %v3772 = vand.u32 %v1646, 4294901760
        %v3773 = vsub.f32 %v1646, %v3772
        %v3774 = vand.u32 %v3773, 4294901760
        %3775 = vmatpush.msra.mxu0 %v3774
        %v3776 = vand.u32 %v1515, 4294901760
        %3777 = vmatmul.f32.gmra.mxu0 %v3776
        %v3778 = vpop.f32.mrf.mxu0
        %v3779 = vadd.f32 %v3710, %v3778
        %3780 = vdwg.mxu0
        %v3781 = vand.u32 %v1766, 4294901760
        %3782 = vmatpush.msra.mxu0 %v3781
        %v3783 = vand.u32 %v1758, 4294901760
        %3784 = vmatpush.msra.mxu0 %v3783
        %v3785 = vand.u32 %v1750, 4294901760
        %3786 = vmatpush.msra.mxu0 %v3785
        %v3787 = vand.u32 %v1742, 4294901760
        %3788 = vmatpush.msra.mxu0 %v3787
        %v3789 = vand.u32 %v1734, 4294901760
        %3790 = vmatpush.msra.mxu0 %v3789
        %v3791 = vand.u32 %v1726, 4294901760
        %3792 = vmatpush.msra.mxu0 %v3791
        %v3793 = vand.u32 %v1718, 4294901760
        %3794 = vmatpush.msra.mxu0 %v3793
        %v3795 = vand.u32 %v1710, 4294901760
        %3796 = vmatpush.msra.mxu0 %v3795
        %v3797 = vand.u32 %v1702, 4294901760
        %3798 = vmatpush.msra.mxu0 %v3797
        %v3799 = vand.u32 %v1694, 4294901760
        %3800 = vmatpush.msra.mxu0 %v3799
        %v3801 = vand.u32 %v1686, 4294901760
        %3802 = vmatpush.msra.mxu0 %v3801
        %v3803 = vand.u32 %v1678, 4294901760
        %3804 = vmatpush.msra.mxu0 %v3803
        %v3805 = vand.u32 %v1670, 4294901760
        %3806 = vmatpush.msra.mxu0 %v3805
        %v3807 = vand.u32 %v1662, 4294901760
        %3808 = vmatpush.msra.mxu0 %v3807
        %v3809 = vand.u32 %v1654, 4294901760
        %3810 = vmatpush.msra.mxu0 %v3809
        %v3811 = vand.u32 %v1646, 4294901760
        %3812 = vmatpush.msra.mxu0 %v3811
        %v3813 = vand.u32 %v1515, 4294901760
        %3814 = vmatmul.f32.gmra.mxu0 %v3813
        %v3815 = vpop.f32.mrf.mxu0
        %v3816 = vadd.f32 %v3779, %v3815
        %3817 = vdwg.mxu0
        %v3818 = vand.u32 %v1639, 4294901760
        %3819 = vmatpush.msra.mxu0 %v3818
        %v3820 = vand.u32 %v1631, 4294901760
        %3821 = vmatpush.msra.mxu0 %v3820
        %v3822 = vand.u32 %v1623, 4294901760
        %3823 = vmatpush.msra.mxu0 %v3822
        %v3824 = vand.u32 %v1615, 4294901760
        %3825 = vmatpush.msra.mxu0 %v3824
        %v3826 = vand.u32 %v1607, 4294901760
        %3827 = vmatpush.msra.mxu0 %v3826
        %v3828 = vand.u32 %v1599, 4294901760
        %3829 = vmatpush.msra.mxu0 %v3828
        %v3830 = vand.u32 %v1591, 4294901760
        %3831 = vmatpush.msra.mxu0 %v3830
        %v3832 = vand.u32 %v1583, 4294901760
        %3833 = vmatpush.msra.mxu0 %v3832
        %v3834 = vand.u32 %v1575, 4294901760
        %3835 = vmatpush.msra.mxu0 %v3834
        %v3836 = vand.u32 %v1567, 4294901760
        %3837 = vmatpush.msra.mxu0 %v3836
        %v3838 = vand.u32 %v1559, 4294901760
        %3839 = vmatpush.msra.mxu0 %v3838
        %v3840 = vand.u32 %v1551, 4294901760
        %3841 = vmatpush.msra.mxu0 %v3840
        %v3842 = vand.u32 %v1543, 4294901760
        %3843 = vmatpush.msra.mxu0 %v3842
        %v3844 = vand.u32 %v1535, 4294901760
        %3845 = vmatpush.msra.mxu0 %v3844
        %v3846 = vand.u32 %v1527, 4294901760
        %3847 = vmatpush.msra.mxu0 %v3846
        %v3848 = vand.u32 %v1519, 4294901760
        %3849 = vmatpush.msra.mxu0 %v3848
        %v3850 = vand.u32 %v1514, 4294901760
        %v3851 = vsub.f32 %v1514, %v3850
        %v3852 = vand.u32 %v3851, 4294901760
        %v3853 = vsub.f32 %v3851, %v3852
        %v3854 = vand.u32 %v3853, 4294901760
        %3855 = vmatmul.f32.gmra.mxu0 %v3854
        %v3856 = vpop.f32.mrf.mxu0
        %v3857 = vadd.f32 0.0, %v3856
        %3858 = vdwg.mxu0
        %v3859 = vand.u32 %v1639, 4294901760
        %v3860 = vsub.f32 %v1639, %v3859
        %v3861 = vand.u32 %v3860, 4294901760
        %v3862 = vsub.f32 %v3860, %v3861
        %v3863 = vand.u32 %v3862, 4294901760
        %3864 = vmatpush.msra.mxu0 %v3863
        %v3865 = vand.u32 %v1631, 4294901760
        %v3866 = vsub.f32 %v1631, %v3865
        %v3867 = vand.u32 %v3866, 4294901760
        %v3868 = vsub.f32 %v3866, %v3867
        %v3869 = vand.u32 %v3868, 4294901760
        %3870 = vmatpush.msra.mxu0 %v3869
        %v3871 = vand.u32 %v1623, 4294901760
        %v3872 = vsub.f32 %v1623, %v3871
        %v3873 = vand.u32 %v3872, 4294901760
        %v3874 = vsub.f32 %v3872, %v3873
        %v3875 = vand.u32 %v3874, 4294901760
        %3876 = vmatpush.msra.mxu0 %v3875
        %v3877 = vand.u32 %v1615, 4294901760
        %v3878 = vsub.f32 %v1615, %v3877
        %v3879 = vand.u32 %v3878, 4294901760
        %v3880 = vsub.f32 %v3878, %v3879
        %v3881 = vand.u32 %v3880, 4294901760
        %3882 = vmatpush.msra.mxu0 %v3881
        %v3883 = vand.u32 %v1607, 4294901760
        %v3884 = vsub.f32 %v1607, %v3883
        %v3885 = vand.u32 %v3884, 4294901760
        %v3886 = vsub.f32 %v3884, %v3885
        %v3887 = vand.u32 %v3886, 4294901760
        %3888 = vmatpush.msra.mxu0 %v3887
        %v3889 = vand.u32 %v1599, 4294901760
        %v3890 = vsub.f32 %v1599, %v3889
        %v3891 = vand.u32 %v3890, 4294901760
        %v3892 = vsub.f32 %v3890, %v3891
        %v3893 = vand.u32 %v3892, 4294901760
        %3894 = vmatpush.msra.mxu0 %v3893
        %v3895 = vand.u32 %v1591, 4294901760
        %v3896 = vsub.f32 %v1591, %v3895
        %v3897 = vand.u32 %v3896, 4294901760
        %v3898 = vsub.f32 %v3896, %v3897
        %v3899 = vand.u32 %v3898, 4294901760
        %3900 = vmatpush.msra.mxu0 %v3899
        %v3901 = vand.u32 %v1583, 4294901760
        %v3902 = vsub.f32 %v1583, %v3901
        %v3903 = vand.u32 %v3902, 4294901760
        %v3904 = vsub.f32 %v3902, %v3903
        %v3905 = vand.u32 %v3904, 4294901760
        %3906 = vmatpush.msra.mxu0 %v3905
        %v3907 = vand.u32 %v1575, 4294901760
        %v3908 = vsub.f32 %v1575, %v3907
        %v3909 = vand.u32 %v3908, 4294901760
        %v3910 = vsub.f32 %v3908, %v3909
        %v3911 = vand.u32 %v3910, 4294901760
        %3912 = vmatpush.msra.mxu0 %v3911
        %v3913 = vand.u32 %v1567, 4294901760
        %v3914 = vsub.f32 %v1567, %v3913
        %v3915 = vand.u32 %v3914, 4294901760
        %v3916 = vsub.f32 %v3914, %v3915
        %v3917 = vand.u32 %v3916, 4294901760
        %3918 = vmatpush.msra.mxu0 %v3917
        %v3919 = vand.u32 %v1559, 4294901760
        %v3920 = vsub.f32 %v1559, %v3919
        %v3921 = vand.u32 %v3920, 4294901760
        %v3922 = vsub.f32 %v3920, %v3921
        %v3923 = vand.u32 %v3922, 4294901760
        %3924 = vmatpush.msra.mxu0 %v3923
        %v3925 = vand.u32 %v1551, 4294901760
        %v3926 = vsub.f32 %v1551, %v3925
        %v3927 = vand.u32 %v3926, 4294901760
        %v3928 = vsub.f32 %v3926, %v3927
        %v3929 = vand.u32 %v3928, 4294901760
        %3930 = vmatpush.msra.mxu0 %v3929
        %v3931 = vand.u32 %v1543, 4294901760
        %v3932 = vsub.f32 %v1543, %v3931
        %v3933 = vand.u32 %v3932, 4294901760
        %v3934 = vsub.f32 %v3932, %v3933
        %v3935 = vand.u32 %v3934, 4294901760
        %3936 = vmatpush.msra.mxu0 %v3935
        %v3937 = vand.u32 %v1535, 4294901760
        %v3938 = vsub.f32 %v1535, %v3937
        %v3939 = vand.u32 %v3938, 4294901760
        %v3940 = vsub.f32 %v3938, %v3939
        %v3941 = vand.u32 %v3940, 4294901760
        %3942 = vmatpush.msra.mxu0 %v3941
        %v3943 = vand.u32 %v1527, 4294901760
        %v3944 = vsub.f32 %v1527, %v3943
        %v3945 = vand.u32 %v3944, 4294901760
        %v3946 = vsub.f32 %v3944, %v3945
        %v3947 = vand.u32 %v3946, 4294901760
        %3948 = vmatpush.msra.mxu0 %v3947
        %v3949 = vand.u32 %v1519, 4294901760
        %v3950 = vsub.f32 %v1519, %v3949
        %v3951 = vand.u32 %v3950, 4294901760
        %v3952 = vsub.f32 %v3950, %v3951
        %v3953 = vand.u32 %v3952, 4294901760
        %3954 = vmatpush.msra.mxu0 %v3953
        %v3955 = vand.u32 %v1514, 4294901760
        %3956 = vmatmul.f32.gmra.mxu0 %v3955
        %v3957 = vpop.f32.mrf.mxu0
        %v3958 = vadd.f32 %v3857, %v3957
        %3959 = vdwg.mxu0
        %v3960 = vand.u32 %v1639, 4294901760
        %v3961 = vsub.f32 %v1639, %v3960
        %3962 = vmatpush.msra.mxu0 %v3961
        %v3963 = vand.u32 %v1631, 4294901760
        %v3964 = vsub.f32 %v1631, %v3963
        %3965 = vmatpush.msra.mxu0 %v3964
        %v3966 = vand.u32 %v1623, 4294901760
        %v3967 = vsub.f32 %v1623, %v3966
        %3968 = vmatpush.msra.mxu0 %v3967
        %v3969 = vand.u32 %v1615, 4294901760
        %v3970 = vsub.f32 %v1615, %v3969
        %3971 = vmatpush.msra.mxu0 %v3970
        %v3972 = vand.u32 %v1607, 4294901760
        %v3973 = vsub.f32 %v1607, %v3972
        %3974 = vmatpush.msra.mxu0 %v3973
        %v3975 = vand.u32 %v1599, 4294901760
        %v3976 = vsub.f32 %v1599, %v3975
        %3977 = vmatpush.msra.mxu0 %v3976
        %v3978 = vand.u32 %v1591, 4294901760
        %v3979 = vsub.f32 %v1591, %v3978
        %3980 = vmatpush.msra.mxu0 %v3979
        %v3981 = vand.u32 %v1583, 4294901760
        %v3982 = vsub.f32 %v1583, %v3981
        %3983 = vmatpush.msra.mxu0 %v3982
        %v3984 = vand.u32 %v1575, 4294901760
        %v3985 = vsub.f32 %v1575, %v3984
        %3986 = vmatpush.msra.mxu0 %v3985
        %v3987 = vand.u32 %v1567, 4294901760
        %v3988 = vsub.f32 %v1567, %v3987
        %3989 = vmatpush.msra.mxu0 %v3988
        %v3990 = vand.u32 %v1559, 4294901760
        %v3991 = vsub.f32 %v1559, %v3990
        %3992 = vmatpush.msra.mxu0 %v3991
        %v3993 = vand.u32 %v1551, 4294901760
        %v3994 = vsub.f32 %v1551, %v3993
        %3995 = vmatpush.msra.mxu0 %v3994
        %v3996 = vand.u32 %v1543, 4294901760
        %v3997 = vsub.f32 %v1543, %v3996
        %3998 = vmatpush.msra.mxu0 %v3997
        %v3999 = vand.u32 %v1535, 4294901760
        %v4000 = vsub.f32 %v1535, %v3999
        %4001 = vmatpush.msra.mxu0 %v4000
        %v4002 = vand.u32 %v1527, 4294901760
        %v4003 = vsub.f32 %v1527, %v4002
        %4004 = vmatpush.msra.mxu0 %v4003
        %v4005 = vand.u32 %v1519, 4294901760
        %v4006 = vsub.f32 %v1519, %v4005
        %4007 = vmatpush.msra.mxu0 %v4006
        %v4008 = vand.u32 %v1514, 4294901760
        %v4009 = vsub.f32 %v1514, %v4008
        %4010 = vmatmul.f32.gmra.mxu0 %v4009
        %v4011 = vpop.f32.mrf.mxu0
        %v4012 = vadd.f32 %v3958, %v4011
        %4013 = vdwg.mxu0
        %v4014 = vand.u32 %v1639, 4294901760
        %4015 = vmatpush.msra.mxu0 %v4014
        %v4016 = vand.u32 %v1631, 4294901760
        %4017 = vmatpush.msra.mxu0 %v4016
        %v4018 = vand.u32 %v1623, 4294901760
        %4019 = vmatpush.msra.mxu0 %v4018
        %v4020 = vand.u32 %v1615, 4294901760
        %4021 = vmatpush.msra.mxu0 %v4020
        %v4022 = vand.u32 %v1607, 4294901760
        %4023 = vmatpush.msra.mxu0 %v4022
        %v4024 = vand.u32 %v1599, 4294901760
        %4025 = vmatpush.msra.mxu0 %v4024
        %v4026 = vand.u32 %v1591, 4294901760
        %4027 = vmatpush.msra.mxu0 %v4026
        %v4028 = vand.u32 %v1583, 4294901760
        %4029 = vmatpush.msra.mxu0 %v4028
        %v4030 = vand.u32 %v1575, 4294901760
        %4031 = vmatpush.msra.mxu0 %v4030
        %v4032 = vand.u32 %v1567, 4294901760
        %4033 = vmatpush.msra.mxu0 %v4032
        %v4034 = vand.u32 %v1559, 4294901760
        %4035 = vmatpush.msra.mxu0 %v4034
        %v4036 = vand.u32 %v1551, 4294901760
        %4037 = vmatpush.msra.mxu0 %v4036
        %v4038 = vand.u32 %v1543, 4294901760
        %4039 = vmatpush.msra.mxu0 %v4038
        %v4040 = vand.u32 %v1535, 4294901760
        %4041 = vmatpush.msra.mxu0 %v4040
        %v4042 = vand.u32 %v1527, 4294901760
        %4043 = vmatpush.msra.mxu0 %v4042
        %v4044 = vand.u32 %v1519, 4294901760
        %4045 = vmatpush.msra.mxu0 %v4044
        %v4046 = vand.u32 %v1514, 4294901760
        %v4047 = vsub.f32 %v1514, %v4046
        %v4048 = vand.u32 %v4047, 4294901760
        %4049 = vmatmul.f32.gmra.mxu0 %v4048
        %v4050 = vpop.f32.mrf.mxu0
        %v4051 = vadd.f32 %v4012, %v4050
        %4052 = vdwg.mxu0
        %v4053 = vand.u32 %v1639, 4294901760
        %v4054 = vsub.f32 %v1639, %v4053
        %v4055 = vand.u32 %v4054, 4294901760
        %4056 = vmatpush.msra.mxu0 %v4055
        %v4057 = vand.u32 %v1631, 4294901760
        %v4058 = vsub.f32 %v1631, %v4057
        %v4059 = vand.u32 %v4058, 4294901760
        %4060 = vmatpush.msra.mxu0 %v4059
        %v4061 = vand.u32 %v1623, 4294901760
        %v4062 = vsub.f32 %v1623, %v4061
        %v4063 = vand.u32 %v4062, 4294901760
        %4064 = vmatpush.msra.mxu0 %v4063
        %v4065 = vand.u32 %v1615, 4294901760
        %v4066 = vsub.f32 %v1615, %v4065
        %v4067 = vand.u32 %v4066, 4294901760
        %4068 = vmatpush.msra.mxu0 %v4067
        %v4069 = vand.u32 %v1607, 4294901760
        %v4070 = vsub.f32 %v1607, %v4069
        %v4071 = vand.u32 %v4070, 4294901760
        %4072 = vmatpush.msra.mxu0 %v4071
        %v4073 = vand.u32 %v1599, 4294901760
        %v4074 = vsub.f32 %v1599, %v4073
        %v4075 = vand.u32 %v4074, 4294901760
        %4076 = vmatpush.msra.mxu0 %v4075
        %v4077 = vand.u32 %v1591, 4294901760
        %v4078 = vsub.f32 %v1591, %v4077
        %v4079 = vand.u32 %v4078, 4294901760
        %4080 = vmatpush.msra.mxu0 %v4079
        %v4081 = vand.u32 %v1583, 4294901760
        %v4082 = vsub.f32 %v1583, %v4081
        %v4083 = vand.u32 %v4082, 4294901760
        %4084 = vmatpush.msra.mxu0 %v4083
        %v4085 = vand.u32 %v1575, 4294901760
        %v4086 = vsub.f32 %v1575, %v4085
        %v4087 = vand.u32 %v4086, 4294901760
        %4088 = vmatpush.msra.mxu0 %v4087
        %v4089 = vand.u32 %v1567, 4294901760
        %v4090 = vsub.f32 %v1567, %v4089
        %v4091 = vand.u32 %v4090, 4294901760
        %4092 = vmatpush.msra.mxu0 %v4091
        %v4093 = vand.u32 %v1559, 4294901760
        %v4094 = vsub.f32 %v1559, %v4093
        %v4095 = vand.u32 %v4094, 4294901760
        %4096 = vmatpush.msra.mxu0 %v4095
        %v4097 = vand.u32 %v1551, 4294901760
        %v4098 = vsub.f32 %v1551, %v4097
        %v4099 = vand.u32 %v4098, 4294901760
        %4100 = vmatpush.msra.mxu0 %v4099
        %v4101 = vand.u32 %v1543, 4294901760
        %v4102 = vsub.f32 %v1543, %v4101
        %v4103 = vand.u32 %v4102, 4294901760
        %4104 = vmatpush.msra.mxu0 %v4103
        %v4105 = vand.u32 %v1535, 4294901760
        %v4106 = vsub.f32 %v1535, %v4105
        %v4107 = vand.u32 %v4106, 4294901760
        %4108 = vmatpush.msra.mxu0 %v4107
        %v4109 = vand.u32 %v1527, 4294901760
        %v4110 = vsub.f32 %v1527, %v4109
        %v4111 = vand.u32 %v4110, 4294901760
        %4112 = vmatpush.msra.mxu0 %v4111
        %v4113 = vand.u32 %v1519, 4294901760
        %v4114 = vsub.f32 %v1519, %v4113
        %v4115 = vand.u32 %v4114, 4294901760
        %4116 = vmatpush.msra.mxu0 %v4115
        %v4117 = vand.u32 %v1514, 4294901760
        %4118 = vmatmul.f32.gmra.mxu0 %v4117
        %v4119 = vpop.f32.mrf.mxu0
        %v4120 = vadd.f32 %v4051, %v4119
        %4121 = vdwg.mxu0
        %v4122 = vand.u32 %v1639, 4294901760
        %4123 = vmatpush.msra.mxu0 %v4122
        %v4124 = vand.u32 %v1631, 4294901760
        %4125 = vmatpush.msra.mxu0 %v4124
        %v4126 = vand.u32 %v1623, 4294901760
        %4127 = vmatpush.msra.mxu0 %v4126
        %v4128 = vand.u32 %v1615, 4294901760
        %4129 = vmatpush.msra.mxu0 %v4128
        %v4130 = vand.u32 %v1607, 4294901760
        %4131 = vmatpush.msra.mxu0 %v4130
        %v4132 = vand.u32 %v1599, 4294901760
        %4133 = vmatpush.msra.mxu0 %v4132
        %v4134 = vand.u32 %v1591, 4294901760
        %4135 = vmatpush.msra.mxu0 %v4134
        %v4136 = vand.u32 %v1583, 4294901760
        %4137 = vmatpush.msra.mxu0 %v4136
        %v4138 = vand.u32 %v1575, 4294901760
        %4139 = vmatpush.msra.mxu0 %v4138
        %v4140 = vand.u32 %v1567, 4294901760
        %4141 = vmatpush.msra.mxu0 %v4140
        %v4142 = vand.u32 %v1559, 4294901760
        %4143 = vmatpush.msra.mxu0 %v4142
        %v4144 = vand.u32 %v1551, 4294901760
        %4145 = vmatpush.msra.mxu0 %v4144
        %v4146 = vand.u32 %v1543, 4294901760
        %4147 = vmatpush.msra.mxu0 %v4146
        %v4148 = vand.u32 %v1535, 4294901760
        %4149 = vmatpush.msra.mxu0 %v4148
        %v4150 = vand.u32 %v1527, 4294901760
        %4151 = vmatpush.msra.mxu0 %v4150
        %v4152 = vand.u32 %v1519, 4294901760
        %4153 = vmatpush.msra.mxu0 %v4152
        %v4154 = vand.u32 %v1514, 4294901760
        %4155 = vmatmul.f32.gmra.mxu0 %v4154
        %v4156 = vpop.f32.mrf.mxu0
        %v4157 = vadd.f32 %v4120, %v4156
        %4158 = vdwg.mxu0
        %v4159 = vand.u32 %v1767, 4294901760
        %4160 = vmatpush.msra.mxu0 %v4159
        %v4161 = vand.u32 %v1759, 4294901760
        %4162 = vmatpush.msra.mxu0 %v4161
        %v4163 = vand.u32 %v1751, 4294901760
        %4164 = vmatpush.msra.mxu0 %v4163
        %v4165 = vand.u32 %v1743, 4294901760
        %4166 = vmatpush.msra.mxu0 %v4165
        %v4167 = vand.u32 %v1735, 4294901760
        %4168 = vmatpush.msra.mxu0 %v4167
        %v4169 = vand.u32 %v1727, 4294901760
        %4170 = vmatpush.msra.mxu0 %v4169
        %v4171 = vand.u32 %v1719, 4294901760
        %4172 = vmatpush.msra.mxu0 %v4171
        %v4173 = vand.u32 %v1711, 4294901760
        %4174 = vmatpush.msra.mxu0 %v4173
        %v4175 = vand.u32 %v1703, 4294901760
        %4176 = vmatpush.msra.mxu0 %v4175
        %v4177 = vand.u32 %v1695, 4294901760
        %4178 = vmatpush.msra.mxu0 %v4177
        %v4179 = vand.u32 %v1687, 4294901760
        %4180 = vmatpush.msra.mxu0 %v4179
        %v4181 = vand.u32 %v1679, 4294901760
        %4182 = vmatpush.msra.mxu0 %v4181
        %v4183 = vand.u32 %v1671, 4294901760
        %4184 = vmatpush.msra.mxu0 %v4183
        %v4185 = vand.u32 %v1663, 4294901760
        %4186 = vmatpush.msra.mxu0 %v4185
        %v4187 = vand.u32 %v1655, 4294901760
        %4188 = vmatpush.msra.mxu0 %v4187
        %v4189 = vand.u32 %v1647, 4294901760
        %4190 = vmatpush.msra.mxu0 %v4189
        %v4191 = vand.u32 %v1515, 4294901760
        %v4192 = vsub.f32 %v1515, %v4191
        %v4193 = vand.u32 %v4192, 4294901760
        %v4194 = vsub.f32 %v4192, %v4193
        %v4195 = vand.u32 %v4194, 4294901760
        %4196 = vmatmul.f32.gmra.mxu0 %v4195
        %v4197 = vpop.f32.mrf.mxu0
        %v4198 = vadd.f32 %v4157, %v4197
        %4199 = vdwg.mxu0
        %v4200 = vand.u32 %v1767, 4294901760
        %v4201 = vsub.f32 %v1767, %v4200
        %v4202 = vand.u32 %v4201, 4294901760
        %v4203 = vsub.f32 %v4201, %v4202
        %v4204 = vand.u32 %v4203, 4294901760
        %4205 = vmatpush.msra.mxu0 %v4204
        %v4206 = vand.u32 %v1759, 4294901760
        %v4207 = vsub.f32 %v1759, %v4206
        %v4208 = vand.u32 %v4207, 4294901760
        %v4209 = vsub.f32 %v4207, %v4208
        %v4210 = vand.u32 %v4209, 4294901760
        %4211 = vmatpush.msra.mxu0 %v4210
        %v4212 = vand.u32 %v1751, 4294901760
        %v4213 = vsub.f32 %v1751, %v4212
        %v4214 = vand.u32 %v4213, 4294901760
        %v4215 = vsub.f32 %v4213, %v4214
        %v4216 = vand.u32 %v4215, 4294901760
        %4217 = vmatpush.msra.mxu0 %v4216
        %v4218 = vand.u32 %v1743, 4294901760
        %v4219 = vsub.f32 %v1743, %v4218
        %v4220 = vand.u32 %v4219, 4294901760
        %v4221 = vsub.f32 %v4219, %v4220
        %v4222 = vand.u32 %v4221, 4294901760
        %4223 = vmatpush.msra.mxu0 %v4222
        %v4224 = vand.u32 %v1735, 4294901760
        %v4225 = vsub.f32 %v1735, %v4224
        %v4226 = vand.u32 %v4225, 4294901760
        %v4227 = vsub.f32 %v4225, %v4226
        %v4228 = vand.u32 %v4227, 4294901760
        %4229 = vmatpush.msra.mxu0 %v4228
        %v4230 = vand.u32 %v1727, 4294901760
        %v4231 = vsub.f32 %v1727, %v4230
        %v4232 = vand.u32 %v4231, 4294901760
        %v4233 = vsub.f32 %v4231, %v4232
        %v4234 = vand.u32 %v4233, 4294901760
        %4235 = vmatpush.msra.mxu0 %v4234
        %v4236 = vand.u32 %v1719, 4294901760
        %v4237 = vsub.f32 %v1719, %v4236
        %v4238 = vand.u32 %v4237, 4294901760
        %v4239 = vsub.f32 %v4237, %v4238
        %v4240 = vand.u32 %v4239, 4294901760
        %4241 = vmatpush.msra.mxu0 %v4240
        %v4242 = vand.u32 %v1711, 4294901760
        %v4243 = vsub.f32 %v1711, %v4242
        %v4244 = vand.u32 %v4243, 4294901760
        %v4245 = vsub.f32 %v4243, %v4244
        %v4246 = vand.u32 %v4245, 4294901760
        %4247 = vmatpush.msra.mxu0 %v4246
        %v4248 = vand.u32 %v1703, 4294901760
        %v4249 = vsub.f32 %v1703, %v4248
        %v4250 = vand.u32 %v4249, 4294901760
        %v4251 = vsub.f32 %v4249, %v4250
        %v4252 = vand.u32 %v4251, 4294901760
        %4253 = vmatpush.msra.mxu0 %v4252
        %v4254 = vand.u32 %v1695, 4294901760
        %v4255 = vsub.f32 %v1695, %v4254
        %v4256 = vand.u32 %v4255, 4294901760
        %v4257 = vsub.f32 %v4255, %v4256
        %v4258 = vand.u32 %v4257, 4294901760
        %4259 = vmatpush.msra.mxu0 %v4258
        %v4260 = vand.u32 %v1687, 4294901760
        %v4261 = vsub.f32 %v1687, %v4260
        %v4262 = vand.u32 %v4261, 4294901760
        %v4263 = vsub.f32 %v4261, %v4262
        %v4264 = vand.u32 %v4263, 4294901760
        %4265 = vmatpush.msra.mxu0 %v4264
        %v4266 = vand.u32 %v1679, 4294901760
        %v4267 = vsub.f32 %v1679, %v4266
        %v4268 = vand.u32 %v4267, 4294901760
        %v4269 = vsub.f32 %v4267, %v4268
        %v4270 = vand.u32 %v4269, 4294901760
        %4271 = vmatpush.msra.mxu0 %v4270
        %v4272 = vand.u32 %v1671, 4294901760
        %v4273 = vsub.f32 %v1671, %v4272
        %v4274 = vand.u32 %v4273, 4294901760
        %v4275 = vsub.f32 %v4273, %v4274
        %v4276 = vand.u32 %v4275, 4294901760
        %4277 = vmatpush.msra.mxu0 %v4276
        %v4278 = vand.u32 %v1663, 4294901760
        %v4279 = vsub.f32 %v1663, %v4278
        %v4280 = vand.u32 %v4279, 4294901760
        %v4281 = vsub.f32 %v4279, %v4280
        %v4282 = vand.u32 %v4281, 4294901760
        %4283 = vmatpush.msra.mxu0 %v4282
        %v4284 = vand.u32 %v1655, 4294901760
        %v4285 = vsub.f32 %v1655, %v4284
        %v4286 = vand.u32 %v4285, 4294901760
        %v4287 = vsub.f32 %v4285, %v4286
        %v4288 = vand.u32 %v4287, 4294901760
        %4289 = vmatpush.msra.mxu0 %v4288
        %v4290 = vand.u32 %v1647, 4294901760
        %v4291 = vsub.f32 %v1647, %v4290
        %v4292 = vand.u32 %v4291, 4294901760
        %v4293 = vsub.f32 %v4291, %v4292
        %v4294 = vand.u32 %v4293, 4294901760
        %4295 = vmatpush.msra.mxu0 %v4294
        %v4296 = vand.u32 %v1515, 4294901760
        %4297 = vmatmul.f32.gmra.mxu0 %v4296
        %v4298 = vpop.f32.mrf.mxu0
        %v4299 = vadd.f32 %v4198, %v4298
        %4300 = vdwg.mxu0
        %v4301 = vand.u32 %v1767, 4294901760
        %v4302 = vsub.f32 %v1767, %v4301
        %4303 = vmatpush.msra.mxu0 %v4302
        %v4304 = vand.u32 %v1759, 4294901760
        %v4305 = vsub.f32 %v1759, %v4304
        %4306 = vmatpush.msra.mxu0 %v4305
        %v4307 = vand.u32 %v1751, 4294901760
        %v4308 = vsub.f32 %v1751, %v4307
        %4309 = vmatpush.msra.mxu0 %v4308
        %v4310 = vand.u32 %v1743, 4294901760
        %v4311 = vsub.f32 %v1743, %v4310
        %4312 = vmatpush.msra.mxu0 %v4311
        %v4313 = vand.u32 %v1735, 4294901760
        %v4314 = vsub.f32 %v1735, %v4313
        %4315 = vmatpush.msra.mxu0 %v4314
        %v4316 = vand.u32 %v1727, 4294901760
        %v4317 = vsub.f32 %v1727, %v4316
        %4318 = vmatpush.msra.mxu0 %v4317
        %v4319 = vand.u32 %v1719, 4294901760
        %v4320 = vsub.f32 %v1719, %v4319
        %4321 = vmatpush.msra.mxu0 %v4320
        %v4322 = vand.u32 %v1711, 4294901760
        %v4323 = vsub.f32 %v1711, %v4322
        %4324 = vmatpush.msra.mxu0 %v4323
        %v4325 = vand.u32 %v1703, 4294901760
        %v4326 = vsub.f32 %v1703, %v4325
        %4327 = vmatpush.msra.mxu0 %v4326
        %v4328 = vand.u32 %v1695, 4294901760
        %v4329 = vsub.f32 %v1695, %v4328
        %4330 = vmatpush.msra.mxu0 %v4329
        %v4331 = vand.u32 %v1687, 4294901760
        %v4332 = vsub.f32 %v1687, %v4331
        %4333 = vmatpush.msra.mxu0 %v4332
        %v4334 = vand.u32 %v1679, 4294901760
        %v4335 = vsub.f32 %v1679, %v4334
        %4336 = vmatpush.msra.mxu0 %v4335
        %v4337 = vand.u32 %v1671, 4294901760
        %v4338 = vsub.f32 %v1671, %v4337
        %4339 = vmatpush.msra.mxu0 %v4338
        %v4340 = vand.u32 %v1663, 4294901760
        %v4341 = vsub.f32 %v1663, %v4340
        %4342 = vmatpush.msra.mxu0 %v4341
        %v4343 = vand.u32 %v1655, 4294901760
        %v4344 = vsub.f32 %v1655, %v4343
        %4345 = vmatpush.msra.mxu0 %v4344
        %v4346 = vand.u32 %v1647, 4294901760
        %v4347 = vsub.f32 %v1647, %v4346
        %4348 = vmatpush.msra.mxu0 %v4347
        %v4349 = vand.u32 %v1515, 4294901760
        %v4350 = vsub.f32 %v1515, %v4349
        %4351 = vmatmul.f32.gmra.mxu0 %v4350
        %v4352 = vpop.f32.mrf.mxu0
        %v4353 = vadd.f32 %v4299, %v4352
        %4354 = vdwg.mxu0
        %v4355 = vand.u32 %v1767, 4294901760
        %4356 = vmatpush.msra.mxu0 %v4355
        %v4357 = vand.u32 %v1759, 4294901760
        %4358 = vmatpush.msra.mxu0 %v4357
        %v4359 = vand.u32 %v1751, 4294901760
        %4360 = vmatpush.msra.mxu0 %v4359
        %v4361 = vand.u32 %v1743, 4294901760
        %4362 = vmatpush.msra.mxu0 %v4361
        %v4363 = vand.u32 %v1735, 4294901760
        %4364 = vmatpush.msra.mxu0 %v4363
        %v4365 = vand.u32 %v1727, 4294901760
        %4366 = vmatpush.msra.mxu0 %v4365
        %v4367 = vand.u32 %v1719, 4294901760
        %4368 = vmatpush.msra.mxu0 %v4367
        %v4369 = vand.u32 %v1711, 4294901760
        %4370 = vmatpush.msra.mxu0 %v4369
        %v4371 = vand.u32 %v1703, 4294901760
        %4372 = vmatpush.msra.mxu0 %v4371
        %v4373 = vand.u32 %v1695, 4294901760
        %4374 = vmatpush.msra.mxu0 %v4373
        %v4375 = vand.u32 %v1687, 4294901760
        %4376 = vmatpush.msra.mxu0 %v4375
        %v4377 = vand.u32 %v1679, 4294901760
        %4378 = vmatpush.msra.mxu0 %v4377
        %v4379 = vand.u32 %v1671, 4294901760
        %4380 = vmatpush.msra.mxu0 %v4379
        %v4381 = vand.u32 %v1663, 4294901760
        %4382 = vmatpush.msra.mxu0 %v4381
        %v4383 = vand.u32 %v1655, 4294901760
        %4384 = vmatpush.msra.mxu0 %v4383
        %v4385 = vand.u32 %v1647, 4294901760
        %4386 = vmatpush.msra.mxu0 %v4385
        %v4387 = vand.u32 %v1515, 4294901760
        %v4388 = vsub.f32 %v1515, %v4387
        %v4389 = vand.u32 %v4388, 4294901760
        %4390 = vmatmul.f32.gmra.mxu0 %v4389
        %v4391 = vpop.f32.mrf.mxu0
        %v4392 = vadd.f32 %v4353, %v4391
        %4393 = vdwg.mxu0
        %v4394 = vand.u32 %v1767, 4294901760
        %v4395 = vsub.f32 %v1767, %v4394
        %v4396 = vand.u32 %v4395, 4294901760
        %4397 = vmatpush.msra.mxu0 %v4396
        %v4398 = vand.u32 %v1759, 4294901760
        %v4399 = vsub.f32 %v1759, %v4398
        %v4400 = vand.u32 %v4399, 4294901760
        %4401 = vmatpush.msra.mxu0 %v4400
        %v4402 = vand.u32 %v1751, 4294901760
        %v4403 = vsub.f32 %v1751, %v4402
        %v4404 = vand.u32 %v4403, 4294901760
        %4405 = vmatpush.msra.mxu0 %v4404
        %v4406 = vand.u32 %v1743, 4294901760
        %v4407 = vsub.f32 %v1743, %v4406
        %v4408 = vand.u32 %v4407, 4294901760
        %4409 = vmatpush.msra.mxu0 %v4408
        %v4410 = vand.u32 %v1735, 4294901760
        %v4411 = vsub.f32 %v1735, %v4410
        %v4412 = vand.u32 %v4411, 4294901760
        %4413 = vmatpush.msra.mxu0 %v4412
        %v4414 = vand.u32 %v1727, 4294901760
        %v4415 = vsub.f32 %v1727, %v4414
        %v4416 = vand.u32 %v4415, 4294901760
        %4417 = vmatpush.msra.mxu0 %v4416
        %v4418 = vand.u32 %v1719, 4294901760
        %v4419 = vsub.f32 %v1719, %v4418
        %v4420 = vand.u32 %v4419, 4294901760
        %4421 = vmatpush.msra.mxu0 %v4420
        %v4422 = vand.u32 %v1711, 4294901760
        %v4423 = vsub.f32 %v1711, %v4422
        %v4424 = vand.u32 %v4423, 4294901760
        %4425 = vmatpush.msra.mxu0 %v4424
        %v4426 = vand.u32 %v1703, 4294901760
        %v4427 = vsub.f32 %v1703, %v4426
        %v4428 = vand.u32 %v4427, 4294901760
        %4429 = vmatpush.msra.mxu0 %v4428
        %v4430 = vand.u32 %v1695, 4294901760
        %v4431 = vsub.f32 %v1695, %v4430
        %v4432 = vand.u32 %v4431, 4294901760
        %4433 = vmatpush.msra.mxu0 %v4432
        %v4434 = vand.u32 %v1687, 4294901760
        %v4435 = vsub.f32 %v1687, %v4434
        %v4436 = vand.u32 %v4435, 4294901760
        %4437 = vmatpush.msra.mxu0 %v4436
        %v4438 = vand.u32 %v1679, 4294901760
        %v4439 = vsub.f32 %v1679, %v4438
        %v4440 = vand.u32 %v4439, 4294901760
        %4441 = vmatpush.msra.mxu0 %v4440
        %v4442 = vand.u32 %v1671, 4294901760
        %v4443 = vsub.f32 %v1671, %v4442
        %v4444 = vand.u32 %v4443, 4294901760
        %4445 = vmatpush.msra.mxu0 %v4444
        %v4446 = vand.u32 %v1663, 4294901760
        %v4447 = vsub.f32 %v1663, %v4446
        %v4448 = vand.u32 %v4447, 4294901760
        %4449 = vmatpush.msra.mxu0 %v4448
        %v4450 = vand.u32 %v1655, 4294901760
        %v4451 = vsub.f32 %v1655, %v4450
        %v4452 = vand.u32 %v4451, 4294901760
        %4453 = vmatpush.msra.mxu0 %v4452
        %v4454 = vand.u32 %v1647, 4294901760
        %v4455 = vsub.f32 %v1647, %v4454
        %v4456 = vand.u32 %v4455, 4294901760
        %4457 = vmatpush.msra.mxu0 %v4456
        %v4458 = vand.u32 %v1515, 4294901760
        %4459 = vmatmul.f32.gmra.mxu0 %v4458
        %v4460 = vpop.f32.mrf.mxu0
        %v4461 = vadd.f32 %v4392, %v4460
        %4462 = vdwg.mxu0
        %v4463 = vand.u32 %v1767, 4294901760
        %4464 = vmatpush.msra.mxu0 %v4463
        %v4465 = vand.u32 %v1759, 4294901760
        %4466 = vmatpush.msra.mxu0 %v4465
        %v4467 = vand.u32 %v1751, 4294901760
        %4468 = vmatpush.msra.mxu0 %v4467
        %v4469 = vand.u32 %v1743, 4294901760
        %4470 = vmatpush.msra.mxu0 %v4469
        %v4471 = vand.u32 %v1735, 4294901760
        %4472 = vmatpush.msra.mxu0 %v4471
        %v4473 = vand.u32 %v1727, 4294901760
        %4474 = vmatpush.msra.mxu0 %v4473
        %v4475 = vand.u32 %v1719, 4294901760
        %4476 = vmatpush.msra.mxu0 %v4475
        %v4477 = vand.u32 %v1711, 4294901760
        %4478 = vmatpush.msra.mxu0 %v4477
        %v4479 = vand.u32 %v1703, 4294901760
        %4480 = vmatpush.msra.mxu0 %v4479
        %v4481 = vand.u32 %v1695, 4294901760
        %4482 = vmatpush.msra.mxu0 %v4481
        %v4483 = vand.u32 %v1687, 4294901760
        %4484 = vmatpush.msra.mxu0 %v4483
        %v4485 = vand.u32 %v1679, 4294901760
        %4486 = vmatpush.msra.mxu0 %v4485
        %v4487 = vand.u32 %v1671, 4294901760
        %4488 = vmatpush.msra.mxu0 %v4487
        %v4489 = vand.u32 %v1663, 4294901760
        %4490 = vmatpush.msra.mxu0 %v4489
        %v4491 = vand.u32 %v1655, 4294901760
        %4492 = vmatpush.msra.mxu0 %v4491
        %v4493 = vand.u32 %v1647, 4294901760
        %4494 = vmatpush.msra.mxu0 %v4493
        %v4495 = vand.u32 %v1515, 4294901760
        %4496 = vmatmul.f32.gmra.mxu0 %v4495
        %v4497 = vpop.f32.mrf.mxu0
        %v4498 = vadd.f32 %v4461, %v4497
        %4499 = vdwg.mxu0
        %v4500 = vand.u32 %v1640, 4294901760
        %4501 = vmatpush.msra.mxu0 %v4500
        %v4502 = vand.u32 %v1632, 4294901760
        %4503 = vmatpush.msra.mxu0 %v4502
        %v4504 = vand.u32 %v1624, 4294901760
        %4505 = vmatpush.msra.mxu0 %v4504
        %v4506 = vand.u32 %v1616, 4294901760
        %4507 = vmatpush.msra.mxu0 %v4506
        %v4508 = vand.u32 %v1608, 4294901760
        %4509 = vmatpush.msra.mxu0 %v4508
        %v4510 = vand.u32 %v1600, 4294901760
        %4511 = vmatpush.msra.mxu0 %v4510
        %v4512 = vand.u32 %v1592, 4294901760
        %4513 = vmatpush.msra.mxu0 %v4512
        %v4514 = vand.u32 %v1584, 4294901760
        %4515 = vmatpush.msra.mxu0 %v4514
        %v4516 = vand.u32 %v1576, 4294901760
        %4517 = vmatpush.msra.mxu0 %v4516
        %v4518 = vand.u32 %v1568, 4294901760
        %4519 = vmatpush.msra.mxu0 %v4518
        %v4520 = vand.u32 %v1560, 4294901760
        %4521 = vmatpush.msra.mxu0 %v4520
        %v4522 = vand.u32 %v1552, 4294901760
        %4523 = vmatpush.msra.mxu0 %v4522
        %v4524 = vand.u32 %v1544, 4294901760
        %4525 = vmatpush.msra.mxu0 %v4524
        %v4526 = vand.u32 %v1536, 4294901760
        %4527 = vmatpush.msra.mxu0 %v4526
        %v4528 = vand.u32 %v1528, 4294901760
        %4529 = vmatpush.msra.mxu0 %v4528
        %v4530 = vand.u32 %v1520, 4294901760
        %4531 = vmatpush.msra.mxu0 %v4530
        %v4532 = vand.u32 %v1514, 4294901760
        %v4533 = vsub.f32 %v1514, %v4532
        %v4534 = vand.u32 %v4533, 4294901760
        %v4535 = vsub.f32 %v4533, %v4534
        %v4536 = vand.u32 %v4535, 4294901760
        %4537 = vmatmul.f32.gmra.mxu0 %v4536
        %v4538 = vpop.f32.mrf.mxu0
        %v4539 = vadd.f32 0.0, %v4538
        %4540 = vdwg.mxu0
        %v4541 = vand.u32 %v1640, 4294901760
        %v4542 = vsub.f32 %v1640, %v4541
        %v4543 = vand.u32 %v4542, 4294901760
        %v4544 = vsub.f32 %v4542, %v4543
        %v4545 = vand.u32 %v4544, 4294901760
        %4546 = vmatpush.msra.mxu0 %v4545
        %v4547 = vand.u32 %v1632, 4294901760
        %v4548 = vsub.f32 %v1632, %v4547
        %v4549 = vand.u32 %v4548, 4294901760
        %v4550 = vsub.f32 %v4548, %v4549
        %v4551 = vand.u32 %v4550, 4294901760
        %4552 = vmatpush.msra.mxu0 %v4551
        %v4553 = vand.u32 %v1624, 4294901760
        %v4554 = vsub.f32 %v1624, %v4553
        %v4555 = vand.u32 %v4554, 4294901760
        %v4556 = vsub.f32 %v4554, %v4555
        %v4557 = vand.u32 %v4556, 4294901760
        %4558 = vmatpush.msra.mxu0 %v4557
        %v4559 = vand.u32 %v1616, 4294901760
        %v4560 = vsub.f32 %v1616, %v4559
        %v4561 = vand.u32 %v4560, 4294901760
        %v4562 = vsub.f32 %v4560, %v4561
        %v4563 = vand.u32 %v4562, 4294901760
        %4564 = vmatpush.msra.mxu0 %v4563
        %v4565 = vand.u32 %v1608, 4294901760
        %v4566 = vsub.f32 %v1608, %v4565
        %v4567 = vand.u32 %v4566, 4294901760
        %v4568 = vsub.f32 %v4566, %v4567
        %v4569 = vand.u32 %v4568, 4294901760
        %4570 = vmatpush.msra.mxu0 %v4569
        %v4571 = vand.u32 %v1600, 4294901760
        %v4572 = vsub.f32 %v1600, %v4571
        %v4573 = vand.u32 %v4572, 4294901760
        %v4574 = vsub.f32 %v4572, %v4573
        %v4575 = vand.u32 %v4574, 4294901760
        %4576 = vmatpush.msra.mxu0 %v4575
        %v4577 = vand.u32 %v1592, 4294901760
        %v4578 = vsub.f32 %v1592, %v4577
        %v4579 = vand.u32 %v4578, 4294901760
        %v4580 = vsub.f32 %v4578, %v4579
        %v4581 = vand.u32 %v4580, 4294901760
        %4582 = vmatpush.msra.mxu0 %v4581
        %v4583 = vand.u32 %v1584, 4294901760
        %v4584 = vsub.f32 %v1584, %v4583
        %v4585 = vand.u32 %v4584, 4294901760
        %v4586 = vsub.f32 %v4584, %v4585
        %v4587 = vand.u32 %v4586, 4294901760
        %4588 = vmatpush.msra.mxu0 %v4587
        %v4589 = vand.u32 %v1576, 4294901760
        %v4590 = vsub.f32 %v1576, %v4589
        %v4591 = vand.u32 %v4590, 4294901760
        %v4592 = vsub.f32 %v4590, %v4591
        %v4593 = vand.u32 %v4592, 4294901760
        %4594 = vmatpush.msra.mxu0 %v4593
        %v4595 = vand.u32 %v1568, 4294901760
        %v4596 = vsub.f32 %v1568, %v4595
        %v4597 = vand.u32 %v4596, 4294901760
        %v4598 = vsub.f32 %v4596, %v4597
        %v4599 = vand.u32 %v4598, 4294901760
        %4600 = vmatpush.msra.mxu0 %v4599
        %v4601 = vand.u32 %v1560, 4294901760
        %v4602 = vsub.f32 %v1560, %v4601
        %v4603 = vand.u32 %v4602, 4294901760
        %v4604 = vsub.f32 %v4602, %v4603
        %v4605 = vand.u32 %v4604, 4294901760
        %4606 = vmatpush.msra.mxu0 %v4605
        %v4607 = vand.u32 %v1552, 4294901760
        %v4608 = vsub.f32 %v1552, %v4607
        %v4609 = vand.u32 %v4608, 4294901760
        %v4610 = vsub.f32 %v4608, %v4609
        %v4611 = vand.u32 %v4610, 4294901760
        %4612 = vmatpush.msra.mxu0 %v4611
        %v4613 = vand.u32 %v1544, 4294901760
        %v4614 = vsub.f32 %v1544, %v4613
        %v4615 = vand.u32 %v4614, 4294901760
        %v4616 = vsub.f32 %v4614, %v4615
        %v4617 = vand.u32 %v4616, 4294901760
        %4618 = vmatpush.msra.mxu0 %v4617
        %v4619 = vand.u32 %v1536, 4294901760
        %v4620 = vsub.f32 %v1536, %v4619
        %v4621 = vand.u32 %v4620, 4294901760
        %v4622 = vsub.f32 %v4620, %v4621
        %v4623 = vand.u32 %v4622, 4294901760
        %4624 = vmatpush.msra.mxu0 %v4623
        %v4625 = vand.u32 %v1528, 4294901760
        %v4626 = vsub.f32 %v1528, %v4625
        %v4627 = vand.u32 %v4626, 4294901760
        %v4628 = vsub.f32 %v4626, %v4627
        %v4629 = vand.u32 %v4628, 4294901760
        %4630 = vmatpush.msra.mxu0 %v4629
        %v4631 = vand.u32 %v1520, 4294901760
        %v4632 = vsub.f32 %v1520, %v4631
        %v4633 = vand.u32 %v4632, 4294901760
        %v4634 = vsub.f32 %v4632, %v4633
        %v4635 = vand.u32 %v4634, 4294901760
        %4636 = vmatpush.msra.mxu0 %v4635
        %v4637 = vand.u32 %v1514, 4294901760
        %4638 = vmatmul.f32.gmra.mxu0 %v4637
        %v4639 = vpop.f32.mrf.mxu0
        %v4640 = vadd.f32 %v4539, %v4639
        %4641 = vdwg.mxu0
        %v4642 = vand.u32 %v1640, 4294901760
        %v4643 = vsub.f32 %v1640, %v4642
        %4644 = vmatpush.msra.mxu0 %v4643
        %v4645 = vand.u32 %v1632, 4294901760
        %v4646 = vsub.f32 %v1632, %v4645
        %4647 = vmatpush.msra.mxu0 %v4646
        %v4648 = vand.u32 %v1624, 4294901760
        %v4649 = vsub.f32 %v1624, %v4648
        %4650 = vmatpush.msra.mxu0 %v4649
        %v4651 = vand.u32 %v1616, 4294901760
        %v4652 = vsub.f32 %v1616, %v4651
        %4653 = vmatpush.msra.mxu0 %v4652
        %v4654 = vand.u32 %v1608, 4294901760
        %v4655 = vsub.f32 %v1608, %v4654
        %4656 = vmatpush.msra.mxu0 %v4655
        %v4657 = vand.u32 %v1600, 4294901760
        %v4658 = vsub.f32 %v1600, %v4657
        %4659 = vmatpush.msra.mxu0 %v4658
        %v4660 = vand.u32 %v1592, 4294901760
        %v4661 = vsub.f32 %v1592, %v4660
        %4662 = vmatpush.msra.mxu0 %v4661
        %v4663 = vand.u32 %v1584, 4294901760
        %v4664 = vsub.f32 %v1584, %v4663
        %4665 = vmatpush.msra.mxu0 %v4664
        %v4666 = vand.u32 %v1576, 4294901760
        %v4667 = vsub.f32 %v1576, %v4666
        %4668 = vmatpush.msra.mxu0 %v4667
        %v4669 = vand.u32 %v1568, 4294901760
        %v4670 = vsub.f32 %v1568, %v4669
        %4671 = vmatpush.msra.mxu0 %v4670
        %v4672 = vand.u32 %v1560, 4294901760
        %v4673 = vsub.f32 %v1560, %v4672
        %4674 = vmatpush.msra.mxu0 %v4673
        %v4675 = vand.u32 %v1552, 4294901760
        %v4676 = vsub.f32 %v1552, %v4675
        %4677 = vmatpush.msra.mxu0 %v4676
        %v4678 = vand.u32 %v1544, 4294901760
        %v4679 = vsub.f32 %v1544, %v4678
        %4680 = vmatpush.msra.mxu0 %v4679
        %v4681 = vand.u32 %v1536, 4294901760
        %v4682 = vsub.f32 %v1536, %v4681
        %4683 = vmatpush.msra.mxu0 %v4682
        %v4684 = vand.u32 %v1528, 4294901760
        %v4685 = vsub.f32 %v1528, %v4684
        %4686 = vmatpush.msra.mxu0 %v4685
        %v4687 = vand.u32 %v1520, 4294901760
        %v4688 = vsub.f32 %v1520, %v4687
        %4689 = vmatpush.msra.mxu0 %v4688
        %v4690 = vand.u32 %v1514, 4294901760
        %v4691 = vsub.f32 %v1514, %v4690
        %4692 = vmatmul.f32.gmra.mxu0 %v4691
        %v4693 = vpop.f32.mrf.mxu0
        %v4694 = vadd.f32 %v4640, %v4693
        %4695 = vdwg.mxu0
        %v4696 = vand.u32 %v1640, 4294901760
        %4697 = vmatpush.msra.mxu0 %v4696
        %v4698 = vand.u32 %v1632, 4294901760
        %4699 = vmatpush.msra.mxu0 %v4698
        %v4700 = vand.u32 %v1624, 4294901760
        %4701 = vmatpush.msra.mxu0 %v4700
        %v4702 = vand.u32 %v1616, 4294901760
        %4703 = vmatpush.msra.mxu0 %v4702
        %v4704 = vand.u32 %v1608, 4294901760
        %4705 = vmatpush.msra.mxu0 %v4704
        %v4706 = vand.u32 %v1600, 4294901760
        %4707 = vmatpush.msra.mxu0 %v4706
        %v4708 = vand.u32 %v1592, 4294901760
        %4709 = vmatpush.msra.mxu0 %v4708
        %v4710 = vand.u32 %v1584, 4294901760
        %4711 = vmatpush.msra.mxu0 %v4710
        %v4712 = vand.u32 %v1576, 4294901760
        %4713 = vmatpush.msra.mxu0 %v4712
        %v4714 = vand.u32 %v1568, 4294901760
        %4715 = vmatpush.msra.mxu0 %v4714
        %v4716 = vand.u32 %v1560, 4294901760
        %4717 = vmatpush.msra.mxu0 %v4716
        %v4718 = vand.u32 %v1552, 4294901760
        %4719 = vmatpush.msra.mxu0 %v4718
        %v4720 = vand.u32 %v1544, 4294901760
        %4721 = vmatpush.msra.mxu0 %v4720
        %v4722 = vand.u32 %v1536, 4294901760
        %4723 = vmatpush.msra.mxu0 %v4722
        %v4724 = vand.u32 %v1528, 4294901760
        %4725 = vmatpush.msra.mxu0 %v4724
        %v4726 = vand.u32 %v1520, 4294901760
        %4727 = vmatpush.msra.mxu0 %v4726
        %v4728 = vand.u32 %v1514, 4294901760
        %v4729 = vsub.f32 %v1514, %v4728
        %v4730 = vand.u32 %v4729, 4294901760
        %4731 = vmatmul.f32.gmra.mxu0 %v4730
        %v4732 = vpop.f32.mrf.mxu0
        %v4733 = vadd.f32 %v4694, %v4732
        %4734 = vdwg.mxu0
        %v4735 = vand.u32 %v1640, 4294901760
        %v4736 = vsub.f32 %v1640, %v4735
        %v4737 = vand.u32 %v4736, 4294901760
        %4738 = vmatpush.msra.mxu0 %v4737
        %v4739 = vand.u32 %v1632, 4294901760
        %v4740 = vsub.f32 %v1632, %v4739
        %v4741 = vand.u32 %v4740, 4294901760
        %4742 = vmatpush.msra.mxu0 %v4741
        %v4743 = vand.u32 %v1624, 4294901760
        %v4744 = vsub.f32 %v1624, %v4743
        %v4745 = vand.u32 %v4744, 4294901760
        %4746 = vmatpush.msra.mxu0 %v4745
        %v4747 = vand.u32 %v1616, 4294901760
        %v4748 = vsub.f32 %v1616, %v4747
        %v4749 = vand.u32 %v4748, 4294901760
        %4750 = vmatpush.msra.mxu0 %v4749
        %v4751 = vand.u32 %v1608, 4294901760
        %v4752 = vsub.f32 %v1608, %v4751
        %v4753 = vand.u32 %v4752, 4294901760
        %4754 = vmatpush.msra.mxu0 %v4753
        %v4755 = vand.u32 %v1600, 4294901760
        %v4756 = vsub.f32 %v1600, %v4755
        %v4757 = vand.u32 %v4756, 4294901760
        %4758 = vmatpush.msra.mxu0 %v4757
        %v4759 = vand.u32 %v1592, 4294901760
        %v4760 = vsub.f32 %v1592, %v4759
        %v4761 = vand.u32 %v4760, 4294901760
        %4762 = vmatpush.msra.mxu0 %v4761
        %v4763 = vand.u32 %v1584, 4294901760
        %v4764 = vsub.f32 %v1584, %v4763
        %v4765 = vand.u32 %v4764, 4294901760
        %4766 = vmatpush.msra.mxu0 %v4765
        %v4767 = vand.u32 %v1576, 4294901760
        %v4768 = vsub.f32 %v1576, %v4767
        %v4769 = vand.u32 %v4768, 4294901760
        %4770 = vmatpush.msra.mxu0 %v4769
        %v4771 = vand.u32 %v1568, 4294901760
        %v4772 = vsub.f32 %v1568, %v4771
        %v4773 = vand.u32 %v4772, 4294901760
        %4774 = vmatpush.msra.mxu0 %v4773
        %v4775 = vand.u32 %v1560, 4294901760
        %v4776 = vsub.f32 %v1560, %v4775
        %v4777 = vand.u32 %v4776, 4294901760
        %4778 = vmatpush.msra.mxu0 %v4777
        %v4779 = vand.u32 %v1552, 4294901760
        %v4780 = vsub.f32 %v1552, %v4779
        %v4781 = vand.u32 %v4780, 4294901760
        %4782 = vmatpush.msra.mxu0 %v4781
        %v4783 = vand.u32 %v1544, 4294901760
        %v4784 = vsub.f32 %v1544, %v4783
        %v4785 = vand.u32 %v4784, 4294901760
        %4786 = vmatpush.msra.mxu0 %v4785
        %v4787 = vand.u32 %v1536, 4294901760
        %v4788 = vsub.f32 %v1536, %v4787
        %v4789 = vand.u32 %v4788, 4294901760
        %4790 = vmatpush.msra.mxu0 %v4789
        %v4791 = vand.u32 %v1528, 4294901760
        %v4792 = vsub.f32 %v1528, %v4791
        %v4793 = vand.u32 %v4792, 4294901760
        %4794 = vmatpush.msra.mxu0 %v4793
        %v4795 = vand.u32 %v1520, 4294901760
        %v4796 = vsub.f32 %v1520, %v4795
        %v4797 = vand.u32 %v4796, 4294901760
        %4798 = vmatpush.msra.mxu0 %v4797
        %v4799 = vand.u32 %v1514, 4294901760
        %4800 = vmatmul.f32.gmra.mxu0 %v4799
        %v4801 = vpop.f32.mrf.mxu0
        %v4802 = vadd.f32 %v4733, %v4801
        %4803 = vdwg.mxu0
        %v4804 = vand.u32 %v1640, 4294901760
        %4805 = vmatpush.msra.mxu0 %v4804
        %v4806 = vand.u32 %v1632, 4294901760
        %4807 = vmatpush.msra.mxu0 %v4806
        %v4808 = vand.u32 %v1624, 4294901760
        %4809 = vmatpush.msra.mxu0 %v4808
        %v4810 = vand.u32 %v1616, 4294901760
        %4811 = vmatpush.msra.mxu0 %v4810
        %v4812 = vand.u32 %v1608, 4294901760
        %4813 = vmatpush.msra.mxu0 %v4812
        %v4814 = vand.u32 %v1600, 4294901760
        %4815 = vmatpush.msra.mxu0 %v4814
        %v4816 = vand.u32 %v1592, 4294901760
        %4817 = vmatpush.msra.mxu0 %v4816
        %v4818 = vand.u32 %v1584, 4294901760
        %4819 = vmatpush.msra.mxu0 %v4818
        %v4820 = vand.u32 %v1576, 4294901760
        %4821 = vmatpush.msra.mxu0 %v4820
        %v4822 = vand.u32 %v1568, 4294901760
        %4823 = vmatpush.msra.mxu0 %v4822
        %v4824 = vand.u32 %v1560, 4294901760
        %4825 = vmatpush.msra.mxu0 %v4824
        %v4826 = vand.u32 %v1552, 4294901760
        %4827 = vmatpush.msra.mxu0 %v4826
        %v4828 = vand.u32 %v1544, 4294901760
        %4829 = vmatpush.msra.mxu0 %v4828
        %v4830 = vand.u32 %v1536, 4294901760
        %4831 = vmatpush.msra.mxu0 %v4830
        %v4832 = vand.u32 %v1528, 4294901760
        %4833 = vmatpush.msra.mxu0 %v4832
        %v4834 = vand.u32 %v1520, 4294901760
        %4835 = vmatpush.msra.mxu0 %v4834
        %v4836 = vand.u32 %v1514, 4294901760
        %4837 = vmatmul.f32.gmra.mxu0 %v4836
        %v4838 = vpop.f32.mrf.mxu0
        %v4839 = vadd.f32 %v4802, %v4838
        %4840 = vdwg.mxu0
        %v4841 = vand.u32 %v1768, 4294901760
        %4842 = vmatpush.msra.mxu0 %v4841
        %v4843 = vand.u32 %v1760, 4294901760
        %4844 = vmatpush.msra.mxu0 %v4843
        %v4845 = vand.u32 %v1752, 4294901760
        %4846 = vmatpush.msra.mxu0 %v4845
        %v4847 = vand.u32 %v1744, 4294901760
        %4848 = vmatpush.msra.mxu0 %v4847
        %v4849 = vand.u32 %v1736, 4294901760
        %4850 = vmatpush.msra.mxu0 %v4849
        %v4851 = vand.u32 %v1728, 4294901760
        %4852 = vmatpush.msra.mxu0 %v4851
        %v4853 = vand.u32 %v1720, 4294901760
        %4854 = vmatpush.msra.mxu0 %v4853
        %v4855 = vand.u32 %v1712, 4294901760
        %4856 = vmatpush.msra.mxu0 %v4855
        %v4857 = vand.u32 %v1704, 4294901760
        %4858 = vmatpush.msra.mxu0 %v4857
        %v4859 = vand.u32 %v1696, 4294901760
        %4860 = vmatpush.msra.mxu0 %v4859
        %v4861 = vand.u32 %v1688, 4294901760
        %4862 = vmatpush.msra.mxu0 %v4861
        %v4863 = vand.u32 %v1680, 4294901760
        %4864 = vmatpush.msra.mxu0 %v4863
        %v4865 = vand.u32 %v1672, 4294901760
        %4866 = vmatpush.msra.mxu0 %v4865
        %v4867 = vand.u32 %v1664, 4294901760
        %4868 = vmatpush.msra.mxu0 %v4867
        %v4869 = vand.u32 %v1656, 4294901760
        %4870 = vmatpush.msra.mxu0 %v4869
        %v4871 = vand.u32 %v1648, 4294901760
        %4872 = vmatpush.msra.mxu0 %v4871
        %v4873 = vand.u32 %v1515, 4294901760
        %v4874 = vsub.f32 %v1515, %v4873
        %v4875 = vand.u32 %v4874, 4294901760
        %v4876 = vsub.f32 %v4874, %v4875
        %v4877 = vand.u32 %v4876, 4294901760
        %4878 = vmatmul.f32.gmra.mxu0 %v4877
        %v4879 = vpop.f32.mrf.mxu0
        %v4880 = vadd.f32 %v4839, %v4879
        %4881 = vdwg.mxu0
        %v4882 = vand.u32 %v1768, 4294901760
        %v4883 = vsub.f32 %v1768, %v4882
        %v4884 = vand.u32 %v4883, 4294901760
        %v4885 = vsub.f32 %v4883, %v4884
        %v4886 = vand.u32 %v4885, 4294901760
        %4887 = vmatpush.msra.mxu0 %v4886
        %v4888 = vand.u32 %v1760, 4294901760
        %v4889 = vsub.f32 %v1760, %v4888
        %v4890 = vand.u32 %v4889, 4294901760
        %v4891 = vsub.f32 %v4889, %v4890
        %v4892 = vand.u32 %v4891, 4294901760
        %4893 = vmatpush.msra.mxu0 %v4892
        %v4894 = vand.u32 %v1752, 4294901760
        %v4895 = vsub.f32 %v1752, %v4894
        %v4896 = vand.u32 %v4895, 4294901760
        %v4897 = vsub.f32 %v4895, %v4896
        %v4898 = vand.u32 %v4897, 4294901760
        %4899 = vmatpush.msra.mxu0 %v4898
        %v4900 = vand.u32 %v1744, 4294901760
        %v4901 = vsub.f32 %v1744, %v4900
        %v4902 = vand.u32 %v4901, 4294901760
        %v4903 = vsub.f32 %v4901, %v4902
        %v4904 = vand.u32 %v4903, 4294901760
        %4905 = vmatpush.msra.mxu0 %v4904
        %v4906 = vand.u32 %v1736, 4294901760
        %v4907 = vsub.f32 %v1736, %v4906
        %v4908 = vand.u32 %v4907, 4294901760
        %v4909 = vsub.f32 %v4907, %v4908
        %v4910 = vand.u32 %v4909, 4294901760
        %4911 = vmatpush.msra.mxu0 %v4910
        %v4912 = vand.u32 %v1728, 4294901760
        %v4913 = vsub.f32 %v1728, %v4912
        %v4914 = vand.u32 %v4913, 4294901760
        %v4915 = vsub.f32 %v4913, %v4914
        %v4916 = vand.u32 %v4915, 4294901760
        %4917 = vmatpush.msra.mxu0 %v4916
        %v4918 = vand.u32 %v1720, 4294901760
        %v4919 = vsub.f32 %v1720, %v4918
        %v4920 = vand.u32 %v4919, 4294901760
        %v4921 = vsub.f32 %v4919, %v4920
        %v4922 = vand.u32 %v4921, 4294901760
        %4923 = vmatpush.msra.mxu0 %v4922
        %v4924 = vand.u32 %v1712, 4294901760
        %v4925 = vsub.f32 %v1712, %v4924
        %v4926 = vand.u32 %v4925, 4294901760
        %v4927 = vsub.f32 %v4925, %v4926
        %v4928 = vand.u32 %v4927, 4294901760
        %4929 = vmatpush.msra.mxu0 %v4928
        %v4930 = vand.u32 %v1704, 4294901760
        %v4931 = vsub.f32 %v1704, %v4930
        %v4932 = vand.u32 %v4931, 4294901760
        %v4933 = vsub.f32 %v4931, %v4932
        %v4934 = vand.u32 %v4933, 4294901760
        %4935 = vmatpush.msra.mxu0 %v4934
        %v4936 = vand.u32 %v1696, 4294901760
        %v4937 = vsub.f32 %v1696, %v4936
        %v4938 = vand.u32 %v4937, 4294901760
        %v4939 = vsub.f32 %v4937, %v4938
        %v4940 = vand.u32 %v4939, 4294901760
        %4941 = vmatpush.msra.mxu0 %v4940
        %v4942 = vand.u32 %v1688, 4294901760
        %v4943 = vsub.f32 %v1688, %v4942
        %v4944 = vand.u32 %v4943, 4294901760
        %v4945 = vsub.f32 %v4943, %v4944
        %v4946 = vand.u32 %v4945, 4294901760
        %4947 = vmatpush.msra.mxu0 %v4946
        %v4948 = vand.u32 %v1680, 4294901760
        %v4949 = vsub.f32 %v1680, %v4948
        %v4950 = vand.u32 %v4949, 4294901760
        %v4951 = vsub.f32 %v4949, %v4950
        %v4952 = vand.u32 %v4951, 4294901760
        %4953 = vmatpush.msra.mxu0 %v4952
        %v4954 = vand.u32 %v1672, 4294901760
        %v4955 = vsub.f32 %v1672, %v4954
        %v4956 = vand.u32 %v4955, 4294901760
        %v4957 = vsub.f32 %v4955, %v4956
        %v4958 = vand.u32 %v4957, 4294901760
        %4959 = vmatpush.msra.mxu0 %v4958
        %v4960 = vand.u32 %v1664, 4294901760
        %v4961 = vsub.f32 %v1664, %v4960
        %v4962 = vand.u32 %v4961, 4294901760
        %v4963 = vsub.f32 %v4961, %v4962
        %v4964 = vand.u32 %v4963, 4294901760
        %4965 = vmatpush.msra.mxu0 %v4964
        %v4966 = vand.u32 %v1656, 4294901760
        %v4967 = vsub.f32 %v1656, %v4966
        %v4968 = vand.u32 %v4967, 4294901760
        %v4969 = vsub.f32 %v4967, %v4968
        %v4970 = vand.u32 %v4969, 4294901760
        %4971 = vmatpush.msra.mxu0 %v4970
        %v4972 = vand.u32 %v1648, 4294901760
        %v4973 = vsub.f32 %v1648, %v4972
        %v4974 = vand.u32 %v4973, 4294901760
        %v4975 = vsub.f32 %v4973, %v4974
        %v4976 = vand.u32 %v4975, 4294901760
        %4977 = vmatpush.msra.mxu0 %v4976
        %v4978 = vand.u32 %v1515, 4294901760
        %4979 = vmatmul.f32.gmra.mxu0 %v4978
        %v4980 = vpop.f32.mrf.mxu0
        %v4981 = vadd.f32 %v4880, %v4980
        %4982 = vdwg.mxu0
        %v4983 = vand.u32 %v1768, 4294901760
        %v4984 = vsub.f32 %v1768, %v4983
        %4985 = vmatpush.msra.mxu0 %v4984
        %v4986 = vand.u32 %v1760, 4294901760
        %v4987 = vsub.f32 %v1760, %v4986
        %4988 = vmatpush.msra.mxu0 %v4987
        %v4989 = vand.u32 %v1752, 4294901760
        %v4990 = vsub.f32 %v1752, %v4989
        %4991 = vmatpush.msra.mxu0 %v4990
        %v4992 = vand.u32 %v1744, 4294901760
        %v4993 = vsub.f32 %v1744, %v4992
        %4994 = vmatpush.msra.mxu0 %v4993
        %v4995 = vand.u32 %v1736, 4294901760
        %v4996 = vsub.f32 %v1736, %v4995
        %4997 = vmatpush.msra.mxu0 %v4996
        %v4998 = vand.u32 %v1728, 4294901760
        %v4999 = vsub.f32 %v1728, %v4998
        %5000 = vmatpush.msra.mxu0 %v4999
        %v5001 = vand.u32 %v1720, 4294901760
        %v5002 = vsub.f32 %v1720, %v5001
        %5003 = vmatpush.msra.mxu0 %v5002
        %v5004 = vand.u32 %v1712, 4294901760
        %v5005 = vsub.f32 %v1712, %v5004
        %5006 = vmatpush.msra.mxu0 %v5005
        %v5007 = vand.u32 %v1704, 4294901760
        %v5008 = vsub.f32 %v1704, %v5007
        %5009 = vmatpush.msra.mxu0 %v5008
        %v5010 = vand.u32 %v1696, 4294901760
        %v5011 = vsub.f32 %v1696, %v5010
        %5012 = vmatpush.msra.mxu0 %v5011
        %v5013 = vand.u32 %v1688, 4294901760
        %v5014 = vsub.f32 %v1688, %v5013
        %5015 = vmatpush.msra.mxu0 %v5014
        %v5016 = vand.u32 %v1680, 4294901760
        %v5017 = vsub.f32 %v1680, %v5016
        %5018 = vmatpush.msra.mxu0 %v5017
        %v5019 = vand.u32 %v1672, 4294901760
        %v5020 = vsub.f32 %v1672, %v5019
        %5021 = vmatpush.msra.mxu0 %v5020
        %v5022 = vand.u32 %v1664, 4294901760
        %v5023 = vsub.f32 %v1664, %v5022
        %5024 = vmatpush.msra.mxu0 %v5023
        %v5025 = vand.u32 %v1656, 4294901760
        %v5026 = vsub.f32 %v1656, %v5025
        %5027 = vmatpush.msra.mxu0 %v5026
        %v5028 = vand.u32 %v1648, 4294901760
        %v5029 = vsub.f32 %v1648, %v5028
        %5030 = vmatpush.msra.mxu0 %v5029
        %v5031 = vand.u32 %v1515, 4294901760
        %v5032 = vsub.f32 %v1515, %v5031
        %5033 = vmatmul.f32.gmra.mxu0 %v5032
        %v5034 = vpop.f32.mrf.mxu0
        %v5035 = vadd.f32 %v4981, %v5034
        %5036 = vdwg.mxu0
        %v5037 = vand.u32 %v1768, 4294901760
        %5038 = vmatpush.msra.mxu0 %v5037
        %v5039 = vand.u32 %v1760, 4294901760
        %5040 = vmatpush.msra.mxu0 %v5039
        %v5041 = vand.u32 %v1752, 4294901760
        %5042 = vmatpush.msra.mxu0 %v5041
        %v5043 = vand.u32 %v1744, 4294901760
        %5044 = vmatpush.msra.mxu0 %v5043
        %v5045 = vand.u32 %v1736, 4294901760
        %5046 = vmatpush.msra.mxu0 %v5045
        %v5047 = vand.u32 %v1728, 4294901760
        %5048 = vmatpush.msra.mxu0 %v5047
        %v5049 = vand.u32 %v1720, 4294901760
        %5050 = vmatpush.msra.mxu0 %v5049
        %v5051 = vand.u32 %v1712, 4294901760
        %5052 = vmatpush.msra.mxu0 %v5051
        %v5053 = vand.u32 %v1704, 4294901760
        %5054 = vmatpush.msra.mxu0 %v5053
        %v5055 = vand.u32 %v1696, 4294901760
        %5056 = vmatpush.msra.mxu0 %v5055
        %v5057 = vand.u32 %v1688, 4294901760
        %5058 = vmatpush.msra.mxu0 %v5057
        %v5059 = vand.u32 %v1680, 4294901760
        %5060 = vmatpush.msra.mxu0 %v5059
        %v5061 = vand.u32 %v1672, 4294901760
        %5062 = vmatpush.msra.mxu0 %v5061
        %v5063 = vand.u32 %v1664, 4294901760
        %5064 = vmatpush.msra.mxu0 %v5063
        %v5065 = vand.u32 %v1656, 4294901760
        %5066 = vmatpush.msra.mxu0 %v5065
        %v5067 = vand.u32 %v1648, 4294901760
        %5068 = vmatpush.msra.mxu0 %v5067
        %v5069 = vand.u32 %v1515, 4294901760
        %v5070 = vsub.f32 %v1515, %v5069
        %v5071 = vand.u32 %v5070, 4294901760
        %5072 = vmatmul.f32.gmra.mxu0 %v5071
        %v5073 = vpop.f32.mrf.mxu0
        %v5074 = vadd.f32 %v5035, %v5073
        %5075 = vdwg.mxu0
        %v5076 = vand.u32 %v1768, 4294901760
        %v5077 = vsub.f32 %v1768, %v5076
        %v5078 = vand.u32 %v5077, 4294901760
        %5079 = vmatpush.msra.mxu0 %v5078
        %v5080 = vand.u32 %v1760, 4294901760
        %v5081 = vsub.f32 %v1760, %v5080
        %v5082 = vand.u32 %v5081, 4294901760
        %5083 = vmatpush.msra.mxu0 %v5082
        %v5084 = vand.u32 %v1752, 4294901760
        %v5085 = vsub.f32 %v1752, %v5084
        %v5086 = vand.u32 %v5085, 4294901760
        %5087 = vmatpush.msra.mxu0 %v5086
        %v5088 = vand.u32 %v1744, 4294901760
        %v5089 = vsub.f32 %v1744, %v5088
        %v5090 = vand.u32 %v5089, 4294901760
        %5091 = vmatpush.msra.mxu0 %v5090
        %v5092 = vand.u32 %v1736, 4294901760
        %v5093 = vsub.f32 %v1736, %v5092
        %v5094 = vand.u32 %v5093, 4294901760
        %5095 = vmatpush.msra.mxu0 %v5094
        %v5096 = vand.u32 %v1728, 4294901760
        %v5097 = vsub.f32 %v1728, %v5096
        %v5098 = vand.u32 %v5097, 4294901760
        %5099 = vmatpush.msra.mxu0 %v5098
        %v5100 = vand.u32 %v1720, 4294901760
        %v5101 = vsub.f32 %v1720, %v5100
        %v5102 = vand.u32 %v5101, 4294901760
        %5103 = vmatpush.msra.mxu0 %v5102
        %v5104 = vand.u32 %v1712, 4294901760
        %v5105 = vsub.f32 %v1712, %v5104
        %v5106 = vand.u32 %v5105, 4294901760
        %5107 = vmatpush.msra.mxu0 %v5106
        %v5108 = vand.u32 %v1704, 4294901760
        %v5109 = vsub.f32 %v1704, %v5108
        %v5110 = vand.u32 %v5109, 4294901760
        %5111 = vmatpush.msra.mxu0 %v5110
        %v5112 = vand.u32 %v1696, 4294901760
        %v5113 = vsub.f32 %v1696, %v5112
        %v5114 = vand.u32 %v5113, 4294901760
        %5115 = vmatpush.msra.mxu0 %v5114
        %v5116 = vand.u32 %v1688, 4294901760
        %v5117 = vsub.f32 %v1688, %v5116
        %v5118 = vand.u32 %v5117, 4294901760
        %5119 = vmatpush.msra.mxu0 %v5118
        %v5120 = vand.u32 %v1680, 4294901760
        %v5121 = vsub.f32 %v1680, %v5120
        %v5122 = vand.u32 %v5121, 4294901760
        %5123 = vmatpush.msra.mxu0 %v5122
        %v5124 = vand.u32 %v1672, 4294901760
        %v5125 = vsub.f32 %v1672, %v5124
        %v5126 = vand.u32 %v5125, 4294901760
        %5127 = vmatpush.msra.mxu0 %v5126
        %v5128 = vand.u32 %v1664, 4294901760
        %v5129 = vsub.f32 %v1664, %v5128
        %v5130 = vand.u32 %v5129, 4294901760
        %5131 = vmatpush.msra.mxu0 %v5130
        %v5132 = vand.u32 %v1656, 4294901760
        %v5133 = vsub.f32 %v1656, %v5132
        %v5134 = vand.u32 %v5133, 4294901760
        %5135 = vmatpush.msra.mxu0 %v5134
        %v5136 = vand.u32 %v1648, 4294901760
        %v5137 = vsub.f32 %v1648, %v5136
        %v5138 = vand.u32 %v5137, 4294901760
        %5139 = vmatpush.msra.mxu0 %v5138
        %v5140 = vand.u32 %v1515, 4294901760
        %5141 = vmatmul.f32.gmra.mxu0 %v5140
        %v5142 = vpop.f32.mrf.mxu0
        %v5143 = vadd.f32 %v5074, %v5142
        %5144 = vdwg.mxu0
        %v5145 = vand.u32 %v1768, 4294901760
        %5146 = vmatpush.msra.mxu0 %v5145
        %v5147 = vand.u32 %v1760, 4294901760
        %5148 = vmatpush.msra.mxu0 %v5147
        %v5149 = vand.u32 %v1752, 4294901760
        %5150 = vmatpush.msra.mxu0 %v5149
        %v5151 = vand.u32 %v1744, 4294901760
        %5152 = vmatpush.msra.mxu0 %v5151
        %v5153 = vand.u32 %v1736, 4294901760
        %5154 = vmatpush.msra.mxu0 %v5153
        %v5155 = vand.u32 %v1728, 4294901760
        %5156 = vmatpush.msra.mxu0 %v5155
        %v5157 = vand.u32 %v1720, 4294901760
        %5158 = vmatpush.msra.mxu0 %v5157
        %v5159 = vand.u32 %v1712, 4294901760
        %5160 = vmatpush.msra.mxu0 %v5159
        %v5161 = vand.u32 %v1704, 4294901760
        %5162 = vmatpush.msra.mxu0 %v5161
        %v5163 = vand.u32 %v1696, 4294901760
        %5164 = vmatpush.msra.mxu0 %v5163
        %v5165 = vand.u32 %v1688, 4294901760
        %5166 = vmatpush.msra.mxu0 %v5165
        %v5167 = vand.u32 %v1680, 4294901760
        %5168 = vmatpush.msra.mxu0 %v5167
        %v5169 = vand.u32 %v1672, 4294901760
        %5170 = vmatpush.msra.mxu0 %v5169
        %v5171 = vand.u32 %v1664, 4294901760
        %5172 = vmatpush.msra.mxu0 %v5171
        %v5173 = vand.u32 %v1656, 4294901760
        %5174 = vmatpush.msra.mxu0 %v5173
        %v5175 = vand.u32 %v1648, 4294901760
        %5176 = vmatpush.msra.mxu0 %v5175
        %v5177 = vand.u32 %v1515, 4294901760
        %5178 = vmatmul.f32.gmra.mxu0 %v5177
        %v5179 = vpop.f32.mrf.mxu0
        %v5180 = vadd.f32 %v5143, %v5179
        %5181 = vdwg.mxu0
        %v5182 = vand.u32 %v1641, 4294901760
        %5183 = vmatpush.msra.mxu0 %v5182
        %v5184 = vand.u32 %v1633, 4294901760
        %5185 = vmatpush.msra.mxu0 %v5184
        %v5186 = vand.u32 %v1625, 4294901760
        %5187 = vmatpush.msra.mxu0 %v5186
        %v5188 = vand.u32 %v1617, 4294901760
        %5189 = vmatpush.msra.mxu0 %v5188
        %v5190 = vand.u32 %v1609, 4294901760
        %5191 = vmatpush.msra.mxu0 %v5190
        %v5192 = vand.u32 %v1601, 4294901760
        %5193 = vmatpush.msra.mxu0 %v5192
        %v5194 = vand.u32 %v1593, 4294901760
        %5195 = vmatpush.msra.mxu0 %v5194
        %v5196 = vand.u32 %v1585, 4294901760
        %5197 = vmatpush.msra.mxu0 %v5196
        %v5198 = vand.u32 %v1577, 4294901760
        %5199 = vmatpush.msra.mxu0 %v5198
        %v5200 = vand.u32 %v1569, 4294901760
        %5201 = vmatpush.msra.mxu0 %v5200
        %v5202 = vand.u32 %v1561, 4294901760
        %5203 = vmatpush.msra.mxu0 %v5202
        %v5204 = vand.u32 %v1553, 4294901760
        %5205 = vmatpush.msra.mxu0 %v5204
        %v5206 = vand.u32 %v1545, 4294901760
        %5207 = vmatpush.msra.mxu0 %v5206
        %v5208 = vand.u32 %v1537, 4294901760
        %5209 = vmatpush.msra.mxu0 %v5208
        %v5210 = vand.u32 %v1529, 4294901760
        %5211 = vmatpush.msra.mxu0 %v5210
        %v5212 = vand.u32 %v1521, 4294901760
        %5213 = vmatpush.msra.mxu0 %v5212
        %v5214 = vand.u32 %v1514, 4294901760
        %v5215 = vsub.f32 %v1514, %v5214
        %v5216 = vand.u32 %v5215, 4294901760
        %v5217 = vsub.f32 %v5215, %v5216
        %v5218 = vand.u32 %v5217, 4294901760
        %5219 = vmatmul.f32.gmra.mxu0 %v5218
        %v5220 = vpop.f32.mrf.mxu0
        %v5221 = vadd.f32 0.0, %v5220
        %5222 = vdwg.mxu0
        %v5223 = vand.u32 %v1641, 4294901760
        %v5224 = vsub.f32 %v1641, %v5223
        %v5225 = vand.u32 %v5224, 4294901760
        %v5226 = vsub.f32 %v5224, %v5225
        %v5227 = vand.u32 %v5226, 4294901760
        %5228 = vmatpush.msra.mxu0 %v5227
        %v5229 = vand.u32 %v1633, 4294901760
        %v5230 = vsub.f32 %v1633, %v5229
        %v5231 = vand.u32 %v5230, 4294901760
        %v5232 = vsub.f32 %v5230, %v5231
        %v5233 = vand.u32 %v5232, 4294901760
        %5234 = vmatpush.msra.mxu0 %v5233
        %v5235 = vand.u32 %v1625, 4294901760
        %v5236 = vsub.f32 %v1625, %v5235
        %v5237 = vand.u32 %v5236, 4294901760
        %v5238 = vsub.f32 %v5236, %v5237
        %v5239 = vand.u32 %v5238, 4294901760
        %5240 = vmatpush.msra.mxu0 %v5239
        %v5241 = vand.u32 %v1617, 4294901760
        %v5242 = vsub.f32 %v1617, %v5241
        %v5243 = vand.u32 %v5242, 4294901760
        %v5244 = vsub.f32 %v5242, %v5243
        %v5245 = vand.u32 %v5244, 4294901760
        %5246 = vmatpush.msra.mxu0 %v5245
        %v5247 = vand.u32 %v1609, 4294901760
        %v5248 = vsub.f32 %v1609, %v5247
        %v5249 = vand.u32 %v5248, 4294901760
        %v5250 = vsub.f32 %v5248, %v5249
        %v5251 = vand.u32 %v5250, 4294901760
        %5252 = vmatpush.msra.mxu0 %v5251
        %v5253 = vand.u32 %v1601, 4294901760
        %v5254 = vsub.f32 %v1601, %v5253
        %v5255 = vand.u32 %v5254, 4294901760
        %v5256 = vsub.f32 %v5254, %v5255
        %v5257 = vand.u32 %v5256, 4294901760
        %5258 = vmatpush.msra.mxu0 %v5257
        %v5259 = vand.u32 %v1593, 4294901760
        %v5260 = vsub.f32 %v1593, %v5259
        %v5261 = vand.u32 %v5260, 4294901760
        %v5262 = vsub.f32 %v5260, %v5261
        %v5263 = vand.u32 %v5262, 4294901760
        %5264 = vmatpush.msra.mxu0 %v5263
        %v5265 = vand.u32 %v1585, 4294901760
        %v5266 = vsub.f32 %v1585, %v5265
        %v5267 = vand.u32 %v5266, 4294901760
        %v5268 = vsub.f32 %v5266, %v5267
        %v5269 = vand.u32 %v5268, 4294901760
        %5270 = vmatpush.msra.mxu0 %v5269
        %v5271 = vand.u32 %v1577, 4294901760
        %v5272 = vsub.f32 %v1577, %v5271
        %v5273 = vand.u32 %v5272, 4294901760
        %v5274 = vsub.f32 %v5272, %v5273
        %v5275 = vand.u32 %v5274, 4294901760
        %5276 = vmatpush.msra.mxu0 %v5275
        %v5277 = vand.u32 %v1569, 4294901760
        %v5278 = vsub.f32 %v1569, %v5277
        %v5279 = vand.u32 %v5278, 4294901760
        %v5280 = vsub.f32 %v5278, %v5279
        %v5281 = vand.u32 %v5280, 4294901760
        %5282 = vmatpush.msra.mxu0 %v5281
        %v5283 = vand.u32 %v1561, 4294901760
        %v5284 = vsub.f32 %v1561, %v5283
        %v5285 = vand.u32 %v5284, 4294901760
        %v5286 = vsub.f32 %v5284, %v5285
        %v5287 = vand.u32 %v5286, 4294901760
        %5288 = vmatpush.msra.mxu0 %v5287
        %v5289 = vand.u32 %v1553, 4294901760
        %v5290 = vsub.f32 %v1553, %v5289
        %v5291 = vand.u32 %v5290, 4294901760
        %v5292 = vsub.f32 %v5290, %v5291
        %v5293 = vand.u32 %v5292, 4294901760
        %5294 = vmatpush.msra.mxu0 %v5293
        %v5295 = vand.u32 %v1545, 4294901760
        %v5296 = vsub.f32 %v1545, %v5295
        %v5297 = vand.u32 %v5296, 4294901760
        %v5298 = vsub.f32 %v5296, %v5297
        %v5299 = vand.u32 %v5298, 4294901760
        %5300 = vmatpush.msra.mxu0 %v5299
        %v5301 = vand.u32 %v1537, 4294901760
        %v5302 = vsub.f32 %v1537, %v5301
        %v5303 = vand.u32 %v5302, 4294901760
        %v5304 = vsub.f32 %v5302, %v5303
        %v5305 = vand.u32 %v5304, 4294901760
        %5306 = vmatpush.msra.mxu0 %v5305
        %v5307 = vand.u32 %v1529, 4294901760
        %v5308 = vsub.f32 %v1529, %v5307
        %v5309 = vand.u32 %v5308, 4294901760
        %v5310 = vsub.f32 %v5308, %v5309
        %v5311 = vand.u32 %v5310, 4294901760
        %5312 = vmatpush.msra.mxu0 %v5311
        %v5313 = vand.u32 %v1521, 4294901760
        %v5314 = vsub.f32 %v1521, %v5313
        %v5315 = vand.u32 %v5314, 4294901760
        %v5316 = vsub.f32 %v5314, %v5315
        %v5317 = vand.u32 %v5316, 4294901760
        %5318 = vmatpush.msra.mxu0 %v5317
        %v5319 = vand.u32 %v1514, 4294901760
        %5320 = vmatmul.f32.gmra.mxu0 %v5319
        %v5321 = vpop.f32.mrf.mxu0
        %v5322 = vadd.f32 %v5221, %v5321
        %5323 = vdwg.mxu0
        %v5324 = vand.u32 %v1641, 4294901760
        %v5325 = vsub.f32 %v1641, %v5324
        %5326 = vmatpush.msra.mxu0 %v5325
        %v5327 = vand.u32 %v1633, 4294901760
        %v5328 = vsub.f32 %v1633, %v5327
        %5329 = vmatpush.msra.mxu0 %v5328
        %v5330 = vand.u32 %v1625, 4294901760
        %v5331 = vsub.f32 %v1625, %v5330
        %5332 = vmatpush.msra.mxu0 %v5331
        %v5333 = vand.u32 %v1617, 4294901760
        %v5334 = vsub.f32 %v1617, %v5333
        %5335 = vmatpush.msra.mxu0 %v5334
        %v5336 = vand.u32 %v1609, 4294901760
        %v5337 = vsub.f32 %v1609, %v5336
        %5338 = vmatpush.msra.mxu0 %v5337
        %v5339 = vand.u32 %v1601, 4294901760
        %v5340 = vsub.f32 %v1601, %v5339
        %5341 = vmatpush.msra.mxu0 %v5340
        %v5342 = vand.u32 %v1593, 4294901760
        %v5343 = vsub.f32 %v1593, %v5342
        %5344 = vmatpush.msra.mxu0 %v5343
        %v5345 = vand.u32 %v1585, 4294901760
        %v5346 = vsub.f32 %v1585, %v5345
        %5347 = vmatpush.msra.mxu0 %v5346
        %v5348 = vand.u32 %v1577, 4294901760
        %v5349 = vsub.f32 %v1577, %v5348
        %5350 = vmatpush.msra.mxu0 %v5349
        %v5351 = vand.u32 %v1569, 4294901760
        %v5352 = vsub.f32 %v1569, %v5351
        %5353 = vmatpush.msra.mxu0 %v5352
        %v5354 = vand.u32 %v1561, 4294901760
        %v5355 = vsub.f32 %v1561, %v5354
        %5356 = vmatpush.msra.mxu0 %v5355
        %v5357 = vand.u32 %v1553, 4294901760
        %v5358 = vsub.f32 %v1553, %v5357
        %5359 = vmatpush.msra.mxu0 %v5358
        %v5360 = vand.u32 %v1545, 4294901760
        %v5361 = vsub.f32 %v1545, %v5360
        %5362 = vmatpush.msra.mxu0 %v5361
        %v5363 = vand.u32 %v1537, 4294901760
        %v5364 = vsub.f32 %v1537, %v5363
        %5365 = vmatpush.msra.mxu0 %v5364
        %v5366 = vand.u32 %v1529, 4294901760
        %v5367 = vsub.f32 %v1529, %v5366
        %5368 = vmatpush.msra.mxu0 %v5367
        %v5369 = vand.u32 %v1521, 4294901760
        %v5370 = vsub.f32 %v1521, %v5369
        %5371 = vmatpush.msra.mxu0 %v5370
        %v5372 = vand.u32 %v1514, 4294901760
        %v5373 = vsub.f32 %v1514, %v5372
        %5374 = vmatmul.f32.gmra.mxu0 %v5373
        %v5375 = vpop.f32.mrf.mxu0
        %v5376 = vadd.f32 %v5322, %v5375
        %5377 = vdwg.mxu0
        %v5378 = vand.u32 %v1641, 4294901760
        %5379 = vmatpush.msra.mxu0 %v5378
        %v5380 = vand.u32 %v1633, 4294901760
        %5381 = vmatpush.msra.mxu0 %v5380
        %v5382 = vand.u32 %v1625, 4294901760
        %5383 = vmatpush.msra.mxu0 %v5382
        %v5384 = vand.u32 %v1617, 4294901760
        %5385 = vmatpush.msra.mxu0 %v5384
        %v5386 = vand.u32 %v1609, 4294901760
        %5387 = vmatpush.msra.mxu0 %v5386
        %v5388 = vand.u32 %v1601, 4294901760
        %5389 = vmatpush.msra.mxu0 %v5388
        %v5390 = vand.u32 %v1593, 4294901760
        %5391 = vmatpush.msra.mxu0 %v5390
        %v5392 = vand.u32 %v1585, 4294901760
        %5393 = vmatpush.msra.mxu0 %v5392
        %v5394 = vand.u32 %v1577, 4294901760
        %5395 = vmatpush.msra.mxu0 %v5394
        %v5396 = vand.u32 %v1569, 4294901760
        %5397 = vmatpush.msra.mxu0 %v5396
        %v5398 = vand.u32 %v1561, 4294901760
        %5399 = vmatpush.msra.mxu0 %v5398
        %v5400 = vand.u32 %v1553, 4294901760
        %5401 = vmatpush.msra.mxu0 %v5400
        %v5402 = vand.u32 %v1545, 4294901760
        %5403 = vmatpush.msra.mxu0 %v5402
        %v5404 = vand.u32 %v1537, 4294901760
        %5405 = vmatpush.msra.mxu0 %v5404
        %v5406 = vand.u32 %v1529, 4294901760
        %5407 = vmatpush.msra.mxu0 %v5406
        %v5408 = vand.u32 %v1521, 4294901760
        %5409 = vmatpush.msra.mxu0 %v5408
        %v5410 = vand.u32 %v1514, 4294901760
        %v5411 = vsub.f32 %v1514, %v5410
        %v5412 = vand.u32 %v5411, 4294901760
        %5413 = vmatmul.f32.gmra.mxu0 %v5412
        %v5414 = vpop.f32.mrf.mxu0
        %v5415 = vadd.f32 %v5376, %v5414
        %5416 = vdwg.mxu0
        %v5417 = vand.u32 %v1641, 4294901760
        %v5418 = vsub.f32 %v1641, %v5417
        %v5419 = vand.u32 %v5418, 4294901760
        %5420 = vmatpush.msra.mxu0 %v5419
        %v5421 = vand.u32 %v1633, 4294901760
        %v5422 = vsub.f32 %v1633, %v5421
        %v5423 = vand.u32 %v5422, 4294901760
        %5424 = vmatpush.msra.mxu0 %v5423
        %v5425 = vand.u32 %v1625, 4294901760
        %v5426 = vsub.f32 %v1625, %v5425
        %v5427 = vand.u32 %v5426, 4294901760
        %5428 = vmatpush.msra.mxu0 %v5427
        %v5429 = vand.u32 %v1617, 4294901760
        %v5430 = vsub.f32 %v1617, %v5429
        %v5431 = vand.u32 %v5430, 4294901760
        %5432 = vmatpush.msra.mxu0 %v5431
        %v5433 = vand.u32 %v1609, 4294901760
        %v5434 = vsub.f32 %v1609, %v5433
        %v5435 = vand.u32 %v5434, 4294901760
        %5436 = vmatpush.msra.mxu0 %v5435
        %v5437 = vand.u32 %v1601, 4294901760
        %v5438 = vsub.f32 %v1601, %v5437
        %v5439 = vand.u32 %v5438, 4294901760
        %5440 = vmatpush.msra.mxu0 %v5439
        %v5441 = vand.u32 %v1593, 4294901760
        %v5442 = vsub.f32 %v1593, %v5441
        %v5443 = vand.u32 %v5442, 4294901760
        %5444 = vmatpush.msra.mxu0 %v5443
        %v5445 = vand.u32 %v1585, 4294901760
        %v5446 = vsub.f32 %v1585, %v5445
        %v5447 = vand.u32 %v5446, 4294901760
        %5448 = vmatpush.msra.mxu0 %v5447
        %v5449 = vand.u32 %v1577, 4294901760
        %v5450 = vsub.f32 %v1577, %v5449
        %v5451 = vand.u32 %v5450, 4294901760
        %5452 = vmatpush.msra.mxu0 %v5451
        %v5453 = vand.u32 %v1569, 4294901760
        %v5454 = vsub.f32 %v1569, %v5453
        %v5455 = vand.u32 %v5454, 4294901760
        %5456 = vmatpush.msra.mxu0 %v5455
        %v5457 = vand.u32 %v1561, 4294901760
        %v5458 = vsub.f32 %v1561, %v5457
        %v5459 = vand.u32 %v5458, 4294901760
        %5460 = vmatpush.msra.mxu0 %v5459
        %v5461 = vand.u32 %v1553, 4294901760
        %v5462 = vsub.f32 %v1553, %v5461
        %v5463 = vand.u32 %v5462, 4294901760
        %5464 = vmatpush.msra.mxu0 %v5463
        %v5465 = vand.u32 %v1545, 4294901760
        %v5466 = vsub.f32 %v1545, %v5465
        %v5467 = vand.u32 %v5466, 4294901760
        %5468 = vmatpush.msra.mxu0 %v5467
        %v5469 = vand.u32 %v1537, 4294901760
        %v5470 = vsub.f32 %v1537, %v5469
        %v5471 = vand.u32 %v5470, 4294901760
        %5472 = vmatpush.msra.mxu0 %v5471
        %v5473 = vand.u32 %v1529, 4294901760
        %v5474 = vsub.f32 %v1529, %v5473
        %v5475 = vand.u32 %v5474, 4294901760
        %5476 = vmatpush.msra.mxu0 %v5475
        %v5477 = vand.u32 %v1521, 4294901760
        %v5478 = vsub.f32 %v1521, %v5477
        %v5479 = vand.u32 %v5478, 4294901760
        %5480 = vmatpush.msra.mxu0 %v5479
        %v5481 = vand.u32 %v1514, 4294901760
        %5482 = vmatmul.f32.gmra.mxu0 %v5481
        %v5483 = vpop.f32.mrf.mxu0
        %v5484 = vadd.f32 %v5415, %v5483
        %5485 = vdwg.mxu0
        %v5486 = vand.u32 %v1641, 4294901760
        %5487 = vmatpush.msra.mxu0 %v5486
        %v5488 = vand.u32 %v1633, 4294901760
        %5489 = vmatpush.msra.mxu0 %v5488
        %v5490 = vand.u32 %v1625, 4294901760
        %5491 = vmatpush.msra.mxu0 %v5490
        %v5492 = vand.u32 %v1617, 4294901760
        %5493 = vmatpush.msra.mxu0 %v5492
        %v5494 = vand.u32 %v1609, 4294901760
        %5495 = vmatpush.msra.mxu0 %v5494
        %v5496 = vand.u32 %v1601, 4294901760
        %5497 = vmatpush.msra.mxu0 %v5496
        %v5498 = vand.u32 %v1593, 4294901760
        %5499 = vmatpush.msra.mxu0 %v5498
        %v5500 = vand.u32 %v1585, 4294901760
        %5501 = vmatpush.msra.mxu0 %v5500
        %v5502 = vand.u32 %v1577, 4294901760
        %5503 = vmatpush.msra.mxu0 %v5502
        %v5504 = vand.u32 %v1569, 4294901760
        %5505 = vmatpush.msra.mxu0 %v5504
        %v5506 = vand.u32 %v1561, 4294901760
        %5507 = vmatpush.msra.mxu0 %v5506
        %v5508 = vand.u32 %v1553, 4294901760
        %5509 = vmatpush.msra.mxu0 %v5508
        %v5510 = vand.u32 %v1545, 4294901760
        %5511 = vmatpush.msra.mxu0 %v5510
        %v5512 = vand.u32 %v1537, 4294901760
        %5513 = vmatpush.msra.mxu0 %v5512
        %v5514 = vand.u32 %v1529, 4294901760
        %5515 = vmatpush.msra.mxu0 %v5514
        %v5516 = vand.u32 %v1521, 4294901760
        %5517 = vmatpush.msra.mxu0 %v5516
        %v5518 = vand.u32 %v1514, 4294901760
        %5519 = vmatmul.f32.gmra.mxu0 %v5518
        %v5520 = vpop.f32.mrf.mxu0
        %v5521 = vadd.f32 %v5484, %v5520
        %5522 = vdwg.mxu0
        %v5523 = vand.u32 %v1769, 4294901760
        %5524 = vmatpush.msra.mxu0 %v5523
        %v5525 = vand.u32 %v1761, 4294901760
        %5526 = vmatpush.msra.mxu0 %v5525
        %v5527 = vand.u32 %v1753, 4294901760
        %5528 = vmatpush.msra.mxu0 %v5527
        %v5529 = vand.u32 %v1745, 4294901760
        %5530 = vmatpush.msra.mxu0 %v5529
        %v5531 = vand.u32 %v1737, 4294901760
        %5532 = vmatpush.msra.mxu0 %v5531
        %v5533 = vand.u32 %v1729, 4294901760
        %5534 = vmatpush.msra.mxu0 %v5533
        %v5535 = vand.u32 %v1721, 4294901760
        %5536 = vmatpush.msra.mxu0 %v5535
        %v5537 = vand.u32 %v1713, 4294901760
        %5538 = vmatpush.msra.mxu0 %v5537
        %v5539 = vand.u32 %v1705, 4294901760
        %5540 = vmatpush.msra.mxu0 %v5539
        %v5541 = vand.u32 %v1697, 4294901760
        %5542 = vmatpush.msra.mxu0 %v5541
        %v5543 = vand.u32 %v1689, 4294901760
        %5544 = vmatpush.msra.mxu0 %v5543
        %v5545 = vand.u32 %v1681, 4294901760
        %5546 = vmatpush.msra.mxu0 %v5545
        %v5547 = vand.u32 %v1673, 4294901760
        %5548 = vmatpush.msra.mxu0 %v5547
        %v5549 = vand.u32 %v1665, 4294901760
        %5550 = vmatpush.msra.mxu0 %v5549
        %v5551 = vand.u32 %v1657, 4294901760
        %5552 = vmatpush.msra.mxu0 %v5551
        %v5553 = vand.u32 %v1649, 4294901760
        %5554 = vmatpush.msra.mxu0 %v5553
        %v5555 = vand.u32 %v1515, 4294901760
        %v5556 = vsub.f32 %v1515, %v5555
        %v5557 = vand.u32 %v5556, 4294901760
        %v5558 = vsub.f32 %v5556, %v5557
        %v5559 = vand.u32 %v5558, 4294901760
        %5560 = vmatmul.f32.gmra.mxu0 %v5559
        %v5561 = vpop.f32.mrf.mxu0
        %v5562 = vadd.f32 %v5521, %v5561
        %5563 = vdwg.mxu0
        %v5564 = vand.u32 %v1769, 4294901760
        %v5565 = vsub.f32 %v1769, %v5564
        %v5566 = vand.u32 %v5565, 4294901760
        %v5567 = vsub.f32 %v5565, %v5566
        %v5568 = vand.u32 %v5567, 4294901760
        %5569 = vmatpush.msra.mxu0 %v5568
        %v5570 = vand.u32 %v1761, 4294901760
        %v5571 = vsub.f32 %v1761, %v5570
        %v5572 = vand.u32 %v5571, 4294901760
        %v5573 = vsub.f32 %v5571, %v5572
        %v5574 = vand.u32 %v5573, 4294901760
        %5575 = vmatpush.msra.mxu0 %v5574
        %v5576 = vand.u32 %v1753, 4294901760
        %v5577 = vsub.f32 %v1753, %v5576
        %v5578 = vand.u32 %v5577, 4294901760
        %v5579 = vsub.f32 %v5577, %v5578
        %v5580 = vand.u32 %v5579, 4294901760
        %5581 = vmatpush.msra.mxu0 %v5580
        %v5582 = vand.u32 %v1745, 4294901760
        %v5583 = vsub.f32 %v1745, %v5582
        %v5584 = vand.u32 %v5583, 4294901760
        %v5585 = vsub.f32 %v5583, %v5584
        %v5586 = vand.u32 %v5585, 4294901760
        %5587 = vmatpush.msra.mxu0 %v5586
        %v5588 = vand.u32 %v1737, 4294901760
        %v5589 = vsub.f32 %v1737, %v5588
        %v5590 = vand.u32 %v5589, 4294901760
        %v5591 = vsub.f32 %v5589, %v5590
        %v5592 = vand.u32 %v5591, 4294901760
        %5593 = vmatpush.msra.mxu0 %v5592
        %v5594 = vand.u32 %v1729, 4294901760
        %v5595 = vsub.f32 %v1729, %v5594
        %v5596 = vand.u32 %v5595, 4294901760
        %v5597 = vsub.f32 %v5595, %v5596
        %v5598 = vand.u32 %v5597, 4294901760
        %5599 = vmatpush.msra.mxu0 %v5598
        %v5600 = vand.u32 %v1721, 4294901760
        %v5601 = vsub.f32 %v1721, %v5600
        %v5602 = vand.u32 %v5601, 4294901760
        %v5603 = vsub.f32 %v5601, %v5602
        %v5604 = vand.u32 %v5603, 4294901760
        %5605 = vmatpush.msra.mxu0 %v5604
        %v5606 = vand.u32 %v1713, 4294901760
        %v5607 = vsub.f32 %v1713, %v5606
        %v5608 = vand.u32 %v5607, 4294901760
        %v5609 = vsub.f32 %v5607, %v5608
        %v5610 = vand.u32 %v5609, 4294901760
        %5611 = vmatpush.msra.mxu0 %v5610
        %v5612 = vand.u32 %v1705, 4294901760
        %v5613 = vsub.f32 %v1705, %v5612
        %v5614 = vand.u32 %v5613, 4294901760
        %v5615 = vsub.f32 %v5613, %v5614
        %v5616 = vand.u32 %v5615, 4294901760
        %5617 = vmatpush.msra.mxu0 %v5616
        %v5618 = vand.u32 %v1697, 4294901760
        %v5619 = vsub.f32 %v1697, %v5618
        %v5620 = vand.u32 %v5619, 4294901760
        %v5621 = vsub.f32 %v5619, %v5620
        %v5622 = vand.u32 %v5621, 4294901760
        %5623 = vmatpush.msra.mxu0 %v5622
        %v5624 = vand.u32 %v1689, 4294901760
        %v5625 = vsub.f32 %v1689, %v5624
        %v5626 = vand.u32 %v5625, 4294901760
        %v5627 = vsub.f32 %v5625, %v5626
        %v5628 = vand.u32 %v5627, 4294901760
        %5629 = vmatpush.msra.mxu0 %v5628
        %v5630 = vand.u32 %v1681, 4294901760
        %v5631 = vsub.f32 %v1681, %v5630
        %v5632 = vand.u32 %v5631, 4294901760
        %v5633 = vsub.f32 %v5631, %v5632
        %v5634 = vand.u32 %v5633, 4294901760
        %5635 = vmatpush.msra.mxu0 %v5634
        %v5636 = vand.u32 %v1673, 4294901760
        %v5637 = vsub.f32 %v1673, %v5636
        %v5638 = vand.u32 %v5637, 4294901760
        %v5639 = vsub.f32 %v5637, %v5638
        %v5640 = vand.u32 %v5639, 4294901760
        %5641 = vmatpush.msra.mxu0 %v5640
        %v5642 = vand.u32 %v1665, 4294901760
        %v5643 = vsub.f32 %v1665, %v5642
        %v5644 = vand.u32 %v5643, 4294901760
        %v5645 = vsub.f32 %v5643, %v5644
        %v5646 = vand.u32 %v5645, 4294901760
        %5647 = vmatpush.msra.mxu0 %v5646
        %v5648 = vand.u32 %v1657, 4294901760
        %v5649 = vsub.f32 %v1657, %v5648
        %v5650 = vand.u32 %v5649, 4294901760
        %v5651 = vsub.f32 %v5649, %v5650
        %v5652 = vand.u32 %v5651, 4294901760
        %5653 = vmatpush.msra.mxu0 %v5652
        %v5654 = vand.u32 %v1649, 4294901760
        %v5655 = vsub.f32 %v1649, %v5654
        %v5656 = vand.u32 %v5655, 4294901760
        %v5657 = vsub.f32 %v5655, %v5656
        %v5658 = vand.u32 %v5657, 4294901760
        %5659 = vmatpush.msra.mxu0 %v5658
        %v5660 = vand.u32 %v1515, 4294901760
        %5661 = vmatmul.f32.gmra.mxu0 %v5660
        %v5662 = vpop.f32.mrf.mxu0
        %v5663 = vadd.f32 %v5562, %v5662
        %5664 = vdwg.mxu0
        %v5665 = vand.u32 %v1769, 4294901760
        %v5666 = vsub.f32 %v1769, %v5665
        %5667 = vmatpush.msra.mxu0 %v5666
        %v5668 = vand.u32 %v1761, 4294901760
        %v5669 = vsub.f32 %v1761, %v5668
        %5670 = vmatpush.msra.mxu0 %v5669
        %v5671 = vand.u32 %v1753, 4294901760
        %v5672 = vsub.f32 %v1753, %v5671
        %5673 = vmatpush.msra.mxu0 %v5672
        %v5674 = vand.u32 %v1745, 4294901760
        %v5675 = vsub.f32 %v1745, %v5674
        %5676 = vmatpush.msra.mxu0 %v5675
        %v5677 = vand.u32 %v1737, 4294901760
        %v5678 = vsub.f32 %v1737, %v5677
        %5679 = vmatpush.msra.mxu0 %v5678
        %v5680 = vand.u32 %v1729, 4294901760
        %v5681 = vsub.f32 %v1729, %v5680
        %5682 = vmatpush.msra.mxu0 %v5681
        %v5683 = vand.u32 %v1721, 4294901760
        %v5684 = vsub.f32 %v1721, %v5683
        %5685 = vmatpush.msra.mxu0 %v5684
        %v5686 = vand.u32 %v1713, 4294901760
        %v5687 = vsub.f32 %v1713, %v5686
        %5688 = vmatpush.msra.mxu0 %v5687
        %v5689 = vand.u32 %v1705, 4294901760
        %v5690 = vsub.f32 %v1705, %v5689
        %5691 = vmatpush.msra.mxu0 %v5690
        %v5692 = vand.u32 %v1697, 4294901760
        %v5693 = vsub.f32 %v1697, %v5692
        %5694 = vmatpush.msra.mxu0 %v5693
        %v5695 = vand.u32 %v1689, 4294901760
        %v5696 = vsub.f32 %v1689, %v5695
        %5697 = vmatpush.msra.mxu0 %v5696
        %v5698 = vand.u32 %v1681, 4294901760
        %v5699 = vsub.f32 %v1681, %v5698
        %5700 = vmatpush.msra.mxu0 %v5699
        %v5701 = vand.u32 %v1673, 4294901760
        %v5702 = vsub.f32 %v1673, %v5701
        %5703 = vmatpush.msra.mxu0 %v5702
        %v5704 = vand.u32 %v1665, 4294901760
        %v5705 = vsub.f32 %v1665, %v5704
        %5706 = vmatpush.msra.mxu0 %v5705
        %v5707 = vand.u32 %v1657, 4294901760
        %v5708 = vsub.f32 %v1657, %v5707
        %5709 = vmatpush.msra.mxu0 %v5708
        %v5710 = vand.u32 %v1649, 4294901760
        %v5711 = vsub.f32 %v1649, %v5710
        %5712 = vmatpush.msra.mxu0 %v5711
        %v5713 = vand.u32 %v1515, 4294901760
        %v5714 = vsub.f32 %v1515, %v5713
        %5715 = vmatmul.f32.gmra.mxu0 %v5714
        %v5716 = vpop.f32.mrf.mxu0
        %v5717 = vadd.f32 %v5663, %v5716
        %5718 = vdwg.mxu0
        %v5719 = vand.u32 %v1769, 4294901760
        %5720 = vmatpush.msra.mxu0 %v5719
        %v5721 = vand.u32 %v1761, 4294901760
        %5722 = vmatpush.msra.mxu0 %v5721
        %v5723 = vand.u32 %v1753, 4294901760
        %5724 = vmatpush.msra.mxu0 %v5723
        %v5725 = vand.u32 %v1745, 4294901760
        %5726 = vmatpush.msra.mxu0 %v5725
        %v5727 = vand.u32 %v1737, 4294901760
        %5728 = vmatpush.msra.mxu0 %v5727
        %v5729 = vand.u32 %v1729, 4294901760
        %5730 = vmatpush.msra.mxu0 %v5729
        %v5731 = vand.u32 %v1721, 4294901760
        %5732 = vmatpush.msra.mxu0 %v5731
        %v5733 = vand.u32 %v1713, 4294901760
        %5734 = vmatpush.msra.mxu0 %v5733
        %v5735 = vand.u32 %v1705, 4294901760
        %5736 = vmatpush.msra.mxu0 %v5735
        %v5737 = vand.u32 %v1697, 4294901760
        %5738 = vmatpush.msra.mxu0 %v5737
        %v5739 = vand.u32 %v1689, 4294901760
        %5740 = vmatpush.msra.mxu0 %v5739
        %v5741 = vand.u32 %v1681, 4294901760
        %5742 = vmatpush.msra.mxu0 %v5741
        %v5743 = vand.u32 %v1673, 4294901760
        %5744 = vmatpush.msra.mxu0 %v5743
        %v5745 = vand.u32 %v1665, 4294901760
        %5746 = vmatpush.msra.mxu0 %v5745
        %v5747 = vand.u32 %v1657, 4294901760
        %5748 = vmatpush.msra.mxu0 %v5747
        %v5749 = vand.u32 %v1649, 4294901760
        %5750 = vmatpush.msra.mxu0 %v5749
        %v5751 = vand.u32 %v1515, 4294901760
        %v5752 = vsub.f32 %v1515, %v5751
        %v5753 = vand.u32 %v5752, 4294901760
        %5754 = vmatmul.f32.gmra.mxu0 %v5753
        %v5755 = vpop.f32.mrf.mxu0
        %v5756 = vadd.f32 %v5717, %v5755
        %5757 = vdwg.mxu0
        %v5758 = vand.u32 %v1769, 4294901760
        %v5759 = vsub.f32 %v1769, %v5758
        %v5760 = vand.u32 %v5759, 4294901760
        %5761 = vmatpush.msra.mxu0 %v5760
        %v5762 = vand.u32 %v1761, 4294901760
        %v5763 = vsub.f32 %v1761, %v5762
        %v5764 = vand.u32 %v5763, 4294901760
        %5765 = vmatpush.msra.mxu0 %v5764
        %v5766 = vand.u32 %v1753, 4294901760
        %v5767 = vsub.f32 %v1753, %v5766
        %v5768 = vand.u32 %v5767, 4294901760
        %5769 = vmatpush.msra.mxu0 %v5768
        %v5770 = vand.u32 %v1745, 4294901760
        %v5771 = vsub.f32 %v1745, %v5770
        %v5772 = vand.u32 %v5771, 4294901760
        %5773 = vmatpush.msra.mxu0 %v5772
        %v5774 = vand.u32 %v1737, 4294901760
        %v5775 = vsub.f32 %v1737, %v5774
        %v5776 = vand.u32 %v5775, 4294901760
        %5777 = vmatpush.msra.mxu0 %v5776
        %v5778 = vand.u32 %v1729, 4294901760
        %v5779 = vsub.f32 %v1729, %v5778
        %v5780 = vand.u32 %v5779, 4294901760
        %5781 = vmatpush.msra.mxu0 %v5780
        %v5782 = vand.u32 %v1721, 4294901760
        %v5783 = vsub.f32 %v1721, %v5782
        %v5784 = vand.u32 %v5783, 4294901760
        %5785 = vmatpush.msra.mxu0 %v5784
        %v5786 = vand.u32 %v1713, 4294901760
        %v5787 = vsub.f32 %v1713, %v5786
        %v5788 = vand.u32 %v5787, 4294901760
        %5789 = vmatpush.msra.mxu0 %v5788
        %v5790 = vand.u32 %v1705, 4294901760
        %v5791 = vsub.f32 %v1705, %v5790
        %v5792 = vand.u32 %v5791, 4294901760
        %5793 = vmatpush.msra.mxu0 %v5792
        %v5794 = vand.u32 %v1697, 4294901760
        %v5795 = vsub.f32 %v1697, %v5794
        %v5796 = vand.u32 %v5795, 4294901760
        %5797 = vmatpush.msra.mxu0 %v5796
        %v5798 = vand.u32 %v1689, 4294901760
        %v5799 = vsub.f32 %v1689, %v5798
        %v5800 = vand.u32 %v5799, 4294901760
        %5801 = vmatpush.msra.mxu0 %v5800
        %v5802 = vand.u32 %v1681, 4294901760
        %v5803 = vsub.f32 %v1681, %v5802
        %v5804 = vand.u32 %v5803, 4294901760
        %5805 = vmatpush.msra.mxu0 %v5804
        %v5806 = vand.u32 %v1673, 4294901760
        %v5807 = vsub.f32 %v1673, %v5806
        %v5808 = vand.u32 %v5807, 4294901760
        %5809 = vmatpush.msra.mxu0 %v5808
        %v5810 = vand.u32 %v1665, 4294901760
        %v5811 = vsub.f32 %v1665, %v5810
        %v5812 = vand.u32 %v5811, 4294901760
        %5813 = vmatpush.msra.mxu0 %v5812
        %v5814 = vand.u32 %v1657, 4294901760
        %v5815 = vsub.f32 %v1657, %v5814
        %v5816 = vand.u32 %v5815, 4294901760
        %5817 = vmatpush.msra.mxu0 %v5816
        %v5818 = vand.u32 %v1649, 4294901760
        %v5819 = vsub.f32 %v1649, %v5818
        %v5820 = vand.u32 %v5819, 4294901760
        %5821 = vmatpush.msra.mxu0 %v5820
        %v5822 = vand.u32 %v1515, 4294901760
        %5823 = vmatmul.f32.gmra.mxu0 %v5822
        %v5824 = vpop.f32.mrf.mxu0
        %v5825 = vadd.f32 %v5756, %v5824
        %5826 = vdwg.mxu0
        %v5827 = vand.u32 %v1769, 4294901760
        %5828 = vmatpush.msra.mxu0 %v5827
        %v5829 = vand.u32 %v1761, 4294901760
        %5830 = vmatpush.msra.mxu0 %v5829
        %v5831 = vand.u32 %v1753, 4294901760
        %5832 = vmatpush.msra.mxu0 %v5831
        %v5833 = vand.u32 %v1745, 4294901760
        %5834 = vmatpush.msra.mxu0 %v5833
        %v5835 = vand.u32 %v1737, 4294901760
        %5836 = vmatpush.msra.mxu0 %v5835
        %v5837 = vand.u32 %v1729, 4294901760
        %5838 = vmatpush.msra.mxu0 %v5837
        %v5839 = vand.u32 %v1721, 4294901760
        %5840 = vmatpush.msra.mxu0 %v5839
        %v5841 = vand.u32 %v1713, 4294901760
        %5842 = vmatpush.msra.mxu0 %v5841
        %v5843 = vand.u32 %v1705, 4294901760
        %5844 = vmatpush.msra.mxu0 %v5843
        %v5845 = vand.u32 %v1697, 4294901760
        %5846 = vmatpush.msra.mxu0 %v5845
        %v5847 = vand.u32 %v1689, 4294901760
        %5848 = vmatpush.msra.mxu0 %v5847
        %v5849 = vand.u32 %v1681, 4294901760
        %5850 = vmatpush.msra.mxu0 %v5849
        %v5851 = vand.u32 %v1673, 4294901760
        %5852 = vmatpush.msra.mxu0 %v5851
        %v5853 = vand.u32 %v1665, 4294901760
        %5854 = vmatpush.msra.mxu0 %v5853
        %v5855 = vand.u32 %v1657, 4294901760
        %5856 = vmatpush.msra.mxu0 %v5855
        %v5857 = vand.u32 %v1649, 4294901760
        %5858 = vmatpush.msra.mxu0 %v5857
        %v5859 = vand.u32 %v1515, 4294901760
        %5860 = vmatmul.f32.gmra.mxu0 %v5859
        %v5861 = vpop.f32.mrf.mxu0
        %v5862 = vadd.f32 %v5825, %v5861
        %5863 = vdwg.mxu0
        %v5864 = vand.u32 %v1642, 4294901760
        %5865 = vmatpush.msra.mxu0 %v5864
        %v5866 = vand.u32 %v1634, 4294901760
        %5867 = vmatpush.msra.mxu0 %v5866
        %v5868 = vand.u32 %v1626, 4294901760
        %5869 = vmatpush.msra.mxu0 %v5868
        %v5870 = vand.u32 %v1618, 4294901760
        %5871 = vmatpush.msra.mxu0 %v5870
        %v5872 = vand.u32 %v1610, 4294901760
        %5873 = vmatpush.msra.mxu0 %v5872
        %v5874 = vand.u32 %v1602, 4294901760
        %5875 = vmatpush.msra.mxu0 %v5874
        %v5876 = vand.u32 %v1594, 4294901760
        %5877 = vmatpush.msra.mxu0 %v5876
        %v5878 = vand.u32 %v1586, 4294901760
        %5879 = vmatpush.msra.mxu0 %v5878
        %v5880 = vand.u32 %v1578, 4294901760
        %5881 = vmatpush.msra.mxu0 %v5880
        %v5882 = vand.u32 %v1570, 4294901760
        %5883 = vmatpush.msra.mxu0 %v5882
        %v5884 = vand.u32 %v1562, 4294901760
        %5885 = vmatpush.msra.mxu0 %v5884
        %v5886 = vand.u32 %v1554, 4294901760
        %5887 = vmatpush.msra.mxu0 %v5886
        %v5888 = vand.u32 %v1546, 4294901760
        %5889 = vmatpush.msra.mxu0 %v5888
        %v5890 = vand.u32 %v1538, 4294901760
        %5891 = vmatpush.msra.mxu0 %v5890
        %v5892 = vand.u32 %v1530, 4294901760
        %5893 = vmatpush.msra.mxu0 %v5892
        %v5894 = vand.u32 %v1522, 4294901760
        %5895 = vmatpush.msra.mxu0 %v5894
        %v5896 = vand.u32 %v1514, 4294901760
        %v5897 = vsub.f32 %v1514, %v5896
        %v5898 = vand.u32 %v5897, 4294901760
        %v5899 = vsub.f32 %v5897, %v5898
        %v5900 = vand.u32 %v5899, 4294901760
        %5901 = vmatmul.f32.gmra.mxu0 %v5900
        %v5902 = vpop.f32.mrf.mxu0
        %v5903 = vadd.f32 0.0, %v5902
        %5904 = vdwg.mxu0
        %v5905 = vand.u32 %v1642, 4294901760
        %v5906 = vsub.f32 %v1642, %v5905
        %v5907 = vand.u32 %v5906, 4294901760
        %v5908 = vsub.f32 %v5906, %v5907
        %v5909 = vand.u32 %v5908, 4294901760
        %5910 = vmatpush.msra.mxu0 %v5909
        %v5911 = vand.u32 %v1634, 4294901760
        %v5912 = vsub.f32 %v1634, %v5911
        %v5913 = vand.u32 %v5912, 4294901760
        %v5914 = vsub.f32 %v5912, %v5913
        %v5915 = vand.u32 %v5914, 4294901760
        %5916 = vmatpush.msra.mxu0 %v5915
        %v5917 = vand.u32 %v1626, 4294901760
        %v5918 = vsub.f32 %v1626, %v5917
        %v5919 = vand.u32 %v5918, 4294901760
        %v5920 = vsub.f32 %v5918, %v5919
        %v5921 = vand.u32 %v5920, 4294901760
        %5922 = vmatpush.msra.mxu0 %v5921
        %v5923 = vand.u32 %v1618, 4294901760
        %v5924 = vsub.f32 %v1618, %v5923
        %v5925 = vand.u32 %v5924, 4294901760
        %v5926 = vsub.f32 %v5924, %v5925
        %v5927 = vand.u32 %v5926, 4294901760
        %5928 = vmatpush.msra.mxu0 %v5927
        %v5929 = vand.u32 %v1610, 4294901760
        %v5930 = vsub.f32 %v1610, %v5929
        %v5931 = vand.u32 %v5930, 4294901760
        %v5932 = vsub.f32 %v5930, %v5931
        %v5933 = vand.u32 %v5932, 4294901760
        %5934 = vmatpush.msra.mxu0 %v5933
        %v5935 = vand.u32 %v1602, 4294901760
        %v5936 = vsub.f32 %v1602, %v5935
        %v5937 = vand.u32 %v5936, 4294901760
        %v5938 = vsub.f32 %v5936, %v5937
        %v5939 = vand.u32 %v5938, 4294901760
        %5940 = vmatpush.msra.mxu0 %v5939
        %v5941 = vand.u32 %v1594, 4294901760
        %v5942 = vsub.f32 %v1594, %v5941
        %v5943 = vand.u32 %v5942, 4294901760
        %v5944 = vsub.f32 %v5942, %v5943
        %v5945 = vand.u32 %v5944, 4294901760
        %5946 = vmatpush.msra.mxu0 %v5945
        %v5947 = vand.u32 %v1586, 4294901760
        %v5948 = vsub.f32 %v1586, %v5947
        %v5949 = vand.u32 %v5948, 4294901760
        %v5950 = vsub.f32 %v5948, %v5949
        %v5951 = vand.u32 %v5950, 4294901760
        %5952 = vmatpush.msra.mxu0 %v5951
        %v5953 = vand.u32 %v1578, 4294901760
        %v5954 = vsub.f32 %v1578, %v5953
        %v5955 = vand.u32 %v5954, 4294901760
        %v5956 = vsub.f32 %v5954, %v5955
        %v5957 = vand.u32 %v5956, 4294901760
        %5958 = vmatpush.msra.mxu0 %v5957
        %v5959 = vand.u32 %v1570, 4294901760
        %v5960 = vsub.f32 %v1570, %v5959
        %v5961 = vand.u32 %v5960, 4294901760
        %v5962 = vsub.f32 %v5960, %v5961
        %v5963 = vand.u32 %v5962, 4294901760
        %5964 = vmatpush.msra.mxu0 %v5963
        %v5965 = vand.u32 %v1562, 4294901760
        %v5966 = vsub.f32 %v1562, %v5965
        %v5967 = vand.u32 %v5966, 4294901760
        %v5968 = vsub.f32 %v5966, %v5967
        %v5969 = vand.u32 %v5968, 4294901760
        %5970 = vmatpush.msra.mxu0 %v5969
        %v5971 = vand.u32 %v1554, 4294901760
        %v5972 = vsub.f32 %v1554, %v5971
        %v5973 = vand.u32 %v5972, 4294901760
        %v5974 = vsub.f32 %v5972, %v5973
        %v5975 = vand.u32 %v5974, 4294901760
        %5976 = vmatpush.msra.mxu0 %v5975
        %v5977 = vand.u32 %v1546, 4294901760
        %v5978 = vsub.f32 %v1546, %v5977
        %v5979 = vand.u32 %v5978, 4294901760
        %v5980 = vsub.f32 %v5978, %v5979
        %v5981 = vand.u32 %v5980, 4294901760
        %5982 = vmatpush.msra.mxu0 %v5981
        %v5983 = vand.u32 %v1538, 4294901760
        %v5984 = vsub.f32 %v1538, %v5983
        %v5985 = vand.u32 %v5984, 4294901760
        %v5986 = vsub.f32 %v5984, %v5985
        %v5987 = vand.u32 %v5986, 4294901760
        %5988 = vmatpush.msra.mxu0 %v5987
        %v5989 = vand.u32 %v1530, 4294901760
        %v5990 = vsub.f32 %v1530, %v5989
        %v5991 = vand.u32 %v5990, 4294901760
        %v5992 = vsub.f32 %v5990, %v5991
        %v5993 = vand.u32 %v5992, 4294901760
        %5994 = vmatpush.msra.mxu0 %v5993
        %v5995 = vand.u32 %v1522, 4294901760
        %v5996 = vsub.f32 %v1522, %v5995
        %v5997 = vand.u32 %v5996, 4294901760
        %v5998 = vsub.f32 %v5996, %v5997
        %v5999 = vand.u32 %v5998, 4294901760
        %6000 = vmatpush.msra.mxu0 %v5999
        %v6001 = vand.u32 %v1514, 4294901760
        %6002 = vmatmul.f32.gmra.mxu0 %v6001
        %v6003 = vpop.f32.mrf.mxu0
        %v6004 = vadd.f32 %v5903, %v6003
        %6005 = vdwg.mxu0
        %v6006 = vand.u32 %v1642, 4294901760
        %v6007 = vsub.f32 %v1642, %v6006
        %6008 = vmatpush.msra.mxu0 %v6007
        %v6009 = vand.u32 %v1634, 4294901760
        %v6010 = vsub.f32 %v1634, %v6009
        %6011 = vmatpush.msra.mxu0 %v6010
        %v6012 = vand.u32 %v1626, 4294901760
        %v6013 = vsub.f32 %v1626, %v6012
        %6014 = vmatpush.msra.mxu0 %v6013
        %v6015 = vand.u32 %v1618, 4294901760
        %v6016 = vsub.f32 %v1618, %v6015
        %6017 = vmatpush.msra.mxu0 %v6016
        %v6018 = vand.u32 %v1610, 4294901760
        %v6019 = vsub.f32 %v1610, %v6018
        %6020 = vmatpush.msra.mxu0 %v6019
        %v6021 = vand.u32 %v1602, 4294901760
        %v6022 = vsub.f32 %v1602, %v6021
        %6023 = vmatpush.msra.mxu0 %v6022
        %v6024 = vand.u32 %v1594, 4294901760
        %v6025 = vsub.f32 %v1594, %v6024
        %6026 = vmatpush.msra.mxu0 %v6025
        %v6027 = vand.u32 %v1586, 4294901760
        %v6028 = vsub.f32 %v1586, %v6027
        %6029 = vmatpush.msra.mxu0 %v6028
        %v6030 = vand.u32 %v1578, 4294901760
        %v6031 = vsub.f32 %v1578, %v6030
        %6032 = vmatpush.msra.mxu0 %v6031
        %v6033 = vand.u32 %v1570, 4294901760
        %v6034 = vsub.f32 %v1570, %v6033
        %6035 = vmatpush.msra.mxu0 %v6034
        %v6036 = vand.u32 %v1562, 4294901760
        %v6037 = vsub.f32 %v1562, %v6036
        %6038 = vmatpush.msra.mxu0 %v6037
        %v6039 = vand.u32 %v1554, 4294901760
        %v6040 = vsub.f32 %v1554, %v6039
        %6041 = vmatpush.msra.mxu0 %v6040
        %v6042 = vand.u32 %v1546, 4294901760
        %v6043 = vsub.f32 %v1546, %v6042
        %6044 = vmatpush.msra.mxu0 %v6043
        %v6045 = vand.u32 %v1538, 4294901760
        %v6046 = vsub.f32 %v1538, %v6045
        %6047 = vmatpush.msra.mxu0 %v6046
        %v6048 = vand.u32 %v1530, 4294901760
        %v6049 = vsub.f32 %v1530, %v6048
        %6050 = vmatpush.msra.mxu0 %v6049
        %v6051 = vand.u32 %v1522, 4294901760
        %v6052 = vsub.f32 %v1522, %v6051
        %6053 = vmatpush.msra.mxu0 %v6052
        %v6054 = vand.u32 %v1514, 4294901760
        %v6055 = vsub.f32 %v1514, %v6054
        %6056 = vmatmul.f32.gmra.mxu0 %v6055
        %v6057 = vpop.f32.mrf.mxu0
        %v6058 = vadd.f32 %v6004, %v6057
        %6059 = vdwg.mxu0
        %v6060 = vand.u32 %v1642, 4294901760
        %6061 = vmatpush.msra.mxu0 %v6060
        %v6062 = vand.u32 %v1634, 4294901760
        %6063 = vmatpush.msra.mxu0 %v6062
        %v6064 = vand.u32 %v1626, 4294901760
        %6065 = vmatpush.msra.mxu0 %v6064
        %v6066 = vand.u32 %v1618, 4294901760
        %6067 = vmatpush.msra.mxu0 %v6066
        %v6068 = vand.u32 %v1610, 4294901760
        %6069 = vmatpush.msra.mxu0 %v6068
        %v6070 = vand.u32 %v1602, 4294901760
        %6071 = vmatpush.msra.mxu0 %v6070
        %v6072 = vand.u32 %v1594, 4294901760
        %6073 = vmatpush.msra.mxu0 %v6072
        %v6074 = vand.u32 %v1586, 4294901760
        %6075 = vmatpush.msra.mxu0 %v6074
        %v6076 = vand.u32 %v1578, 4294901760
        %6077 = vmatpush.msra.mxu0 %v6076
        %v6078 = vand.u32 %v1570, 4294901760
        %6079 = vmatpush.msra.mxu0 %v6078
        %v6080 = vand.u32 %v1562, 4294901760
        %6081 = vmatpush.msra.mxu0 %v6080
        %v6082 = vand.u32 %v1554, 4294901760
        %6083 = vmatpush.msra.mxu0 %v6082
        %v6084 = vand.u32 %v1546, 4294901760
        %6085 = vmatpush.msra.mxu0 %v6084
        %v6086 = vand.u32 %v1538, 4294901760
        %6087 = vmatpush.msra.mxu0 %v6086
        %v6088 = vand.u32 %v1530, 4294901760
        %6089 = vmatpush.msra.mxu0 %v6088
        %v6090 = vand.u32 %v1522, 4294901760
        %6091 = vmatpush.msra.mxu0 %v6090
        %v6092 = vand.u32 %v1514, 4294901760
        %v6093 = vsub.f32 %v1514, %v6092
        %v6094 = vand.u32 %v6093, 4294901760
        %6095 = vmatmul.f32.gmra.mxu0 %v6094
        %v6096 = vpop.f32.mrf.mxu0
        %v6097 = vadd.f32 %v6058, %v6096
        %6098 = vdwg.mxu0
        %v6099 = vand.u32 %v1642, 4294901760
        %v6100 = vsub.f32 %v1642, %v6099
        %v6101 = vand.u32 %v6100, 4294901760
        %6102 = vmatpush.msra.mxu0 %v6101
        %v6103 = vand.u32 %v1634, 4294901760
        %v6104 = vsub.f32 %v1634, %v6103
        %v6105 = vand.u32 %v6104, 4294901760
        %6106 = vmatpush.msra.mxu0 %v6105
        %v6107 = vand.u32 %v1626, 4294901760
        %v6108 = vsub.f32 %v1626, %v6107
        %v6109 = vand.u32 %v6108, 4294901760
        %6110 = vmatpush.msra.mxu0 %v6109
        %v6111 = vand.u32 %v1618, 4294901760
        %v6112 = vsub.f32 %v1618, %v6111
        %v6113 = vand.u32 %v6112, 4294901760
        %6114 = vmatpush.msra.mxu0 %v6113
        %v6115 = vand.u32 %v1610, 4294901760
        %v6116 = vsub.f32 %v1610, %v6115
        %v6117 = vand.u32 %v6116, 4294901760
        %6118 = vmatpush.msra.mxu0 %v6117
        %v6119 = vand.u32 %v1602, 4294901760
        %v6120 = vsub.f32 %v1602, %v6119
        %v6121 = vand.u32 %v6120, 4294901760
        %6122 = vmatpush.msra.mxu0 %v6121
        %v6123 = vand.u32 %v1594, 4294901760
        %v6124 = vsub.f32 %v1594, %v6123
        %v6125 = vand.u32 %v6124, 4294901760
        %6126 = vmatpush.msra.mxu0 %v6125
        %v6127 = vand.u32 %v1586, 4294901760
        %v6128 = vsub.f32 %v1586, %v6127
        %v6129 = vand.u32 %v6128, 4294901760
        %6130 = vmatpush.msra.mxu0 %v6129
        %v6131 = vand.u32 %v1578, 4294901760
        %v6132 = vsub.f32 %v1578, %v6131
        %v6133 = vand.u32 %v6132, 4294901760
        %6134 = vmatpush.msra.mxu0 %v6133
        %v6135 = vand.u32 %v1570, 4294901760
        %v6136 = vsub.f32 %v1570, %v6135
        %v6137 = vand.u32 %v6136, 4294901760
        %6138 = vmatpush.msra.mxu0 %v6137
        %v6139 = vand.u32 %v1562, 4294901760
        %v6140 = vsub.f32 %v1562, %v6139
        %v6141 = vand.u32 %v6140, 4294901760
        %6142 = vmatpush.msra.mxu0 %v6141
        %v6143 = vand.u32 %v1554, 4294901760
        %v6144 = vsub.f32 %v1554, %v6143
        %v6145 = vand.u32 %v6144, 4294901760
        %6146 = vmatpush.msra.mxu0 %v6145
        %v6147 = vand.u32 %v1546, 4294901760
        %v6148 = vsub.f32 %v1546, %v6147
        %v6149 = vand.u32 %v6148, 4294901760
        %6150 = vmatpush.msra.mxu0 %v6149
        %v6151 = vand.u32 %v1538, 4294901760
        %v6152 = vsub.f32 %v1538, %v6151
        %v6153 = vand.u32 %v6152, 4294901760
        %6154 = vmatpush.msra.mxu0 %v6153
        %v6155 = vand.u32 %v1530, 4294901760
        %v6156 = vsub.f32 %v1530, %v6155
        %v6157 = vand.u32 %v6156, 4294901760
        %6158 = vmatpush.msra.mxu0 %v6157
        %v6159 = vand.u32 %v1522, 4294901760
        %v6160 = vsub.f32 %v1522, %v6159
        %v6161 = vand.u32 %v6160, 4294901760
        %6162 = vmatpush.msra.mxu0 %v6161
        %v6163 = vand.u32 %v1514, 4294901760
        %6164 = vmatmul.f32.gmra.mxu0 %v6163
        %v6165 = vpop.f32.mrf.mxu0
        %v6166 = vadd.f32 %v6097, %v6165
        %6167 = vdwg.mxu0
        %v6168 = vand.u32 %v1642, 4294901760
        %6169 = vmatpush.msra.mxu0 %v6168
        %v6170 = vand.u32 %v1634, 4294901760
        %6171 = vmatpush.msra.mxu0 %v6170
        %v6172 = vand.u32 %v1626, 4294901760
        %6173 = vmatpush.msra.mxu0 %v6172
        %v6174 = vand.u32 %v1618, 4294901760
        %6175 = vmatpush.msra.mxu0 %v6174
        %v6176 = vand.u32 %v1610, 4294901760
        %6177 = vmatpush.msra.mxu0 %v6176
        %v6178 = vand.u32 %v1602, 4294901760
        %6179 = vmatpush.msra.mxu0 %v6178
        %v6180 = vand.u32 %v1594, 4294901760
        %6181 = vmatpush.msra.mxu0 %v6180
        %v6182 = vand.u32 %v1586, 4294901760
        %6183 = vmatpush.msra.mxu0 %v6182
        %v6184 = vand.u32 %v1578, 4294901760
        %6185 = vmatpush.msra.mxu0 %v6184
        %v6186 = vand.u32 %v1570, 4294901760
        %6187 = vmatpush.msra.mxu0 %v6186
        %v6188 = vand.u32 %v1562, 4294901760
        %6189 = vmatpush.msra.mxu0 %v6188
        %v6190 = vand.u32 %v1554, 4294901760
        %6191 = vmatpush.msra.mxu0 %v6190
        %v6192 = vand.u32 %v1546, 4294901760
        %6193 = vmatpush.msra.mxu0 %v6192
        %v6194 = vand.u32 %v1538, 4294901760
        %6195 = vmatpush.msra.mxu0 %v6194
        %v6196 = vand.u32 %v1530, 4294901760
        %6197 = vmatpush.msra.mxu0 %v6196
        %v6198 = vand.u32 %v1522, 4294901760
        %6199 = vmatpush.msra.mxu0 %v6198
        %v6200 = vand.u32 %v1514, 4294901760
        %6201 = vmatmul.f32.gmra.mxu0 %v6200
        %v6202 = vpop.f32.mrf.mxu0
        %v6203 = vadd.f32 %v6166, %v6202
        %6204 = vdwg.mxu0
        %v6205 = vand.u32 %v1770, 4294901760
        %6206 = vmatpush.msra.mxu0 %v6205
        %v6207 = vand.u32 %v1762, 4294901760
        %6208 = vmatpush.msra.mxu0 %v6207
        %v6209 = vand.u32 %v1754, 4294901760
        %6210 = vmatpush.msra.mxu0 %v6209
        %v6211 = vand.u32 %v1746, 4294901760
        %6212 = vmatpush.msra.mxu0 %v6211
        %v6213 = vand.u32 %v1738, 4294901760
        %6214 = vmatpush.msra.mxu0 %v6213
        %v6215 = vand.u32 %v1730, 4294901760
        %6216 = vmatpush.msra.mxu0 %v6215
        %v6217 = vand.u32 %v1722, 4294901760
        %6218 = vmatpush.msra.mxu0 %v6217
        %v6219 = vand.u32 %v1714, 4294901760
        %6220 = vmatpush.msra.mxu0 %v6219
        %v6221 = vand.u32 %v1706, 4294901760
        %6222 = vmatpush.msra.mxu0 %v6221
        %v6223 = vand.u32 %v1698, 4294901760
        %6224 = vmatpush.msra.mxu0 %v6223
        %v6225 = vand.u32 %v1690, 4294901760
        %6226 = vmatpush.msra.mxu0 %v6225
        %v6227 = vand.u32 %v1682, 4294901760
        %6228 = vmatpush.msra.mxu0 %v6227
        %v6229 = vand.u32 %v1674, 4294901760
        %6230 = vmatpush.msra.mxu0 %v6229
        %v6231 = vand.u32 %v1666, 4294901760
        %6232 = vmatpush.msra.mxu0 %v6231
        %v6233 = vand.u32 %v1658, 4294901760
        %6234 = vmatpush.msra.mxu0 %v6233
        %v6235 = vand.u32 %v1650, 4294901760
        %6236 = vmatpush.msra.mxu0 %v6235
        %v6237 = vand.u32 %v1515, 4294901760
        %v6238 = vsub.f32 %v1515, %v6237
        %v6239 = vand.u32 %v6238, 4294901760
        %v6240 = vsub.f32 %v6238, %v6239
        %v6241 = vand.u32 %v6240, 4294901760
        %6242 = vmatmul.f32.gmra.mxu0 %v6241
        %v6243 = vpop.f32.mrf.mxu0
        %v6244 = vadd.f32 %v6203, %v6243
        %6245 = vdwg.mxu0
        %v6246 = vand.u32 %v1770, 4294901760
        %v6247 = vsub.f32 %v1770, %v6246
        %v6248 = vand.u32 %v6247, 4294901760
        %v6249 = vsub.f32 %v6247, %v6248
        %v6250 = vand.u32 %v6249, 4294901760
        %6251 = vmatpush.msra.mxu0 %v6250
        %v6252 = vand.u32 %v1762, 4294901760
        %v6253 = vsub.f32 %v1762, %v6252
        %v6254 = vand.u32 %v6253, 4294901760
        %v6255 = vsub.f32 %v6253, %v6254
        %v6256 = vand.u32 %v6255, 4294901760
        %6257 = vmatpush.msra.mxu0 %v6256
        %v6258 = vand.u32 %v1754, 4294901760
        %v6259 = vsub.f32 %v1754, %v6258
        %v6260 = vand.u32 %v6259, 4294901760
        %v6261 = vsub.f32 %v6259, %v6260
        %v6262 = vand.u32 %v6261, 4294901760
        %6263 = vmatpush.msra.mxu0 %v6262
        %v6264 = vand.u32 %v1746, 4294901760
        %v6265 = vsub.f32 %v1746, %v6264
        %v6266 = vand.u32 %v6265, 4294901760
        %v6267 = vsub.f32 %v6265, %v6266
        %v6268 = vand.u32 %v6267, 4294901760
        %6269 = vmatpush.msra.mxu0 %v6268
        %v6270 = vand.u32 %v1738, 4294901760
        %v6271 = vsub.f32 %v1738, %v6270
        %v6272 = vand.u32 %v6271, 4294901760
        %v6273 = vsub.f32 %v6271, %v6272
        %v6274 = vand.u32 %v6273, 4294901760
        %6275 = vmatpush.msra.mxu0 %v6274
        %v6276 = vand.u32 %v1730, 4294901760
        %v6277 = vsub.f32 %v1730, %v6276
        %v6278 = vand.u32 %v6277, 4294901760
        %v6279 = vsub.f32 %v6277, %v6278
        %v6280 = vand.u32 %v6279, 4294901760
        %6281 = vmatpush.msra.mxu0 %v6280
        %v6282 = vand.u32 %v1722, 4294901760
        %v6283 = vsub.f32 %v1722, %v6282
        %v6284 = vand.u32 %v6283, 4294901760
        %v6285 = vsub.f32 %v6283, %v6284
        %v6286 = vand.u32 %v6285, 4294901760
        %6287 = vmatpush.msra.mxu0 %v6286
        %v6288 = vand.u32 %v1714, 4294901760
        %v6289 = vsub.f32 %v1714, %v6288
        %v6290 = vand.u32 %v6289, 4294901760
        %v6291 = vsub.f32 %v6289, %v6290
        %v6292 = vand.u32 %v6291, 4294901760
        %6293 = vmatpush.msra.mxu0 %v6292
        %v6294 = vand.u32 %v1706, 4294901760
        %v6295 = vsub.f32 %v1706, %v6294
        %v6296 = vand.u32 %v6295, 4294901760
        %v6297 = vsub.f32 %v6295, %v6296
        %v6298 = vand.u32 %v6297, 4294901760
        %6299 = vmatpush.msra.mxu0 %v6298
        %v6300 = vand.u32 %v1698, 4294901760
        %v6301 = vsub.f32 %v1698, %v6300
        %v6302 = vand.u32 %v6301, 4294901760
        %v6303 = vsub.f32 %v6301, %v6302
        %v6304 = vand.u32 %v6303, 4294901760
        %6305 = vmatpush.msra.mxu0 %v6304
        %v6306 = vand.u32 %v1690, 4294901760
        %v6307 = vsub.f32 %v1690, %v6306
        %v6308 = vand.u32 %v6307, 4294901760
        %v6309 = vsub.f32 %v6307, %v6308
        %v6310 = vand.u32 %v6309, 4294901760
        %6311 = vmatpush.msra.mxu0 %v6310
        %v6312 = vand.u32 %v1682, 4294901760
        %v6313 = vsub.f32 %v1682, %v6312
        %v6314 = vand.u32 %v6313, 4294901760
        %v6315 = vsub.f32 %v6313, %v6314
        %v6316 = vand.u32 %v6315, 4294901760
        %6317 = vmatpush.msra.mxu0 %v6316
        %v6318 = vand.u32 %v1674, 4294901760
        %v6319 = vsub.f32 %v1674, %v6318
        %v6320 = vand.u32 %v6319, 4294901760
        %v6321 = vsub.f32 %v6319, %v6320
        %v6322 = vand.u32 %v6321, 4294901760
        %6323 = vmatpush.msra.mxu0 %v6322
        %v6324 = vand.u32 %v1666, 4294901760
        %v6325 = vsub.f32 %v1666, %v6324
        %v6326 = vand.u32 %v6325, 4294901760
        %v6327 = vsub.f32 %v6325, %v6326
        %v6328 = vand.u32 %v6327, 4294901760
        %6329 = vmatpush.msra.mxu0 %v6328
        %v6330 = vand.u32 %v1658, 4294901760
        %v6331 = vsub.f32 %v1658, %v6330
        %v6332 = vand.u32 %v6331, 4294901760
        %v6333 = vsub.f32 %v6331, %v6332
        %v6334 = vand.u32 %v6333, 4294901760
        %6335 = vmatpush.msra.mxu0 %v6334
        %v6336 = vand.u32 %v1650, 4294901760
        %v6337 = vsub.f32 %v1650, %v6336
        %v6338 = vand.u32 %v6337, 4294901760
        %v6339 = vsub.f32 %v6337, %v6338
        %v6340 = vand.u32 %v6339, 4294901760
        %6341 = vmatpush.msra.mxu0 %v6340
        %v6342 = vand.u32 %v1515, 4294901760
        %6343 = vmatmul.f32.gmra.mxu0 %v6342
        %v6344 = vpop.f32.mrf.mxu0
        %v6345 = vadd.f32 %v6244, %v6344
        %6346 = vdwg.mxu0
        %v6347 = vand.u32 %v1770, 4294901760
        %v6348 = vsub.f32 %v1770, %v6347
        %6349 = vmatpush.msra.mxu0 %v6348
        %v6350 = vand.u32 %v1762, 4294901760
        %v6351 = vsub.f32 %v1762, %v6350
        %6352 = vmatpush.msra.mxu0 %v6351
        %v6353 = vand.u32 %v1754, 4294901760
        %v6354 = vsub.f32 %v1754, %v6353
        %6355 = vmatpush.msra.mxu0 %v6354
        %v6356 = vand.u32 %v1746, 4294901760
        %v6357 = vsub.f32 %v1746, %v6356
        %6358 = vmatpush.msra.mxu0 %v6357
        %v6359 = vand.u32 %v1738, 4294901760
        %v6360 = vsub.f32 %v1738, %v6359
        %6361 = vmatpush.msra.mxu0 %v6360
        %v6362 = vand.u32 %v1730, 4294901760
        %v6363 = vsub.f32 %v1730, %v6362
        %6364 = vmatpush.msra.mxu0 %v6363
        %v6365 = vand.u32 %v1722, 4294901760
        %v6366 = vsub.f32 %v1722, %v6365
        %6367 = vmatpush.msra.mxu0 %v6366
        %v6368 = vand.u32 %v1714, 4294901760
        %v6369 = vsub.f32 %v1714, %v6368
        %6370 = vmatpush.msra.mxu0 %v6369
        %v6371 = vand.u32 %v1706, 4294901760
        %v6372 = vsub.f32 %v1706, %v6371
        %6373 = vmatpush.msra.mxu0 %v6372
        %v6374 = vand.u32 %v1698, 4294901760
        %v6375 = vsub.f32 %v1698, %v6374
        %6376 = vmatpush.msra.mxu0 %v6375
        %v6377 = vand.u32 %v1690, 4294901760
        %v6378 = vsub.f32 %v1690, %v6377
        %6379 = vmatpush.msra.mxu0 %v6378
        %v6380 = vand.u32 %v1682, 4294901760
        %v6381 = vsub.f32 %v1682, %v6380
        %6382 = vmatpush.msra.mxu0 %v6381
        %v6383 = vand.u32 %v1674, 4294901760
        %v6384 = vsub.f32 %v1674, %v6383
        %6385 = vmatpush.msra.mxu0 %v6384
        %v6386 = vand.u32 %v1666, 4294901760
        %v6387 = vsub.f32 %v1666, %v6386
        %6388 = vmatpush.msra.mxu0 %v6387
        %v6389 = vand.u32 %v1658, 4294901760
        %v6390 = vsub.f32 %v1658, %v6389
        %6391 = vmatpush.msra.mxu0 %v6390
        %v6392 = vand.u32 %v1650, 4294901760
        %v6393 = vsub.f32 %v1650, %v6392
        %6394 = vmatpush.msra.mxu0 %v6393
        %v6395 = vand.u32 %v1515, 4294901760
        %v6396 = vsub.f32 %v1515, %v6395
        %6397 = vmatmul.f32.gmra.mxu0 %v6396
        %v6398 = vpop.f32.mrf.mxu0
        %v6399 = vadd.f32 %v6345, %v6398
        %6400 = vdwg.mxu0
        %v6401 = vand.u32 %v1770, 4294901760
        %6402 = vmatpush.msra.mxu0 %v6401
        %v6403 = vand.u32 %v1762, 4294901760
        %6404 = vmatpush.msra.mxu0 %v6403
        %v6405 = vand.u32 %v1754, 4294901760
        %6406 = vmatpush.msra.mxu0 %v6405
        %v6407 = vand.u32 %v1746, 4294901760
        %6408 = vmatpush.msra.mxu0 %v6407
        %v6409 = vand.u32 %v1738, 4294901760
        %6410 = vmatpush.msra.mxu0 %v6409
        %v6411 = vand.u32 %v1730, 4294901760
        %6412 = vmatpush.msra.mxu0 %v6411
        %v6413 = vand.u32 %v1722, 4294901760
        %6414 = vmatpush.msra.mxu0 %v6413
        %v6415 = vand.u32 %v1714, 4294901760
        %6416 = vmatpush.msra.mxu0 %v6415
        %v6417 = vand.u32 %v1706, 4294901760
        %6418 = vmatpush.msra.mxu0 %v6417
        %v6419 = vand.u32 %v1698, 4294901760
        %6420 = vmatpush.msra.mxu0 %v6419
        %v6421 = vand.u32 %v1690, 4294901760
        %6422 = vmatpush.msra.mxu0 %v6421
        %v6423 = vand.u32 %v1682, 4294901760
        %6424 = vmatpush.msra.mxu0 %v6423
        %v6425 = vand.u32 %v1674, 4294901760
        %6426 = vmatpush.msra.mxu0 %v6425
        %v6427 = vand.u32 %v1666, 4294901760
        %6428 = vmatpush.msra.mxu0 %v6427
        %v6429 = vand.u32 %v1658, 4294901760
        %6430 = vmatpush.msra.mxu0 %v6429
        %v6431 = vand.u32 %v1650, 4294901760
        %6432 = vmatpush.msra.mxu0 %v6431
        %v6433 = vand.u32 %v1515, 4294901760
        %v6434 = vsub.f32 %v1515, %v6433
        %v6435 = vand.u32 %v6434, 4294901760
        %6436 = vmatmul.f32.gmra.mxu0 %v6435
        %v6437 = vpop.f32.mrf.mxu0
        %v6438 = vadd.f32 %v6399, %v6437
        %6439 = vdwg.mxu0
        %v6440 = vand.u32 %v1770, 4294901760
        %v6441 = vsub.f32 %v1770, %v6440
        %v6442 = vand.u32 %v6441, 4294901760
        %6443 = vmatpush.msra.mxu0 %v6442
        %v6444 = vand.u32 %v1762, 4294901760
        %v6445 = vsub.f32 %v1762, %v6444
        %v6446 = vand.u32 %v6445, 4294901760
        %6447 = vmatpush.msra.mxu0 %v6446
        %v6448 = vand.u32 %v1754, 4294901760
        %v6449 = vsub.f32 %v1754, %v6448
        %v6450 = vand.u32 %v6449, 4294901760
        %6451 = vmatpush.msra.mxu0 %v6450
        %v6452 = vand.u32 %v1746, 4294901760
        %v6453 = vsub.f32 %v1746, %v6452
        %v6454 = vand.u32 %v6453, 4294901760
        %6455 = vmatpush.msra.mxu0 %v6454
        %v6456 = vand.u32 %v1738, 4294901760
        %v6457 = vsub.f32 %v1738, %v6456
        %v6458 = vand.u32 %v6457, 4294901760
        %6459 = vmatpush.msra.mxu0 %v6458
        %v6460 = vand.u32 %v1730, 4294901760
        %v6461 = vsub.f32 %v1730, %v6460
        %v6462 = vand.u32 %v6461, 4294901760
        %6463 = vmatpush.msra.mxu0 %v6462
        %v6464 = vand.u32 %v1722, 4294901760
        %v6465 = vsub.f32 %v1722, %v6464
        %v6466 = vand.u32 %v6465, 4294901760
        %6467 = vmatpush.msra.mxu0 %v6466
        %v6468 = vand.u32 %v1714, 4294901760
        %v6469 = vsub.f32 %v1714, %v6468
        %v6470 = vand.u32 %v6469, 4294901760
        %6471 = vmatpush.msra.mxu0 %v6470
        %v6472 = vand.u32 %v1706, 4294901760
        %v6473 = vsub.f32 %v1706, %v6472
        %v6474 = vand.u32 %v6473, 4294901760
        %6475 = vmatpush.msra.mxu0 %v6474
        %v6476 = vand.u32 %v1698, 4294901760
        %v6477 = vsub.f32 %v1698, %v6476
        %v6478 = vand.u32 %v6477, 4294901760
        %6479 = vmatpush.msra.mxu0 %v6478
        %v6480 = vand.u32 %v1690, 4294901760
        %v6481 = vsub.f32 %v1690, %v6480
        %v6482 = vand.u32 %v6481, 4294901760
        %6483 = vmatpush.msra.mxu0 %v6482
        %v6484 = vand.u32 %v1682, 4294901760
        %v6485 = vsub.f32 %v1682, %v6484
        %v6486 = vand.u32 %v6485, 4294901760
        %6487 = vmatpush.msra.mxu0 %v6486
        %v6488 = vand.u32 %v1674, 4294901760
        %v6489 = vsub.f32 %v1674, %v6488
        %v6490 = vand.u32 %v6489, 4294901760
        %6491 = vmatpush.msra.mxu0 %v6490
        %v6492 = vand.u32 %v1666, 4294901760
        %v6493 = vsub.f32 %v1666, %v6492
        %v6494 = vand.u32 %v6493, 4294901760
        %6495 = vmatpush.msra.mxu0 %v6494
        %v6496 = vand.u32 %v1658, 4294901760
        %v6497 = vsub.f32 %v1658, %v6496
        %v6498 = vand.u32 %v6497, 4294901760
        %6499 = vmatpush.msra.mxu0 %v6498
        %v6500 = vand.u32 %v1650, 4294901760
        %v6501 = vsub.f32 %v1650, %v6500
        %v6502 = vand.u32 %v6501, 4294901760
        %6503 = vmatpush.msra.mxu0 %v6502
        %v6504 = vand.u32 %v1515, 4294901760
        %6505 = vmatmul.f32.gmra.mxu0 %v6504
        %v6506 = vpop.f32.mrf.mxu0
        %v6507 = vadd.f32 %v6438, %v6506
        %6508 = vdwg.mxu0
        %v6509 = vand.u32 %v1770, 4294901760
        %6510 = vmatpush.msra.mxu0 %v6509
        %v6511 = vand.u32 %v1762, 4294901760
        %6512 = vmatpush.msra.mxu0 %v6511
        %v6513 = vand.u32 %v1754, 4294901760
        %6514 = vmatpush.msra.mxu0 %v6513
        %v6515 = vand.u32 %v1746, 4294901760
        %6516 = vmatpush.msra.mxu0 %v6515
        %v6517 = vand.u32 %v1738, 4294901760
        %6518 = vmatpush.msra.mxu0 %v6517
        %v6519 = vand.u32 %v1730, 4294901760
        %6520 = vmatpush.msra.mxu0 %v6519
        %v6521 = vand.u32 %v1722, 4294901760
        %6522 = vmatpush.msra.mxu0 %v6521
        %v6523 = vand.u32 %v1714, 4294901760
        %6524 = vmatpush.msra.mxu0 %v6523
        %v6525 = vand.u32 %v1706, 4294901760
        %6526 = vmatpush.msra.mxu0 %v6525
        %v6527 = vand.u32 %v1698, 4294901760
        %6528 = vmatpush.msra.mxu0 %v6527
        %v6529 = vand.u32 %v1690, 4294901760
        %6530 = vmatpush.msra.mxu0 %v6529
        %v6531 = vand.u32 %v1682, 4294901760
        %6532 = vmatpush.msra.mxu0 %v6531
        %v6533 = vand.u32 %v1674, 4294901760
        %6534 = vmatpush.msra.mxu0 %v6533
        %v6535 = vand.u32 %v1666, 4294901760
        %6536 = vmatpush.msra.mxu0 %v6535
        %v6537 = vand.u32 %v1658, 4294901760
        %6538 = vmatpush.msra.mxu0 %v6537
        %v6539 = vand.u32 %v1650, 4294901760
        %6540 = vmatpush.msra.mxu0 %v6539
        %v6541 = vand.u32 %v1515, 4294901760
        %6542 = vmatmul.f32.gmra.mxu0 %v6541
        %v6543 = vpop.f32.mrf.mxu0
        %v6544 = vadd.f32 %v6507, %v6543
        %6545 = vdwg.mxu0
        %v6546 = vand.u32 %v1643, 4294901760
        %6547 = vmatpush.msra.mxu0 %v6546
        %v6548 = vand.u32 %v1635, 4294901760
        %6549 = vmatpush.msra.mxu0 %v6548
        %v6550 = vand.u32 %v1627, 4294901760
        %6551 = vmatpush.msra.mxu0 %v6550
        %v6552 = vand.u32 %v1619, 4294901760
        %6553 = vmatpush.msra.mxu0 %v6552
        %v6554 = vand.u32 %v1611, 4294901760
        %6555 = vmatpush.msra.mxu0 %v6554
        %v6556 = vand.u32 %v1603, 4294901760
        %6557 = vmatpush.msra.mxu0 %v6556
        %v6558 = vand.u32 %v1595, 4294901760
        %6559 = vmatpush.msra.mxu0 %v6558
        %v6560 = vand.u32 %v1587, 4294901760
        %6561 = vmatpush.msra.mxu0 %v6560
        %v6562 = vand.u32 %v1579, 4294901760
        %6563 = vmatpush.msra.mxu0 %v6562
        %v6564 = vand.u32 %v1571, 4294901760
        %6565 = vmatpush.msra.mxu0 %v6564
        %v6566 = vand.u32 %v1563, 4294901760
        %6567 = vmatpush.msra.mxu0 %v6566
        %v6568 = vand.u32 %v1555, 4294901760
        %6569 = vmatpush.msra.mxu0 %v6568
        %v6570 = vand.u32 %v1547, 4294901760
        %6571 = vmatpush.msra.mxu0 %v6570
        %v6572 = vand.u32 %v1539, 4294901760
        %6573 = vmatpush.msra.mxu0 %v6572
        %v6574 = vand.u32 %v1531, 4294901760
        %6575 = vmatpush.msra.mxu0 %v6574
        %v6576 = vand.u32 %v1523, 4294901760
        %6577 = vmatpush.msra.mxu0 %v6576
        %v6578 = vand.u32 %v1514, 4294901760
        %v6579 = vsub.f32 %v1514, %v6578
        %v6580 = vand.u32 %v6579, 4294901760
        %v6581 = vsub.f32 %v6579, %v6580
        %v6582 = vand.u32 %v6581, 4294901760
        %6583 = vmatmul.f32.gmra.mxu0 %v6582
        %v6584 = vpop.f32.mrf.mxu0
        %v6585 = vadd.f32 0.0, %v6584
        %6586 = vdwg.mxu0
        %v6587 = vand.u32 %v1643, 4294901760
        %v6588 = vsub.f32 %v1643, %v6587
        %v6589 = vand.u32 %v6588, 4294901760
        %v6590 = vsub.f32 %v6588, %v6589
        %v6591 = vand.u32 %v6590, 4294901760
        %6592 = vmatpush.msra.mxu0 %v6591
        %v6593 = vand.u32 %v1635, 4294901760
        %v6594 = vsub.f32 %v1635, %v6593
        %v6595 = vand.u32 %v6594, 4294901760
        %v6596 = vsub.f32 %v6594, %v6595
        %v6597 = vand.u32 %v6596, 4294901760
        %6598 = vmatpush.msra.mxu0 %v6597
        %v6599 = vand.u32 %v1627, 4294901760
        %v6600 = vsub.f32 %v1627, %v6599
        %v6601 = vand.u32 %v6600, 4294901760
        %v6602 = vsub.f32 %v6600, %v6601
        %v6603 = vand.u32 %v6602, 4294901760
        %6604 = vmatpush.msra.mxu0 %v6603
        %v6605 = vand.u32 %v1619, 4294901760
        %v6606 = vsub.f32 %v1619, %v6605
        %v6607 = vand.u32 %v6606, 4294901760
        %v6608 = vsub.f32 %v6606, %v6607
        %v6609 = vand.u32 %v6608, 4294901760
        %6610 = vmatpush.msra.mxu0 %v6609
        %v6611 = vand.u32 %v1611, 4294901760
        %v6612 = vsub.f32 %v1611, %v6611
        %v6613 = vand.u32 %v6612, 4294901760
        %v6614 = vsub.f32 %v6612, %v6613
        %v6615 = vand.u32 %v6614, 4294901760
        %6616 = vmatpush.msra.mxu0 %v6615
        %v6617 = vand.u32 %v1603, 4294901760
        %v6618 = vsub.f32 %v1603, %v6617
        %v6619 = vand.u32 %v6618, 4294901760
        %v6620 = vsub.f32 %v6618, %v6619
        %v6621 = vand.u32 %v6620, 4294901760
        %6622 = vmatpush.msra.mxu0 %v6621
        %v6623 = vand.u32 %v1595, 4294901760
        %v6624 = vsub.f32 %v1595, %v6623
        %v6625 = vand.u32 %v6624, 4294901760
        %v6626 = vsub.f32 %v6624, %v6625
        %v6627 = vand.u32 %v6626, 4294901760
        %6628 = vmatpush.msra.mxu0 %v6627
        %v6629 = vand.u32 %v1587, 4294901760
        %v6630 = vsub.f32 %v1587, %v6629
        %v6631 = vand.u32 %v6630, 4294901760
        %v6632 = vsub.f32 %v6630, %v6631
        %v6633 = vand.u32 %v6632, 4294901760
        %6634 = vmatpush.msra.mxu0 %v6633
        %v6635 = vand.u32 %v1579, 4294901760
        %v6636 = vsub.f32 %v1579, %v6635
        %v6637 = vand.u32 %v6636, 4294901760
        %v6638 = vsub.f32 %v6636, %v6637
        %v6639 = vand.u32 %v6638, 4294901760
        %6640 = vmatpush.msra.mxu0 %v6639
        %v6641 = vand.u32 %v1571, 4294901760
        %v6642 = vsub.f32 %v1571, %v6641
        %v6643 = vand.u32 %v6642, 4294901760
        %v6644 = vsub.f32 %v6642, %v6643
        %v6645 = vand.u32 %v6644, 4294901760
        %6646 = vmatpush.msra.mxu0 %v6645
        %v6647 = vand.u32 %v1563, 4294901760
        %v6648 = vsub.f32 %v1563, %v6647
        %v6649 = vand.u32 %v6648, 4294901760
        %v6650 = vsub.f32 %v6648, %v6649
        %v6651 = vand.u32 %v6650, 4294901760
        %6652 = vmatpush.msra.mxu0 %v6651
        %v6653 = vand.u32 %v1555, 4294901760
        %v6654 = vsub.f32 %v1555, %v6653
        %v6655 = vand.u32 %v6654, 4294901760
        %v6656 = vsub.f32 %v6654, %v6655
        %v6657 = vand.u32 %v6656, 4294901760
        %6658 = vmatpush.msra.mxu0 %v6657
        %v6659 = vand.u32 %v1547, 4294901760
        %v6660 = vsub.f32 %v1547, %v6659
        %v6661 = vand.u32 %v6660, 4294901760
        %v6662 = vsub.f32 %v6660, %v6661
        %v6663 = vand.u32 %v6662, 4294901760
        %6664 = vmatpush.msra.mxu0 %v6663
        %v6665 = vand.u32 %v1539, 4294901760
        %v6666 = vsub.f32 %v1539, %v6665
        %v6667 = vand.u32 %v6666, 4294901760
        %v6668 = vsub.f32 %v6666, %v6667
        %v6669 = vand.u32 %v6668, 4294901760
        %6670 = vmatpush.msra.mxu0 %v6669
        %v6671 = vand.u32 %v1531, 4294901760
        %v6672 = vsub.f32 %v1531, %v6671
        %v6673 = vand.u32 %v6672, 4294901760
        %v6674 = vsub.f32 %v6672, %v6673
        %v6675 = vand.u32 %v6674, 4294901760
        %6676 = vmatpush.msra.mxu0 %v6675
        %v6677 = vand.u32 %v1523, 4294901760
        %v6678 = vsub.f32 %v1523, %v6677
        %v6679 = vand.u32 %v6678, 4294901760
        %v6680 = vsub.f32 %v6678, %v6679
        %v6681 = vand.u32 %v6680, 4294901760
        %6682 = vmatpush.msra.mxu0 %v6681
        %v6683 = vand.u32 %v1514, 4294901760
        %6684 = vmatmul.f32.gmra.mxu0 %v6683
        %v6685 = vpop.f32.mrf.mxu0
        %v6686 = vadd.f32 %v6585, %v6685
        %6687 = vdwg.mxu0
        %v6688 = vand.u32 %v1643, 4294901760
        %v6689 = vsub.f32 %v1643, %v6688
        %6690 = vmatpush.msra.mxu0 %v6689
        %v6691 = vand.u32 %v1635, 4294901760
        %v6692 = vsub.f32 %v1635, %v6691
        %6693 = vmatpush.msra.mxu0 %v6692
        %v6694 = vand.u32 %v1627, 4294901760
        %v6695 = vsub.f32 %v1627, %v6694
        %6696 = vmatpush.msra.mxu0 %v6695
        %v6697 = vand.u32 %v1619, 4294901760
        %v6698 = vsub.f32 %v1619, %v6697
        %6699 = vmatpush.msra.mxu0 %v6698
        %v6700 = vand.u32 %v1611, 4294901760
        %v6701 = vsub.f32 %v1611, %v6700
        %6702 = vmatpush.msra.mxu0 %v6701
        %v6703 = vand.u32 %v1603, 4294901760
        %v6704 = vsub.f32 %v1603, %v6703
        %6705 = vmatpush.msra.mxu0 %v6704
        %v6706 = vand.u32 %v1595, 4294901760
        %v6707 = vsub.f32 %v1595, %v6706
        %6708 = vmatpush.msra.mxu0 %v6707
        %v6709 = vand.u32 %v1587, 4294901760
        %v6710 = vsub.f32 %v1587, %v6709
        %6711 = vmatpush.msra.mxu0 %v6710
        %v6712 = vand.u32 %v1579, 4294901760
        %v6713 = vsub.f32 %v1579, %v6712
        %6714 = vmatpush.msra.mxu0 %v6713
        %v6715 = vand.u32 %v1571, 4294901760
        %v6716 = vsub.f32 %v1571, %v6715
        %6717 = vmatpush.msra.mxu0 %v6716
        %v6718 = vand.u32 %v1563, 4294901760
        %v6719 = vsub.f32 %v1563, %v6718
        %6720 = vmatpush.msra.mxu0 %v6719
        %v6721 = vand.u32 %v1555, 4294901760
        %v6722 = vsub.f32 %v1555, %v6721
        %6723 = vmatpush.msra.mxu0 %v6722
        %v6724 = vand.u32 %v1547, 4294901760
        %v6725 = vsub.f32 %v1547, %v6724
        %6726 = vmatpush.msra.mxu0 %v6725
        %v6727 = vand.u32 %v1539, 4294901760
        %v6728 = vsub.f32 %v1539, %v6727
        %6729 = vmatpush.msra.mxu0 %v6728
        %v6730 = vand.u32 %v1531, 4294901760
        %v6731 = vsub.f32 %v1531, %v6730
        %6732 = vmatpush.msra.mxu0 %v6731
        %v6733 = vand.u32 %v1523, 4294901760
        %v6734 = vsub.f32 %v1523, %v6733
        %6735 = vmatpush.msra.mxu0 %v6734
        %v6736 = vand.u32 %v1514, 4294901760
        %v6737 = vsub.f32 %v1514, %v6736
        %6738 = vmatmul.f32.gmra.mxu0 %v6737
        %v6739 = vpop.f32.mrf.mxu0
        %v6740 = vadd.f32 %v6686, %v6739
        %6741 = vdwg.mxu0
        %v6742 = vand.u32 %v1643, 4294901760
        %6743 = vmatpush.msra.mxu0 %v6742
        %v6744 = vand.u32 %v1635, 4294901760
        %6745 = vmatpush.msra.mxu0 %v6744
        %v6746 = vand.u32 %v1627, 4294901760
        %6747 = vmatpush.msra.mxu0 %v6746
        %v6748 = vand.u32 %v1619, 4294901760
        %6749 = vmatpush.msra.mxu0 %v6748
        %v6750 = vand.u32 %v1611, 4294901760
        %6751 = vmatpush.msra.mxu0 %v6750
        %v6752 = vand.u32 %v1603, 4294901760
        %6753 = vmatpush.msra.mxu0 %v6752
        %v6754 = vand.u32 %v1595, 4294901760
        %6755 = vmatpush.msra.mxu0 %v6754
        %v6756 = vand.u32 %v1587, 4294901760
        %6757 = vmatpush.msra.mxu0 %v6756
        %v6758 = vand.u32 %v1579, 4294901760
        %6759 = vmatpush.msra.mxu0 %v6758
        %v6760 = vand.u32 %v1571, 4294901760
        %6761 = vmatpush.msra.mxu0 %v6760
        %v6762 = vand.u32 %v1563, 4294901760
        %6763 = vmatpush.msra.mxu0 %v6762
        %v6764 = vand.u32 %v1555, 4294901760
        %6765 = vmatpush.msra.mxu0 %v6764
        %v6766 = vand.u32 %v1547, 4294901760
        %6767 = vmatpush.msra.mxu0 %v6766
        %v6768 = vand.u32 %v1539, 4294901760
        %6769 = vmatpush.msra.mxu0 %v6768
        %v6770 = vand.u32 %v1531, 4294901760
        %6771 = vmatpush.msra.mxu0 %v6770
        %v6772 = vand.u32 %v1523, 4294901760
        %6773 = vmatpush.msra.mxu0 %v6772
        %v6774 = vand.u32 %v1514, 4294901760
        %v6775 = vsub.f32 %v1514, %v6774
        %v6776 = vand.u32 %v6775, 4294901760
        %6777 = vmatmul.f32.gmra.mxu0 %v6776
        %v6778 = vpop.f32.mrf.mxu0
        %v6779 = vadd.f32 %v6740, %v6778
        %6780 = vdwg.mxu0
        %v6781 = vand.u32 %v1643, 4294901760
        %v6782 = vsub.f32 %v1643, %v6781
        %v6783 = vand.u32 %v6782, 4294901760
        %6784 = vmatpush.msra.mxu0 %v6783
        %v6785 = vand.u32 %v1635, 4294901760
        %v6786 = vsub.f32 %v1635, %v6785
        %v6787 = vand.u32 %v6786, 4294901760
        %6788 = vmatpush.msra.mxu0 %v6787
        %v6789 = vand.u32 %v1627, 4294901760
        %v6790 = vsub.f32 %v1627, %v6789
        %v6791 = vand.u32 %v6790, 4294901760
        %6792 = vmatpush.msra.mxu0 %v6791
        %v6793 = vand.u32 %v1619, 4294901760
        %v6794 = vsub.f32 %v1619, %v6793
        %v6795 = vand.u32 %v6794, 4294901760
        %6796 = vmatpush.msra.mxu0 %v6795
        %v6797 = vand.u32 %v1611, 4294901760
        %v6798 = vsub.f32 %v1611, %v6797
        %v6799 = vand.u32 %v6798, 4294901760
        %6800 = vmatpush.msra.mxu0 %v6799
        %v6801 = vand.u32 %v1603, 4294901760
        %v6802 = vsub.f32 %v1603, %v6801
        %v6803 = vand.u32 %v6802, 4294901760
        %6804 = vmatpush.msra.mxu0 %v6803
        %v6805 = vand.u32 %v1595, 4294901760
        %v6806 = vsub.f32 %v1595, %v6805
        %v6807 = vand.u32 %v6806, 4294901760
        %6808 = vmatpush.msra.mxu0 %v6807
        %v6809 = vand.u32 %v1587, 4294901760
        %v6810 = vsub.f32 %v1587, %v6809
        %v6811 = vand.u32 %v6810, 4294901760
        %6812 = vmatpush.msra.mxu0 %v6811
        %v6813 = vand.u32 %v1579, 4294901760
        %v6814 = vsub.f32 %v1579, %v6813
        %v6815 = vand.u32 %v6814, 4294901760
        %6816 = vmatpush.msra.mxu0 %v6815
        %v6817 = vand.u32 %v1571, 4294901760
        %v6818 = vsub.f32 %v1571, %v6817
        %v6819 = vand.u32 %v6818, 4294901760
        %6820 = vmatpush.msra.mxu0 %v6819
        %v6821 = vand.u32 %v1563, 4294901760
        %v6822 = vsub.f32 %v1563, %v6821
        %v6823 = vand.u32 %v6822, 4294901760
        %6824 = vmatpush.msra.mxu0 %v6823
        %v6825 = vand.u32 %v1555, 4294901760
        %v6826 = vsub.f32 %v1555, %v6825
        %v6827 = vand.u32 %v6826, 4294901760
        %6828 = vmatpush.msra.mxu0 %v6827
        %v6829 = vand.u32 %v1547, 4294901760
        %v6830 = vsub.f32 %v1547, %v6829
        %v6831 = vand.u32 %v6830, 4294901760
        %6832 = vmatpush.msra.mxu0 %v6831
        %v6833 = vand.u32 %v1539, 4294901760
        %v6834 = vsub.f32 %v1539, %v6833
        %v6835 = vand.u32 %v6834, 4294901760
        %6836 = vmatpush.msra.mxu0 %v6835
        %v6837 = vand.u32 %v1531, 4294901760
        %v6838 = vsub.f32 %v1531, %v6837
        %v6839 = vand.u32 %v6838, 4294901760
        %6840 = vmatpush.msra.mxu0 %v6839
        %v6841 = vand.u32 %v1523, 4294901760
        %v6842 = vsub.f32 %v1523, %v6841
        %v6843 = vand.u32 %v6842, 4294901760
        %6844 = vmatpush.msra.mxu0 %v6843
        %v6845 = vand.u32 %v1514, 4294901760
        %6846 = vmatmul.f32.gmra.mxu0 %v6845
        %v6847 = vpop.f32.mrf.mxu0
        %v6848 = vadd.f32 %v6779, %v6847
        %6849 = vdwg.mxu0
        %v6850 = vand.u32 %v1643, 4294901760
        %6851 = vmatpush.msra.mxu0 %v6850
        %v6852 = vand.u32 %v1635, 4294901760
        %6853 = vmatpush.msra.mxu0 %v6852
        %v6854 = vand.u32 %v1627, 4294901760
        %6855 = vmatpush.msra.mxu0 %v6854
        %v6856 = vand.u32 %v1619, 4294901760
        %6857 = vmatpush.msra.mxu0 %v6856
        %v6858 = vand.u32 %v1611, 4294901760
        %6859 = vmatpush.msra.mxu0 %v6858
        %v6860 = vand.u32 %v1603, 4294901760
        %6861 = vmatpush.msra.mxu0 %v6860
        %v6862 = vand.u32 %v1595, 4294901760
        %6863 = vmatpush.msra.mxu0 %v6862
        %v6864 = vand.u32 %v1587, 4294901760
        %6865 = vmatpush.msra.mxu0 %v6864
        %v6866 = vand.u32 %v1579, 4294901760
        %6867 = vmatpush.msra.mxu0 %v6866
        %v6868 = vand.u32 %v1571, 4294901760
        %6869 = vmatpush.msra.mxu0 %v6868
        %v6870 = vand.u32 %v1563, 4294901760
        %6871 = vmatpush.msra.mxu0 %v6870
        %v6872 = vand.u32 %v1555, 4294901760
        %6873 = vmatpush.msra.mxu0 %v6872
        %v6874 = vand.u32 %v1547, 4294901760
        %6875 = vmatpush.msra.mxu0 %v6874
        %v6876 = vand.u32 %v1539, 4294901760
        %6877 = vmatpush.msra.mxu0 %v6876
        %v6878 = vand.u32 %v1531, 4294901760
        %6879 = vmatpush.msra.mxu0 %v6878
        %v6880 = vand.u32 %v1523, 4294901760
        %6881 = vmatpush.msra.mxu0 %v6880
        %v6882 = vand.u32 %v1514, 4294901760
        %6883 = vmatmul.f32.gmra.mxu0 %v6882
        %v6884 = vpop.f32.mrf.mxu0
        %v6885 = vadd.f32 %v6848, %v6884
        %6886 = vdwg.mxu0
        %v6887 = vand.u32 %v1771, 4294901760
        %6888 = vmatpush.msra.mxu0 %v6887
        %v6889 = vand.u32 %v1763, 4294901760
        %6890 = vmatpush.msra.mxu0 %v6889
        %v6891 = vand.u32 %v1755, 4294901760
        %6892 = vmatpush.msra.mxu0 %v6891
        %v6893 = vand.u32 %v1747, 4294901760
        %6894 = vmatpush.msra.mxu0 %v6893
        %v6895 = vand.u32 %v1739, 4294901760
        %6896 = vmatpush.msra.mxu0 %v6895
        %v6897 = vand.u32 %v1731, 4294901760
        %6898 = vmatpush.msra.mxu0 %v6897
        %v6899 = vand.u32 %v1723, 4294901760
        %6900 = vmatpush.msra.mxu0 %v6899
        %v6901 = vand.u32 %v1715, 4294901760
        %6902 = vmatpush.msra.mxu0 %v6901
        %v6903 = vand.u32 %v1707, 4294901760
        %6904 = vmatpush.msra.mxu0 %v6903
        %v6905 = vand.u32 %v1699, 4294901760
        %6906 = vmatpush.msra.mxu0 %v6905
        %v6907 = vand.u32 %v1691, 4294901760
        %6908 = vmatpush.msra.mxu0 %v6907
        %v6909 = vand.u32 %v1683, 4294901760
        %6910 = vmatpush.msra.mxu0 %v6909
        %v6911 = vand.u32 %v1675, 4294901760
        %6912 = vmatpush.msra.mxu0 %v6911
        %v6913 = vand.u32 %v1667, 4294901760
        %6914 = vmatpush.msra.mxu0 %v6913
        %v6915 = vand.u32 %v1659, 4294901760
        %6916 = vmatpush.msra.mxu0 %v6915
        %v6917 = vand.u32 %v1651, 4294901760
        %6918 = vmatpush.msra.mxu0 %v6917
        %v6919 = vand.u32 %v1515, 4294901760
        %v6920 = vsub.f32 %v1515, %v6919
        %v6921 = vand.u32 %v6920, 4294901760
        %v6922 = vsub.f32 %v6920, %v6921
        %v6923 = vand.u32 %v6922, 4294901760
        %6924 = vmatmul.f32.gmra.mxu0 %v6923
        %v6925 = vpop.f32.mrf.mxu0
        %v6926 = vadd.f32 %v6885, %v6925
        %6927 = vdwg.mxu0
        %v6928 = vand.u32 %v1771, 4294901760
        %v6929 = vsub.f32 %v1771, %v6928
        %v6930 = vand.u32 %v6929, 4294901760
        %v6931 = vsub.f32 %v6929, %v6930
        %v6932 = vand.u32 %v6931, 4294901760
        %6933 = vmatpush.msra.mxu0 %v6932
        %v6934 = vand.u32 %v1763, 4294901760
        %v6935 = vsub.f32 %v1763, %v6934
        %v6936 = vand.u32 %v6935, 4294901760
        %v6937 = vsub.f32 %v6935, %v6936
        %v6938 = vand.u32 %v6937, 4294901760
        %6939 = vmatpush.msra.mxu0 %v6938
        %v6940 = vand.u32 %v1755, 4294901760
        %v6941 = vsub.f32 %v1755, %v6940
        %v6942 = vand.u32 %v6941, 4294901760
        %v6943 = vsub.f32 %v6941, %v6942
        %v6944 = vand.u32 %v6943, 4294901760
        %6945 = vmatpush.msra.mxu0 %v6944
        %v6946 = vand.u32 %v1747, 4294901760
        %v6947 = vsub.f32 %v1747, %v6946
        %v6948 = vand.u32 %v6947, 4294901760
        %v6949 = vsub.f32 %v6947, %v6948
        %v6950 = vand.u32 %v6949, 4294901760
        %6951 = vmatpush.msra.mxu0 %v6950
        %v6952 = vand.u32 %v1739, 4294901760
        %v6953 = vsub.f32 %v1739, %v6952
        %v6954 = vand.u32 %v6953, 4294901760
        %v6955 = vsub.f32 %v6953, %v6954
        %v6956 = vand.u32 %v6955, 4294901760
        %6957 = vmatpush.msra.mxu0 %v6956
        %v6958 = vand.u32 %v1731, 4294901760
        %v6959 = vsub.f32 %v1731, %v6958
        %v6960 = vand.u32 %v6959, 4294901760
        %v6961 = vsub.f32 %v6959, %v6960
        %v6962 = vand.u32 %v6961, 4294901760
        %6963 = vmatpush.msra.mxu0 %v6962
        %v6964 = vand.u32 %v1723, 4294901760
        %v6965 = vsub.f32 %v1723, %v6964
        %v6966 = vand.u32 %v6965, 4294901760
        %v6967 = vsub.f32 %v6965, %v6966
        %v6968 = vand.u32 %v6967, 4294901760
        %6969 = vmatpush.msra.mxu0 %v6968
        %v6970 = vand.u32 %v1715, 4294901760
        %v6971 = vsub.f32 %v1715, %v6970
        %v6972 = vand.u32 %v6971, 4294901760
        %v6973 = vsub.f32 %v6971, %v6972
        %v6974 = vand.u32 %v6973, 4294901760
        %6975 = vmatpush.msra.mxu0 %v6974
        %v6976 = vand.u32 %v1707, 4294901760
        %v6977 = vsub.f32 %v1707, %v6976
        %v6978 = vand.u32 %v6977, 4294901760
        %v6979 = vsub.f32 %v6977, %v6978
        %v6980 = vand.u32 %v6979, 4294901760
        %6981 = vmatpush.msra.mxu0 %v6980
        %v6982 = vand.u32 %v1699, 4294901760
        %v6983 = vsub.f32 %v1699, %v6982
        %v6984 = vand.u32 %v6983, 4294901760
        %v6985 = vsub.f32 %v6983, %v6984
        %v6986 = vand.u32 %v6985, 4294901760
        %6987 = vmatpush.msra.mxu0 %v6986
        %v6988 = vand.u32 %v1691, 4294901760
        %v6989 = vsub.f32 %v1691, %v6988
        %v6990 = vand.u32 %v6989, 4294901760
        %v6991 = vsub.f32 %v6989, %v6990
        %v6992 = vand.u32 %v6991, 4294901760
        %6993 = vmatpush.msra.mxu0 %v6992
        %v6994 = vand.u32 %v1683, 4294901760
        %v6995 = vsub.f32 %v1683, %v6994
        %v6996 = vand.u32 %v6995, 4294901760
        %v6997 = vsub.f32 %v6995, %v6996
        %v6998 = vand.u32 %v6997, 4294901760
        %6999 = vmatpush.msra.mxu0 %v6998
        %v7000 = vand.u32 %v1675, 4294901760
        %v7001 = vsub.f32 %v1675, %v7000
        %v7002 = vand.u32 %v7001, 4294901760
        %v7003 = vsub.f32 %v7001, %v7002
        %v7004 = vand.u32 %v7003, 4294901760
        %7005 = vmatpush.msra.mxu0 %v7004
        %v7006 = vand.u32 %v1667, 4294901760
        %v7007 = vsub.f32 %v1667, %v7006
        %v7008 = vand.u32 %v7007, 4294901760
        %v7009 = vsub.f32 %v7007, %v7008
        %v7010 = vand.u32 %v7009, 4294901760
        %7011 = vmatpush.msra.mxu0 %v7010
        %v7012 = vand.u32 %v1659, 4294901760
        %v7013 = vsub.f32 %v1659, %v7012
        %v7014 = vand.u32 %v7013, 4294901760
        %v7015 = vsub.f32 %v7013, %v7014
        %v7016 = vand.u32 %v7015, 4294901760
        %7017 = vmatpush.msra.mxu0 %v7016
        %v7018 = vand.u32 %v1651, 4294901760
        %v7019 = vsub.f32 %v1651, %v7018
        %v7020 = vand.u32 %v7019, 4294901760
        %v7021 = vsub.f32 %v7019, %v7020
        %v7022 = vand.u32 %v7021, 4294901760
        %7023 = vmatpush.msra.mxu0 %v7022
        %v7024 = vand.u32 %v1515, 4294901760
        %7025 = vmatmul.f32.gmra.mxu0 %v7024
        %v7026 = vpop.f32.mrf.mxu0
        %v7027 = vadd.f32 %v6926, %v7026
        %7028 = vdwg.mxu0
        %v7029 = vand.u32 %v1771, 4294901760
        %v7030 = vsub.f32 %v1771, %v7029
        %7031 = vmatpush.msra.mxu0 %v7030
        %v7032 = vand.u32 %v1763, 4294901760
        %v7033 = vsub.f32 %v1763, %v7032
        %7034 = vmatpush.msra.mxu0 %v7033
        %v7035 = vand.u32 %v1755, 4294901760
        %v7036 = vsub.f32 %v1755, %v7035
        %7037 = vmatpush.msra.mxu0 %v7036
        %v7038 = vand.u32 %v1747, 4294901760
        %v7039 = vsub.f32 %v1747, %v7038
        %7040 = vmatpush.msra.mxu0 %v7039
        %v7041 = vand.u32 %v1739, 4294901760
        %v7042 = vsub.f32 %v1739, %v7041
        %7043 = vmatpush.msra.mxu0 %v7042
        %v7044 = vand.u32 %v1731, 4294901760
        %v7045 = vsub.f32 %v1731, %v7044
        %7046 = vmatpush.msra.mxu0 %v7045
        %v7047 = vand.u32 %v1723, 4294901760
        %v7048 = vsub.f32 %v1723, %v7047
        %7049 = vmatpush.msra.mxu0 %v7048
        %v7050 = vand.u32 %v1715, 4294901760
        %v7051 = vsub.f32 %v1715, %v7050
        %7052 = vmatpush.msra.mxu0 %v7051
        %v7053 = vand.u32 %v1707, 4294901760
        %v7054 = vsub.f32 %v1707, %v7053
        %7055 = vmatpush.msra.mxu0 %v7054
        %v7056 = vand.u32 %v1699, 4294901760
        %v7057 = vsub.f32 %v1699, %v7056
        %7058 = vmatpush.msra.mxu0 %v7057
        %v7059 = vand.u32 %v1691, 4294901760
        %v7060 = vsub.f32 %v1691, %v7059
        %7061 = vmatpush.msra.mxu0 %v7060
        %v7062 = vand.u32 %v1683, 4294901760
        %v7063 = vsub.f32 %v1683, %v7062
        %7064 = vmatpush.msra.mxu0 %v7063
        %v7065 = vand.u32 %v1675, 4294901760
        %v7066 = vsub.f32 %v1675, %v7065
        %7067 = vmatpush.msra.mxu0 %v7066
        %v7068 = vand.u32 %v1667, 4294901760
        %v7069 = vsub.f32 %v1667, %v7068
        %7070 = vmatpush.msra.mxu0 %v7069
        %v7071 = vand.u32 %v1659, 4294901760
        %v7072 = vsub.f32 %v1659, %v7071
        %7073 = vmatpush.msra.mxu0 %v7072
        %v7074 = vand.u32 %v1651, 4294901760
        %v7075 = vsub.f32 %v1651, %v7074
        %7076 = vmatpush.msra.mxu0 %v7075
        %v7077 = vand.u32 %v1515, 4294901760
        %v7078 = vsub.f32 %v1515, %v7077
        %7079 = vmatmul.f32.gmra.mxu0 %v7078
        %v7080 = vpop.f32.mrf.mxu0
        %v7081 = vadd.f32 %v7027, %v7080
        %7082 = vdwg.mxu0
        %v7083 = vand.u32 %v1771, 4294901760
        %7084 = vmatpush.msra.mxu0 %v7083
        %v7085 = vand.u32 %v1763, 4294901760
        %7086 = vmatpush.msra.mxu0 %v7085
        %v7087 = vand.u32 %v1755, 4294901760
        %7088 = vmatpush.msra.mxu0 %v7087
        %v7089 = vand.u32 %v1747, 4294901760
        %7090 = vmatpush.msra.mxu0 %v7089
        %v7091 = vand.u32 %v1739, 4294901760
        %7092 = vmatpush.msra.mxu0 %v7091
        %v7093 = vand.u32 %v1731, 4294901760
        %7094 = vmatpush.msra.mxu0 %v7093
        %v7095 = vand.u32 %v1723, 4294901760
        %7096 = vmatpush.msra.mxu0 %v7095
        %v7097 = vand.u32 %v1715, 4294901760
        %7098 = vmatpush.msra.mxu0 %v7097
        %v7099 = vand.u32 %v1707, 4294901760
        %7100 = vmatpush.msra.mxu0 %v7099
        %v7101 = vand.u32 %v1699, 4294901760
        %7102 = vmatpush.msra.mxu0 %v7101
        %v7103 = vand.u32 %v1691, 4294901760
        %7104 = vmatpush.msra.mxu0 %v7103
        %v7105 = vand.u32 %v1683, 4294901760
        %7106 = vmatpush.msra.mxu0 %v7105
        %v7107 = vand.u32 %v1675, 4294901760
        %7108 = vmatpush.msra.mxu0 %v7107
        %v7109 = vand.u32 %v1667, 4294901760
        %7110 = vmatpush.msra.mxu0 %v7109
        %v7111 = vand.u32 %v1659, 4294901760
        %7112 = vmatpush.msra.mxu0 %v7111
        %v7113 = vand.u32 %v1651, 4294901760
        %7114 = vmatpush.msra.mxu0 %v7113
        %v7115 = vand.u32 %v1515, 4294901760
        %v7116 = vsub.f32 %v1515, %v7115
        %v7117 = vand.u32 %v7116, 4294901760
        %7118 = vmatmul.f32.gmra.mxu0 %v7117
        %v7119 = vpop.f32.mrf.mxu0
        %v7120 = vadd.f32 %v7081, %v7119
        %7121 = vdwg.mxu0
        %v7122 = vand.u32 %v1771, 4294901760
        %v7123 = vsub.f32 %v1771, %v7122
        %v7124 = vand.u32 %v7123, 4294901760
        %7125 = vmatpush.msra.mxu0 %v7124
        %v7126 = vand.u32 %v1763, 4294901760
        %v7127 = vsub.f32 %v1763, %v7126
        %v7128 = vand.u32 %v7127, 4294901760
        %7129 = vmatpush.msra.mxu0 %v7128
        %v7130 = vand.u32 %v1755, 4294901760
        %v7131 = vsub.f32 %v1755, %v7130
        %v7132 = vand.u32 %v7131, 4294901760
        %7133 = vmatpush.msra.mxu0 %v7132
        %v7134 = vand.u32 %v1747, 4294901760
        %v7135 = vsub.f32 %v1747, %v7134
        %v7136 = vand.u32 %v7135, 4294901760
        %7137 = vmatpush.msra.mxu0 %v7136
        %v7138 = vand.u32 %v1739, 4294901760
        %v7139 = vsub.f32 %v1739, %v7138
        %v7140 = vand.u32 %v7139, 4294901760
        %7141 = vmatpush.msra.mxu0 %v7140
        %v7142 = vand.u32 %v1731, 4294901760
        %v7143 = vsub.f32 %v1731, %v7142
        %v7144 = vand.u32 %v7143, 4294901760
        %7145 = vmatpush.msra.mxu0 %v7144
        %v7146 = vand.u32 %v1723, 4294901760
        %v7147 = vsub.f32 %v1723, %v7146
        %v7148 = vand.u32 %v7147, 4294901760
        %7149 = vmatpush.msra.mxu0 %v7148
        %v7150 = vand.u32 %v1715, 4294901760
        %v7151 = vsub.f32 %v1715, %v7150
        %v7152 = vand.u32 %v7151, 4294901760
        %7153 = vmatpush.msra.mxu0 %v7152
        %v7154 = vand.u32 %v1707, 4294901760
        %v7155 = vsub.f32 %v1707, %v7154
        %v7156 = vand.u32 %v7155, 4294901760
        %7157 = vmatpush.msra.mxu0 %v7156
        %v7158 = vand.u32 %v1699, 4294901760
        %v7159 = vsub.f32 %v1699, %v7158
        %v7160 = vand.u32 %v7159, 4294901760
        %7161 = vmatpush.msra.mxu0 %v7160
        %v7162 = vand.u32 %v1691, 4294901760
        %v7163 = vsub.f32 %v1691, %v7162
        %v7164 = vand.u32 %v7163, 4294901760
        %7165 = vmatpush.msra.mxu0 %v7164
        %v7166 = vand.u32 %v1683, 4294901760
        %v7167 = vsub.f32 %v1683, %v7166
        %v7168 = vand.u32 %v7167, 4294901760
        %7169 = vmatpush.msra.mxu0 %v7168
        %v7170 = vand.u32 %v1675, 4294901760
        %v7171 = vsub.f32 %v1675, %v7170
        %v7172 = vand.u32 %v7171, 4294901760
        %7173 = vmatpush.msra.mxu0 %v7172
        %v7174 = vand.u32 %v1667, 4294901760
        %v7175 = vsub.f32 %v1667, %v7174
        %v7176 = vand.u32 %v7175, 4294901760
        %7177 = vmatpush.msra.mxu0 %v7176
        %v7178 = vand.u32 %v1659, 4294901760
        %v7179 = vsub.f32 %v1659, %v7178
        %v7180 = vand.u32 %v7179, 4294901760
        %7181 = vmatpush.msra.mxu0 %v7180
        %v7182 = vand.u32 %v1651, 4294901760
        %v7183 = vsub.f32 %v1651, %v7182
        %v7184 = vand.u32 %v7183, 4294901760
        %7185 = vmatpush.msra.mxu0 %v7184
        %v7186 = vand.u32 %v1515, 4294901760
        %7187 = vmatmul.f32.gmra.mxu0 %v7186
        %v7188 = vpop.f32.mrf.mxu0
        %v7189 = vadd.f32 %v7120, %v7188
        %7190 = vdwg.mxu0
        %v7191 = vand.u32 %v1771, 4294901760
        %7192 = vmatpush.msra.mxu0 %v7191
        %v7193 = vand.u32 %v1763, 4294901760
        %7194 = vmatpush.msra.mxu0 %v7193
        %v7195 = vand.u32 %v1755, 4294901760
        %7196 = vmatpush.msra.mxu0 %v7195
        %v7197 = vand.u32 %v1747, 4294901760
        %7198 = vmatpush.msra.mxu0 %v7197
        %v7199 = vand.u32 %v1739, 4294901760
        %7200 = vmatpush.msra.mxu0 %v7199
        %v7201 = vand.u32 %v1731, 4294901760
        %7202 = vmatpush.msra.mxu0 %v7201
        %v7203 = vand.u32 %v1723, 4294901760
        %7204 = vmatpush.msra.mxu0 %v7203
        %v7205 = vand.u32 %v1715, 4294901760
        %7206 = vmatpush.msra.mxu0 %v7205
        %v7207 = vand.u32 %v1707, 4294901760
        %7208 = vmatpush.msra.mxu0 %v7207
        %v7209 = vand.u32 %v1699, 4294901760
        %7210 = vmatpush.msra.mxu0 %v7209
        %v7211 = vand.u32 %v1691, 4294901760
        %7212 = vmatpush.msra.mxu0 %v7211
        %v7213 = vand.u32 %v1683, 4294901760
        %7214 = vmatpush.msra.mxu0 %v7213
        %v7215 = vand.u32 %v1675, 4294901760
        %7216 = vmatpush.msra.mxu0 %v7215
        %v7217 = vand.u32 %v1667, 4294901760
        %7218 = vmatpush.msra.mxu0 %v7217
        %v7219 = vand.u32 %v1659, 4294901760
        %7220 = vmatpush.msra.mxu0 %v7219
        %v7221 = vand.u32 %v1651, 4294901760
        %7222 = vmatpush.msra.mxu0 %v7221
        %v7223 = vand.u32 %v1515, 4294901760
        %7224 = vmatmul.f32.gmra.mxu0 %v7223
        %v7225 = vpop.f32.mrf.mxu0
        %v7226 = vadd.f32 %v7189, %v7225
        %7227 = vdwg.mxu0
        %v7228 = vadd.f32 %v2452, %v3134
        %v7229 = vadd.f32 %v7228, %v3816
        %v7230 = vadd.f32 %v7229, %v4498
        %v7231 = vadd.f32 %v7230, %v5180
        %v7232 = vadd.f32 %v7231, %v5862
        %v7233 = vadd.f32 %v7232, %v6544
        %v7234 = vadd.f32 %v7233, %v7226
        %7235 = vadd.xlane.f32.xlu0 %v7234
        %v7236 = vpop.xlane.xlu0 %7235
        %v7237 = vmul.f32 %v7236, 0.0009765625
        %v7238 = vsub.f32 %v2452, %v7237
        %v7239 = vsub.f32 %v3134, %v7237
        %v7240 = vsub.f32 %v3816, %v7237
        %v7241 = vsub.f32 %v4498, %v7237
        %v7242 = vsub.f32 %v5180, %v7237
        %v7243 = vsub.f32 %v5862, %v7237
        %v7244 = vsub.f32 %v6544, %v7237
        %v7245 = vsub.f32 %v7226, %v7237
        %v7246 = vmul.f32 %v7238, %v7238
        %v7247 = vmul.f32 %v7239, %v7239
        %v7248 = vmul.f32 %v7240, %v7240
        %v7249 = vmul.f32 %v7241, %v7241
        %v7250 = vmul.f32 %v7242, %v7242
        %v7251 = vmul.f32 %v7243, %v7243
        %v7252 = vmul.f32 %v7244, %v7244
        %v7253 = vmul.f32 %v7245, %v7245
        %v7254 = vadd.f32 %v7246, %v7247
        %v7255 = vadd.f32 %v7254, %v7248
        %v7256 = vadd.f32 %v7255, %v7249
        %v7257 = vadd.f32 %v7256, %v7250
        %v7258 = vadd.f32 %v7257, %v7251
        %v7259 = vadd.f32 %v7258, %v7252
        %v7260 = vadd.f32 %v7259, %v7253
        %7261 = vadd.xlane.f32.xlu0 %v7260
        %v7262 = vpop.xlane.xlu0 %7261
        %v7263 = vmul.f32 %v7262, 0.0009765625
        %v7264 = vadd.f32 %v7263, 0.001
        %v7265 = vrsqrt.pop %v7264
        %v7266 = vmul.f32 %v7265, %v7264
        %v7267 = vmul.f32 %v7266, %v7265
        %v7268 = vmul.f32 0.5, %v7267
        %v7269 = vsub.f32 1.5, %v7268
        %v7270 = vmul.f32 %v7265, %v7269
        %vm7271 = vweird.f32 %v7264
        %vm7272 = vweird.f32 %v7265
        %vm7273 = vmor %vm7271, %vm7272
        %v7274 = vsel %vm7273, %v7265, %v7270
        %v7275 = vmul.f32 %v7238, %v7274
        %v7276 = vmul.f32 %v7239, %v7274
        %v7277 = vmul.f32 %v7240, %v7274
        %v7278 = vmul.f32 %v7241, %v7274
        %v7279 = vmul.f32 %v7242, %v7274
        %v7280 = vmul.f32 %v7243, %v7274
        %v7281 = vmul.f32 %v7244, %v7274
        %v7282 = vmul.f32 %v7245, %v7274
        %v7283 = vmax.f32 %v7275, 0.0
        %v7284 = vmax.f32 %v7276, 0.0
        %v7285 = vmax.f32 %v7277, 0.0
        %v7286 = vmax.f32 %v7278, 0.0
        %v7287 = vmax.f32 %v7279, 0.0
        %v7288 = vmax.f32 %v7280, 0.0
        %v7289 = vmax.f32 %v7281, 0.0
        %v7290 = vmax.f32 %v7282, 0.0
        %v7291 = vmul.f32 %v7283, 0.75
        %v7292 = vmul.f32 %v7284, 0.75
        %v7293 = vmul.f32 %v7285, 0.75
        %v7294 = vmul.f32 %v7286, 0.75
        %v7295 = vmul.f32 %v7287, 0.75
        %v7296 = vmul.f32 %v7288, 0.75
        %v7297 = vmul.f32 %v7289, 0.75
        %v7298 = vmul.f32 %v7290, 0.75
        %s7299 = scalar_lea.vmem [#allocation6], 216
        %v7300 = vld [vmem:[%s7299] sm:$0xff]
        %7301 = vrot.lane.b32.xlu0 %v7283, 1
        %v7302 = vpop.permute.xlu0 %7301
        %7303 = vrot.lane.b32.xlu0 %v7284, 1
        %v7304 = vpop.permute.xlu0 %7303
        %7305 = vrot.lane.b32.xlu0 %v7285, 1
        %v7306 = vpop.permute.xlu0 %7305
        %7307 = vrot.lane.b32.xlu0 %v7286, 1
        %v7308 = vpop.permute.xlu0 %7307
        %7309 = vrot.lane.b32.xlu0 %v7287, 1
        %v7310 = vpop.permute.xlu0 %7309
        %7311 = vrot.lane.b32.xlu0 %v7288, 1
        %v7312 = vpop.permute.xlu0 %7311
        %7313 = vrot.lane.b32.xlu0 %v7289, 1
        %v7314 = vpop.permute.xlu0 %7313
        %7315 = vrot.lane.b32.xlu0 %v7290, 1
        %v7316 = vpop.permute.xlu0 %7315
        %v7317 = vsel %vm552, %v7314, %v7316
        %v7318 = vsel %vm552, %v7312, %v7314
        %v7319 = vsel %vm552, %v7310, %v7312
        %v7320 = vsel %vm552, %v7308, %v7310
        %v7321 = vsel %vm552, %v7306, %v7308
        %v7322 = vsel %vm552, %v7304, %v7306
        %v7323 = vsel %vm552, %v7302, %v7304
        %v7324 = vsel %vm552, %v7316, %v7302
        %v7325 = vsub.f32 1.0, %v7300
        %v7327 = vperm.slane %v7325, 0
        %v7328 = vperm.slane %v7325, 1
        %v7329 = vperm.slane %v7325, 2
        %v7330 = vperm.slane %v7325, 3
        %v7331 = vperm.slane %v7325, 4
        %v7332 = vperm.slane %v7325, 5
        %v7333 = vperm.slane %v7325, 6
        %v7334 = vperm.slane %v7325, 7
        %v7343 = vmul.f32 %v7324, %v7327
        %v7344 = vmul.f32 %v7323, %v7328
        %v7345 = vmul.f32 %v7322, %v7329
        %v7346 = vmul.f32 %v7321, %v7330
        %v7347 = vmul.f32 %v7320, %v7331
        %v7348 = vmul.f32 %v7319, %v7332
        %v7349 = vmul.f32 %v7318, %v7333
        %v7350 = vmul.f32 %v7317, %v7334
        %v7352 = vperm.slane %v7300, 0
        %v7353 = vperm.slane %v7300, 1
        %v7354 = vperm.slane %v7300, 2
        %v7355 = vperm.slane %v7300, 3
        %v7356 = vperm.slane %v7300, 4
        %v7357 = vperm.slane %v7300, 5
        %v7358 = vperm.slane %v7300, 6
        %v7359 = vperm.slane %v7300, 7
        %v7368 = vmul.f32 %v7283, %v7352
        %v7369 = vmul.f32 %v7284, %v7353
        %v7370 = vmul.f32 %v7285, %v7354
        %v7371 = vmul.f32 %v7286, %v7355
        %v7372 = vmul.f32 %v7287, %v7356
        %v7373 = vmul.f32 %v7288, %v7357
        %v7374 = vmul.f32 %v7289, %v7358
        %v7375 = vmul.f32 %v7290, %v7359
        %v7376 = vadd.f32 %v7343, %v7368
        %v7377 = vadd.f32 %v7344, %v7369
        %v7378 = vadd.f32 %v7345, %v7370
        %v7379 = vadd.f32 %v7346, %v7371
        %v7380 = vadd.f32 %v7347, %v7372
        %v7381 = vadd.f32 %v7348, %v7373
        %v7382 = vadd.f32 %v7349, %v7374
        %v7383 = vadd.f32 %v7350, %v7375
        %v7384 = vmul.f32 %v7376, 0.25
        %v7385 = vmul.f32 %v7377, 0.25
        %v7386 = vmul.f32 %v7378, 0.25
        %v7387 = vmul.f32 %v7379, 0.25
        %v7388 = vmul.f32 %v7380, 0.25
        %v7389 = vmul.f32 %v7381, 0.25
        %v7390 = vmul.f32 %v7382, 0.25
        %v7391 = vmul.f32 %v7383, 0.25
        %v7392 = vadd.f32 %v7291, %v7384
        %v7393 = vadd.f32 %v7292, %v7385
        %v7394 = vadd.f32 %v7293, %v7386
        %v7395 = vadd.f32 %v7294, %v7387
        %v7396 = vadd.f32 %v7295, %v7388
        %v7397 = vadd.f32 %v7296, %v7389
        %v7398 = vadd.f32 %v7297, %v7390
        %v7399 = vadd.f32 %v7298, %v7391
        %s7400 = scalar_lea.vmem [#allocation6], 224
        %v7401 = vld [vmem:[%s7400] sm:$0xff]
        %7402 = vrot.lane.b32.xlu0 %v7283, 127
        %v7403 = vpop.permute.xlu0 %7402
        %7404 = vrot.lane.b32.xlu0 %v7284, 127
        %v7405 = vpop.permute.xlu0 %7404
        %7406 = vrot.lane.b32.xlu0 %v7285, 127
        %v7407 = vpop.permute.xlu0 %7406
        %7408 = vrot.lane.b32.xlu0 %v7286, 127
        %v7409 = vpop.permute.xlu0 %7408
        %7410 = vrot.lane.b32.xlu0 %v7287, 127
        %v7411 = vpop.permute.xlu0 %7410
        %7412 = vrot.lane.b32.xlu0 %v7288, 127
        %v7413 = vpop.permute.xlu0 %7412
        %7414 = vrot.lane.b32.xlu0 %v7289, 127
        %v7415 = vpop.permute.xlu0 %7414
        %7416 = vrot.lane.b32.xlu0 %v7290, 127
        %v7417 = vpop.permute.xlu0 %7416
        %v7418 = vsel %vm647, %v7415, %v7417
        %v7419 = vsel %vm647, %v7413, %v7415
        %v7420 = vsel %vm647, %v7411, %v7413
        %v7421 = vsel %vm647, %v7409, %v7411
        %v7422 = vsel %vm647, %v7407, %v7409
        %v7423 = vsel %vm647, %v7405, %v7407
        %v7424 = vsel %vm647, %v7403, %v7405
        %v7425 = vsel %vm647, %v7417, %v7403
        %v7426 = vsub.f32 1.0, %v7401
        %v7428 = vperm.slane %v7426, 0
        %v7429 = vperm.slane %v7426, 1
        %v7430 = vperm.slane %v7426, 2
        %v7431 = vperm.slane %v7426, 3
        %v7432 = vperm.slane %v7426, 4
        %v7433 = vperm.slane %v7426, 5
        %v7434 = vperm.slane %v7426, 6
        %v7435 = vperm.slane %v7426, 7
        %v7444 = vmul.f32 %v7424, %v7428
        %v7445 = vmul.f32 %v7423, %v7429
        %v7446 = vmul.f32 %v7422, %v7430
        %v7447 = vmul.f32 %v7421, %v7431
        %v7448 = vmul.f32 %v7420, %v7432
        %v7449 = vmul.f32 %v7419, %v7433
        %v7450 = vmul.f32 %v7418, %v7434
        %v7451 = vmul.f32 %v7425, %v7435
        %v7453 = vperm.slane %v7401, 0
        %v7454 = vperm.slane %v7401, 1
        %v7455 = vperm.slane %v7401, 2
        %v7456 = vperm.slane %v7401, 3
        %v7457 = vperm.slane %v7401, 4
        %v7458 = vperm.slane %v7401, 5
        %v7459 = vperm.slane %v7401, 6
        %v7460 = vperm.slane %v7401, 7
        %v7469 = vmul.f32 %v7283, %v7453
        %v7470 = vmul.f32 %v7284, %v7454
        %v7471 = vmul.f32 %v7285, %v7455
        %v7472 = vmul.f32 %v7286, %v7456
        %v7473 = vmul.f32 %v7287, %v7457
        %v7474 = vmul.f32 %v7288, %v7458
        %v7475 = vmul.f32 %v7289, %v7459
        %v7476 = vmul.f32 %v7290, %v7460
        %v7477 = vadd.f32 %v7444, %v7469
        %v7478 = vadd.f32 %v7445, %v7470
        %v7479 = vadd.f32 %v7446, %v7471
        %v7480 = vadd.f32 %v7447, %v7472
        %v7481 = vadd.f32 %v7448, %v7473
        %v7482 = vadd.f32 %v7449, %v7474
        %v7483 = vadd.f32 %v7450, %v7475
        %v7484 = vadd.f32 %v7451, %v7476
        %v7485 = vmul.f32 %v7477, 0.25
        %v7486 = vmul.f32 %v7478, 0.25
        %v7487 = vmul.f32 %v7479, 0.25
        %v7488 = vmul.f32 %v7480, 0.25
        %v7489 = vmul.f32 %v7481, 0.25
        %v7490 = vmul.f32 %v7482, 0.25
        %v7491 = vmul.f32 %v7483, 0.25
        %v7492 = vmul.f32 %v7484, 0.25
        %v7493 = vadd.f32 %v7291, %v7485
        %v7494 = vadd.f32 %v7292, %v7486
        %v7495 = vadd.f32 %v7293, %v7487
        %v7496 = vadd.f32 %v7294, %v7488
        %v7497 = vadd.f32 %v7295, %v7489
        %v7498 = vadd.f32 %v7296, %v7490
        %v7499 = vadd.f32 %v7297, %v7491
        %v7500 = vadd.f32 %v7298, %v7492
        %v7501 = vmul.f32 %v7392, 0.75
        %v7502 = vmul.f32 %v7393, 0.75
        %v7503 = vmul.f32 %v7394, 0.75
        %v7504 = vmul.f32 %v7395, 0.75
        %v7505 = vmul.f32 %v7396, 0.75
        %v7506 = vmul.f32 %v7397, 0.75
        %v7507 = vmul.f32 %v7398, 0.75
        %v7508 = vmul.f32 %v7399, 0.75
        %s7509 = scalar_lea.vmem [#allocation6], 232
        %v7510 = vld [vmem:[%s7509] sm:$0xff]
        %7511 = vrot.lane.b32.xlu0 %v7392, 16
        %v7512 = vpop.permute.xlu0 %7511
        %7513 = vrot.lane.b32.xlu0 %v7393, 16
        %v7514 = vpop.permute.xlu0 %7513
        %7515 = vrot.lane.b32.xlu0 %v7394, 16
        %v7516 = vpop.permute.xlu0 %7515
        %7517 = vrot.lane.b32.xlu0 %v7395, 16
        %v7518 = vpop.permute.xlu0 %7517
        %7519 = vrot.lane.b32.xlu0 %v7396, 16
        %v7520 = vpop.permute.xlu0 %7519
        %7521 = vrot.lane.b32.xlu0 %v7397, 16
        %v7522 = vpop.permute.xlu0 %7521
        %7523 = vrot.lane.b32.xlu0 %v7398, 16
        %v7524 = vpop.permute.xlu0 %7523
        %7525 = vrot.lane.b32.xlu0 %v7399, 16
        %v7526 = vpop.permute.xlu0 %7525
        %v7527 = vsel %vm432, %v7524, %v7526
        %v7528 = vsel %vm432, %v7522, %v7524
        %v7529 = vsel %vm432, %v7520, %v7522
        %v7530 = vsel %vm432, %v7518, %v7520
        %v7531 = vsel %vm432, %v7516, %v7518
        %v7532 = vsel %vm432, %v7514, %v7516
        %v7533 = vsel %vm432, %v7512, %v7514
        %v7534 = vsel %vm432, %v7526, %v7512
        %v7535 = vsub.f32 1.0, %v7510
        %v7537 = vperm.slane %v7535, 0
        %v7538 = vperm.slane %v7535, 1
        %v7539 = vperm.slane %v7535, 2
        %v7540 = vperm.slane %v7535, 3
        %v7541 = vperm.slane %v7535, 4
        %v7542 = vperm.slane %v7535, 5
        %v7543 = vperm.slane %v7535, 6
        %v7544 = vperm.slane %v7535, 7
        %v7553 = vmul.f32 %v7534, %v7537
        %v7554 = vmul.f32 %v7533, %v7538
        %v7555 = vmul.f32 %v7532, %v7539
        %v7556 = vmul.f32 %v7531, %v7540
        %v7557 = vmul.f32 %v7530, %v7541
        %v7558 = vmul.f32 %v7529, %v7542
        %v7559 = vmul.f32 %v7528, %v7543
        %v7560 = vmul.f32 %v7527, %v7544
        %v7562 = vperm.slane %v7510, 0
        %v7563 = vperm.slane %v7510, 1
        %v7564 = vperm.slane %v7510, 2
        %v7565 = vperm.slane %v7510, 3
        %v7566 = vperm.slane %v7510, 4
        %v7567 = vperm.slane %v7510, 5
        %v7568 = vperm.slane %v7510, 6
        %v7569 = vperm.slane %v7510, 7
        %v7578 = vmul.f32 %v7392, %v7562
        %v7579 = vmul.f32 %v7393, %v7563
        %v7580 = vmul.f32 %v7394, %v7564
        %v7581 = vmul.f32 %v7395, %v7565
        %v7582 = vmul.f32 %v7396, %v7566
        %v7583 = vmul.f32 %v7397, %v7567
        %v7584 = vmul.f32 %v7398, %v7568
        %v7585 = vmul.f32 %v7399, %v7569
        %v7586 = vadd.f32 %v7553, %v7578
        %v7587 = vadd.f32 %v7554, %v7579
        %v7588 = vadd.f32 %v7555, %v7580
        %v7589 = vadd.f32 %v7556, %v7581
        %v7590 = vadd.f32 %v7557, %v7582
        %v7591 = vadd.f32 %v7558, %v7583
        %v7592 = vadd.f32 %v7559, %v7584
        %v7593 = vadd.f32 %v7560, %v7585
        %v7594 = vmul.f32 %v7586, 0.25
        %v7595 = vmul.f32 %v7587, 0.25
        %v7596 = vmul.f32 %v7588, 0.25
        %v7597 = vmul.f32 %v7589, 0.25
        %v7598 = vmul.f32 %v7590, 0.25
        %v7599 = vmul.f32 %v7591, 0.25
        %v7600 = vmul.f32 %v7592, 0.25
        %v7601 = vmul.f32 %v7593, 0.25
        %v7602 = vadd.f32 %v7501, %v7594
        %v7603 = vadd.f32 %v7502, %v7595
        %v7604 = vadd.f32 %v7503, %v7596
        %v7605 = vadd.f32 %v7504, %v7597
        %v7606 = vadd.f32 %v7505, %v7598
        %v7607 = vadd.f32 %v7506, %v7599
        %v7608 = vadd.f32 %v7507, %v7600
        %v7609 = vadd.f32 %v7508, %v7601
        %s7610 = scalar_lea.vmem [#allocation6], 240
        %v7611 = vld [vmem:[%s7610] sm:$0xff]
        %7612 = vrot.lane.b32.xlu0 %v7392, 112
        %v7613 = vpop.permute.xlu0 %7612
        %7614 = vrot.lane.b32.xlu0 %v7393, 112
        %v7615 = vpop.permute.xlu0 %7614
        %7616 = vrot.lane.b32.xlu0 %v7394, 112
        %v7617 = vpop.permute.xlu0 %7616
        %7618 = vrot.lane.b32.xlu0 %v7395, 112
        %v7619 = vpop.permute.xlu0 %7618
        %7620 = vrot.lane.b32.xlu0 %v7396, 112
        %v7621 = vpop.permute.xlu0 %7620
        %7622 = vrot.lane.b32.xlu0 %v7397, 112
        %v7623 = vpop.permute.xlu0 %7622
        %7624 = vrot.lane.b32.xlu0 %v7398, 112
        %v7625 = vpop.permute.xlu0 %7624
        %7626 = vrot.lane.b32.xlu0 %v7399, 112
        %v7627 = vpop.permute.xlu0 %7626
        %v7628 = vsel %vm767, %v7625, %v7627
        %v7629 = vsel %vm767, %v7623, %v7625
        %v7630 = vsel %vm767, %v7621, %v7623
        %v7631 = vsel %vm767, %v7619, %v7621
        %v7632 = vsel %vm767, %v7617, %v7619
        %v7633 = vsel %vm767, %v7615, %v7617
        %v7634 = vsel %vm767, %v7613, %v7615
        %v7635 = vsel %vm767, %v7627, %v7613
        %v7636 = vsub.f32 1.0, %v7611
        %v7638 = vperm.slane %v7636, 0
        %v7639 = vperm.slane %v7636, 1
        %v7640 = vperm.slane %v7636, 2
        %v7641 = vperm.slane %v7636, 3
        %v7642 = vperm.slane %v7636, 4
        %v7643 = vperm.slane %v7636, 5
        %v7644 = vperm.slane %v7636, 6
        %v7645 = vperm.slane %v7636, 7
        %v7654 = vmul.f32 %v7634, %v7638
        %v7655 = vmul.f32 %v7633, %v7639
        %v7656 = vmul.f32 %v7632, %v7640
        %v7657 = vmul.f32 %v7631, %v7641
        %v7658 = vmul.f32 %v7630, %v7642
        %v7659 = vmul.f32 %v7629, %v7643
        %v7660 = vmul.f32 %v7628, %v7644
        %v7661 = vmul.f32 %v7635, %v7645
        %v7663 = vperm.slane %v7611, 0
        %v7664 = vperm.slane %v7611, 1
        %v7665 = vperm.slane %v7611, 2
        %v7666 = vperm.slane %v7611, 3
        %v7667 = vperm.slane %v7611, 4
        %v7668 = vperm.slane %v7611, 5
        %v7669 = vperm.slane %v7611, 6
        %v7670 = vperm.slane %v7611, 7
        %v7679 = vmul.f32 %v7392, %v7663
        %v7680 = vmul.f32 %v7393, %v7664
        %v7681 = vmul.f32 %v7394, %v7665
        %v7682 = vmul.f32 %v7395, %v7666
        %v7683 = vmul.f32 %v7396, %v7667
        %v7684 = vmul.f32 %v7397, %v7668
        %v7685 = vmul.f32 %v7398, %v7669
        %v7686 = vmul.f32 %v7399, %v7670
        %v7687 = vadd.f32 %v7654, %v7679
        %v7688 = vadd.f32 %v7655, %v7680
        %v7689 = vadd.f32 %v7656, %v7681
        %v7690 = vadd.f32 %v7657, %v7682
        %v7691 = vadd.f32 %v7658, %v7683
        %v7692 = vadd.f32 %v7659, %v7684
        %v7693 = vadd.f32 %v7660, %v7685
        %v7694 = vadd.f32 %v7661, %v7686
        %v7695 = vmul.f32 %v7687, 0.25
        %v7696 = vmul.f32 %v7688, 0.25
        %v7697 = vmul.f32 %v7689, 0.25
        %v7698 = vmul.f32 %v7690, 0.25
        %v7699 = vmul.f32 %v7691, 0.25
        %v7700 = vmul.f32 %v7692, 0.25
        %v7701 = vmul.f32 %v7693, 0.25
        %v7702 = vmul.f32 %v7694, 0.25
        %v7703 = vadd.f32 %v7501, %v7695
        %v7704 = vadd.f32 %v7502, %v7696
        %v7705 = vadd.f32 %v7503, %v7697
        %v7706 = vadd.f32 %v7504, %v7698
        %v7707 = vadd.f32 %v7505, %v7699
        %v7708 = vadd.f32 %v7506, %v7700
        %v7709 = vadd.f32 %v7507, %v7701
        %v7710 = vadd.f32 %v7508, %v7702
        %v7711 = vmul.f32 %v7602, 0.75
        %v7712 = vmul.f32 %v7603, 0.75
        %v7713 = vmul.f32 %v7604, 0.75
        %v7714 = vmul.f32 %v7605, 0.75
        %v7715 = vmul.f32 %v7606, 0.75
        %v7716 = vmul.f32 %v7607, 0.75
        %v7717 = vmul.f32 %v7608, 0.75
        %v7718 = vmul.f32 %v7609, 0.75
        %s7719 = scalar_lea.vmem [#allocation6], 248
        %v7720 = vld [vmem:[%s7719] sm:$0xff]
        %v7721 = vsub.f32 1.0, %v7720
        %v7723 = vperm.slane %v7721, 0
        %v7724 = vperm.slane %v7721, 1
        %v7725 = vperm.slane %v7721, 2
        %v7726 = vperm.slane %v7721, 3
        %v7727 = vperm.slane %v7721, 4
        %v7728 = vperm.slane %v7721, 5
        %v7729 = vperm.slane %v7721, 6
        %v7730 = vperm.slane %v7721, 7
        %v7739 = vmul.f32 %v7609, %v7723
        %v7740 = vmul.f32 %v7602, %v7724
        %v7741 = vmul.f32 %v7603, %v7725
        %v7742 = vmul.f32 %v7604, %v7726
        %v7743 = vmul.f32 %v7605, %v7727
        %v7744 = vmul.f32 %v7606, %v7728
        %v7745 = vmul.f32 %v7607, %v7729
        %v7746 = vmul.f32 %v7608, %v7730
        %v7748 = vperm.slane %v7720, 0
        %v7749 = vperm.slane %v7720, 1
        %v7750 = vperm.slane %v7720, 2
        %v7751 = vperm.slane %v7720, 3
        %v7752 = vperm.slane %v7720, 4
        %v7753 = vperm.slane %v7720, 5
        %v7754 = vperm.slane %v7720, 6
        %v7755 = vperm.slane %v7720, 7
        %v7764 = vmul.f32 %v7602, %v7748
        %v7765 = vmul.f32 %v7603, %v7749
        %v7766 = vmul.f32 %v7604, %v7750
        %v7767 = vmul.f32 %v7605, %v7751
        %v7768 = vmul.f32 %v7606, %v7752
        %v7769 = vmul.f32 %v7607, %v7753
        %v7770 = vmul.f32 %v7608, %v7754
        %v7771 = vmul.f32 %v7609, %v7755
        %v7772 = vadd.f32 %v7739, %v7764
        %v7773 = vadd.f32 %v7740, %v7765
        %v7774 = vadd.f32 %v7741, %v7766
        %v7775 = vadd.f32 %v7742, %v7767
        %v7776 = vadd.f32 %v7743, %v7768
        %v7777 = vadd.f32 %v7744, %v7769
        %v7778 = vadd.f32 %v7745, %v7770
        %v7779 = vadd.f32 %v7746, %v7771
        %v7780 = vmul.f32 %v7772, 0.25
        %v7781 = vmul.f32 %v7773, 0.25
        %v7782 = vmul.f32 %v7774, 0.25
        %v7783 = vmul.f32 %v7775, 0.25
        %v7784 = vmul.f32 %v7776, 0.25
        %v7785 = vmul.f32 %v7777, 0.25
        %v7786 = vmul.f32 %v7778, 0.25
        %v7787 = vmul.f32 %v7779, 0.25
        %v7788 = vadd.f32 %v7711, %v7780
        %v7789 = vadd.f32 %v7712, %v7781
        %v7790 = vadd.f32 %v7713, %v7782
        %v7791 = vadd.f32 %v7714, %v7783
        %v7792 = vadd.f32 %v7715, %v7784
        %v7793 = vadd.f32 %v7716, %v7785
        %v7794 = vadd.f32 %v7717, %v7786
        %v7795 = vadd.f32 %v7718, %v7787
        %7796 = vst [vmem:[%s219] sm:$0xff] %v7788
        %7797 = vst [vmem:[%s219 + $0x8] sm:$0xff] %v7789
        %7798 = vst [vmem:[%s219 + $0x10] sm:$0xff] %v7790
        %7799 = vst [vmem:[%s219 + $0x18] sm:$0xff] %v7791
        %7800 = vst [vmem:[%s219 + $0x20] sm:$0xff] %v7792
        %7801 = vst [vmem:[%s219 + $0x28] sm:$0xff] %v7793
        %7802 = vst [vmem:[%s219 + $0x30] sm:$0xff] %v7794
        %7803 = vst [vmem:[%s219 + $0x38] sm:$0xff] %v7795
        %s7804 = scalar_lea.vmem [#allocation6], 256
        %v7805 = vld [vmem:[%s7804] sm:$0xff]
        %v7806 = vsub.f32 1.0, %v7805
        %v7808 = vperm.slane %v7806, 0
        %v7809 = vperm.slane %v7806, 1
        %v7810 = vperm.slane %v7806, 2
        %v7811 = vperm.slane %v7806, 3
        %v7812 = vperm.slane %v7806, 4
        %v7813 = vperm.slane %v7806, 5
        %v7814 = vperm.slane %v7806, 6
        %v7815 = vperm.slane %v7806, 7
        %v7824 = vmul.f32 %v7603, %v7808
        %v7825 = vmul.f32 %v7604, %v7809
        %v7826 = vmul.f32 %v7605, %v7810
        %v7827 = vmul.f32 %v7606, %v7811
        %v7828 = vmul.f32 %v7607, %v7812
        %v7829 = vmul.f32 %v7608, %v7813
        %v7830 = vmul.f32 %v7609, %v7814
        %v7831 = vmul.f32 %v7602, %v7815
        %v7833 = vperm.slane %v7805, 0
        %v7834 = vperm.slane %v7805, 1
        %v7835 = vperm.slane %v7805, 2
        %v7836 = vperm.slane %v7805, 3
        %v7837 = vperm.slane %v7805, 4
        %v7838 = vperm.slane %v7805, 5
        %v7839 = vperm.slane %v7805, 6
        %v7840 = vperm.slane %v7805, 7
        %v7849 = vmul.f32 %v7602, %v7833
        %v7850 = vmul.f32 %v7603, %v7834
        %v7851 = vmul.f32 %v7604, %v7835
        %v7852 = vmul.f32 %v7605, %v7836
        %v7853 = vmul.f32 %v7606, %v7837
        %v7854 = vmul.f32 %v7607, %v7838
        %v7855 = vmul.f32 %v7608, %v7839
        %v7856 = vmul.f32 %v7609, %v7840
        %v7857 = vadd.f32 %v7824, %v7849
        %v7858 = vadd.f32 %v7825, %v7850
        %v7859 = vadd.f32 %v7826, %v7851
        %v7860 = vadd.f32 %v7827, %v7852
        %v7861 = vadd.f32 %v7828, %v7853
        %v7862 = vadd.f32 %v7829, %v7854
        %v7863 = vadd.f32 %v7830, %v7855
        %v7864 = vadd.f32 %v7831, %v7856
        %v7865 = vmul.f32 %v7857, 0.25
        %v7866 = vmul.f32 %v7858, 0.25
        %v7867 = vmul.f32 %v7859, 0.25
        %v7868 = vmul.f32 %v7860, 0.25
        %v7869 = vmul.f32 %v7861, 0.25
        %v7870 = vmul.f32 %v7862, 0.25
        %v7871 = vmul.f32 %v7863, 0.25
        %v7872 = vmul.f32 %v7864, 0.25
        %v7873 = vadd.f32 %v7711, %v7865
        %v7874 = vadd.f32 %v7712, %v7866
        %v7875 = vadd.f32 %v7713, %v7867
        %v7876 = vadd.f32 %v7714, %v7868
        %v7877 = vadd.f32 %v7715, %v7869
        %v7878 = vadd.f32 %v7716, %v7870
        %v7879 = vadd.f32 %v7717, %v7871
        %v7880 = vadd.f32 %v7718, %v7872
        %s7881 = scalar_lea.vmem %s219, 256 [#allocation9]
        %7882 = vst [vmem:[%s7881] sm:$0xff] %v7873
        %7883 = vst [vmem:[%s7881 + $0x8] sm:$0xff] %v7874
        %7884 = vst [vmem:[%s7881 + $0x10] sm:$0xff] %v7875
        %7885 = vst [vmem:[%s7881 + $0x18] sm:$0xff] %v7876
        %7886 = vst [vmem:[%s7881 + $0x20] sm:$0xff] %v7877
        %7887 = vst [vmem:[%s7881 + $0x28] sm:$0xff] %v7878
        %7888 = vst [vmem:[%s7881 + $0x30] sm:$0xff] %v7879
        %7889 = vst [vmem:[%s7881 + $0x38] sm:$0xff] %v7880
        %v7890 = vmul.f32 %v7703, 0.75
        %v7891 = vmul.f32 %v7704, 0.75
        %v7892 = vmul.f32 %v7705, 0.75
        %v7893 = vmul.f32 %v7706, 0.75
        %v7894 = vmul.f32 %v7707, 0.75
        %v7895 = vmul.f32 %v7708, 0.75
        %v7896 = vmul.f32 %v7709, 0.75
        %v7897 = vmul.f32 %v7710, 0.75
        %v7898 = vld [vmem:[%s7719] sm:$0xff]
        %v7899 = vsub.f32 1.0, %v7898
        %v7901 = vperm.slane %v7899, 0
        %v7902 = vperm.slane %v7899, 1
        %v7903 = vperm.slane %v7899, 2
        %v7904 = vperm.slane %v7899, 3
        %v7905 = vperm.slane %v7899, 4
        %v7906 = vperm.slane %v7899, 5
        %v7907 = vperm.slane %v7899, 6
        %v7908 = vperm.slane %v7899, 7
        %v7917 = vmul.f32 %v7710, %v7901
        %v7918 = vmul.f32 %v7703, %v7902
        %v7919 = vmul.f32 %v7704, %v7903
        %v7920 = vmul.f32 %v7705, %v7904
        %v7921 = vmul.f32 %v7706, %v7905
        %v7922 = vmul.f32 %v7707, %v7906
        %v7923 = vmul.f32 %v7708, %v7907
        %v7924 = vmul.f32 %v7709, %v7908
        %v7926 = vperm.slane %v7898, 0
        %v7927 = vperm.slane %v7898, 1
        %v7928 = vperm.slane %v7898, 2
        %v7929 = vperm.slane %v7898, 3
        %v7930 = vperm.slane %v7898, 4
        %v7931 = vperm.slane %v7898, 5
        %v7932 = vperm.slane %v7898, 6
        %v7933 = vperm.slane %v7898, 7
        %v7942 = vmul.f32 %v7703, %v7926
        %v7943 = vmul.f32 %v7704, %v7927
        %v7944 = vmul.f32 %v7705, %v7928
        %v7945 = vmul.f32 %v7706, %v7929
        %v7946 = vmul.f32 %v7707, %v7930
        %v7947 = vmul.f32 %v7708, %v7931
        %v7948 = vmul.f32 %v7709, %v7932
        %v7949 = vmul.f32 %v7710, %v7933
        %v7950 = vadd.f32 %v7917, %v7942
        %v7951 = vadd.f32 %v7918, %v7943
        %v7952 = vadd.f32 %v7919, %v7944
        %v7953 = vadd.f32 %v7920, %v7945
        %v7954 = vadd.f32 %v7921, %v7946
        %v7955 = vadd.f32 %v7922, %v7947
        %v7956 = vadd.f32 %v7923, %v7948
        %v7957 = vadd.f32 %v7924, %v7949
        %v7958 = vmul.f32 %v7950, 0.25
        %v7959 = vmul.f32 %v7951, 0.25
        %v7960 = vmul.f32 %v7952, 0.25
        %v7961 = vmul.f32 %v7953, 0.25
        %v7962 = vmul.f32 %v7954, 0.25
        %v7963 = vmul.f32 %v7955, 0.25
        %v7964 = vmul.f32 %v7956, 0.25
        %v7965 = vmul.f32 %v7957, 0.25
        %v7966 = vadd.f32 %v7890, %v7958
        %v7967 = vadd.f32 %v7891, %v7959
        %v7968 = vadd.f32 %v7892, %v7960
        %v7969 = vadd.f32 %v7893, %v7961
        %v7970 = vadd.f32 %v7894, %v7962
        %v7971 = vadd.f32 %v7895, %v7963
        %v7972 = vadd.f32 %v7896, %v7964
        %v7973 = vadd.f32 %v7897, %v7965
        %s7974 = scalar_lea.vmem %s219, 128 [#allocation9]
        %7975 = vst [vmem:[%s7974] sm:$0xff] %v7966
        %7976 = vst [vmem:[%s7974 + $0x8] sm:$0xff] %v7967
        %7977 = vst [vmem:[%s7974 + $0x10] sm:$0xff] %v7968
        %7978 = vst [vmem:[%s7974 + $0x18] sm:$0xff] %v7969
        %7979 = vst [vmem:[%s7974 + $0x20] sm:$0xff] %v7970
        %7980 = vst [vmem:[%s7974 + $0x28] sm:$0xff] %v7971
        %7981 = vst [vmem:[%s7974 + $0x30] sm:$0xff] %v7972
        %7982 = vst [vmem:[%s7974 + $0x38] sm:$0xff] %v7973
        %v7983 = vld [vmem:[%s7804] sm:$0xff]
        %v7984 = vsub.f32 1.0, %v7983
        %v7986 = vperm.slane %v7984, 0
        %v7987 = vperm.slane %v7984, 1
        %v7988 = vperm.slane %v7984, 2
        %v7989 = vperm.slane %v7984, 3
        %v7990 = vperm.slane %v7984, 4
        %v7991 = vperm.slane %v7984, 5
        %v7992 = vperm.slane %v7984, 6
        %v7993 = vperm.slane %v7984, 7
        %v8002 = vmul.f32 %v7704, %v7986
        %v8003 = vmul.f32 %v7705, %v7987
        %v8004 = vmul.f32 %v7706, %v7988
        %v8005 = vmul.f32 %v7707, %v7989
        %v8006 = vmul.f32 %v7708, %v7990
        %v8007 = vmul.f32 %v7709, %v7991
        %v8008 = vmul.f32 %v7710, %v7992
        %v8009 = vmul.f32 %v7703, %v7993
        %v8011 = vperm.slane %v7983, 0
        %v8012 = vperm.slane %v7983, 1
        %v8013 = vperm.slane %v7983, 2
        %v8014 = vperm.slane %v7983, 3
        %v8015 = vperm.slane %v7983, 4
        %v8016 = vperm.slane %v7983, 5
        %v8017 = vperm.slane %v7983, 6
        %v8018 = vperm.slane %v7983, 7
        %v8027 = vmul.f32 %v7703, %v8011
        %v8028 = vmul.f32 %v7704, %v8012
        %v8029 = vmul.f32 %v7705, %v8013
        %v8030 = vmul.f32 %v7706, %v8014
        %v8031 = vmul.f32 %v7707, %v8015
        %v8032 = vmul.f32 %v7708, %v8016
        %v8033 = vmul.f32 %v7709, %v8017
        %v8034 = vmul.f32 %v7710, %v8018
        %v8035 = vadd.f32 %v8002, %v8027
        %v8036 = vadd.f32 %v8003, %v8028
        %v8037 = vadd.f32 %v8004, %v8029
        %v8038 = vadd.f32 %v8005, %v8030
        %v8039 = vadd.f32 %v8006, %v8031
        %v8040 = vadd.f32 %v8007, %v8032
        %v8041 = vadd.f32 %v8008, %v8033
        %v8042 = vadd.f32 %v8009, %v8034
        %v8043 = vmul.f32 %v8035, 0.25
        %v8044 = vmul.f32 %v8036, 0.25
        %v8045 = vmul.f32 %v8037, 0.25
        %v8046 = vmul.f32 %v8038, 0.25
        %v8047 = vmul.f32 %v8039, 0.25
        %v8048 = vmul.f32 %v8040, 0.25
        %v8049 = vmul.f32 %v8041, 0.25
        %v8050 = vmul.f32 %v8042, 0.25
        %v8051 = vadd.f32 %v7890, %v8043
        %v8052 = vadd.f32 %v7891, %v8044
        %v8053 = vadd.f32 %v7892, %v8045
        %v8054 = vadd.f32 %v7893, %v8046
        %v8055 = vadd.f32 %v7894, %v8047
        %v8056 = vadd.f32 %v7895, %v8048
        %v8057 = vadd.f32 %v7896, %v8049
        %v8058 = vadd.f32 %v7897, %v8050
        %s8059 = scalar_lea.vmem %s219, 384 [#allocation9]
        %8060 = vst [vmem:[%s8059] sm:$0xff] %v8051
        %8061 = vst [vmem:[%s8059 + $0x8] sm:$0xff] %v8052
        %8062 = vst [vmem:[%s8059 + $0x10] sm:$0xff] %v8053
        %8063 = vst [vmem:[%s8059 + $0x18] sm:$0xff] %v8054
        %8064 = vst [vmem:[%s8059 + $0x20] sm:$0xff] %v8055
        %8065 = vst [vmem:[%s8059 + $0x28] sm:$0xff] %v8056
        %8066 = vst [vmem:[%s8059 + $0x30] sm:$0xff] %v8057
        %8067 = vst [vmem:[%s8059 + $0x38] sm:$0xff] %v8058
        %v8068 = vmul.f32 %v7493, 0.75
        %v8069 = vmul.f32 %v7494, 0.75
        %v8070 = vmul.f32 %v7495, 0.75
        %v8071 = vmul.f32 %v7496, 0.75
        %v8072 = vmul.f32 %v7497, 0.75
        %v8073 = vmul.f32 %v7498, 0.75
        %v8074 = vmul.f32 %v7499, 0.75
        %v8075 = vmul.f32 %v7500, 0.75
        %v8076 = vld [vmem:[%s7509] sm:$0xff]
        %8077 = vrot.lane.b32.xlu0 %v7493, 16
        %v8078 = vpop.permute.xlu0 %8077
        %8079 = vrot.lane.b32.xlu0 %v7494, 16
        %v8080 = vpop.permute.xlu0 %8079
        %8081 = vrot.lane.b32.xlu0 %v7495, 16
        %v8082 = vpop.permute.xlu0 %8081
        %8083 = vrot.lane.b32.xlu0 %v7496, 16
        %v8084 = vpop.permute.xlu0 %8083
        %8085 = vrot.lane.b32.xlu0 %v7497, 16
        %v8086 = vpop.permute.xlu0 %8085
        %8087 = vrot.lane.b32.xlu0 %v7498, 16
        %v8088 = vpop.permute.xlu0 %8087
        %8089 = vrot.lane.b32.xlu0 %v7499, 16
        %v8090 = vpop.permute.xlu0 %8089
        %8091 = vrot.lane.b32.xlu0 %v7500, 16
        %v8092 = vpop.permute.xlu0 %8091
        %v8093 = vsel %vm432, %v8090, %v8092
        %v8094 = vsel %vm432, %v8088, %v8090
        %v8095 = vsel %vm432, %v8086, %v8088
        %v8096 = vsel %vm432, %v8084, %v8086
        %v8097 = vsel %vm432, %v8082, %v8084
        %v8098 = vsel %vm432, %v8080, %v8082
        %v8099 = vsel %vm432, %v8078, %v8080
        %v8100 = vsel %vm432, %v8092, %v8078
        %v8101 = vsub.f32 1.0, %v8076
        %v8103 = vperm.slane %v8101, 0
        %v8104 = vperm.slane %v8101, 1
        %v8105 = vperm.slane %v8101, 2
        %v8106 = vperm.slane %v8101, 3
        %v8107 = vperm.slane %v8101, 4
        %v8108 = vperm.slane %v8101, 5
        %v8109 = vperm.slane %v8101, 6
        %v8110 = vperm.slane %v8101, 7
        %v8119 = vmul.f32 %v8100, %v8103
        %v8120 = vmul.f32 %v8099, %v8104
        %v8121 = vmul.f32 %v8098, %v8105
        %v8122 = vmul.f32 %v8097, %v8106
        %v8123 = vmul.f32 %v8096, %v8107
        %v8124 = vmul.f32 %v8095, %v8108
        %v8125 = vmul.f32 %v8094, %v8109
        %v8126 = vmul.f32 %v8093, %v8110
        %v8128 = vperm.slane %v8076, 0
        %v8129 = vperm.slane %v8076, 1
        %v8130 = vperm.slane %v8076, 2
        %v8131 = vperm.slane %v8076, 3
        %v8132 = vperm.slane %v8076, 4
        %v8133 = vperm.slane %v8076, 5
        %v8134 = vperm.slane %v8076, 6
        %v8135 = vperm.slane %v8076, 7
        %v8144 = vmul.f32 %v7493, %v8128
        %v8145 = vmul.f32 %v7494, %v8129
        %v8146 = vmul.f32 %v7495, %v8130
        %v8147 = vmul.f32 %v7496, %v8131
        %v8148 = vmul.f32 %v7497, %v8132
        %v8149 = vmul.f32 %v7498, %v8133
        %v8150 = vmul.f32 %v7499, %v8134
        %v8151 = vmul.f32 %v7500, %v8135
        %v8152 = vadd.f32 %v8119, %v8144
        %v8153 = vadd.f32 %v8120, %v8145
        %v8154 = vadd.f32 %v8121, %v8146
        %v8155 = vadd.f32 %v8122, %v8147
        %v8156 = vadd.f32 %v8123, %v8148
        %v8157 = vadd.f32 %v8124, %v8149
        %v8158 = vadd.f32 %v8125, %v8150
        %v8159 = vadd.f32 %v8126, %v8151
        %v8160 = vmul.f32 %v8152, 0.25
        %v8161 = vmul.f32 %v8153, 0.25
        %v8162 = vmul.f32 %v8154, 0.25
        %v8163 = vmul.f32 %v8155, 0.25
        %v8164 = vmul.f32 %v8156, 0.25
        %v8165 = vmul.f32 %v8157, 0.25
        %v8166 = vmul.f32 %v8158, 0.25
        %v8167 = vmul.f32 %v8159, 0.25
        %v8168 = vadd.f32 %v8068, %v8160
        %v8169 = vadd.f32 %v8069, %v8161
        %v8170 = vadd.f32 %v8070, %v8162
        %v8171 = vadd.f32 %v8071, %v8163
        %v8172 = vadd.f32 %v8072, %v8164
        %v8173 = vadd.f32 %v8073, %v8165
        %v8174 = vadd.f32 %v8074, %v8166
        %v8175 = vadd.f32 %v8075, %v8167
        %v8176 = vld [vmem:[%s7610] sm:$0xff]
        %8177 = vrot.lane.b32.xlu0 %v7493, 112
        %v8178 = vpop.permute.xlu0 %8177
        %8179 = vrot.lane.b32.xlu0 %v7494, 112
        %v8180 = vpop.permute.xlu0 %8179
        %8181 = vrot.lane.b32.xlu0 %v7495, 112
        %v8182 = vpop.permute.xlu0 %8181
        %8183 = vrot.lane.b32.xlu0 %v7496, 112
        %v8184 = vpop.permute.xlu0 %8183
        %8185 = vrot.lane.b32.xlu0 %v7497, 112
        %v8186 = vpop.permute.xlu0 %8185
        %8187 = vrot.lane.b32.xlu0 %v7498, 112
        %v8188 = vpop.permute.xlu0 %8187
        %8189 = vrot.lane.b32.xlu0 %v7499, 112
        %v8190 = vpop.permute.xlu0 %8189
        %8191 = vrot.lane.b32.xlu0 %v7500, 112
        %v8192 = vpop.permute.xlu0 %8191
        %v8193 = vsel %vm767, %v8190, %v8192
        %v8194 = vsel %vm767, %v8188, %v8190
        %v8195 = vsel %vm767, %v8186, %v8188
        %v8196 = vsel %vm767, %v8184, %v8186
        %v8197 = vsel %vm767, %v8182, %v8184
        %v8198 = vsel %vm767, %v8180, %v8182
        %v8199 = vsel %vm767, %v8178, %v8180
        %v8200 = vsel %vm767, %v8192, %v8178
        %v8201 = vsub.f32 1.0, %v8176
        %v8203 = vperm.slane %v8201, 0
        %v8204 = vperm.slane %v8201, 1
        %v8205 = vperm.slane %v8201, 2
        %v8206 = vperm.slane %v8201, 3
        %v8207 = vperm.slane %v8201, 4
        %v8208 = vperm.slane %v8201, 5
        %v8209 = vperm.slane %v8201, 6
        %v8210 = vperm.slane %v8201, 7
        %v8219 = vmul.f32 %v8199, %v8203
        %v8220 = vmul.f32 %v8198, %v8204
        %v8221 = vmul.f32 %v8197, %v8205
        %v8222 = vmul.f32 %v8196, %v8206
        %v8223 = vmul.f32 %v8195, %v8207
        %v8224 = vmul.f32 %v8194, %v8208
        %v8225 = vmul.f32 %v8193, %v8209
        %v8226 = vmul.f32 %v8200, %v8210
        %v8228 = vperm.slane %v8176, 0
        %v8229 = vperm.slane %v8176, 1
        %v8230 = vperm.slane %v8176, 2
        %v8231 = vperm.slane %v8176, 3
        %v8232 = vperm.slane %v8176, 4
        %v8233 = vperm.slane %v8176, 5
        %v8234 = vperm.slane %v8176, 6
        %v8235 = vperm.slane %v8176, 7
        %v8244 = vmul.f32 %v7493, %v8228
        %v8245 = vmul.f32 %v7494, %v8229
        %v8246 = vmul.f32 %v7495, %v8230
        %v8247 = vmul.f32 %v7496, %v8231
        %v8248 = vmul.f32 %v7497, %v8232
        %v8249 = vmul.f32 %v7498, %v8233
        %v8250 = vmul.f32 %v7499, %v8234
        %v8251 = vmul.f32 %v7500, %v8235
        %v8252 = vadd.f32 %v8219, %v8244
        %v8253 = vadd.f32 %v8220, %v8245
        %v8254 = vadd.f32 %v8221, %v8246
        %v8255 = vadd.f32 %v8222, %v8247
        %v8256 = vadd.f32 %v8223, %v8248
        %v8257 = vadd.f32 %v8224, %v8249
        %v8258 = vadd.f32 %v8225, %v8250
        %v8259 = vadd.f32 %v8226, %v8251
        %v8260 = vmul.f32 %v8252, 0.25
        %v8261 = vmul.f32 %v8253, 0.25
        %v8262 = vmul.f32 %v8254, 0.25
        %v8263 = vmul.f32 %v8255, 0.25
        %v8264 = vmul.f32 %v8256, 0.25
        %v8265 = vmul.f32 %v8257, 0.25
        %v8266 = vmul.f32 %v8258, 0.25
        %v8267 = vmul.f32 %v8259, 0.25
        %v8268 = vadd.f32 %v8068, %v8260
        %v8269 = vadd.f32 %v8069, %v8261
        %v8270 = vadd.f32 %v8070, %v8262
        %v8271 = vadd.f32 %v8071, %v8263
        %v8272 = vadd.f32 %v8072, %v8264
        %v8273 = vadd.f32 %v8073, %v8265
        %v8274 = vadd.f32 %v8074, %v8266
        %v8275 = vadd.f32 %v8075, %v8267
        %v8276 = vmul.f32 %v8168, 0.75
        %v8277 = vmul.f32 %v8169, 0.75
        %v8278 = vmul.f32 %v8170, 0.75
        %v8279 = vmul.f32 %v8171, 0.75
        %v8280 = vmul.f32 %v8172, 0.75
        %v8281 = vmul.f32 %v8173, 0.75
        %v8282 = vmul.f32 %v8174, 0.75
        %v8283 = vmul.f32 %v8175, 0.75
        %v8284 = vld [vmem:[%s7719] sm:$0xff]
        %v8285 = vsub.f32 1.0, %v8284
        %v8287 = vperm.slane %v8285, 0
        %v8288 = vperm.slane %v8285, 1
        %v8289 = vperm.slane %v8285, 2
        %v8290 = vperm.slane %v8285, 3
        %v8291 = vperm.slane %v8285, 4
        %v8292 = vperm.slane %v8285, 5
        %v8293 = vperm.slane %v8285, 6
        %v8294 = vperm.slane %v8285, 7
        %v8303 = vmul.f32 %v8175, %v8287
        %v8304 = vmul.f32 %v8168, %v8288
        %v8305 = vmul.f32 %v8169, %v8289
        %v8306 = vmul.f32 %v8170, %v8290
        %v8307 = vmul.f32 %v8171, %v8291
        %v8308 = vmul.f32 %v8172, %v8292
        %v8309 = vmul.f32 %v8173, %v8293
        %v8310 = vmul.f32 %v8174, %v8294
        %v8312 = vperm.slane %v8284, 0
        %v8313 = vperm.slane %v8284, 1
        %v8314 = vperm.slane %v8284, 2
        %v8315 = vperm.slane %v8284, 3
        %v8316 = vperm.slane %v8284, 4
        %v8317 = vperm.slane %v8284, 5
        %v8318 = vperm.slane %v8284, 6
        %v8319 = vperm.slane %v8284, 7
        %v8328 = vmul.f32 %v8168, %v8312
        %v8329 = vmul.f32 %v8169, %v8313
        %v8330 = vmul.f32 %v8170, %v8314
        %v8331 = vmul.f32 %v8171, %v8315
        %v8332 = vmul.f32 %v8172, %v8316
        %v8333 = vmul.f32 %v8173, %v8317
        %v8334 = vmul.f32 %v8174, %v8318
        %v8335 = vmul.f32 %v8175, %v8319
        %v8336 = vadd.f32 %v8303, %v8328
        %v8337 = vadd.f32 %v8304, %v8329
        %v8338 = vadd.f32 %v8305, %v8330
        %v8339 = vadd.f32 %v8306, %v8331
        %v8340 = vadd.f32 %v8307, %v8332
        %v8341 = vadd.f32 %v8308, %v8333
        %v8342 = vadd.f32 %v8309, %v8334
        %v8343 = vadd.f32 %v8310, %v8335
        %v8344 = vmul.f32 %v8336, 0.25
        %v8345 = vmul.f32 %v8337, 0.25
        %v8346 = vmul.f32 %v8338, 0.25
        %v8347 = vmul.f32 %v8339, 0.25
        %v8348 = vmul.f32 %v8340, 0.25
        %v8349 = vmul.f32 %v8341, 0.25
        %v8350 = vmul.f32 %v8342, 0.25
        %v8351 = vmul.f32 %v8343, 0.25
        %v8352 = vadd.f32 %v8276, %v8344
        %v8353 = vadd.f32 %v8277, %v8345
        %v8354 = vadd.f32 %v8278, %v8346
        %v8355 = vadd.f32 %v8279, %v8347
        %v8356 = vadd.f32 %v8280, %v8348
        %v8357 = vadd.f32 %v8281, %v8349
        %v8358 = vadd.f32 %v8282, %v8350
        %v8359 = vadd.f32 %v8283, %v8351
        %s8360 = scalar_lea.vmem %s219, 64 [#allocation9]
        %8361 = vst [vmem:[%s8360] sm:$0xff] %v8352
        %8362 = vst [vmem:[%s8360 + $0x8] sm:$0xff] %v8353
        %8363 = vst [vmem:[%s8360 + $0x10] sm:$0xff] %v8354
        %8364 = vst [vmem:[%s8360 + $0x18] sm:$0xff] %v8355
        %8365 = vst [vmem:[%s8360 + $0x20] sm:$0xff] %v8356
        %8366 = vst [vmem:[%s8360 + $0x28] sm:$0xff] %v8357
        %8367 = vst [vmem:[%s8360 + $0x30] sm:$0xff] %v8358
        %8368 = vst [vmem:[%s8360 + $0x38] sm:$0xff] %v8359
        %v8369 = vld [vmem:[%s7804] sm:$0xff]
        %v8370 = vsub.f32 1.0, %v8369
        %v8372 = vperm.slane %v8370, 0
        %v8373 = vperm.slane %v8370, 1
        %v8374 = vperm.slane %v8370, 2
        %v8375 = vperm.slane %v8370, 3
        %v8376 = vperm.slane %v8370, 4
        %v8377 = vperm.slane %v8370, 5
        %v8378 = vperm.slane %v8370, 6
        %v8379 = vperm.slane %v8370, 7
        %v8388 = vmul.f32 %v8169, %v8372
        %v8389 = vmul.f32 %v8170, %v8373
        %v8390 = vmul.f32 %v8171, %v8374
        %v8391 = vmul.f32 %v8172, %v8375
        %v8392 = vmul.f32 %v8173, %v8376
        %v8393 = vmul.f32 %v8174, %v8377
        %v8394 = vmul.f32 %v8175, %v8378
        %v8395 = vmul.f32 %v8168, %v8379
        %v8397 = vperm.slane %v8369, 0
        %v8398 = vperm.slane %v8369, 1
        %v8399 = vperm.slane %v8369, 2
        %v8400 = vperm.slane %v8369, 3
        %v8401 = vperm.slane %v8369, 4
        %v8402 = vperm.slane %v8369, 5
        %v8403 = vperm.slane %v8369, 6
        %v8404 = vperm.slane %v8369, 7
        %v8413 = vmul.f32 %v8168, %v8397
        %v8414 = vmul.f32 %v8169, %v8398
        %v8415 = vmul.f32 %v8170, %v8399
        %v8416 = vmul.f32 %v8171, %v8400
        %v8417 = vmul.f32 %v8172, %v8401
        %v8418 = vmul.f32 %v8173, %v8402
        %v8419 = vmul.f32 %v8174, %v8403
        %v8420 = vmul.f32 %v8175, %v8404
        %v8421 = vadd.f32 %v8388, %v8413
        %v8422 = vadd.f32 %v8389, %v8414
        %v8423 = vadd.f32 %v8390, %v8415
        %v8424 = vadd.f32 %v8391, %v8416
        %v8425 = vadd.f32 %v8392, %v8417
        %v8426 = vadd.f32 %v8393, %v8418
        %v8427 = vadd.f32 %v8394, %v8419
        %v8428 = vadd.f32 %v8395, %v8420
        %v8429 = vmul.f32 %v8421, 0.25
        %v8430 = vmul.f32 %v8422, 0.25
        %v8431 = vmul.f32 %v8423, 0.25
        %v8432 = vmul.f32 %v8424, 0.25
        %v8433 = vmul.f32 %v8425, 0.25
        %v8434 = vmul.f32 %v8426, 0.25
        %v8435 = vmul.f32 %v8427, 0.25
        %v8436 = vmul.f32 %v8428, 0.25
        %v8437 = vadd.f32 %v8276, %v8429
        %v8438 = vadd.f32 %v8277, %v8430
        %v8439 = vadd.f32 %v8278, %v8431
        %v8440 = vadd.f32 %v8279, %v8432
        %v8441 = vadd.f32 %v8280, %v8433
        %v8442 = vadd.f32 %v8281, %v8434
        %v8443 = vadd.f32 %v8282, %v8435
        %v8444 = vadd.f32 %v8283, %v8436
        %s8445 = scalar_lea.vmem %s219, 320 [#allocation9]
        %8446 = vst [vmem:[%s8445] sm:$0xff] %v8437
        %8447 = vst [vmem:[%s8445 + $0x8] sm:$0xff] %v8438
        %8448 = vst [vmem:[%s8445 + $0x10] sm:$0xff] %v8439
        %8449 = vst [vmem:[%s8445 + $0x18] sm:$0xff] %v8440
        %8450 = vst [vmem:[%s8445 + $0x20] sm:$0xff] %v8441
        %8451 = vst [vmem:[%s8445 + $0x28] sm:$0xff] %v8442
        %8452 = vst [vmem:[%s8445 + $0x30] sm:$0xff] %v8443
        %8453 = vst [vmem:[%s8445 + $0x38] sm:$0xff] %v8444
        %v8454 = vmul.f32 %v8268, 0.75
        %v8455 = vmul.f32 %v8269, 0.75
        %v8456 = vmul.f32 %v8270, 0.75
        %v8457 = vmul.f32 %v8271, 0.75
        %v8458 = vmul.f32 %v8272, 0.75
        %v8459 = vmul.f32 %v8273, 0.75
        %v8460 = vmul.f32 %v8274, 0.75
        %v8461 = vmul.f32 %v8275, 0.75
        %v8462 = vld [vmem:[%s7719] sm:$0xff]
        %v8463 = vsub.f32 1.0, %v8462
        %v8465 = vperm.slane %v8463, 0
        %v8466 = vperm.slane %v8463, 1
        %v8467 = vperm.slane %v8463, 2
        %v8468 = vperm.slane %v8463, 3
        %v8469 = vperm.slane %v8463, 4
        %v8470 = vperm.slane %v8463, 5
        %v8471 = vperm.slane %v8463, 6
        %v8472 = vperm.slane %v8463, 7
        %v8481 = vmul.f32 %v8275, %v8465
        %v8482 = vmul.f32 %v8268, %v8466
        %v8483 = vmul.f32 %v8269, %v8467
        %v8484 = vmul.f32 %v8270, %v8468
        %v8485 = vmul.f32 %v8271, %v8469
        %v8486 = vmul.f32 %v8272, %v8470
        %v8487 = vmul.f32 %v8273, %v8471
        %v8488 = vmul.f32 %v8274, %v8472
        %v8490 = vperm.slane %v8462, 0
        %v8491 = vperm.slane %v8462, 1
        %v8492 = vperm.slane %v8462, 2
        %v8493 = vperm.slane %v8462, 3
        %v8494 = vperm.slane %v8462, 4
        %v8495 = vperm.slane %v8462, 5
        %v8496 = vperm.slane %v8462, 6
        %v8497 = vperm.slane %v8462, 7
        %v8506 = vmul.f32 %v8268, %v8490
        %v8507 = vmul.f32 %v8269, %v8491
        %v8508 = vmul.f32 %v8270, %v8492
        %v8509 = vmul.f32 %v8271, %v8493
        %v8510 = vmul.f32 %v8272, %v8494
        %v8511 = vmul.f32 %v8273, %v8495
        %v8512 = vmul.f32 %v8274, %v8496
        %v8513 = vmul.f32 %v8275, %v8497
        %v8514 = vadd.f32 %v8481, %v8506
        %v8515 = vadd.f32 %v8482, %v8507
        %v8516 = vadd.f32 %v8483, %v8508
        %v8517 = vadd.f32 %v8484, %v8509
        %v8518 = vadd.f32 %v8485, %v8510
        %v8519 = vadd.f32 %v8486, %v8511
        %v8520 = vadd.f32 %v8487, %v8512
        %v8521 = vadd.f32 %v8488, %v8513
        %v8522 = vmul.f32 %v8514, 0.25
        %v8523 = vmul.f32 %v8515, 0.25
        %v8524 = vmul.f32 %v8516, 0.25
        %v8525 = vmul.f32 %v8517, 0.25
        %v8526 = vmul.f32 %v8518, 0.25
        %v8527 = vmul.f32 %v8519, 0.25
        %v8528 = vmul.f32 %v8520, 0.25
        %v8529 = vmul.f32 %v8521, 0.25
        %v8530 = vadd.f32 %v8454, %v8522
        %v8531 = vadd.f32 %v8455, %v8523
        %v8532 = vadd.f32 %v8456, %v8524
        %v8533 = vadd.f32 %v8457, %v8525
        %v8534 = vadd.f32 %v8458, %v8526
        %v8535 = vadd.f32 %v8459, %v8527
        %v8536 = vadd.f32 %v8460, %v8528
        %v8537 = vadd.f32 %v8461, %v8529
        %s8538 = scalar_lea.vmem %s219, 192 [#allocation9]
        %8539 = vst [vmem:[%s8538] sm:$0xff] %v8530
        %8540 = vst [vmem:[%s8538 + $0x8] sm:$0xff] %v8531
        %8541 = vst [vmem:[%s8538 + $0x10] sm:$0xff] %v8532
        %8542 = vst [vmem:[%s8538 + $0x18] sm:$0xff] %v8533
        %8543 = vst [vmem:[%s8538 + $0x20] sm:$0xff] %v8534
        %8544 = vst [vmem:[%s8538 + $0x28] sm:$0xff] %v8535
        %8545 = vst [vmem:[%s8538 + $0x30] sm:$0xff] %v8536
        %8546 = vst [vmem:[%s8538 + $0x38] sm:$0xff] %v8537
        %v8547 = vld [vmem:[%s7804] sm:$0xff]
        %v8548 = vsub.f32 1.0, %v8547
        %v8550 = vperm.slane %v8548, 0
        %v8551 = vperm.slane %v8548, 1
        %v8552 = vperm.slane %v8548, 2
        %v8553 = vperm.slane %v8548, 3
        %v8554 = vperm.slane %v8548, 4
        %v8555 = vperm.slane %v8548, 5
        %v8556 = vperm.slane %v8548, 6
        %v8557 = vperm.slane %v8548, 7
        %v8566 = vmul.f32 %v8269, %v8550
        %v8567 = vmul.f32 %v8270, %v8551
        %v8568 = vmul.f32 %v8271, %v8552
        %v8569 = vmul.f32 %v8272, %v8553
        %v8570 = vmul.f32 %v8273, %v8554
        %v8571 = vmul.f32 %v8274, %v8555
        %v8572 = vmul.f32 %v8275, %v8556
        %v8573 = vmul.f32 %v8268, %v8557
        %v8575 = vperm.slane %v8547, 0
        %v8576 = vperm.slane %v8547, 1
        %v8577 = vperm.slane %v8547, 2
        %v8578 = vperm.slane %v8547, 3
        %v8579 = vperm.slane %v8547, 4
        %v8580 = vperm.slane %v8547, 5
        %v8581 = vperm.slane %v8547, 6
        %v8582 = vperm.slane %v8547, 7
        %v8591 = vmul.f32 %v8268, %v8575
        %v8592 = vmul.f32 %v8269, %v8576
        %v8593 = vmul.f32 %v8270, %v8577
        %v8594 = vmul.f32 %v8271, %v8578
        %v8595 = vmul.f32 %v8272, %v8579
        %v8596 = vmul.f32 %v8273, %v8580
        %v8597 = vmul.f32 %v8274, %v8581
        %v8598 = vmul.f32 %v8275, %v8582
        %v8599 = vadd.f32 %v8566, %v8591
        %v8600 = vadd.f32 %v8567, %v8592
        %v8601 = vadd.f32 %v8568, %v8593
        %v8602 = vadd.f32 %v8569, %v8594
        %v8603 = vadd.f32 %v8570, %v8595
        %v8604 = vadd.f32 %v8571, %v8596
        %v8605 = vadd.f32 %v8572, %v8597
        %v8606 = vadd.f32 %v8573, %v8598
        %v8607 = vmul.f32 %v8599, 0.25
        %v8608 = vmul.f32 %v8600, 0.25
        %v8609 = vmul.f32 %v8601, 0.25
        %v8610 = vmul.f32 %v8602, 0.25
        %v8611 = vmul.f32 %v8603, 0.25
        %v8612 = vmul.f32 %v8604, 0.25
        %v8613 = vmul.f32 %v8605, 0.25
        %v8614 = vmul.f32 %v8606, 0.25
        %v8615 = vadd.f32 %v8454, %v8607
        %v8616 = vadd.f32 %v8455, %v8608
        %v8617 = vadd.f32 %v8456, %v8609
        %v8618 = vadd.f32 %v8457, %v8610
        %v8619 = vadd.f32 %v8458, %v8611
        %v8620 = vadd.f32 %v8459, %v8612
        %v8621 = vadd.f32 %v8460, %v8613
        %v8622 = vadd.f32 %v8461, %v8614
        %s8623 = scalar_lea.vmem %s219, 448 [#allocation9]
        %8624 = vst [vmem:[%s8623] sm:$0xff] %v8615
        %8625 = vst [vmem:[%s8623 + $0x8] sm:$0xff] %v8616
        %8626 = vst [vmem:[%s8623 + $0x10] sm:$0xff] %v8617
        %8627 = vst [vmem:[%s8623 + $0x18] sm:$0xff] %v8618
        %8628 = vst [vmem:[%s8623 + $0x20] sm:$0xff] %v8619
        %8629 = vst [vmem:[%s8623 + $0x28] sm:$0xff] %v8620
        %8630 = vst [vmem:[%s8623 + $0x30] sm:$0xff] %v8621
        %8631 = vst [vmem:[%s8623 + $0x38] sm:$0xff] %v8622
        %s8632 = sand.u32 %s95, 1
        %s8633 = scalar_lea.sflag [#allocation5], %s8632
        %s8634 = sand.u32 %s95, 1
        %s8635 = smul.addr %s8634, 512
        %s8636 = scalar_lea.vmem [#allocation9], %s8635
        // Predicated region
        $region45: #{tpu_custom_call.1} parent=31 // pred_check
          %p8637 = pneg %p105
        $region46: #{tpu_custom_call.1} parent=31 // pred_check_branch
          %8639 = sbr.rel (%p8637) target = $region48
        $region47: #{tpu_custom_call.1} parent=31 // pred_region
          %8641 = vsyncadd %s8633, 0
          %s8642 = smul.addr %s19, 64
          %s8643 = smul.addr %s8642, 8
          %s8644 = scalar_lea.hbm %s3, %s8643
          %s8645 = sshll.u32 %s8636, 4
          %s8646 = int_to_ptr.vmem [resolvable:$true] %s8645
          %s8647 = sshll.u32 %s8644, 4
          %s8648 = int_to_ptr.hbm [resolvable:$true] %s8647
          %8653 = dma.vmem_to_hbm [thread:$0]  %s8646, 8192, %s8648, %s8633, 1024, 1024, 64
        $region48: #{tpu_custom_call.1} parent=31 // pred_fallthru
          _
      $region32: #{tpu_custom_call.1} parent=5 // pred_fallthru
        _
      %p8654 = scmp.le.s32.totalorder 2, %s14
      // Predicated region
      $region49: #{tpu_custom_call.1} parent=5 // pred_check
        %p8655 = pneg %p8654
      $region50: #{tpu_custom_call.1} parent=5 // pred_check_branch
        %8657 = sbr.rel (%p8655) target = $region52
      $region51: #{tpu_custom_call.1} parent=5 // pred_region
        %s8658 = ssub.s32 %s14, 2
        // Predicated region
        $region53: #{tpu_custom_call.1} parent=51 // pred_check
          %p8659 = pneg %p111
        $region54: #{tpu_custom_call.1} parent=51 // pred_check_branch
          %8661 = sbr.rel (%p8659) target = $region56
        $region55: #{tpu_custom_call.1} parent=51 // pred_region
          %s8662 = sand.u32 %s96, 1
          %s8663 = scalar_lea.sflag [#allocation5], %s8662
          %s8664 = sand.u32 %s96, 1
          %s8665 = smul.addr %s8664, 512
          %s8666 = scalar_lea.vmem [#allocation9], %s8665
          %8668 = dma.done %s8663, 8192
        $region56: #{tpu_custom_call.1} parent=51 // pred_fallthru
          _
      $region52: #{tpu_custom_call.1} parent=5 // pred_fallthru
        _
    $region6: #{tpu_custom_call.1} parent=1 // loop_footer
      %s18 = sadd.s32 1, %s14
    $region7: #{tpu_custom_call.1} parent=1 // loop_footer_branch
      %13 = sbr.rel target = $region3
    $region8: #{tpu_custom_call.1} parent=1 // loop_exit
      _
    %8669 = vsyncpa [#allocation4], 1
    %s8670 = scalar_lea.sflag [#allocation4], 1
    %8671 = vsyncpa %s8670, 1
    %8672 = vsyncpa [#allocation7], 1
    %8673 = vsyncpa [#allocation5], 1
    %s8674 = scalar_lea.sflag [#allocation5], 1
    %8675 = vsyncpa %s8674, 1

</llo_original>
